<compile_context>
chip_gen: v6e
topology: v6e:2x2x1
jax: 0.10.0
libtpu: 0.0.40
codegen_flags: <defaults>
</compile_context>

<pallas_src>
import functools

import jax
import jax.numpy as jnp
from jax import lax
from jax.experimental import pallas as pl
from jax.experimental.pallas import tpu as pltpu


def _round_up(v, m):
    return (v + m - 1) // m * m


def _recurrent_block_kernel(x_ref, w_ref, scale_ref, shift_ref, o_ref, pad_ref,
                            *, t, true_w):
    """One batch element per grid step.

    x_ref:     (1, H, Wp, Cp)   f32 input tile (channels / width zero-padded)
    w_ref:     (9*Cp, Cp)       bf16 conv weights, tap-major ((ky*3+kx)*Cp + ci)
    scale_ref: (1, Cp)          f32 folded BN scale  = gamma / sqrt(var + eps)
    shift_ref: (1, Cp)          f32 folded BN shift  = (bias - mean)*scale + beta
    o_ref:     (1, H, Wp, Cp)   f32 output tile
    pad_ref:   (H+2, Wp+2, Cp)  bf16 zero-border scratch for the 3x3 stencil
    """
    _, H, Wp, Cp = x_ref.shape
    W = true_w  # true (unpadded) width

    # Zero the border and the right width-padding columns once per grid step
    # (scratch is per-core; a "parallel" grid may be sharded across TCs, so a
    # program_id == 0 guard would leave the other core's border stale).  The
    # interior rows 1..H / cols 1..W are fully rewritten before every conv and
    # cols > W are never written again, so they stay exactly zero through the
    # recurrence (acting as the conv's zero padding).
    zrow = jnp.zeros((1, Wp + 2, Cp), jnp.bfloat16)
    pad_ref[0:1, :, :] = zrow
    pad_ref[H + 1:H + 2, :, :] = zrow
    pad_ref[:, 0:1, :] = jnp.zeros((H + 2, 1, Cp), jnp.bfloat16)
    pad_ref[:, W + 1:Wp + 2, :] = jnp.zeros((H + 2, Wp + 1 - W, Cp), jnp.bfloat16)

    scale = scale_ref[...]            # (1, Cp) f32
    shift = shift_ref[...]            # (1, Cp) f32

    def conv_bn_relu(inp):            # inp: (H, Wp, Cp) f32
        # Single bf16 cast of the (H, W, Cp) conv input as it is written into
        # the padded scratch; residual/BN/ReLU stay in f32 outside this write.
        pad_ref[1:H + 1, 1:W + 1, :] = inp[:, :W, :].astype(jnp.bfloat16)
        padded = pad_ref[...]                                   # (H+2, Wp+2, Cp) bf16
        # dx taps: three column-shifted copies concatenated along the
        # lane-aligned channel axis (the only sublane-misaligned reads).
        cols = jnp.concatenate(
            [padded[:, 0:Wp, :], padded[:, 1:Wp + 1, :], padded[:, 2:Wp + 2, :]],
            axis=-1)                                            # (H+2, Wp, 3*Cp) bf16
        # dy taps: three accumulating K = 3*Cp matmuls over leading-dim views
        # of `cols` (no 9*Cp slab materialization; identical total MXU work).
        acc = None
        for dy in range(3):
            lhs = cols[dy:dy + H].reshape(H * Wp, 3 * Cp)       # no-op: Wp % 8 == 0
            part = jnp.dot(lhs, w_ref[dy * 3 * Cp:(dy + 1) * 3 * Cp, :],
                           preferred_element_type=jnp.float32)  # (H*Wp, Cp) f32
            acc = part if acc is None else acc + part
        y = acc * scale + shift       # conv bias + eval-mode BN folded (f32 VPU)
        return jnp.maximum(y, 0.0).reshape(H, Wp, Cp)           # ReLU

    # Recurrence (matches the PyTorch loop): conv(x), then t x conv(x + x1).
    x1 = conv_bn_relu(x_ref[0])
    for _ in range(t):
        x1 = conv_bn_relu(x_ref[0] + x1)     # re-read x from VMEM each step
    o_ref[0] = x1.astype(o_ref.dtype)


def recurrent_block(x_nchw, w_oihw, conv_bias, bn_gamma, bn_beta, bn_mean, bn_var,
                    *, t=2, eps=1e-5):
    """Pallas implementation of Recurrent_block.forward.  Input/output are NCHW."""
    N, C, H, W = x_nchw.shape
    Cp = _round_up(C, 128)   # lane-dense channel axis
    Wp = _round_up(W, 8)     # sublane-aligned width: (H,Wp,K)->(H*Wp,K) is a no-op

    x = jnp.transpose(x_nchw, (0, 2, 3, 1)).astype(jnp.float32)          # NHWC
    x = jnp.pad(x, ((0, 0), (0, 0), (0, Wp - W), (0, Cp - C)))

    # OIHW -> (ky, kx, I, O), zero-pad channels, flatten taps -> (9*Cp, Cp) bf16.
    w_hwio = jnp.transpose(w_oihw, (2, 3, 1, 0)).astype(jnp.float32)     # (3,3,C,C)
    w_p = jnp.zeros((3, 3, Cp, Cp), jnp.float32).at[:, :, :C, :C].set(w_hwio)
    w9 = w_p.reshape(9 * Cp, Cp).astype(jnp.bfloat16)

    inv_std = 1.0 / jnp.sqrt(bn_var.astype(jnp.float32) + eps)
    scale_c = bn_gamma.astype(jnp.float32) * inv_std
    shift_c = ((conv_bias.astype(jnp.float32) - bn_mean.astype(jnp.float32)) * scale_c
               + bn_beta.astype(jnp.float32))
    # Padded channels get scale = shift = 0 -> relu(0) = 0, so they never
    # contaminate real channels through the recurrence.
    scale = jnp.zeros((1, Cp), jnp.float32).at[0, :C].set(scale_c)
    shift = jnp.zeros((1, Cp), jnp.float32).at[0, :C].set(shift_c)

    kernel = functools.partial(_recurrent_block_kernel, t=t, true_w=W)

    # Explicit scoped-VMEM budget: double-buffered in/out blocks + weights +
    # bf16 pad scratch + live im2col/accumulator intermediates, 2x headroom.
    x_blk = H * Wp * Cp * 4
    w_bytes = 9 * Cp * Cp * 2
    pad_bytes = (H + 2) * (Wp + 2) * Cp * 2
    cols_bytes = (H + 2) * Wp * 3 * Cp * 2
    acc_bytes = H * Wp * Cp * 4
    live = (4 * x_blk                 # 2x input + 2x output block buffers
            + 2 * w_bytes + 4 * Cp * 4 * 2
            + pad_bytes + cols_bytes
            + 2 * acc_bytes + 2 * x_blk)   # matmul acc + residual/x1 temporaries
    vmem_limit = int(min(max(2 * live, 32 << 20), 100 << 20))

    out_nhwc = pl.pallas_call(
        kernel,
        out_shape=jax.ShapeDtypeStruct((N, H, Wp, Cp), jnp.float32),
        grid_spec=pltpu.PrefetchScalarGridSpec(
            num_scalar_prefetch=0,
            grid=(N,),
            in_specs=[
                pl.BlockSpec((1, H, Wp, Cp), lambda n: (n, 0, 0, 0)),
                # TODO(synk): on VMEM-tight chips (v7x) avoid double-buffering this
                # invariant operand (pipeline_mode=pl.Buffered(1) or one-time DMA).
                pl.BlockSpec((9 * Cp, Cp), lambda n: (0, 0)),
                pl.BlockSpec((1, Cp), lambda n: (0, 0)),
                pl.BlockSpec((1, Cp), lambda n: (0, 0)),
            ],
            out_specs=pl.BlockSpec((1, H, Wp, Cp), lambda n: (n, 0, 0, 0)),
            scratch_shapes=[pltpu.VMEM((H + 2, Wp + 2, Cp), jnp.bfloat16)],
        ),
        compiler_params=pltpu.CompilerParams(
            dimension_semantics=("parallel",),
            vmem_limit_bytes=vmem_limit),
    )(x, w9, scale, shift)

    out_nhwc = out_nhwc[:, :, :W, :C]
    return jnp.transpose(out_nhwc, (0, 3, 1, 2))                          # NCHW


def _reference(x_nchw, w_oihw, conv_bias, bn_gamma, bn_beta, bn_mean, bn_var,
               *, t=2, eps=1e-5, matmul_dtype=jnp.bfloat16):
    """Pure-JAX reference (same eval-mode BN folding).  With
    matmul_dtype=bf16 the conv operands match the kernel's MXU precision."""
    x = jnp.transpose(x_nchw, (0, 2, 3, 1)).astype(jnp.float32)
    w_hwio = jnp.transpose(w_oihw, (2, 3, 1, 0)).astype(jnp.float32)
    inv_std = 1.0 / jnp.sqrt(bn_var.astype(jnp.float32) + eps)
    scale = bn_gamma * inv_std
    shift = (conv_bias - bn_mean) * scale + bn_beta
    prec = lax.Precision.HIGHEST if matmul_dtype == jnp.float32 else None

    def cbr(inp):
        y = lax.conv_general_dilated(
            inp.astype(matmul_dtype), w_hwio.astype(matmul_dtype),
            window_strides=(1, 1), padding="SAME",
            dimension_numbers=("NHWC", "HWIO", "NHWC"),
            preferred_element_type=jnp.float32,
            precision=prec)
        return jnp.maximum(y * scale + shift, 0.0)

    x1 = cbr(x)
    for _ in range(t):
        x1 = cbr(x + x1)
    return jnp.transpose(x1, (0, 3, 1, 2))


if __name__ == "__main__":
    # Small shapes consistent with the module: batch=2, ch_out=4, 16x16 spatial, t=2.
    N, C, H, W, T = 2, 4, 16, 16, 2

    key = jax.random.PRNGKey(0)
    kx, kw, kb, kg, kbeta, km, kv = jax.random.split(key, 7)

    x = jax.random.normal(kx, (N, C, H, W), dtype=jnp.float32)
    conv_w = jax.random.normal(kw, (C, C, 3, 3), dtype=jnp.float32) * 0.2   # OIHW
    conv_b = jax.random.normal(kb, (C,), dtype=jnp.float32) * 0.1
    bn_gamma = 1.0 + 0.1 * jax.random.normal(kg, (C,), dtype=jnp.float32)
    bn_beta = 0.1 * jax.random.normal(kbeta, (C,), dtype=jnp.float32)
    bn_mean = 0.1 * jax.random.normal(km, (C,), dtype=jnp.float32)
    bn_var = 1.0 + 0.1 * jax.nn.softplus(jax.random.normal(kv, (C,), dtype=jnp.float32))

    out = recurrent_block(x, conv_w, conv_b, bn_gamma, bn_beta, bn_mean, bn_var, t=T)
    out = jax.block_until_ready(out)
    assert out.shape == (N, C, H, W), out.shape

    # Precision-matched reference (bf16 conv operands, f32 accumulation).
    ref_bf16 = _reference(x, conv_w, conv_b, bn_gamma, bn_beta, bn_mean, bn_var,
                          t=T, matmul_dtype=jnp.bfloat16)
    ref_bf16 = jax.block_until_ready(ref_bf16)
    assert jnp.allclose(out, ref_bf16, atol=5e-3, rtol=5e-3), \
        f"max abs err vs bf16-matched ref: {jnp.max(jnp.abs(out - ref_bf16))}"

    # Loose sanity check against a full-f32 reference (bf16 MXU operand rounding).
    ref_f32 = _reference(x, conv_w, conv_b, bn_gamma, bn_beta, bn_mean, bn_var,
                         t=T, matmul_dtype=jnp.float32)
    ref_f32 = jax.block_until_ready(ref_f32)
    assert jnp.allclose(out, ref_f32, atol=1e-1, rtol=1e-1), \
        f"max abs err vs f32 ref: {jnp.max(jnp.abs(out - ref_f32))}"

    print("KERNEL_OK")
</pallas_src>

<mosaic_0001>
module attributes {stable_mosaic.version = 11 : i64} {
  func.func @_recurrent_block_kernel(%arg0: i32, %arg1: memref<1x16x16x128xf32, #tpu.memory_space<vmem>>, %arg2: memref<1152x128xbf16, #tpu.memory_space<vmem>>, %arg3: memref<1x128xf32, #tpu.memory_space<vmem>>, %arg4: memref<1x128xf32, #tpu.memory_space<vmem>>, %arg5: memref<1x16x16x128xf32, #tpu.memory_space<vmem>>, %arg6: memref<18x18x128xbf16, #tpu.memory_space<vmem>>) attributes {dimension_semantics = [#tpu.dimension_semantics<parallel>], iteration_bounds = array<i64: 2>, scalar_prefetch = 0 : i64, scratch_operands = 1 : i64, tpu.core_type = #tpu.core_type<tc>, window_params = [{transform_indices = @transform_0, window_bounds = array<i64: 1, 16, 16, 128>}, {pipeline_mode = #tpu.pipeline_mode<synchronous>, transform_indices = @transform_1, window_bounds = array<i64: 1152, 128>}, {pipeline_mode = #tpu.pipeline_mode<synchronous>, transform_indices = @transform_2, window_bounds = array<i64: 1, 128>}, {pipeline_mode = #tpu.pipeline_mode<synchronous>, transform_indices = @transform_3, window_bounds = array<i64: 1, 128>}, {transform_indices = @transform_4, window_bounds = array<i64: 1, 16, 16, 128>}]} {
    %cst = arith.constant 0.000000e+00 : bf16
    %0 = vector.broadcast %cst : bf16 to vector<1x18x128xbf16>
    %c0 = arith.constant 0 : index
    %c0_0 = arith.constant 0 : index
    %c0_1 = arith.constant 0 : index
    %1 = vector.load %arg6[%c0, %c0_0, %c0_1] : memref<18x18x128xbf16, #tpu.memory_space<vmem>>, vector<1x18x128xbf16>
    tpu.vector_store %arg6[%c0, %c0_0, %c0_1], %0 {strides = array<i32>} : memref<18x18x128xbf16, #tpu.memory_space<vmem>>, vector<1x18x128xbf16>,
    %c17 = arith.constant 17 : index
    %c0_2 = arith.constant 0 : index
    %c0_3 = arith.constant 0 : index
    %2 = vector.load %arg6[%c17, %c0_2, %c0_3] : memref<18x18x128xbf16, #tpu.memory_space<vmem>>, vector<1x18x128xbf16>
    tpu.vector_store %arg6[%c17, %c0_2, %c0_3], %0 {strides = array<i32>} : memref<18x18x128xbf16, #tpu.memory_space<vmem>>, vector<1x18x128xbf16>,
    %cst_4 = arith.constant 0.000000e+00 : bf16
    %3 = vector.broadcast %cst_4 : bf16 to vector<18x1x128xbf16>
    %c0_5 = arith.constant 0 : index
    %c0_6 = arith.constant 0 : index
    %c0_7 = arith.constant 0 : index
    %4 = vector.load %arg6[%c0_5, %c0_6, %c0_7] : memref<18x18x128xbf16, #tpu.memory_space<vmem>>, vector<18x1x128xbf16>
    tpu.vector_store %arg6[%c0_5, %c0_6, %c0_7], %3 {strides = array<i32>} : memref<18x18x128xbf16, #tpu.memory_space<vmem>>, vector<18x1x128xbf16>,
    %cst_8 = arith.constant 0.000000e+00 : bf16
    %5 = vector.broadcast %cst_8 : bf16 to vector<18x1x128xbf16>
    %c0_9 = arith.constant 0 : index
    %c17_10 = arith.constant 17 : index
    %c0_11 = arith.constant 0 : index
    %6 = vector.load %arg6[%c0_9, %c17_10, %c0_11] : memref<18x18x128xbf16, #tpu.memory_space<vmem>>, vector<18x1x128xbf16>
    tpu.vector_store %arg6[%c0_9, %c17_10, %c0_11], %5 {strides = array<i32>} : memref<18x18x128xbf16, #tpu.memory_space<vmem>>, vector<18x1x128xbf16>,
    %c0_12 = arith.constant 0 : index
    %c0_13 = arith.constant 0 : index
    %7 = vector.load %arg3[%c0_12, %c0_13] : memref<1x128xf32, #tpu.memory_space<vmem>>, vector<1x128xf32>
    %c0_14 = arith.constant 0 : index
    %c0_15 = arith.constant 0 : index
    %8 = vector.load %arg4[%c0_14, %c0_15] : memref<1x128xf32, #tpu.memory_space<vmem>>, vector<1x128xf32>
    %c0_16 = arith.constant 0 : index
    %c0_17 = arith.constant 0 : index
    %c0_18 = arith.constant 0 : index
    %c0_19 = arith.constant 0 : index
    %9 = vector.load %arg1[%c0_16, %c0_17, %c0_18, %c0_19] : memref<1x16x16x128xf32, #tpu.memory_space<vmem>>, vector<1x16x16x128xf32>
    %10 = vector.shape_cast %9 : vector<1x16x16x128xf32> to vector<16x16x128xf32>
    %11 = arith.truncf %10 : vector<16x16x128xf32> to vector<16x16x128xbf16>
    %c1 = arith.constant 1 : index
    %c1_20 = arith.constant 1 : index
    %c0_21 = arith.constant 0 : index
    %12 = vector.load %arg6[%c1, %c1_20, %c0_21] : memref<18x18x128xbf16, #tpu.memory_space<vmem>>, vector<16x16x128xbf16>
    tpu.vector_store %arg6[%c1, %c1_20, %c0_21], %11 {strides = array<i32>} : memref<18x18x128xbf16, #tpu.memory_space<vmem>>, vector<16x16x128xbf16>,
    %c0_22 = arith.constant 0 : index
    %c0_23 = arith.constant 0 : index
    %c0_24 = arith.constant 0 : index
    %13 = vector.load %arg6[%c0_22, %c0_23, %c0_24] : memref<18x18x128xbf16, #tpu.memory_space<vmem>>, vector<18x18x128xbf16>
    %14 = vector.extract_strided_slice %13 {offsets = [0, 0, 0], sizes = [18, 16, 128], strides = [1, 1, 1]} : vector<18x18x128xbf16> to vector<18x16x128xbf16>
    %15 = vector.extract_strided_slice %13 {offsets = [0, 1, 0], sizes = [18, 16, 128], strides = [1, 1, 1]} : vector<18x18x128xbf16> to vector<18x16x128xbf16>
    %16 = vector.extract_strided_slice %13 {offsets = [0, 2, 0], sizes = [18, 16, 128], strides = [1, 1, 1]} : vector<18x18x128xbf16> to vector<18x16x128xbf16>
    %17 = tpu.concatenate %14, %15, %16 in 2 : vector<18x16x128xbf16>, vector<18x16x128xbf16>, vector<18x16x128xbf16> -> vector<18x16x384xbf16>
    %18 = vector.extract_strided_slice %17 {offsets = [0, 0, 0], sizes = [16, 16, 384], strides = [1, 1, 1]} : vector<18x16x384xbf16> to vector<16x16x384xbf16>
    %19 = vector.shape_cast %18 : vector<16x16x384xbf16> to vector<256x384xbf16>
    %c0_25 = arith.constant 0 : index
    %c0_26 = arith.constant 0 : index
    %20 = vector.load %arg2[%c0_25, %c0_26] : memref<1152x128xbf16, #tpu.memory_space<vmem>>, vector<384x128xbf16>
    %cst_27 = arith.constant dense<0.000000e+00> : vector<256x128xf32>
    %21 = tpu.matmul %19, %20, %cst_27 {dimension_numbers = #tpu.dot_dimension_numbers<[1], [0], [0], [1], [0, 0, 1, 1], [], []>} : vector<256x384xbf16>, vector<384x128xbf16>, vector<256x128xf32> -> vector<256x128xf32>
    %22 = vector.extract_strided_slice %17 {offsets = [1, 0, 0], sizes = [16, 16, 384], strides = [1, 1, 1]} : vector<18x16x384xbf16> to vector<16x16x384xbf16>
    %23 = vector.shape_cast %22 : vector<16x16x384xbf16> to vector<256x384xbf16>
    %c384 = arith.constant 384 : index
    %c0_28 = arith.constant 0 : index
    %24 = vector.load %arg2[%c384, %c0_28] : memref<1152x128xbf16, #tpu.memory_space<vmem>>, vector<384x128xbf16>
    %cst_29 = arith.constant dense<0.000000e+00> : vector<256x128xf32>
    %25 = tpu.matmul %23, %24, %cst_29 {dimension_numbers = #tpu.dot_dimension_numbers<[1], [0], [0], [1], [0, 0, 1, 1], [], []>} : vector<256x384xbf16>, vector<384x128xbf16>, vector<256x128xf32> -> vector<256x128xf32>
    %26 = arith.addf %21, %25 : vector<256x128xf32>
    %27 = vector.extract_strided_slice %17 {offsets = [2, 0, 0], sizes = [16, 16, 384], strides = [1, 1, 1]} : vector<18x16x384xbf16> to vector<16x16x384xbf16>
    %28 = vector.shape_cast %27 : vector<16x16x384xbf16> to vector<256x384xbf16>
    %c768 = arith.constant 768 : index
    %c0_30 = arith.constant 0 : index
    %29 = vector.load %arg2[%c768, %c0_30] : memref<1152x128xbf16, #tpu.memory_space<vmem>>, vector<384x128xbf16>
    %cst_31 = arith.constant dense<0.000000e+00> : vector<256x128xf32>
    %30 = tpu.matmul %28, %29, %cst_31 {dimension_numbers = #tpu.dot_dimension_numbers<[1], [0], [0], [1], [0, 0, 1, 1], [], []>} : vector<256x384xbf16>, vector<384x128xbf16>, vector<256x128xf32> -> vector<256x128xf32>
    %31 = arith.addf %26, %30 : vector<256x128xf32>
    %32 = vector.broadcast %7 : vector<1x128xf32> to vector<256x128xf32>
    %33 = arith.mulf %31, %32 : vector<256x128xf32>
    %34 = vector.broadcast %8 : vector<1x128xf32> to vector<256x128xf32>
    %35 = arith.addf %33, %34 : vector<256x128xf32>
    %cst_32 = arith.constant 0.000000e+00 : f32
    %36 = vector.broadcast %cst_32 : f32 to vector<256x128xf32>
    %37 = arith.maximumf %35, %36 : vector<256x128xf32>
    %38 = vector.shape_cast %37 : vector<256x128xf32> to vector<16x16x128xf32>
    %c0_33 = arith.constant 0 : index
    %c0_34 = arith.constant 0 : index
    %c0_35 = arith.constant 0 : index
    %c0_36 = arith.constant 0 : index
    %39 = vector.load %arg1[%c0_33, %c0_34, %c0_35, %c0_36] : memref<1x16x16x128xf32, #tpu.memory_space<vmem>>, vector<1x16x16x128xf32>
    %40 = vector.shape_cast %39 : vector<1x16x16x128xf32> to vector<16x16x128xf32>
    %41 = arith.addf %40, %38 : vector<16x16x128xf32>
    %42 = arith.truncf %41 : vector<16x16x128xf32> to vector<16x16x128xbf16>
    %c1_37 = arith.constant 1 : index
    %c1_38 = arith.constant 1 : index
    %c0_39 = arith.constant 0 : index
    %43 = vector.load %arg6[%c1_37, %c1_38, %c0_39] : memref<18x18x128xbf16, #tpu.memory_space<vmem>>, vector<16x16x128xbf16>
    tpu.vector_store %arg6[%c1_37, %c1_38, %c0_39], %42 {strides = array<i32>} : memref<18x18x128xbf16, #tpu.memory_space<vmem>>, vector<16x16x128xbf16>,
    %c0_40 = arith.constant 0 : index
    %c0_41 = arith.constant 0 : index
    %c0_42 = arith.constant 0 : index
    %44 = vector.load %arg6[%c0_40, %c0_41, %c0_42] : memref<18x18x128xbf16, #tpu.memory_space<vmem>>, vector<18x18x128xbf16>
    %45 = vector.extract_strided_slice %44 {offsets = [0, 0, 0], sizes = [18, 16, 128], strides = [1, 1, 1]} : vector<18x18x128xbf16> to vector<18x16x128xbf16>
    %46 = vector.extract_strided_slice %44 {offsets = [0, 1, 0], sizes = [18, 16, 128], strides = [1, 1, 1]} : vector<18x18x128xbf16> to vector<18x16x128xbf16>
    %47 = vector.extract_strided_slice %44 {offsets = [0, 2, 0], sizes = [18, 16, 128], strides = [1, 1, 1]} : vector<18x18x128xbf16> to vector<18x16x128xbf16>
    %48 = tpu.concatenate %45, %46, %47 in 2 : vector<18x16x128xbf16>, vector<18x16x128xbf16>, vector<18x16x128xbf16> -> vector<18x16x384xbf16>
    %49 = vector.extract_strided_slice %48 {offsets = [0, 0, 0], sizes = [16, 16, 384], strides = [1, 1, 1]} : vector<18x16x384xbf16> to vector<16x16x384xbf16>
    %50 = vector.shape_cast %49 : vector<16x16x384xbf16> to vector<256x384xbf16>
    %c0_43 = arith.constant 0 : index
    %c0_44 = arith.constant 0 : index
    %51 = vector.load %arg2[%c0_43, %c0_44] : memref<1152x128xbf16, #tpu.memory_space<vmem>>, vector<384x128xbf16>
    %cst_45 = arith.constant dense<0.000000e+00> : vector<256x128xf32>
    %52 = tpu.matmul %50, %51, %cst_45 {dimension_numbers = #tpu.dot_dimension_numbers<[1], [0], [0], [1], [0, 0, 1, 1], [], []>} : vector<256x384xbf16>, vector<384x128xbf16>, vector<256x128xf32> -> vector<256x128xf32>
    %53 = vector.extract_strided_slice %48 {offsets = [1, 0, 0], sizes = [16, 16, 384], strides = [1, 1, 1]} : vector<18x16x384xbf16> to vector<16x16x384xbf16>
    %54 = vector.shape_cast %53 : vector<16x16x384xbf16> to vector<256x384xbf16>
    %c384_46 = arith.constant 384 : index
    %c0_47 = arith.constant 0 : index
    %55 = vector.load %arg2[%c384_46, %c0_47] : memref<1152x128xbf16, #tpu.memory_space<vmem>>, vector<384x128xbf16>
    %cst_48 = arith.constant dense<0.000000e+00> : vector<256x128xf32>
    %56 = tpu.matmul %54, %55, %cst_48 {dimension_numbers = #tpu.dot_dimension_numbers<[1], [0], [0], [1], [0, 0, 1, 1], [], []>} : vector<256x384xbf16>, vector<384x128xbf16>, vector<256x128xf32> -> vector<256x128xf32>
    %57 = arith.addf %52, %56 : vector<256x128xf32>
    %58 = vector.extract_strided_slice %48 {offsets = [2, 0, 0], sizes = [16, 16, 384], strides = [1, 1, 1]} : vector<18x16x384xbf16> to vector<16x16x384xbf16>
    %59 = vector.shape_cast %58 : vector<16x16x384xbf16> to vector<256x384xbf16>
    %c768_49 = arith.constant 768 : index
    %c0_50 = arith.constant 0 : index
    %60 = vector.load %arg2[%c768_49, %c0_50] : memref<1152x128xbf16, #tpu.memory_space<vmem>>, vector<384x128xbf16>
    %cst_51 = arith.constant dense<0.000000e+00> : vector<256x128xf32>
    %61 = tpu.matmul %59, %60, %cst_51 {dimension_numbers = #tpu.dot_dimension_numbers<[1], [0], [0], [1], [0, 0, 1, 1], [], []>} : vector<256x384xbf16>, vector<384x128xbf16>, vector<256x128xf32> -> vector<256x128xf32>
    %62 = arith.addf %57, %61 : vector<256x128xf32>
    %63 = vector.broadcast %7 : vector<1x128xf32> to vector<256x128xf32>
    %64 = arith.mulf %62, %63 : vector<256x128xf32>
    %65 = vector.broadcast %8 : vector<1x128xf32> to vector<256x128xf32>
    %66 = arith.addf %64, %65 : vector<256x128xf32>
    %cst_52 = arith.constant 0.000000e+00 : f32
    %67 = vector.broadcast %cst_52 : f32 to vector<256x128xf32>
    %68 = arith.maximumf %66, %67 : vector<256x128xf32>
    %69 = vector.shape_cast %68 : vector<256x128xf32> to vector<16x16x128xf32>
    %c0_53 = arith.constant 0 : index
    %c0_54 = arith.constant 0 : index
    %c0_55 = arith.constant 0 : index
    %c0_56 = arith.constant 0 : index
    %70 = vector.load %arg1[%c0_53, %c0_54, %c0_55, %c0_56] : memref<1x16x16x128xf32, #tpu.memory_space<vmem>>, vector<1x16x16x128xf32>
    %71 = vector.shape_cast %70 : vector<1x16x16x128xf32> to vector<16x16x128xf32>
    %72 = arith.addf %71, %69 : vector<16x16x128xf32>
    %73 = arith.truncf %72 : vector<16x16x128xf32> to vector<16x16x128xbf16>
    %c1_57 = arith.constant 1 : index
    %c1_58 = arith.constant 1 : index
    %c0_59 = arith.constant 0 : index
    %74 = vector.load %arg6[%c1_57, %c1_58, %c0_59] : memref<18x18x128xbf16, #tpu.memory_space<vmem>>, vector<16x16x128xbf16>
    tpu.vector_store %arg6[%c1_57, %c1_58, %c0_59], %73 {strides = array<i32>} : memref<18x18x128xbf16, #tpu.memory_space<vmem>>, vector<16x16x128xbf16>,
    %c0_60 = arith.constant 0 : index
    %c0_61 = arith.constant 0 : index
    %c0_62 = arith.constant 0 : index
    %75 = vector.load %arg6[%c0_60, %c0_61, %c0_62] : memref<18x18x128xbf16, #tpu.memory_space<vmem>>, vector<18x18x128xbf16>
    %76 = vector.extract_strided_slice %75 {offsets = [0, 0, 0], sizes = [18, 16, 128], strides = [1, 1, 1]} : vector<18x18x128xbf16> to vector<18x16x128xbf16>
    %77 = vector.extract_strided_slice %75 {offsets = [0, 1, 0], sizes = [18, 16, 128], strides = [1, 1, 1]} : vector<18x18x128xbf16> to vector<18x16x128xbf16>
    %78 = vector.extract_strided_slice %75 {offsets = [0, 2, 0], sizes = [18, 16, 128], strides = [1, 1, 1]} : vector<18x18x128xbf16> to vector<18x16x128xbf16>
    %79 = tpu.concatenate %76, %77, %78 in 2 : vector<18x16x128xbf16>, vector<18x16x128xbf16>, vector<18x16x128xbf16> -> vector<18x16x384xbf16>
    %80 = vector.extract_strided_slice %79 {offsets = [0, 0, 0], sizes = [16, 16, 384], strides = [1, 1, 1]} : vector<18x16x384xbf16> to vector<16x16x384xbf16>
    %81 = vector.shape_cast %80 : vector<16x16x384xbf16> to vector<256x384xbf16>
    %c0_63 = arith.constant 0 : index
    %c0_64 = arith.constant 0 : index
    %82 = vector.load %arg2[%c0_63, %c0_64] : memref<1152x128xbf16, #tpu.memory_space<vmem>>, vector<384x128xbf16>
    %cst_65 = arith.constant dense<0.000000e+00> : vector<256x128xf32>
    %83 = tpu.matmul %81, %82, %cst_65 {dimension_numbers = #tpu.dot_dimension_numbers<[1], [0], [0], [1], [0, 0, 1, 1], [], []>} : vector<256x384xbf16>, vector<384x128xbf16>, vector<256x128xf32> -> vector<256x128xf32>
    %84 = vector.extract_strided_slice %79 {offsets = [1, 0, 0], sizes = [16, 16, 384], strides = [1, 1, 1]} : vector<18x16x384xbf16> to vector<16x16x384xbf16>
    %85 = vector.shape_cast %84 : vector<16x16x384xbf16> to vector<256x384xbf16>
    %c384_66 = arith.constant 384 : index
    %c0_67 = arith.constant 0 : index
    %86 = vector.load %arg2[%c384_66, %c0_67] : memref<1152x128xbf16, #tpu.memory_space<vmem>>, vector<384x128xbf16>
    %cst_68 = arith.constant dense<0.000000e+00> : vector<256x128xf32>
    %87 = tpu.matmul %85, %86, %cst_68 {dimension_numbers = #tpu.dot_dimension_numbers<[1], [0], [0], [1], [0, 0, 1, 1], [], []>} : vector<256x384xbf16>, vector<384x128xbf16>, vector<256x128xf32> -> vector<256x128xf32>
    %88 = arith.addf %83, %87 : vector<256x128xf32>
    %89 = vector.extract_strided_slice %79 {offsets = [2, 0, 0], sizes = [16, 16, 384], strides = [1, 1, 1]} : vector<18x16x384xbf16> to vector<16x16x384xbf16>
    %90 = vector.shape_cast %89 : vector<16x16x384xbf16> to vector<256x384xbf16>
    %c768_69 = arith.constant 768 : index
    %c0_70 = arith.constant 0 : index
    %91 = vector.load %arg2[%c768_69, %c0_70] : memref<1152x128xbf16, #tpu.memory_space<vmem>>, vector<384x128xbf16>
    %cst_71 = arith.constant dense<0.000000e+00> : vector<256x128xf32>
    %92 = tpu.matmul %90, %91, %cst_71 {dimension_numbers = #tpu.dot_dimension_numbers<[1], [0], [0], [1], [0, 0, 1, 1], [], []>} : vector<256x384xbf16>, vector<384x128xbf16>, vector<256x128xf32> -> vector<256x128xf32>
    %93 = arith.addf %88, %92 : vector<256x128xf32>
    %94 = vector.broadcast %7 : vector<1x128xf32> to vector<256x128xf32>
    %95 = arith.mulf %93, %94 : vector<256x128xf32>
    %96 = vector.broadcast %8 : vector<1x128xf32> to vector<256x128xf32>
    %97 = arith.addf %95, %96 : vector<256x128xf32>
    %cst_72 = arith.constant 0.000000e+00 : f32
    %98 = vector.broadcast %cst_72 : f32 to vector<256x128xf32>
    %99 = arith.maximumf %97, %98 : vector<256x128xf32>
    %100 = vector.shape_cast %99 : vector<256x128xf32> to vector<16x16x128xf32>
    %c0_73 = arith.constant 0 : index
    %c0_74 = arith.constant 0 : index
    %c0_75 = arith.constant 0 : index
    %c0_76 = arith.constant 0 : index
    %101 = vector.load %arg5[%c0_73, %c0_74, %c0_75, %c0_76] : memref<1x16x16x128xf32, #tpu.memory_space<vmem>>, vector<1x16x16x128xf32>
    %102 = vector.shape_cast %101 : vector<1x16x16x128xf32> to vector<16x16x128xf32>
    %103 = vector.shape_cast %100 : vector<16x16x128xf32> to vector<1x16x16x128xf32>
    tpu.vector_store %arg5[%c0_73, %c0_74, %c0_75, %c0_76], %103 {strides = array<i32>} : memref<1x16x16x128xf32, #tpu.memory_space<vmem>>, vector<1x16x16x128xf32>,
    return
  }
  func.func @transform_0(%arg0: i32) -> (i32, i32, i32, i32) {
    %c0_i32 = arith.constant 0 : i32
    %c0_i32_0 = arith.constant 0 : i32
    %c0_i32_1 = arith.constant 0 : i32
    %c0_i32_2 = arith.constant 0 : i32
    return %arg0, %c0_i32, %c0_i32_0, %c0_i32_1 : i32, i32, i32, i32
  }
  func.func @transform_1(%arg0: i32) -> (i32, i32) {
    %c0_i32 = arith.constant 0 : i32
    %c0_i32_0 = arith.constant 0 : i32
    %c0_i32_1 = arith.constant 0 : i32
    return %c0_i32, %c0_i32_0 : i32, i32
  }
  func.func @transform_2(%arg0: i32) -> (i32, i32) {
    %c0_i32 = arith.constant 0 : i32
    %c0_i32_0 = arith.constant 0 : i32
    %c0_i32_1 = arith.constant 0 : i32
    return %c0_i32, %c0_i32_0 : i32, i32
  }
  func.func @transform_3(%arg0: i32) -> (i32, i32) {
    %c0_i32 = arith.constant 0 : i32
    %c0_i32_0 = arith.constant 0 : i32
    %c0_i32_1 = arith.constant 0 : i32
    return %c0_i32, %c0_i32_0 : i32, i32
  }
  func.func @transform_4(%arg0: i32) -> (i32, i32, i32, i32) {
    %c0_i32 = arith.constant 0 : i32
    %c0_i32_0 = arith.constant 0 : i32
    %c0_i32_1 = arith.constant 0 : i32
    %c0_i32_2 = arith.constant 0 : i32
    return %arg0, %c0_i32, %c0_i32_0, %c0_i32_1 : i32, i32, i32, i32
  }
}

</mosaic_0001>

<llo_original>
// kernel: tpu_custom_call.1
$region0: #{tpu_custom_call.1}
  #allocation0 [shape = 'u32[]', space=smem, size = 0x4, offset = 0x4, fixed_abs, tag = 'smem constant byte address 0x4 - core index']
  #allocation1 [shape = 'u32[144,128]{1,0:T(1,128)}', space=vmem, size = 0x12000, scoped, tag = 'internal scratch']
  #allocation2 [shape = 'bf16[18,18,128]{2,1,0:T(8,128)(2,1)}', space=vmem, size = 0x1b000, scoped, tag = 'scratch operand']
  %s0 = inlined_call_operand.hbm [shape: f32[2,16,16,128], index: 0, kind: input, shape index: {}]
  %s1 = inlined_call_operand.hbm [shape: bf16[1152,128], index: 1, kind: input, shape index: {}]
  %s2 = inlined_call_operand.vmem [shape: f32[1,128], index: 2, kind: input, shape index: {}]
  %s3 = inlined_call_operand.vmem [shape: f32[1,128], index: 3, kind: input, shape index: {}]
  %s4 = inlined_call_operand.hbm [shape: f32[2,16,16,128], index: 4, kind: output, shape index: {}]
  %s5 = sld [smem:[#allocation0]]
  $region57: #{tpu_custom_call.1} parent=0
    _
  %s7 = ssub.s32 1, %s5
  %s8 = scalar_select 0, %s7, %s5
  $region1: #{tpu_custom_call.1} parent=0
    #allocation3 [shape = 'u8[262144]{0}', space=vmem, size = 0x40000, scoped, tag = 'input window, operand 0']
    #allocation4 [shape = 's32[2]{0}', space=sflag, size = 0x8, scoped, tag = 'scoped memory for tpu_custom_call.1']
    #allocation5 [shape = 's32[2]{0}', space=sflag, size = 0x8, scoped, tag = 'scoped memory for tpu_custom_call.1']
    #allocation6 [shape = 'u8[294912]{0}', space=vmem, size = 0x48000, scoped, tag = 'input window, operand 1, single buffered']
    #allocation7 [shape = 's32[1]{0}', space=sflag, size = 0x4, scoped, tag = 'scoped memory for tpu_custom_call.1']
    #allocation8 [shape = 'u8[262144]{0}', space=vmem, size = 0x40000, scoped, tag = 'output window, operand 0']
    %9 = vsyncpa [#allocation4], 0
    %s10 = scalar_lea.sflag [#allocation4], 1
    %11 = vsyncpa %s10, 0
    %12 = vsyncpa [#allocation7], 0
    %13 = vsyncpa [#allocation5], 0
    %s14 = scalar_lea.sflag [#allocation5], 1
    %15 = vsyncpa %s14, 0
    loop: start=0, step=1, limit=4
    $region2: #{tpu_custom_call.1} parent=1 // loop_pre_header
      _
    $region3: #{tpu_custom_call.1} parent=1 // loop_header
      %s17 = sphi 0, %s21
      %p18 = scmp.ge.s32.totalorder %s17, 4
      %s27 = sphi 0, %s29
      %s30 = sphi 0, %s27
      %s31 = sphi 0, %s30
      %s47 = sphi 0, %s31
      %s51 = sphi 0, %s51
      %s53 = sphi 0, %s51
      %s54 = sphi 0, %s53
      %s68 = sphi 0, %s54
      %s72 = sphi 0, %s72
      %s74 = sphi 0, %s72
      %s75 = sphi 0, %s74
      %s89 = sphi 0, %s75
      %s93 = sphi 0, %s93
      %s95 = sphi 0, %s93
      %s96 = sphi 0, %s95
      %s110 = sphi 0, %s96
      %s116 = sphi 0, %s118
      %s119 = sphi 0, %s116
      %s120 = sphi 0, %s119
      %s136 = sphi 0, %s120
    $region4: #{tpu_custom_call.1} parent=1 // loop_header_branch
      %20 = sbr.rel (%p18) target = $region8
    $region5: #{tpu_custom_call.1} parent=1 // loop_body
      %s22 = ssub.s32 %s17, 1
      %s23 = ssub.s32 %s17, 2
      %s24 = sadd.s32 %s17, 1
      %s25 = ssub.s32 %s17, %s24
      %p26 = scmp.eq.s32.totalorder %s25, 0
      %s28 = sadd.s32 %s27, 1
      %s29 = scalar_select %p26, %s27, %s28
      %p32 = pneg %p26
      %p33 = scmp.eq.s32.totalorder %s17, 1
      %p34 = por %p32, %p33
      %p35 = scmp.ne.s32.totalorder %s27, %s30
      %p36 = scmp.eq.s32.totalorder %s17, 0
      %p37 = por %p35, %p36
      %p38 = scmp.ne.s32.totalorder %s27, %s30
      %p39 = scmp.eq.s32.totalorder %s22, 1
      %p40 = por %p38, %p39
      %p41 = scmp.ne.s32.totalorder %s30, %s31
      %p42 = scmp.eq.s32.totalorder %s22, 0
      %p43 = por %p41, %p42
      %p44 = scmp.ne.s32.totalorder %s30, %s31
      %p45 = scmp.eq.s32.totalorder %s23, 1
      %p46 = por %p44, %p45
      %p48 = scmp.ne.s32.totalorder %s31, %s47
      %p49 = scmp.eq.s32.totalorder %s23, 0
      %p50 = por %p48, %p49
      %s52 = sadd.s32 %s51, 1
      %p55 = scmp.eq.s32.totalorder %s17, 1
      %p56 = scmp.ne.s32.totalorder %s51, %s53
      %p57 = scmp.eq.s32.totalorder %s17, 0
      %p58 = por %p56, %p57
      %p59 = scmp.ne.s32.totalorder %s51, %s53
      %p60 = scmp.eq.s32.totalorder %s22, 1
      %p61 = por %p59, %p60
      %p62 = scmp.ne.s32.totalorder %s53, %s54
      %p63 = scmp.eq.s32.totalorder %s22, 0
      %p64 = por %p62, %p63
      %p65 = scmp.ne.s32.totalorder %s53, %s54
      %p66 = scmp.eq.s32.totalorder %s23, 1
      %p67 = por %p65, %p66
      %p69 = scmp.ne.s32.totalorder %s54, %s68
      %p70 = scmp.eq.s32.totalorder %s23, 0
      %p71 = por %p69, %p70
      %s73 = sadd.s32 %s72, 1
      %p76 = scmp.eq.s32.totalorder %s17, 1
      %p77 = scmp.ne.s32.totalorder %s72, %s74
      %p78 = scmp.eq.s32.totalorder %s17, 0
      %p79 = por %p77, %p78
      %p80 = scmp.ne.s32.totalorder %s72, %s74
      %p81 = scmp.eq.s32.totalorder %s22, 1
      %p82 = por %p80, %p81
      %p83 = scmp.ne.s32.totalorder %s74, %s75
      %p84 = scmp.eq.s32.totalorder %s22, 0
      %p85 = por %p83, %p84
      %p86 = scmp.ne.s32.totalorder %s74, %s75
      %p87 = scmp.eq.s32.totalorder %s23, 1
      %p88 = por %p86, %p87
      %p90 = scmp.ne.s32.totalorder %s75, %s89
      %p91 = scmp.eq.s32.totalorder %s23, 0
      %p92 = por %p90, %p91
      %s94 = sadd.s32 %s93, 1
      %p97 = scmp.eq.s32.totalorder %s17, 1
      %p98 = scmp.ne.s32.totalorder %s93, %s95
      %p99 = scmp.eq.s32.totalorder %s17, 0
      %p100 = por %p98, %p99
      %p101 = scmp.ne.s32.totalorder %s93, %s95
      %p102 = scmp.eq.s32.totalorder %s22, 1
      %p103 = por %p101, %p102
      %p104 = scmp.ne.s32.totalorder %s95, %s96
      %p105 = scmp.eq.s32.totalorder %s22, 0
      %p106 = por %p104, %p105
      %p107 = scmp.ne.s32.totalorder %s95, %s96
      %p108 = scmp.eq.s32.totalorder %s23, 1
      %p109 = por %p107, %p108
      %p111 = scmp.ne.s32.totalorder %s96, %s110
      %p112 = scmp.eq.s32.totalorder %s23, 0
      %p113 = por %p111, %p112
      %s114 = ssub.s32 %s17, %s24
      %p115 = scmp.eq.s32.totalorder %s114, 0
      %s117 = sadd.s32 %s116, 1
      %s118 = scalar_select %p115, %s116, %s117
      %p121 = pneg %p115
      %p122 = scmp.eq.s32.totalorder %s17, 1
      %p123 = por %p121, %p122
      %p124 = scmp.ne.s32.totalorder %s116, %s119
      %p125 = scmp.eq.s32.totalorder %s17, 0
      %p126 = por %p124, %p125
      %p127 = scmp.ne.s32.totalorder %s116, %s119
      %p128 = scmp.eq.s32.totalorder %s22, 1
      %p129 = por %p127, %p128
      %p130 = scmp.ne.s32.totalorder %s119, %s120
      %p131 = scmp.eq.s32.totalorder %s22, 0
      %p132 = por %p130, %p131
      %p133 = scmp.ne.s32.totalorder %s119, %s120
      %p134 = scmp.eq.s32.totalorder %s23, 1
      %p135 = por %p133, %p134
      %p137 = scmp.ne.s32.totalorder %s120, %s136
      %p138 = scmp.eq.s32.totalorder %s23, 0
      %p139 = por %p137, %p138
      %p140 = scmp.le.s32.totalorder 1, %s17
      %p141 = scmp.lt.s32.totalorder %s17, 3
      %p142 = pnand %p140, %p141
      %p143 = pneg %p142
      // Predicated region
      $region9: #{tpu_custom_call.1} parent=5 // pred_check
        _
      $region10: #{tpu_custom_call.1} parent=5 // pred_check_branch
        %145 = sbr.rel (%p142) target = $region12
      $region11: #{tpu_custom_call.1} parent=5 // pred_region
        %s146 = ssub.s32 %s17, 1
        // Predicated region
        $region13: #{tpu_custom_call.1} parent=11 // pred_check
          %p147 = pneg %p64
        $region14: #{tpu_custom_call.1} parent=11 // pred_check_branch
          %149 = sbr.rel (%p147) target = $region16
        $region15: #{tpu_custom_call.1} parent=11 // pred_region
          %s151 = ssub.s32 9216, 9216
          %152 = vsyncadd [#allocation7], %s151
          %s153 = sshll.u32 [#allocation6], 4
          %s154 = int_to_ptr.vmem [resolvable:$true] %s153
          %159 = dma.hbm_to_vmem [thread:$0]  %s1, 9216, %s154, [#allocation7], 64, 64, 4
        $region16: #{tpu_custom_call.1} parent=11 // pred_fallthru
          _
        // Predicated region
        $region17: #{tpu_custom_call.1} parent=11 // pred_check
          %p160 = pneg %p85
        $region18: #{tpu_custom_call.1} parent=11 // pred_check_branch
          %162 = sbr.rel (%p160) target = $region20
        $region19: #{tpu_custom_call.1} parent=11 // pred_region
          _
        $region20: #{tpu_custom_call.1} parent=11 // pred_fallthru
          _
        // Predicated region
        $region21: #{tpu_custom_call.1} parent=11 // pred_check
          %p163 = pneg %p106
        $region22: #{tpu_custom_call.1} parent=11 // pred_check_branch
          %165 = sbr.rel (%p163) target = $region24
        $region23: #{tpu_custom_call.1} parent=11 // pred_region
          _
        $region24: #{tpu_custom_call.1} parent=11 // pred_fallthru
          _
      $region12: #{tpu_custom_call.1} parent=5 // pred_fallthru
        _
      %p166 = scmp.lt.s32.totalorder %s17, 2
      // Predicated region
      $region25: #{tpu_custom_call.1} parent=5 // pred_check
        %p167 = pneg %p166
      $region26: #{tpu_custom_call.1} parent=5 // pred_check_branch
        %169 = sbr.rel (%p167) target = $region28
      $region27: #{tpu_custom_call.1} parent=5 // pred_region
        // Predicated region
        $region29: #{tpu_custom_call.1} parent=27 // pred_check
          %p170 = pneg %p37
        $region30: #{tpu_custom_call.1} parent=27 // pred_check_branch
          %172 = sbr.rel (%p170) target = $region32
        $region31: #{tpu_custom_call.1} parent=27 // pred_region
          %s173 = sand.u32 %s27, 1
          %s174 = scalar_lea.sflag [#allocation4], %s173
          %s175 = sand.u32 %s27, 1
          %s176 = smul.addr %s175, 256
          %s177 = scalar_lea.vmem [#allocation3], %s176
          %s179 = ssub.s32 4096, 4096
          %180 = vsyncadd %s174, %s179
          %s181 = smul.addr %s17, 32
          %s182 = smul.addr %s181, 128
          %s183 = scalar_lea.hbm %s0, %s182
          %s184 = sshll.u32 %s177, 4
          %s185 = int_to_ptr.vmem [resolvable:$true] %s184
          %190 = dma.hbm_to_vmem [thread:$0]  %s183, 4096, %s185, %s174, 128, 128, 8
        $region32: #{tpu_custom_call.1} parent=27 // pred_fallthru
          _
      $region28: #{tpu_custom_call.1} parent=5 // pred_fallthru
        _
      %p191 = scmp.le.s32.totalorder 1, %s17
      %p192 = scmp.lt.s32.totalorder %s17, 3
      %p193 = pnand %p191, %p192
      %p194 = pneg %p193
      // Predicated region
      $region33: #{tpu_custom_call.1} parent=5 // pred_check
        _
      $region34: #{tpu_custom_call.1} parent=5 // pred_check_branch
        %196 = sbr.rel (%p193) target = $region36
      $region35: #{tpu_custom_call.1} parent=5 // pred_region
        %s197 = ssub.s32 %s17, 1
        %s198 = sand.u32 %s30, 1
        %s199 = scalar_lea.sflag [#allocation4], %s198
        %s200 = sand.u32 %s30, 1
        %s201 = smul.addr %s200, 256
        %s202 = scalar_lea.vmem [#allocation3], %s201
        // Predicated region
        $region37: #{tpu_custom_call.1} parent=35 // pred_check
          %p203 = pneg %p43
        $region38: #{tpu_custom_call.1} parent=35 // pred_check_branch
          %205 = sbr.rel (%p203) target = $region40
        $region39: #{tpu_custom_call.1} parent=35 // pred_region
          %206 = dma.done %s199, 4096
        $region40: #{tpu_custom_call.1} parent=35 // pred_fallthru
          _
        // Predicated region
        $region41: #{tpu_custom_call.1} parent=35 // pred_check
          %p207 = pneg %p64
        $region42: #{tpu_custom_call.1} parent=35 // pred_check_branch
          %209 = sbr.rel (%p207) target = $region44
        $region43: #{tpu_custom_call.1} parent=35 // pred_region
          %210 = dma.done [#allocation7], 9216
        $region44: #{tpu_custom_call.1} parent=35 // pred_fallthru
          _
        %s211 = sand.u32 %s30, 1
        %s212 = scalar_lea.sflag [#allocation4], %s211
        %s213 = sand.u32 %s30, 1
        %s214 = smul.addr %s213, 256
        %s215 = scalar_lea.vmem [#allocation3], %s214
        %p216 = pneg %p43
        %p217 = pneg %p40
        %p218 = pneg %p64
        %p219 = pneg %p61
        %p220 = pneg %p85
        %p221 = pneg %p82
        %p222 = pneg %p106
        %p223 = pneg %p103
        %p224 = pneg %p132
        %p225 = pneg %p129
        %s226 = sand.u32 %s119, 1
        %s227 = scalar_lea.sflag [#allocation5], %s226
        %s228 = sand.u32 %s119, 1
        %s229 = smul.addr %s228, 256
        %s230 = scalar_lea.vmem [#allocation8], %s229
        %232 = vst [vmem:[#allocation2] sm:$0xf] 0
        %233 = vst [vmem:[#allocation2 + $0x4] sm:$0xf] 0
        %234 = vst [vmem:[#allocation2 + $0x8] sm:$0x1] 0
        %s235 = scalar_lea.vmem [#allocation2], 204
        %236 = vst [vmem:[%s235] sm:$0xf] 0
        %237 = vst [vmem:[%s235 + $0x4] sm:$0xf] 0
        %238 = vst [vmem:[%s235 + $0x8] sm:$0x1] 0
        %vm239 = vcmask 1040384
        %vm240 = vsmask.f32 256
        %vm241 = vmand %vm239, %vm240
        %v242 = vld [vmem:[#allocation2] sm:$0x1]
        %v243 = vsel %vm241, 0, %v242
        %244 = vst [vmem:[#allocation2] sm:$0x1] %v243
        %v245 = vld [vmem:[#allocation2 + $0xc] sm:$0x1]
        %v246 = vsel %vm241, 0, %v245
        %247 = vst [vmem:[#allocation2 + $0xc] sm:$0x1] %v246
        %v248 = vld [vmem:[#allocation2 + $0x18] sm:$0x1]
        %v249 = vsel %vm241, 0, %v248
        %250 = vst [vmem:[#allocation2 + $0x18] sm:$0x1] %v249
        %v251 = vld [vmem:[#allocation2 + $0x24] sm:$0x1]
        %v252 = vsel %vm241, 0, %v251
        %253 = vst [vmem:[#allocation2 + $0x24] sm:$0x1] %v252
        %v254 = vld [vmem:[#allocation2 + $0x30] sm:$0x1]
        %v255 = vsel %vm241, 0, %v254
        %256 = vst [vmem:[#allocation2 + $0x30] sm:$0x1] %v255
        %v257 = vld [vmem:[#allocation2 + $0x3c] sm:$0x1]
        %v258 = vsel %vm241, 0, %v257
        %259 = vst [vmem:[#allocation2 + $0x3c] sm:$0x1] %v258
        %v260 = vld [vmem:[#allocation2 + $0x48] sm:$0x1]
        %v261 = vsel %vm241, 0, %v260
        %262 = vst [vmem:[#allocation2 + $0x48] sm:$0x1] %v261
        %v263 = vld [vmem:[#allocation2 + $0x54] sm:$0x1]
        %v264 = vsel %vm241, 0, %v263
        %265 = vst [vmem:[#allocation2 + $0x54] sm:$0x1] %v264
        %v266 = vld [vmem:[#allocation2 + $0x60] sm:$0x1]
        %v267 = vsel %vm241, 0, %v266
        %268 = vst [vmem:[#allocation2 + $0x60] sm:$0x1] %v267
        %v269 = vld [vmem:[#allocation2 + $0x6c] sm:$0x1]
        %v270 = vsel %vm241, 0, %v269
        %271 = vst [vmem:[#allocation2 + $0x6c] sm:$0x1] %v270
        %v272 = vld [vmem:[#allocation2 + $0x78] sm:$0x1]
        %v273 = vsel %vm241, 0, %v272
        %274 = vst [vmem:[#allocation2 + $0x78] sm:$0x1] %v273
        %v275 = vld [vmem:[#allocation2 + $0x84] sm:$0x1]
        %v276 = vsel %vm241, 0, %v275
        %277 = vst [vmem:[#allocation2 + $0x84] sm:$0x1] %v276
        %v278 = vld [vmem:[#allocation2 + $0x90] sm:$0x1]
        %v279 = vsel %vm241, 0, %v278
        %280 = vst [vmem:[#allocation2 + $0x90] sm:$0x1] %v279
        %v281 = vld [vmem:[#allocation2 + $0x9c] sm:$0x1]
        %v282 = vsel %vm241, 0, %v281
        %283 = vst [vmem:[#allocation2 + $0x9c] sm:$0x1] %v282
        %v284 = vld [vmem:[#allocation2 + $0xa8] sm:$0x1]
        %v285 = vsel %vm241, 0, %v284
        %286 = vst [vmem:[#allocation2 + $0xa8] sm:$0x1] %v285
        %v287 = vld [vmem:[#allocation2 + $0xb4] sm:$0x1]
        %v288 = vsel %vm241, 0, %v287
        %289 = vst [vmem:[#allocation2 + $0xb4] sm:$0x1] %v288
        %v290 = vld [vmem:[#allocation2 + $0xc0] sm:$0x1]
        %v291 = vsel %vm241, 0, %v290
        %292 = vst [vmem:[#allocation2 + $0xc0] sm:$0x1] %v291
        %v293 = vld [vmem:[#allocation2 + $0xcc] sm:$0x1]
        %v294 = vsel %vm241, 0, %v293
        %295 = vst [vmem:[#allocation2 + $0xcc] sm:$0x1] %v294
        %vm296 = vsmask.f32 7938
        %vm297 = vmand %vm239, %vm296
        %v298 = vld [vmem:[#allocation2 + $0x8] sm:$0x1]
        %v299 = vsel %vm297, 0, %v298
        %300 = vst [vmem:[#allocation2 + $0x8] sm:$0x1] %v299
        %v301 = vld [vmem:[#allocation2 + $0x14] sm:$0x1]
        %v302 = vsel %vm297, 0, %v301
        %303 = vst [vmem:[#allocation2 + $0x14] sm:$0x1] %v302
        %v304 = vld [vmem:[#allocation2 + $0x20] sm:$0x1]
        %v305 = vsel %vm297, 0, %v304
        %306 = vst [vmem:[#allocation2 + $0x20] sm:$0x1] %v305
        %v307 = vld [vmem:[#allocation2 + $0x2c] sm:$0x1]
        %v308 = vsel %vm297, 0, %v307
        %309 = vst [vmem:[#allocation2 + $0x2c] sm:$0x1] %v308
        %v310 = vld [vmem:[#allocation2 + $0x38] sm:$0x1]
        %v311 = vsel %vm297, 0, %v310
        %312 = vst [vmem:[#allocation2 + $0x38] sm:$0x1] %v311
        %v313 = vld [vmem:[#allocation2 + $0x44] sm:$0x1]
        %v314 = vsel %vm297, 0, %v313
        %315 = vst [vmem:[#allocation2 + $0x44] sm:$0x1] %v314
        %v316 = vld [vmem:[#allocation2 + $0x50] sm:$0x1]
        %v317 = vsel %vm297, 0, %v316
        %318 = vst [vmem:[#allocation2 + $0x50] sm:$0x1] %v317
        %v319 = vld [vmem:[#allocation2 + $0x5c] sm:$0x1]
        %v320 = vsel %vm297, 0, %v319
        %321 = vst [vmem:[#allocation2 + $0x5c] sm:$0x1] %v320
        %v322 = vld [vmem:[#allocation2 + $0x68] sm:$0x1]
        %v323 = vsel %vm297, 0, %v322
        %324 = vst [vmem:[#allocation2 + $0x68] sm:$0x1] %v323
        %v325 = vld [vmem:[#allocation2 + $0x74] sm:$0x1]
        %v326 = vsel %vm297, 0, %v325
        %327 = vst [vmem:[#allocation2 + $0x74] sm:$0x1] %v326
        %v328 = vld [vmem:[#allocation2 + $0x80] sm:$0x1]
        %v329 = vsel %vm297, 0, %v328
        %330 = vst [vmem:[#allocation2 + $0x80] sm:$0x1] %v329
        %v331 = vld [vmem:[#allocation2 + $0x8c] sm:$0x1]
        %v332 = vsel %vm297, 0, %v331
        %333 = vst [vmem:[#allocation2 + $0x8c] sm:$0x1] %v332
        %v334 = vld [vmem:[#allocation2 + $0x98] sm:$0x1]
        %v335 = vsel %vm297, 0, %v334
        %336 = vst [vmem:[#allocation2 + $0x98] sm:$0x1] %v335
        %v337 = vld [vmem:[#allocation2 + $0xa4] sm:$0x1]
        %v338 = vsel %vm297, 0, %v337
        %339 = vst [vmem:[#allocation2 + $0xa4] sm:$0x1] %v338
        %v340 = vld [vmem:[#allocation2 + $0xb0] sm:$0x1]
        %v341 = vsel %vm297, 0, %v340
        %342 = vst [vmem:[#allocation2 + $0xb0] sm:$0x1] %v341
        %v343 = vld [vmem:[#allocation2 + $0xbc] sm:$0x1]
        %v344 = vsel %vm297, 0, %v343
        %345 = vst [vmem:[#allocation2 + $0xbc] sm:$0x1] %v344
        %v346 = vld [vmem:[#allocation2 + $0xc8] sm:$0x1]
        %v347 = vsel %vm297, 0, %v346
        %348 = vst [vmem:[#allocation2 + $0xc8] sm:$0x1] %v347
        %v349 = vld [vmem:[#allocation2 + $0xd4] sm:$0x1]
        %v350 = vsel %vm297, 0, %v349
        %351 = vst [vmem:[#allocation2 + $0xd4] sm:$0x1] %v350
        %v352 = vld [vmem:[%s2] sm:$0x1]
        %v353 = vld [vmem:[%s3] sm:$0x1]
        %v354 = vld [vmem:[%s202] sm:$0xff]
        %v355 = vld [vmem:[%s202 + $0x8] sm:$0xff]
        %v356 = vld [vmem:[%s202 + $0x10] sm:$0xff]
        %v357 = vld [vmem:[%s202 + $0x18] sm:$0xff]
        %v358 = vld [vmem:[%s202 + $0x20] sm:$0xff]
        %v359 = vld [vmem:[%s202 + $0x28] sm:$0xff]
        %v360 = vld [vmem:[%s202 + $0x30] sm:$0xff]
        %v361 = vld [vmem:[%s202 + $0x38] sm:$0xff]
        %v362 = vld [vmem:[%s202 + $0x40] sm:$0xff]
        %v363 = vld [vmem:[%s202 + $0x48] sm:$0xff]
        %v364 = vld [vmem:[%s202 + $0x50] sm:$0xff]
        %v365 = vld [vmem:[%s202 + $0x58] sm:$0xff]
        %v366 = vld [vmem:[%s202 + $0x60] sm:$0xff]
        %v367 = vld [vmem:[%s202 + $0x68] sm:$0xff]
        %v368 = vld [vmem:[%s202 + $0x70] sm:$0xff]
        %v369 = vld [vmem:[%s202 + $0x78] sm:$0xff]
        %v370 = vld [vmem:[%s202 + $0x80] sm:$0xff]
        %v371 = vld [vmem:[%s202 + $0x88] sm:$0xff]
        %v372 = vld [vmem:[%s202 + $0x90] sm:$0xff]
        %v373 = vld [vmem:[%s202 + $0x98] sm:$0xff]
        %v374 = vld [vmem:[%s202 + $0xa0] sm:$0xff]
        %v375 = vld [vmem:[%s202 + $0xa8] sm:$0xff]
        %v376 = vld [vmem:[%s202 + $0xb0] sm:$0xff]
        %v377 = vld [vmem:[%s202 + $0xb8] sm:$0xff]
        %v378 = vld [vmem:[%s202 + $0xc0] sm:$0xff]
        %v379 = vld [vmem:[%s202 + $0xc8] sm:$0xff]
        %v380 = vld [vmem:[%s202 + $0xd0] sm:$0xff]
        %v381 = vld [vmem:[%s202 + $0xd8] sm:$0xff]
        %v382 = vld [vmem:[%s202 + $0xe0] sm:$0xff]
        %v383 = vld [vmem:[%s202 + $0xe8] sm:$0xff]
        %v384 = vld [vmem:[%s202 + $0xf0] sm:$0xff]
        %v385 = vld [vmem:[%s202 + $0xf8] sm:$0xff]
        %v386 = vpack.c.bf16 %v355, %v354
        %v387 = vpack.c.bf16 %v357, %v356
        %v388 = vpack.c.bf16 %v359, %v358
        %v389 = vpack.c.bf16 %v361, %v360
        %v390 = vpack.c.bf16 %v363, %v362
        %v391 = vpack.c.bf16 %v365, %v364
        %v392 = vpack.c.bf16 %v367, %v366
        %v393 = vpack.c.bf16 %v369, %v368
        %v394 = vpack.c.bf16 %v371, %v370
        %v395 = vpack.c.bf16 %v373, %v372
        %v396 = vpack.c.bf16 %v375, %v374
        %v397 = vpack.c.bf16 %v377, %v376
        %v398 = vpack.c.bf16 %v379, %v378
        %v399 = vpack.c.bf16 %v381, %v380
        %v400 = vpack.c.bf16 %v383, %v382
        %v401 = vpack.c.bf16 %v385, %v384
        %v418 = vunpack.c.l.b16 %v386
        %v419 = vunpack.c.h.b16 %v386
        %v420 = vunpack.c.l.b16 %v387
        %v421 = vunpack.c.h.b16 %v387
        %v422 = vunpack.c.l.b16 %v388
        %v423 = vunpack.c.h.b16 %v388
        %v424 = vunpack.c.l.b16 %v389
        %v425 = vunpack.c.h.b16 %v389
        %v426 = vunpack.c.l.b16 %v390
        %v427 = vunpack.c.h.b16 %v390
        %v428 = vunpack.c.l.b16 %v391
        %v429 = vunpack.c.h.b16 %v391
        %v430 = vunpack.c.l.b16 %v392
        %v431 = vunpack.c.h.b16 %v392
        %v432 = vunpack.c.l.b16 %v393
        %v433 = vunpack.c.h.b16 %v393
        %v434 = vunpack.c.l.b16 %v394
        %v435 = vunpack.c.h.b16 %v394
        %v436 = vunpack.c.l.b16 %v395
        %v437 = vunpack.c.h.b16 %v395
        %v438 = vunpack.c.l.b16 %v396
        %v439 = vunpack.c.h.b16 %v396
        %v440 = vunpack.c.l.b16 %v397
        %v441 = vunpack.c.h.b16 %v397
        %v442 = vunpack.c.l.b16 %v398
        %v443 = vunpack.c.h.b16 %v398
        %v444 = vunpack.c.l.b16 %v399
        %v445 = vunpack.c.h.b16 %v399
        %v446 = vunpack.c.l.b16 %v400
        %v447 = vunpack.c.h.b16 %v400
        %v448 = vunpack.c.l.b16 %v401
        %v449 = vunpack.c.h.b16 %v401
        %v450 = vpack.c.b16 %v418, %v418
        %v451 = vpack.c.b16 %v419, %v419
        %v452 = vpack.c.b16 %v420, %v420
        %v453 = vpack.c.b16 %v421, %v421
        %v454 = vpack.c.b16 %v422, %v422
        %v455 = vpack.c.b16 %v423, %v423
        %v456 = vpack.c.b16 %v424, %v424
        %v457 = vpack.c.b16 %v425, %v425
        %v458 = vpack.c.b16 %v426, %v426
        %v459 = vpack.c.b16 %v427, %v427
        %v460 = vpack.c.b16 %v428, %v428
        %v461 = vpack.c.b16 %v429, %v429
        %v462 = vpack.c.b16 %v430, %v430
        %v463 = vpack.c.b16 %v431, %v431
        %v464 = vpack.c.b16 %v432, %v432
        %v465 = vpack.c.b16 %v433, %v433
        %v466 = vpack.c.b16 %v434, %v434
        %v467 = vpack.c.b16 %v435, %v435
        %v468 = vpack.c.b16 %v436, %v436
        %v469 = vpack.c.b16 %v437, %v437
        %v470 = vpack.c.b16 %v438, %v438
        %v471 = vpack.c.b16 %v439, %v439
        %v472 = vpack.c.b16 %v440, %v440
        %v473 = vpack.c.b16 %v441, %v441
        %v474 = vpack.c.b16 %v442, %v442
        %v475 = vpack.c.b16 %v443, %v443
        %v476 = vpack.c.b16 %v444, %v444
        %v477 = vpack.c.b16 %v445, %v445
        %v478 = vpack.c.b16 %v446, %v446
        %v479 = vpack.c.b16 %v447, %v447
        %v480 = vpack.c.b16 %v448, %v448
        %v481 = vpack.c.b16 %v449, %v449
        %vm482 = vsmask.f32 4368
        %vm483 = vmor %vm240, %vm482
        %v485 = vshrl.u32 %v450, 16
        %v487 = vrot.slane %v485, 7
        %v488 = vshll.u32 %v450, 16
        %v490 = vor.u32 %v487, %v488
        %v491 = vrot.slane %v487, 4
        %v493 = vshrl.u32 %v451, 16
        %v495 = vrot.slane %v493, 7
        %v496 = vshll.u32 %v451, 16
        %v498 = vor.u32 %v495, %v496
        %v499 = vsel %vm483, %v491, %v498
        %v500 = vrot.slane %v495, 4
        %v502 = vshrl.u32 %v452, 16
        %v504 = vrot.slane %v502, 7
        %v505 = vshll.u32 %v452, 16
        %v507 = vor.u32 %v504, %v505
        %v508 = vrot.slane %v504, 4
        %v510 = vshrl.u32 %v453, 16
        %v512 = vrot.slane %v510, 7
        %v513 = vshll.u32 %v453, 16
        %v515 = vor.u32 %v512, %v513
        %v516 = vsel %vm483, %v508, %v515
        %v517 = vrot.slane %v512, 4
        %v519 = vshrl.u32 %v454, 16
        %v521 = vrot.slane %v519, 7
        %v522 = vshll.u32 %v454, 16
        %v524 = vor.u32 %v521, %v522
        %v525 = vrot.slane %v521, 4
        %v527 = vshrl.u32 %v455, 16
        %v529 = vrot.slane %v527, 7
        %v530 = vshll.u32 %v455, 16
        %v532 = vor.u32 %v529, %v530
        %v533 = vsel %vm483, %v525, %v532
        %v534 = vrot.slane %v529, 4
        %v536 = vshrl.u32 %v456, 16
        %v538 = vrot.slane %v536, 7
        %v539 = vshll.u32 %v456, 16
        %v541 = vor.u32 %v538, %v539
        %v542 = vrot.slane %v538, 4
        %v544 = vshrl.u32 %v457, 16
        %v546 = vrot.slane %v544, 7
        %v547 = vshll.u32 %v457, 16
        %v549 = vor.u32 %v546, %v547
        %v550 = vsel %vm483, %v542, %v549
        %v551 = vrot.slane %v546, 4
        %v553 = vshrl.u32 %v458, 16
        %v555 = vrot.slane %v553, 7
        %v556 = vshll.u32 %v458, 16
        %v558 = vor.u32 %v555, %v556
        %v559 = vrot.slane %v555, 4
        %v561 = vshrl.u32 %v459, 16
        %v563 = vrot.slane %v561, 7
        %v564 = vshll.u32 %v459, 16
        %v566 = vor.u32 %v563, %v564
        %v567 = vsel %vm483, %v559, %v566
        %v568 = vrot.slane %v563, 4
        %v570 = vshrl.u32 %v460, 16
        %v572 = vrot.slane %v570, 7
        %v573 = vshll.u32 %v460, 16
        %v575 = vor.u32 %v572, %v573
        %v576 = vrot.slane %v572, 4
        %v578 = vshrl.u32 %v461, 16
        %v580 = vrot.slane %v578, 7
        %v581 = vshll.u32 %v461, 16
        %v583 = vor.u32 %v580, %v581
        %v584 = vsel %vm483, %v576, %v583
        %v585 = vrot.slane %v580, 4
        %v587 = vshrl.u32 %v462, 16
        %v589 = vrot.slane %v587, 7
        %v590 = vshll.u32 %v462, 16
        %v592 = vor.u32 %v589, %v590
        %v593 = vrot.slane %v589, 4
        %v595 = vshrl.u32 %v463, 16
        %v597 = vrot.slane %v595, 7
        %v598 = vshll.u32 %v463, 16
        %v600 = vor.u32 %v597, %v598
        %v601 = vsel %vm483, %v593, %v600
        %v602 = vrot.slane %v597, 4
        %v604 = vshrl.u32 %v464, 16
        %v606 = vrot.slane %v604, 7
        %v607 = vshll.u32 %v464, 16
        %v609 = vor.u32 %v606, %v607
        %v610 = vrot.slane %v606, 4
        %v612 = vshrl.u32 %v465, 16
        %v614 = vrot.slane %v612, 7
        %v615 = vshll.u32 %v465, 16
        %v617 = vor.u32 %v614, %v615
        %v618 = vsel %vm483, %v610, %v617
        %v619 = vrot.slane %v614, 4
        %v621 = vshrl.u32 %v466, 16
        %v623 = vrot.slane %v621, 7
        %v624 = vshll.u32 %v466, 16
        %v626 = vor.u32 %v623, %v624
        %v627 = vrot.slane %v623, 4
        %v629 = vshrl.u32 %v467, 16
        %v631 = vrot.slane %v629, 7
        %v632 = vshll.u32 %v467, 16
        %v634 = vor.u32 %v631, %v632
        %v635 = vsel %vm483, %v627, %v634
        %v636 = vrot.slane %v631, 4
        %v638 = vshrl.u32 %v468, 16
        %v640 = vrot.slane %v638, 7
        %v641 = vshll.u32 %v468, 16
        %v643 = vor.u32 %v640, %v641
        %v644 = vrot.slane %v640, 4
        %v646 = vshrl.u32 %v469, 16
        %v648 = vrot.slane %v646, 7
        %v649 = vshll.u32 %v469, 16
        %v651 = vor.u32 %v648, %v649
        %v652 = vsel %vm483, %v644, %v651
        %v653 = vrot.slane %v648, 4
        %v655 = vshrl.u32 %v470, 16
        %v657 = vrot.slane %v655, 7
        %v658 = vshll.u32 %v470, 16
        %v660 = vor.u32 %v657, %v658
        %v661 = vrot.slane %v657, 4
        %v663 = vshrl.u32 %v471, 16
        %v665 = vrot.slane %v663, 7
        %v666 = vshll.u32 %v471, 16
        %v668 = vor.u32 %v665, %v666
        %v669 = vsel %vm483, %v661, %v668
        %v670 = vrot.slane %v665, 4
        %v672 = vshrl.u32 %v472, 16
        %v674 = vrot.slane %v672, 7
        %v675 = vshll.u32 %v472, 16
        %v677 = vor.u32 %v674, %v675
        %v678 = vrot.slane %v674, 4
        %v680 = vshrl.u32 %v473, 16
        %v682 = vrot.slane %v680, 7
        %v683 = vshll.u32 %v473, 16
        %v685 = vor.u32 %v682, %v683
        %v686 = vsel %vm483, %v678, %v685
        %v687 = vrot.slane %v682, 4
        %v689 = vshrl.u32 %v474, 16
        %v691 = vrot.slane %v689, 7
        %v692 = vshll.u32 %v474, 16
        %v694 = vor.u32 %v691, %v692
        %v695 = vrot.slane %v691, 4
        %v697 = vshrl.u32 %v475, 16
        %v699 = vrot.slane %v697, 7
        %v700 = vshll.u32 %v475, 16
        %v702 = vor.u32 %v699, %v700
        %v703 = vsel %vm483, %v695, %v702
        %v704 = vrot.slane %v699, 4
        %v706 = vshrl.u32 %v476, 16
        %v708 = vrot.slane %v706, 7
        %v709 = vshll.u32 %v476, 16
        %v711 = vor.u32 %v708, %v709
        %v712 = vrot.slane %v708, 4
        %v714 = vshrl.u32 %v477, 16
        %v716 = vrot.slane %v714, 7
        %v717 = vshll.u32 %v477, 16
        %v719 = vor.u32 %v716, %v717
        %v720 = vsel %vm483, %v712, %v719
        %v721 = vrot.slane %v716, 4
        %v723 = vshrl.u32 %v478, 16
        %v725 = vrot.slane %v723, 7
        %v726 = vshll.u32 %v478, 16
        %v728 = vor.u32 %v725, %v726
        %v729 = vrot.slane %v725, 4
        %v731 = vshrl.u32 %v479, 16
        %v733 = vrot.slane %v731, 7
        %v734 = vshll.u32 %v479, 16
        %v736 = vor.u32 %v733, %v734
        %v737 = vsel %vm483, %v729, %v736
        %v738 = vrot.slane %v733, 4
        %v740 = vshrl.u32 %v480, 16
        %v742 = vrot.slane %v740, 7
        %v743 = vshll.u32 %v480, 16
        %v745 = vor.u32 %v742, %v743
        %v746 = vrot.slane %v742, 4
        %v748 = vshrl.u32 %v481, 16
        %v750 = vrot.slane %v748, 7
        %v751 = vshll.u32 %v481, 16
        %v753 = vor.u32 %v750, %v751
        %v754 = vsel %vm483, %v746, %v753
        %v755 = vrot.slane %v750, 4
        %s804 = scalar_lea.vmem [#allocation2], 12
        %vm805 = vcmask 1043456
        %vm806 = vmand %vm805, %vm296
        %v807 = vld [vmem:[%s804] sm:$0xf]
        %v808 = vsel %vm806, %v490, %v807
        %809 = vst [vmem:[%s804] sm:$0xf] %v808
        %810 = vst [vmem:[%s804 + $0x4] sm:$0xf] %v499
        %v811 = vld [vmem:[%s804 + $0x8] sm:$0x1]
        %v812 = vsel %vm241, %v500, %v811
        %813 = vst [vmem:[%s804 + $0x8] sm:$0x1] %v812
        %v814 = vld [vmem:[%s804 + $0xc] sm:$0xf]
        %v815 = vsel %vm806, %v507, %v814
        %816 = vst [vmem:[%s804 + $0xc] sm:$0xf] %v815
        %817 = vst [vmem:[%s804 + $0x10] sm:$0xf] %v516
        %v818 = vld [vmem:[%s804 + $0x14] sm:$0x1]
        %v819 = vsel %vm241, %v517, %v818
        %820 = vst [vmem:[%s804 + $0x14] sm:$0x1] %v819
        %v821 = vld [vmem:[%s804 + $0x18] sm:$0xf]
        %v822 = vsel %vm806, %v524, %v821
        %823 = vst [vmem:[%s804 + $0x18] sm:$0xf] %v822
        %824 = vst [vmem:[%s804 + $0x1c] sm:$0xf] %v533
        %v825 = vld [vmem:[%s804 + $0x20] sm:$0x1]
        %v826 = vsel %vm241, %v534, %v825
        %827 = vst [vmem:[%s804 + $0x20] sm:$0x1] %v826
        %v828 = vld [vmem:[%s804 + $0x24] sm:$0xf]
        %v829 = vsel %vm806, %v541, %v828
        %830 = vst [vmem:[%s804 + $0x24] sm:$0xf] %v829
        %831 = vst [vmem:[%s804 + $0x28] sm:$0xf] %v550
        %v832 = vld [vmem:[%s804 + $0x2c] sm:$0x1]
        %v833 = vsel %vm241, %v551, %v832
        %834 = vst [vmem:[%s804 + $0x2c] sm:$0x1] %v833
        %v835 = vld [vmem:[%s804 + $0x30] sm:$0xf]
        %v836 = vsel %vm806, %v558, %v835
        %837 = vst [vmem:[%s804 + $0x30] sm:$0xf] %v836
        %838 = vst [vmem:[%s804 + $0x34] sm:$0xf] %v567
        %v839 = vld [vmem:[%s804 + $0x38] sm:$0x1]
        %v840 = vsel %vm241, %v568, %v839
        %841 = vst [vmem:[%s804 + $0x38] sm:$0x1] %v840
        %v842 = vld [vmem:[%s804 + $0x3c] sm:$0xf]
        %v843 = vsel %vm806, %v575, %v842
        %844 = vst [vmem:[%s804 + $0x3c] sm:$0xf] %v843
        %845 = vst [vmem:[%s804 + $0x40] sm:$0xf] %v584
        %v846 = vld [vmem:[%s804 + $0x44] sm:$0x1]
        %v847 = vsel %vm241, %v585, %v846
        %848 = vst [vmem:[%s804 + $0x44] sm:$0x1] %v847
        %v849 = vld [vmem:[%s804 + $0x48] sm:$0xf]
        %v850 = vsel %vm806, %v592, %v849
        %851 = vst [vmem:[%s804 + $0x48] sm:$0xf] %v850
        %852 = vst [vmem:[%s804 + $0x4c] sm:$0xf] %v601
        %v853 = vld [vmem:[%s804 + $0x50] sm:$0x1]
        %v854 = vsel %vm241, %v602, %v853
        %855 = vst [vmem:[%s804 + $0x50] sm:$0x1] %v854
        %v856 = vld [vmem:[%s804 + $0x54] sm:$0xf]
        %v857 = vsel %vm806, %v609, %v856
        %858 = vst [vmem:[%s804 + $0x54] sm:$0xf] %v857
        %859 = vst [vmem:[%s804 + $0x58] sm:$0xf] %v618
        %v860 = vld [vmem:[%s804 + $0x5c] sm:$0x1]
        %v861 = vsel %vm241, %v619, %v860
        %862 = vst [vmem:[%s804 + $0x5c] sm:$0x1] %v861
        %v863 = vld [vmem:[%s804 + $0x60] sm:$0xf]
        %v864 = vsel %vm806, %v626, %v863
        %865 = vst [vmem:[%s804 + $0x60] sm:$0xf] %v864
        %866 = vst [vmem:[%s804 + $0x64] sm:$0xf] %v635
        %v867 = vld [vmem:[%s804 + $0x68] sm:$0x1]
        %v868 = vsel %vm241, %v636, %v867
        %869 = vst [vmem:[%s804 + $0x68] sm:$0x1] %v868
        %v870 = vld [vmem:[%s804 + $0x6c] sm:$0xf]
        %v871 = vsel %vm806, %v643, %v870
        %872 = vst [vmem:[%s804 + $0x6c] sm:$0xf] %v871
        %873 = vst [vmem:[%s804 + $0x70] sm:$0xf] %v652
        %v874 = vld [vmem:[%s804 + $0x74] sm:$0x1]
        %v875 = vsel %vm241, %v653, %v874
        %876 = vst [vmem:[%s804 + $0x74] sm:$0x1] %v875
        %v877 = vld [vmem:[%s804 + $0x78] sm:$0xf]
        %v878 = vsel %vm806, %v660, %v877
        %879 = vst [vmem:[%s804 + $0x78] sm:$0xf] %v878
        %880 = vst [vmem:[%s804 + $0x7c] sm:$0xf] %v669
        %v881 = vld [vmem:[%s804 + $0x80] sm:$0x1]
        %v882 = vsel %vm241, %v670, %v881
        %883 = vst [vmem:[%s804 + $0x80] sm:$0x1] %v882
        %v884 = vld [vmem:[%s804 + $0x84] sm:$0xf]
        %v885 = vsel %vm806, %v677, %v884
        %886 = vst [vmem:[%s804 + $0x84] sm:$0xf] %v885
        %887 = vst [vmem:[%s804 + $0x88] sm:$0xf] %v686
        %v888 = vld [vmem:[%s804 + $0x8c] sm:$0x1]
        %v889 = vsel %vm241, %v687, %v888
        %890 = vst [vmem:[%s804 + $0x8c] sm:$0x1] %v889
        %v891 = vld [vmem:[%s804 + $0x90] sm:$0xf]
        %v892 = vsel %vm806, %v694, %v891
        %893 = vst [vmem:[%s804 + $0x90] sm:$0xf] %v892
        %894 = vst [vmem:[%s804 + $0x94] sm:$0xf] %v703
        %v895 = vld [vmem:[%s804 + $0x98] sm:$0x1]
        %v896 = vsel %vm241, %v704, %v895
        %897 = vst [vmem:[%s804 + $0x98] sm:$0x1] %v896
        %v898 = vld [vmem:[%s804 + $0x9c] sm:$0xf]
        %v899 = vsel %vm806, %v711, %v898
        %900 = vst [vmem:[%s804 + $0x9c] sm:$0xf] %v899
        %901 = vst [vmem:[%s804 + $0xa0] sm:$0xf] %v720
        %v902 = vld [vmem:[%s804 + $0xa4] sm:$0x1]
        %v903 = vsel %vm241, %v721, %v902
        %904 = vst [vmem:[%s804 + $0xa4] sm:$0x1] %v903
        %v905 = vld [vmem:[%s804 + $0xa8] sm:$0xf]
        %v906 = vsel %vm806, %v728, %v905
        %907 = vst [vmem:[%s804 + $0xa8] sm:$0xf] %v906
        %908 = vst [vmem:[%s804 + $0xac] sm:$0xf] %v737
        %v909 = vld [vmem:[%s804 + $0xb0] sm:$0x1]
        %v910 = vsel %vm241, %v738, %v909
        %911 = vst [vmem:[%s804 + $0xb0] sm:$0x1] %v910
        %v912 = vld [vmem:[%s804 + $0xb4] sm:$0xf]
        %v913 = vsel %vm806, %v745, %v912
        %914 = vst [vmem:[%s804 + $0xb4] sm:$0xf] %v913
        %915 = vst [vmem:[%s804 + $0xb8] sm:$0xf] %v754
        %v916 = vld [vmem:[%s804 + $0xbc] sm:$0x1]
        %v917 = vsel %vm241, %v755, %v916
        %918 = vst [vmem:[%s804 + $0xbc] sm:$0x1] %v917
        %v919 = vld [vmem:[#allocation2] sm:$0xf]
        %v920 = vld [vmem:[#allocation2 + $0x4] sm:$0xf]
        %v921 = vld [vmem:[#allocation2 + $0x8] sm:$0x1]
        %v922 = vld [vmem:[#allocation2 + $0xc] sm:$0xf]
        %v923 = vld [vmem:[#allocation2 + $0x10] sm:$0xf]
        %v924 = vld [vmem:[#allocation2 + $0x14] sm:$0x1]
        %v925 = vld [vmem:[#allocation2 + $0x18] sm:$0xf]
        %v926 = vld [vmem:[#allocation2 + $0x1c] sm:$0xf]
        %v927 = vld [vmem:[#allocation2 + $0x20] sm:$0x1]
        %v928 = vld [vmem:[#allocation2 + $0x24] sm:$0xf]
        %v929 = vld [vmem:[#allocation2 + $0x28] sm:$0xf]
        %v930 = vld [vmem:[#allocation2 + $0x2c] sm:$0x1]
        %v931 = vld [vmem:[#allocation2 + $0x30] sm:$0xf]
        %v932 = vld [vmem:[#allocation2 + $0x34] sm:$0xf]
        %v933 = vld [vmem:[#allocation2 + $0x38] sm:$0x1]
        %v934 = vld [vmem:[#allocation2 + $0x3c] sm:$0xf]
        %v935 = vld [vmem:[#allocation2 + $0x40] sm:$0xf]
        %v936 = vld [vmem:[#allocation2 + $0x44] sm:$0x1]
        %v937 = vld [vmem:[#allocation2 + $0x48] sm:$0xf]
        %v938 = vld [vmem:[#allocation2 + $0x4c] sm:$0xf]
        %v939 = vld [vmem:[#allocation2 + $0x50] sm:$0x1]
        %v940 = vld [vmem:[#allocation2 + $0x54] sm:$0xf]
        %v941 = vld [vmem:[#allocation2 + $0x58] sm:$0xf]
        %v942 = vld [vmem:[#allocation2 + $0x5c] sm:$0x1]
        %v943 = vld [vmem:[#allocation2 + $0x60] sm:$0xf]
        %v944 = vld [vmem:[#allocation2 + $0x64] sm:$0xf]
        %v945 = vld [vmem:[#allocation2 + $0x68] sm:$0x1]
        %v946 = vld [vmem:[#allocation2 + $0x6c] sm:$0xf]
        %v947 = vld [vmem:[#allocation2 + $0x70] sm:$0xf]
        %v948 = vld [vmem:[#allocation2 + $0x74] sm:$0x1]
        %v949 = vld [vmem:[#allocation2 + $0x78] sm:$0xf]
        %v950 = vld [vmem:[#allocation2 + $0x7c] sm:$0xf]
        %v951 = vld [vmem:[#allocation2 + $0x80] sm:$0x1]
        %v952 = vld [vmem:[#allocation2 + $0x84] sm:$0xf]
        %v953 = vld [vmem:[#allocation2 + $0x88] sm:$0xf]
        %v954 = vld [vmem:[#allocation2 + $0x8c] sm:$0x1]
        %v955 = vld [vmem:[#allocation2 + $0x90] sm:$0xf]
        %v956 = vld [vmem:[#allocation2 + $0x94] sm:$0xf]
        %v957 = vld [vmem:[#allocation2 + $0x98] sm:$0x1]
        %v958 = vld [vmem:[#allocation2 + $0x9c] sm:$0xf]
        %v959 = vld [vmem:[#allocation2 + $0xa0] sm:$0xf]
        %v960 = vld [vmem:[#allocation2 + $0xa4] sm:$0x1]
        %v961 = vld [vmem:[#allocation2 + $0xa8] sm:$0xf]
        %v962 = vld [vmem:[#allocation2 + $0xac] sm:$0xf]
        %v963 = vld [vmem:[#allocation2 + $0xb0] sm:$0x1]
        %v964 = vld [vmem:[#allocation2 + $0xb4] sm:$0xf]
        %v965 = vld [vmem:[#allocation2 + $0xb8] sm:$0xf]
        %v966 = vld [vmem:[#allocation2 + $0xbc] sm:$0x1]
        %v967 = vld [vmem:[#allocation2 + $0xc0] sm:$0xf]
        %v968 = vld [vmem:[#allocation2 + $0xc4] sm:$0xf]
        %v969 = vld [vmem:[#allocation2 + $0xc8] sm:$0x1]
        %v970 = vld [vmem:[#allocation2 + $0xcc] sm:$0xf]
        %v971 = vld [vmem:[#allocation2 + $0xd0] sm:$0xf]
        %v972 = vld [vmem:[#allocation2 + $0xd4] sm:$0x1]
        %v1009 = vunpack.c.l.b16 %v919
        %v1010 = vunpack.c.l.b16 %v920
        %v1011 = vunpack.c.l.b16 %v922
        %v1012 = vunpack.c.l.b16 %v923
        %v1013 = vunpack.c.l.b16 %v925
        %v1014 = vunpack.c.l.b16 %v926
        %v1015 = vunpack.c.l.b16 %v928
        %v1016 = vunpack.c.l.b16 %v929
        %v1017 = vunpack.c.l.b16 %v931
        %v1018 = vunpack.c.l.b16 %v932
        %v1019 = vunpack.c.l.b16 %v934
        %v1020 = vunpack.c.l.b16 %v935
        %v1021 = vunpack.c.l.b16 %v937
        %v1022 = vunpack.c.l.b16 %v938
        %v1023 = vunpack.c.l.b16 %v940
        %v1024 = vunpack.c.l.b16 %v941
        %v1025 = vunpack.c.l.b16 %v943
        %v1026 = vunpack.c.l.b16 %v944
        %v1027 = vunpack.c.l.b16 %v946
        %v1028 = vunpack.c.l.b16 %v947
        %v1029 = vunpack.c.l.b16 %v949
        %v1030 = vunpack.c.l.b16 %v950
        %v1031 = vunpack.c.l.b16 %v952
        %v1032 = vunpack.c.l.b16 %v953
        %v1033 = vunpack.c.l.b16 %v955
        %v1034 = vunpack.c.l.b16 %v956
        %v1035 = vunpack.c.l.b16 %v958
        %v1036 = vunpack.c.l.b16 %v959
        %v1037 = vunpack.c.l.b16 %v961
        %v1038 = vunpack.c.l.b16 %v962
        %v1039 = vunpack.c.l.b16 %v964
        %v1040 = vunpack.c.l.b16 %v965
        %v1041 = vunpack.c.l.b16 %v967
        %v1042 = vunpack.c.l.b16 %v968
        %v1043 = vunpack.c.l.b16 %v970
        %v1044 = vunpack.c.l.b16 %v971
        %v1045 = vpack.c.b16 %v1010, %v1009
        %v1046 = vpack.c.b16 %v1012, %v1011
        %v1047 = vpack.c.b16 %v1014, %v1013
        %v1048 = vpack.c.b16 %v1016, %v1015
        %v1049 = vpack.c.b16 %v1018, %v1017
        %v1050 = vpack.c.b16 %v1020, %v1019
        %v1051 = vpack.c.b16 %v1022, %v1021
        %v1052 = vpack.c.b16 %v1024, %v1023
        %v1053 = vpack.c.b16 %v1026, %v1025
        %v1054 = vpack.c.b16 %v1028, %v1027
        %v1055 = vpack.c.b16 %v1030, %v1029
        %v1056 = vpack.c.b16 %v1032, %v1031
        %v1057 = vpack.c.b16 %v1034, %v1033
        %v1058 = vpack.c.b16 %v1036, %v1035
        %v1059 = vpack.c.b16 %v1038, %v1037
        %v1060 = vpack.c.b16 %v1040, %v1039
        %v1061 = vpack.c.b16 %v1042, %v1041
        %v1062 = vpack.c.b16 %v1044, %v1043
        %v1099 = vunpack.c.l.b16 %v921
        %v1100 = vunpack.c.l.b16 %v924
        %v1101 = vunpack.c.l.b16 %v927
        %v1102 = vunpack.c.l.b16 %v930
        %v1103 = vunpack.c.l.b16 %v933
        %v1104 = vunpack.c.l.b16 %v936
        %v1105 = vunpack.c.l.b16 %v939
        %v1106 = vunpack.c.l.b16 %v942
        %v1107 = vunpack.c.l.b16 %v945
        %v1108 = vunpack.c.l.b16 %v948
        %v1109 = vunpack.c.l.b16 %v951
        %v1110 = vunpack.c.l.b16 %v954
        %v1111 = vunpack.c.l.b16 %v957
        %v1112 = vunpack.c.l.b16 %v960
        %v1113 = vunpack.c.l.b16 %v963
        %v1114 = vunpack.c.l.b16 %v966
        %v1115 = vunpack.c.l.b16 %v969
        %v1116 = vunpack.c.l.b16 %v972
        %v1117 = vpack.c.b16 %v1099, %v1099
        %v1118 = vpack.c.b16 %v1100, %v1100
        %v1119 = vpack.c.b16 %v1101, %v1101
        %v1120 = vpack.c.b16 %v1102, %v1102
        %v1121 = vpack.c.b16 %v1103, %v1103
        %v1122 = vpack.c.b16 %v1104, %v1104
        %v1123 = vpack.c.b16 %v1105, %v1105
        %v1124 = vpack.c.b16 %v1106, %v1106
        %v1125 = vpack.c.b16 %v1107, %v1107
        %v1126 = vpack.c.b16 %v1108, %v1108
        %v1127 = vpack.c.b16 %v1109, %v1109
        %v1128 = vpack.c.b16 %v1110, %v1110
        %v1129 = vpack.c.b16 %v1111, %v1111
        %v1130 = vpack.c.b16 %v1112, %v1112
        %v1131 = vpack.c.b16 %v1113, %v1113
        %v1132 = vpack.c.b16 %v1114, %v1114
        %v1133 = vpack.c.b16 %v1115, %v1115
        %v1134 = vpack.c.b16 %v1116, %v1116
        %vm1135 = vsmask.f32 7424
        %v1137 = vshrl.u32 %v1045, 16
        %v1139 = vshll.u32 %v1045, 16
        %v1141 = vrot.slane %v1139, 1
        %v1142 = vor.u32 %v1137, %v1141
        %v1144 = vshll.u32 %v1117, 16
        %v1146 = vrot.slane %v1144, 1
        %v1147 = vsel %vm1135, %v1142, %v1146
        %v1149 = vshrl.u32 %v1046, 16
        %v1151 = vshll.u32 %v1046, 16
        %v1153 = vrot.slane %v1151, 1
        %v1154 = vor.u32 %v1149, %v1153
        %v1156 = vshll.u32 %v1118, 16
        %v1158 = vrot.slane %v1156, 1
        %v1159 = vsel %vm1135, %v1154, %v1158
        %v1161 = vshrl.u32 %v1047, 16
        %v1163 = vshll.u32 %v1047, 16
        %v1165 = vrot.slane %v1163, 1
        %v1166 = vor.u32 %v1161, %v1165
        %v1168 = vshll.u32 %v1119, 16
        %v1170 = vrot.slane %v1168, 1
        %v1171 = vsel %vm1135, %v1166, %v1170
        %v1173 = vshrl.u32 %v1048, 16
        %v1175 = vshll.u32 %v1048, 16
        %v1177 = vrot.slane %v1175, 1
        %v1178 = vor.u32 %v1173, %v1177
        %v1180 = vshll.u32 %v1120, 16
        %v1182 = vrot.slane %v1180, 1
        %v1183 = vsel %vm1135, %v1178, %v1182
        %v1185 = vshrl.u32 %v1049, 16
        %v1187 = vshll.u32 %v1049, 16
        %v1189 = vrot.slane %v1187, 1
        %v1190 = vor.u32 %v1185, %v1189
        %v1192 = vshll.u32 %v1121, 16
        %v1194 = vrot.slane %v1192, 1
        %v1195 = vsel %vm1135, %v1190, %v1194
        %v1197 = vshrl.u32 %v1050, 16
        %v1199 = vshll.u32 %v1050, 16
        %v1201 = vrot.slane %v1199, 1
        %v1202 = vor.u32 %v1197, %v1201
        %v1204 = vshll.u32 %v1122, 16
        %v1206 = vrot.slane %v1204, 1
        %v1207 = vsel %vm1135, %v1202, %v1206
        %v1209 = vshrl.u32 %v1051, 16
        %v1211 = vshll.u32 %v1051, 16
        %v1213 = vrot.slane %v1211, 1
        %v1214 = vor.u32 %v1209, %v1213
        %v1216 = vshll.u32 %v1123, 16
        %v1218 = vrot.slane %v1216, 1
        %v1219 = vsel %vm1135, %v1214, %v1218
        %v1221 = vshrl.u32 %v1052, 16
        %v1223 = vshll.u32 %v1052, 16
        %v1225 = vrot.slane %v1223, 1
        %v1226 = vor.u32 %v1221, %v1225
        %v1228 = vshll.u32 %v1124, 16
        %v1230 = vrot.slane %v1228, 1
        %v1231 = vsel %vm1135, %v1226, %v1230
        %v1233 = vshrl.u32 %v1053, 16
        %v1235 = vshll.u32 %v1053, 16
        %v1237 = vrot.slane %v1235, 1
        %v1238 = vor.u32 %v1233, %v1237
        %v1240 = vshll.u32 %v1125, 16
        %v1242 = vrot.slane %v1240, 1
        %v1243 = vsel %vm1135, %v1238, %v1242
        %v1245 = vshrl.u32 %v1054, 16
        %v1247 = vshll.u32 %v1054, 16
        %v1249 = vrot.slane %v1247, 1
        %v1250 = vor.u32 %v1245, %v1249
        %v1252 = vshll.u32 %v1126, 16
        %v1254 = vrot.slane %v1252, 1
        %v1255 = vsel %vm1135, %v1250, %v1254
        %v1257 = vshrl.u32 %v1055, 16
        %v1259 = vshll.u32 %v1055, 16
        %v1261 = vrot.slane %v1259, 1
        %v1262 = vor.u32 %v1257, %v1261
        %v1264 = vshll.u32 %v1127, 16
        %v1266 = vrot.slane %v1264, 1
        %v1267 = vsel %vm1135, %v1262, %v1266
        %v1269 = vshrl.u32 %v1056, 16
        %v1271 = vshll.u32 %v1056, 16
        %v1273 = vrot.slane %v1271, 1
        %v1274 = vor.u32 %v1269, %v1273
        %v1276 = vshll.u32 %v1128, 16
        %v1278 = vrot.slane %v1276, 1
        %v1279 = vsel %vm1135, %v1274, %v1278
        %v1281 = vshrl.u32 %v1057, 16
        %v1283 = vshll.u32 %v1057, 16
        %v1285 = vrot.slane %v1283, 1
        %v1286 = vor.u32 %v1281, %v1285
        %v1288 = vshll.u32 %v1129, 16
        %v1290 = vrot.slane %v1288, 1
        %v1291 = vsel %vm1135, %v1286, %v1290
        %v1293 = vshrl.u32 %v1058, 16
        %v1295 = vshll.u32 %v1058, 16
        %v1297 = vrot.slane %v1295, 1
        %v1298 = vor.u32 %v1293, %v1297
        %v1300 = vshll.u32 %v1130, 16
        %v1302 = vrot.slane %v1300, 1
        %v1303 = vsel %vm1135, %v1298, %v1302
        %v1305 = vshrl.u32 %v1059, 16
        %v1307 = vshll.u32 %v1059, 16
        %v1309 = vrot.slane %v1307, 1
        %v1310 = vor.u32 %v1305, %v1309
        %v1312 = vshll.u32 %v1131, 16
        %v1314 = vrot.slane %v1312, 1
        %v1315 = vsel %vm1135, %v1310, %v1314
        %v1317 = vshrl.u32 %v1060, 16
        %v1319 = vshll.u32 %v1060, 16
        %v1321 = vrot.slane %v1319, 1
        %v1322 = vor.u32 %v1317, %v1321
        %v1324 = vshll.u32 %v1132, 16
        %v1326 = vrot.slane %v1324, 1
        %v1327 = vsel %vm1135, %v1322, %v1326
        %v1329 = vshrl.u32 %v1061, 16
        %v1331 = vshll.u32 %v1061, 16
        %v1333 = vrot.slane %v1331, 1
        %v1334 = vor.u32 %v1329, %v1333
        %v1336 = vshll.u32 %v1133, 16
        %v1338 = vrot.slane %v1336, 1
        %v1339 = vsel %vm1135, %v1334, %v1338
        %v1341 = vshrl.u32 %v1062, 16
        %v1343 = vshll.u32 %v1062, 16
        %v1345 = vrot.slane %v1343, 1
        %v1346 = vor.u32 %v1341, %v1345
        %v1348 = vshll.u32 %v1134, 16
        %v1350 = vrot.slane %v1348, 1
        %v1351 = vsel %vm1135, %v1346, %v1350
        %vm1370 = vcmask 1046528
        %v1371 = vrot.slane %v1045, 1
        %v1372 = vrot.slane %v1117, 1
        %v1373 = vsel %vm1370, %v1371, %v1372
        %v1374 = vrot.slane %v1046, 1
        %v1375 = vrot.slane %v1118, 1
        %v1376 = vsel %vm1370, %v1374, %v1375
        %v1377 = vrot.slane %v1047, 1
        %v1378 = vrot.slane %v1119, 1
        %v1379 = vsel %vm1370, %v1377, %v1378
        %v1380 = vrot.slane %v1048, 1
        %v1381 = vrot.slane %v1120, 1
        %v1382 = vsel %vm1370, %v1380, %v1381
        %v1383 = vrot.slane %v1049, 1
        %v1384 = vrot.slane %v1121, 1
        %v1385 = vsel %vm1370, %v1383, %v1384
        %v1386 = vrot.slane %v1050, 1
        %v1387 = vrot.slane %v1122, 1
        %v1388 = vsel %vm1370, %v1386, %v1387
        %v1389 = vrot.slane %v1051, 1
        %v1390 = vrot.slane %v1123, 1
        %v1391 = vsel %vm1370, %v1389, %v1390
        %v1392 = vrot.slane %v1052, 1
        %v1393 = vrot.slane %v1124, 1
        %v1394 = vsel %vm1370, %v1392, %v1393
        %v1395 = vrot.slane %v1053, 1
        %v1396 = vrot.slane %v1125, 1
        %v1397 = vsel %vm1370, %v1395, %v1396
        %v1398 = vrot.slane %v1054, 1
        %v1399 = vrot.slane %v1126, 1
        %v1400 = vsel %vm1370, %v1398, %v1399
        %v1401 = vrot.slane %v1055, 1
        %v1402 = vrot.slane %v1127, 1
        %v1403 = vsel %vm1370, %v1401, %v1402
        %v1404 = vrot.slane %v1056, 1
        %v1405 = vrot.slane %v1128, 1
        %v1406 = vsel %vm1370, %v1404, %v1405
        %v1407 = vrot.slane %v1057, 1
        %v1408 = vrot.slane %v1129, 1
        %v1409 = vsel %vm1370, %v1407, %v1408
        %v1410 = vrot.slane %v1058, 1
        %v1411 = vrot.slane %v1130, 1
        %v1412 = vsel %vm1370, %v1410, %v1411
        %v1413 = vrot.slane %v1059, 1
        %v1414 = vrot.slane %v1131, 1
        %v1415 = vsel %vm1370, %v1413, %v1414
        %v1416 = vrot.slane %v1060, 1
        %v1417 = vrot.slane %v1132, 1
        %v1418 = vsel %vm1370, %v1416, %v1417
        %v1419 = vrot.slane %v1061, 1
        %v1420 = vrot.slane %v1133, 1
        %v1421 = vsel %vm1370, %v1419, %v1420
        %v1422 = vrot.slane %v1062, 1
        %v1423 = vrot.slane %v1134, 1
        %v1424 = vsel %vm1370, %v1422, %v1423
        %v1443 = vld [vmem:[#allocation6] sm:$0xf]
        %v1444 = vld [vmem:[#allocation6 + $0x4] sm:$0xf]
        %v1445 = vld [vmem:[#allocation6 + $0x8] sm:$0xf]
        %v1446 = vld [vmem:[#allocation6 + $0xc] sm:$0xf]
        %v1447 = vld [vmem:[#allocation6 + $0x10] sm:$0xf]
        %v1448 = vld [vmem:[#allocation6 + $0x14] sm:$0xf]
        %v1449 = vld [vmem:[#allocation6 + $0x18] sm:$0xf]
        %v1450 = vld [vmem:[#allocation6 + $0x1c] sm:$0xf]
        %v1451 = vld [vmem:[#allocation6 + $0x20] sm:$0xf]
        %v1452 = vld [vmem:[#allocation6 + $0x24] sm:$0xf]
        %v1453 = vld [vmem:[#allocation6 + $0x28] sm:$0xf]
        %v1454 = vld [vmem:[#allocation6 + $0x2c] sm:$0xf]
        %v1455 = vld [vmem:[#allocation6 + $0x30] sm:$0xf]
        %v1456 = vld [vmem:[#allocation6 + $0x34] sm:$0xf]
        %v1457 = vld [vmem:[#allocation6 + $0x38] sm:$0xf]
        %v1458 = vld [vmem:[#allocation6 + $0x3c] sm:$0xf]
        %v1459 = vld [vmem:[#allocation6 + $0x40] sm:$0xf]
        %v1460 = vld [vmem:[#allocation6 + $0x44] sm:$0xf]
        %v1461 = vld [vmem:[#allocation6 + $0x48] sm:$0xf]
        %v1462 = vld [vmem:[#allocation6 + $0x4c] sm:$0xf]
        %v1463 = vld [vmem:[#allocation6 + $0x50] sm:$0xf]
        %v1464 = vld [vmem:[#allocation6 + $0x54] sm:$0xf]
        %v1465 = vld [vmem:[#allocation6 + $0x58] sm:$0xf]
        %v1466 = vld [vmem:[#allocation6 + $0x5c] sm:$0xf]
        %v1467 = vld [vmem:[#allocation6 + $0x60] sm:$0xf]
        %v1468 = vld [vmem:[#allocation6 + $0x64] sm:$0xf]
        %v1469 = vld [vmem:[#allocation6 + $0x68] sm:$0xf]
        %v1470 = vld [vmem:[#allocation6 + $0x6c] sm:$0xf]
        %v1471 = vld [vmem:[#allocation6 + $0x70] sm:$0xf]
        %v1472 = vld [vmem:[#allocation6 + $0x74] sm:$0xf]
        %v1473 = vld [vmem:[#allocation6 + $0x78] sm:$0xf]
        %v1474 = vld [vmem:[#allocation6 + $0x7c] sm:$0xf]
        %v1475 = vld [vmem:[#allocation6 + $0x80] sm:$0xf]
        %v1476 = vld [vmem:[#allocation6 + $0x84] sm:$0xf]
        %v1477 = vld [vmem:[#allocation6 + $0x88] sm:$0xf]
        %v1478 = vld [vmem:[#allocation6 + $0x8c] sm:$0xf]
        %v1479 = vld [vmem:[#allocation6 + $0x90] sm:$0xf]
        %v1480 = vld [vmem:[#allocation6 + $0x94] sm:$0xf]
        %v1481 = vld [vmem:[#allocation6 + $0x98] sm:$0xf]
        %v1482 = vld [vmem:[#allocation6 + $0x9c] sm:$0xf]
        %v1483 = vld [vmem:[#allocation6 + $0xa0] sm:$0xf]
        %v1484 = vld [vmem:[#allocation6 + $0xa4] sm:$0xf]
        %v1485 = vld [vmem:[#allocation6 + $0xa8] sm:$0xf]
        %v1486 = vld [vmem:[#allocation6 + $0xac] sm:$0xf]
        %v1487 = vld [vmem:[#allocation6 + $0xb0] sm:$0xf]
        %v1488 = vld [vmem:[#allocation6 + $0xb4] sm:$0xf]
        %v1489 = vld [vmem:[#allocation6 + $0xb8] sm:$0xf]
        %v1490 = vld [vmem:[#allocation6 + $0xbc] sm:$0xf]
        %v1491 = vld [vmem:[#allocation6 + $0xc0] sm:$0xf]
        %v1492 = vld [vmem:[#allocation6 + $0xc4] sm:$0xf]
        %v1493 = vld [vmem:[#allocation6 + $0xc8] sm:$0xf]
        %v1494 = vld [vmem:[#allocation6 + $0xcc] sm:$0xf]
        %v1495 = vld [vmem:[#allocation6 + $0xd0] sm:$0xf]
        %v1496 = vld [vmem:[#allocation6 + $0xd4] sm:$0xf]
        %v1497 = vld [vmem:[#allocation6 + $0xd8] sm:$0xf]
        %v1498 = vld [vmem:[#allocation6 + $0xdc] sm:$0xf]
        %v1499 = vld [vmem:[#allocation6 + $0xe0] sm:$0xf]
        %v1500 = vld [vmem:[#allocation6 + $0xe4] sm:$0xf]
        %v1501 = vld [vmem:[#allocation6 + $0xe8] sm:$0xf]
        %v1502 = vld [vmem:[#allocation6 + $0xec] sm:$0xf]
        %v1503 = vld [vmem:[#allocation6 + $0xf0] sm:$0xf]
        %v1504 = vld [vmem:[#allocation6 + $0xf4] sm:$0xf]
        %v1505 = vld [vmem:[#allocation6 + $0xf8] sm:$0xf]
        %v1506 = vld [vmem:[#allocation6 + $0xfc] sm:$0xf]
        %v1507 = vld [vmem:[#allocation6 + $0x100] sm:$0xf]
        %v1508 = vld [vmem:[#allocation6 + $0x104] sm:$0xf]
        %v1509 = vld [vmem:[#allocation6 + $0x108] sm:$0xf]
        %v1510 = vld [vmem:[#allocation6 + $0x10c] sm:$0xf]
        %v1511 = vld [vmem:[#allocation6 + $0x110] sm:$0xf]
        %v1512 = vld [vmem:[#allocation6 + $0x114] sm:$0xf]
        %v1513 = vld [vmem:[#allocation6 + $0x118] sm:$0xf]
        %v1514 = vld [vmem:[#allocation6 + $0x11c] sm:$0xf]
        %v1515 = vld [vmem:[#allocation6 + $0x120] sm:$0xf]
        %v1516 = vld [vmem:[#allocation6 + $0x124] sm:$0xf]
        %v1517 = vld [vmem:[#allocation6 + $0x128] sm:$0xf]
        %v1518 = vld [vmem:[#allocation6 + $0x12c] sm:$0xf]
        %v1519 = vld [vmem:[#allocation6 + $0x130] sm:$0xf]
        %v1520 = vld [vmem:[#allocation6 + $0x134] sm:$0xf]
        %v1521 = vld [vmem:[#allocation6 + $0x138] sm:$0xf]
        %v1522 = vld [vmem:[#allocation6 + $0x13c] sm:$0xf]
        %v1523 = vld [vmem:[#allocation6 + $0x140] sm:$0xf]
        %v1524 = vld [vmem:[#allocation6 + $0x144] sm:$0xf]
        %v1525 = vld [vmem:[#allocation6 + $0x148] sm:$0xf]
        %v1526 = vld [vmem:[#allocation6 + $0x14c] sm:$0xf]
        %v1527 = vld [vmem:[#allocation6 + $0x150] sm:$0xf]
        %v1528 = vld [vmem:[#allocation6 + $0x154] sm:$0xf]
        %v1529 = vld [vmem:[#allocation6 + $0x158] sm:$0xf]
        %v1530 = vld [vmem:[#allocation6 + $0x15c] sm:$0xf]
        %v1531 = vld [vmem:[#allocation6 + $0x160] sm:$0xf]
        %v1532 = vld [vmem:[#allocation6 + $0x164] sm:$0xf]
        %v1533 = vld [vmem:[#allocation6 + $0x168] sm:$0xf]
        %v1534 = vld [vmem:[#allocation6 + $0x16c] sm:$0xf]
        %v1535 = vld [vmem:[#allocation6 + $0x170] sm:$0xf]
        %v1536 = vld [vmem:[#allocation6 + $0x174] sm:$0xf]
        %v1537 = vld [vmem:[#allocation6 + $0x178] sm:$0xf]
        %v1538 = vld [vmem:[#allocation6 + $0x17c] sm:$0xf]
        %v1587 = vunpack.c.l.b16 %v1491
        %v1588 = vunpack.c.l.b16 %v1492
        %v1589 = vunpack.c.l.b16 %v1493
        %v1590 = vunpack.c.l.b16 %v1494
        %v1591 = vunpack.c.l.b16 %v1495
        %v1592 = vunpack.c.l.b16 %v1496
        %v1593 = vunpack.c.l.b16 %v1497
        %v1594 = vunpack.c.l.b16 %v1498
        %v1595 = vunpack.c.l.b16 %v1499
        %v1596 = vunpack.c.l.b16 %v1500
        %v1597 = vunpack.c.l.b16 %v1501
        %v1598 = vunpack.c.l.b16 %v1502
        %v1599 = vunpack.c.l.b16 %v1503
        %v1600 = vunpack.c.l.b16 %v1504
        %v1601 = vunpack.c.l.b16 %v1505
        %v1602 = vunpack.c.l.b16 %v1506
        %v1603 = vunpack.c.l.b16 %v1507
        %v1604 = vunpack.c.l.b16 %v1508
        %v1605 = vunpack.c.l.b16 %v1509
        %v1606 = vunpack.c.l.b16 %v1510
        %v1607 = vunpack.c.l.b16 %v1511
        %v1608 = vunpack.c.l.b16 %v1512
        %v1609 = vunpack.c.l.b16 %v1513
        %v1610 = vunpack.c.l.b16 %v1514
        %v1611 = vunpack.c.l.b16 %v1515
        %v1612 = vunpack.c.l.b16 %v1516
        %v1613 = vunpack.c.l.b16 %v1517
        %v1614 = vunpack.c.l.b16 %v1518
        %v1615 = vunpack.c.l.b16 %v1519
        %v1616 = vunpack.c.l.b16 %v1520
        %v1617 = vunpack.c.l.b16 %v1521
        %v1618 = vunpack.c.l.b16 %v1522
        %v1619 = vunpack.c.l.b16 %v1523
        %v1620 = vunpack.c.l.b16 %v1524
        %v1621 = vunpack.c.l.b16 %v1525
        %v1622 = vunpack.c.l.b16 %v1526
        %v1623 = vunpack.c.l.b16 %v1527
        %v1624 = vunpack.c.l.b16 %v1528
        %v1625 = vunpack.c.l.b16 %v1529
        %v1626 = vunpack.c.l.b16 %v1530
        %v1627 = vunpack.c.l.b16 %v1531
        %v1628 = vunpack.c.l.b16 %v1532
        %v1629 = vunpack.c.l.b16 %v1533
        %v1630 = vunpack.c.l.b16 %v1534
        %v1631 = vunpack.c.l.b16 %v1535
        %v1632 = vunpack.c.l.b16 %v1536
        %v1633 = vunpack.c.l.b16 %v1537
        %v1634 = vunpack.c.l.b16 %v1538
        %v1635 = vpack.c.b16 %v1588, %v1587
        %v1636 = vpack.c.b16 %v1590, %v1589
        %v1637 = vpack.c.b16 %v1592, %v1591
        %v1638 = vpack.c.b16 %v1594, %v1593
        %v1639 = vpack.c.b16 %v1596, %v1595
        %v1640 = vpack.c.b16 %v1598, %v1597
        %v1641 = vpack.c.b16 %v1600, %v1599
        %v1642 = vpack.c.b16 %v1602, %v1601
        %v1643 = vpack.c.b16 %v1604, %v1603
        %v1644 = vpack.c.b16 %v1606, %v1605
        %v1645 = vpack.c.b16 %v1608, %v1607
        %v1646 = vpack.c.b16 %v1610, %v1609
        %v1647 = vpack.c.b16 %v1612, %v1611
        %v1648 = vpack.c.b16 %v1614, %v1613
        %v1649 = vpack.c.b16 %v1616, %v1615
        %v1650 = vpack.c.b16 %v1618, %v1617
        %v1651 = vpack.c.b16 %v1620, %v1619
        %v1652 = vpack.c.b16 %v1622, %v1621
        %v1653 = vpack.c.b16 %v1624, %v1623
        %v1654 = vpack.c.b16 %v1626, %v1625
        %v1655 = vpack.c.b16 %v1628, %v1627
        %v1656 = vpack.c.b16 %v1630, %v1629
        %v1657 = vpack.c.b16 %v1632, %v1631
        %v1658 = vpack.c.b16 %v1634, %v1633
        %1683 = vmatprep.subr.bf16.mxu0 0
        %1684 = vmatpush1.bf16.msra.mxu0 %v1642
        %1685 = vmatprep.subr.bf16.mxu0 0
        %1686 = vmatpush1.bf16.msra.mxu0 %v1641
        %1687 = vmatprep.subr.bf16.mxu0 0
        %1688 = vmatpush1.bf16.msra.mxu0 %v1640
        %1689 = vmatprep.subr.bf16.mxu0 0
        %1690 = vmatpush1.bf16.msra.mxu0 %v1639
        %1691 = vmatprep.subr.bf16.mxu0 0
        %1692 = vmatpush1.bf16.msra.mxu0 %v1638
        %1693 = vmatprep.subr.bf16.mxu0 0
        %1694 = vmatpush1.bf16.msra.mxu0 %v1637
        %1695 = vmatprep.subr.bf16.mxu0 0
        %1696 = vmatpush1.bf16.msra.mxu0 %v1636
        %1697 = vmatprep.subr.bf16.mxu0 0
        %1698 = vmatpush1.bf16.msra.mxu0 %v1635
        %1699 = vmatprep.subr.bf16.mxu0 0
        %1700 = vmatpush2.bf16.msra.mxu0 %v1650
        %1701 = vmatprep.subr.bf16.mxu0 0
        %1702 = vmatpush2.bf16.msra.mxu0 %v1649
        %1703 = vmatprep.subr.bf16.mxu0 0
        %1704 = vmatpush2.bf16.msra.mxu0 %v1648
        %1705 = vmatprep.subr.bf16.mxu0 0
        %1706 = vmatpush2.bf16.msra.mxu0 %v1647
        %1707 = vmatprep.subr.bf16.mxu0 0
        %1708 = vmatpush2.bf16.msra.mxu0 %v1646
        %1709 = vmatprep.subr.bf16.mxu0 0
        %1710 = vmatpush2.bf16.msra.mxu0 %v1645
        %1711 = vmatprep.subr.bf16.mxu0 0
        %1712 = vmatpush2.bf16.msra.mxu0 %v1644
        %1713 = vmatprep.subr.bf16.mxu0 0
        %1714 = vmatpush2.bf16.msra.mxu0 %v1643
        %1715 = vmatprep.mubr.bf16.mxu0 %v1159
        %1716 = vmatmul.mubr.bf16.gmra.mxu0 %v1046
        %v1717 = vpop.f32.mrf.mxu0
        %v1718 = vadd.f32 0.0, %v1717
        %v1719 = vpop.f32.mrf.mxu0
        %v1720 = vpop.f32.mrf.mxu0
        %v1721 = vadd.f32 0.0, %v1720
        %v1722 = vpop.f32.mrf.mxu0
        %1723 = vmatprep.mubr.bf16.mxu0 %v1171
        %1724 = vmatmul.mubr.bf16.gmra.mxu0 %v1047
        %v1725 = vpop.f32.mrf.mxu0
        %v1726 = vadd.f32 0.0, %v1725
        %v1727 = vpop.f32.mrf.mxu0
        %v1728 = vpop.f32.mrf.mxu0
        %v1729 = vadd.f32 0.0, %v1728
        %v1730 = vpop.f32.mrf.mxu0
        %1731 = vmatprep.mubr.bf16.mxu0 %v1183
        %1732 = vmatmul.mubr.bf16.gmra.mxu0 %v1048
        %v1733 = vpop.f32.mrf.mxu0
        %v1734 = vadd.f32 0.0, %v1733
        %v1735 = vpop.f32.mrf.mxu0
        %v1736 = vpop.f32.mrf.mxu0
        %v1737 = vadd.f32 0.0, %v1736
        %v1738 = vpop.f32.mrf.mxu0
        %1739 = vmatprep.mubr.bf16.mxu0 %v1195
        %1740 = vmatmul.mubr.bf16.gmra.mxu0 %v1049
        %v1741 = vpop.f32.mrf.mxu0
        %v1742 = vadd.f32 0.0, %v1741
        %v1743 = vpop.f32.mrf.mxu0
        %v1744 = vpop.f32.mrf.mxu0
        %v1745 = vadd.f32 0.0, %v1744
        %v1746 = vpop.f32.mrf.mxu0
        %1747 = vmatprep.mubr.bf16.mxu0 %v1207
        %1748 = vmatmul.mubr.bf16.gmra.mxu0 %v1050
        %v1749 = vpop.f32.mrf.mxu0
        %v1750 = vadd.f32 0.0, %v1749
        %v1751 = vpop.f32.mrf.mxu0
        %v1752 = vpop.f32.mrf.mxu0
        %v1753 = vadd.f32 0.0, %v1752
        %v1754 = vpop.f32.mrf.mxu0
        %1755 = vmatprep.mubr.bf16.mxu0 %v1219
        %1756 = vmatmul.mubr.bf16.gmra.mxu0 %v1051
        %v1757 = vpop.f32.mrf.mxu0
        %v1758 = vadd.f32 0.0, %v1757
        %v1759 = vpop.f32.mrf.mxu0
        %v1760 = vpop.f32.mrf.mxu0
        %v1761 = vadd.f32 0.0, %v1760
        %v1762 = vpop.f32.mrf.mxu0
        %1763 = vmatprep.mubr.bf16.mxu0 %v1231
        %1764 = vmatmul.mubr.bf16.gmra.mxu0 %v1052
        %v1765 = vpop.f32.mrf.mxu0
        %v1766 = vadd.f32 0.0, %v1765
        %v1767 = vpop.f32.mrf.mxu0
        %v1768 = vpop.f32.mrf.mxu0
        %v1769 = vadd.f32 0.0, %v1768
        %v1770 = vpop.f32.mrf.mxu0
        %1771 = vmatprep.mubr.bf16.mxu0 %v1243
        %1772 = vmatmul.mubr.bf16.gmra.mxu0 %v1053
        %v1773 = vpop.f32.mrf.mxu0
        %v1774 = vadd.f32 0.0, %v1773
        %v1775 = vpop.f32.mrf.mxu0
        %v1776 = vpop.f32.mrf.mxu0
        %v1777 = vadd.f32 0.0, %v1776
        %v1778 = vpop.f32.mrf.mxu0
        %1779 = vmatprep.mubr.bf16.mxu0 %v1255
        %1780 = vmatmul.mubr.bf16.gmra.mxu0 %v1054
        %v1781 = vpop.f32.mrf.mxu0
        %v1782 = vadd.f32 0.0, %v1781
        %v1783 = vpop.f32.mrf.mxu0
        %v1784 = vpop.f32.mrf.mxu0
        %v1785 = vadd.f32 0.0, %v1784
        %v1786 = vpop.f32.mrf.mxu0
        %1787 = vmatprep.mubr.bf16.mxu0 %v1267
        %1788 = vmatmul.mubr.bf16.gmra.mxu0 %v1055
        %v1789 = vpop.f32.mrf.mxu0
        %v1790 = vadd.f32 0.0, %v1789
        %v1791 = vpop.f32.mrf.mxu0
        %v1792 = vpop.f32.mrf.mxu0
        %v1793 = vadd.f32 0.0, %v1792
        %v1794 = vpop.f32.mrf.mxu0
        %1795 = vmatprep.mubr.bf16.mxu0 %v1279
        %1796 = vmatmul.mubr.bf16.gmra.mxu0 %v1056
        %v1797 = vpop.f32.mrf.mxu0
        %v1798 = vadd.f32 0.0, %v1797
        %v1799 = vpop.f32.mrf.mxu0
        %v1800 = vpop.f32.mrf.mxu0
        %v1801 = vadd.f32 0.0, %v1800
        %v1802 = vpop.f32.mrf.mxu0
        %1803 = vmatprep.mubr.bf16.mxu0 %v1291
        %1804 = vmatmul.mubr.bf16.gmra.mxu0 %v1057
        %v1805 = vpop.f32.mrf.mxu0
        %v1806 = vadd.f32 0.0, %v1805
        %v1807 = vpop.f32.mrf.mxu0
        %v1808 = vpop.f32.mrf.mxu0
        %v1809 = vadd.f32 0.0, %v1808
        %v1810 = vpop.f32.mrf.mxu0
        %1811 = vmatprep.mubr.bf16.mxu0 %v1303
        %1812 = vmatmul.mubr.bf16.gmra.mxu0 %v1058
        %v1813 = vpop.f32.mrf.mxu0
        %v1814 = vadd.f32 0.0, %v1813
        %v1815 = vpop.f32.mrf.mxu0
        %v1816 = vpop.f32.mrf.mxu0
        %v1817 = vadd.f32 0.0, %v1816
        %v1818 = vpop.f32.mrf.mxu0
        %1819 = vmatprep.mubr.bf16.mxu0 %v1315
        %1820 = vmatmul.mubr.bf16.gmra.mxu0 %v1059
        %v1821 = vpop.f32.mrf.mxu0
        %v1822 = vadd.f32 0.0, %v1821
        %v1823 = vpop.f32.mrf.mxu0
        %v1824 = vpop.f32.mrf.mxu0
        %v1825 = vadd.f32 0.0, %v1824
        %v1826 = vpop.f32.mrf.mxu0
        %1827 = vmatprep.mubr.bf16.mxu0 %v1327
        %1828 = vmatmul.mubr.bf16.gmra.mxu0 %v1060
        %v1829 = vpop.f32.mrf.mxu0
        %v1830 = vadd.f32 0.0, %v1829
        %v1831 = vpop.f32.mrf.mxu0
        %v1832 = vpop.f32.mrf.mxu0
        %v1833 = vadd.f32 0.0, %v1832
        %v1834 = vpop.f32.mrf.mxu0
        %1835 = vmatprep.mubr.bf16.mxu0 %v1339
        %1836 = vmatmul.mubr.bf16.gmra.mxu0 %v1061
        %v1837 = vpop.f32.mrf.mxu0
        %v1838 = vadd.f32 0.0, %v1837
        %v1839 = vpop.f32.mrf.mxu0
        %v1840 = vpop.f32.mrf.mxu0
        %v1841 = vadd.f32 0.0, %v1840
        %v1842 = vpop.f32.mrf.mxu0
        %1843 = vdwg.mxu0
        %1844 = vmatprep.subr.bf16.mxu0 0
        %1845 = vmatpush1.bf16.msra.mxu0 %v1658
        %1846 = vmatprep.subr.bf16.mxu0 0
        %1847 = vmatpush1.bf16.msra.mxu0 %v1657
        %1848 = vmatprep.subr.bf16.mxu0 0
        %1849 = vmatpush1.bf16.msra.mxu0 %v1656
        %1850 = vmatprep.subr.bf16.mxu0 0
        %1851 = vmatpush1.bf16.msra.mxu0 %v1655
        %1852 = vmatprep.subr.bf16.mxu0 0
        %1853 = vmatpush1.bf16.msra.mxu0 %v1654
        %1854 = vmatprep.subr.bf16.mxu0 0
        %1855 = vmatpush1.bf16.msra.mxu0 %v1653
        %1856 = vmatprep.subr.bf16.mxu0 0
        %1857 = vmatpush1.bf16.msra.mxu0 %v1652
        %1858 = vmatprep.subr.bf16.mxu0 0
        %1859 = vmatpush1.bf16.msra.mxu0 %v1651
        %1860 = vmatprep.subr.bf16.mxu0 0
        %1861 = vmatpush2.bf16.msra.mxu0 0
        %1862 = vmatprep.subr.bf16.mxu0 0
        %1863 = vmatpush2.bf16.msra.mxu0 0
        %1864 = vmatprep.subr.bf16.mxu0 0
        %1865 = vmatpush2.bf16.msra.mxu0 0
        %1866 = vmatprep.subr.bf16.mxu0 0
        %1867 = vmatpush2.bf16.msra.mxu0 0
        %1868 = vmatprep.subr.bf16.mxu0 0
        %1869 = vmatpush2.bf16.msra.mxu0 0
        %1870 = vmatprep.subr.bf16.mxu0 0
        %1871 = vmatpush2.bf16.msra.mxu0 0
        %1872 = vmatprep.subr.bf16.mxu0 0
        %1873 = vmatpush2.bf16.msra.mxu0 0
        %1874 = vmatprep.subr.bf16.mxu0 0
        %1875 = vmatpush2.bf16.msra.mxu0 0
        %1876 = vmatprep.mubr.bf16.mxu0 0
        %1877 = vmatmul.mubr.bf16.gmra.mxu0 %v1376
        %v1878 = vpop.f32.mrf.mxu0
        %v1879 = vadd.f32 %v1718, %v1878
        %v1880 = vpop.f32.mrf.mxu0
        %v1881 = vpop.f32.mrf.mxu0
        %v1882 = vadd.f32 %v1721, %v1881
        %v1883 = vpop.f32.mrf.mxu0
        %1884 = vmatprep.mubr.bf16.mxu0 0
        %1885 = vmatmul.mubr.bf16.gmra.mxu0 %v1379
        %v1886 = vpop.f32.mrf.mxu0
        %v1887 = vadd.f32 %v1726, %v1886
        %v1888 = vpop.f32.mrf.mxu0
        %v1889 = vpop.f32.mrf.mxu0
        %v1890 = vadd.f32 %v1729, %v1889
        %v1891 = vpop.f32.mrf.mxu0
        %1892 = vmatprep.mubr.bf16.mxu0 0
        %1893 = vmatmul.mubr.bf16.gmra.mxu0 %v1382
        %v1894 = vpop.f32.mrf.mxu0
        %v1895 = vadd.f32 %v1734, %v1894
        %v1896 = vpop.f32.mrf.mxu0
        %v1897 = vpop.f32.mrf.mxu0
        %v1898 = vadd.f32 %v1737, %v1897
        %v1899 = vpop.f32.mrf.mxu0
        %1900 = vmatprep.mubr.bf16.mxu0 0
        %1901 = vmatmul.mubr.bf16.gmra.mxu0 %v1385
        %v1902 = vpop.f32.mrf.mxu0
        %v1903 = vadd.f32 %v1742, %v1902
        %v1904 = vpop.f32.mrf.mxu0
        %v1905 = vpop.f32.mrf.mxu0
        %v1906 = vadd.f32 %v1745, %v1905
        %v1907 = vpop.f32.mrf.mxu0
        %1908 = vmatprep.mubr.bf16.mxu0 0
        %1909 = vmatmul.mubr.bf16.gmra.mxu0 %v1388
        %v1910 = vpop.f32.mrf.mxu0
        %v1911 = vadd.f32 %v1750, %v1910
        %v1912 = vpop.f32.mrf.mxu0
        %v1913 = vpop.f32.mrf.mxu0
        %v1914 = vadd.f32 %v1753, %v1913
        %v1915 = vpop.f32.mrf.mxu0
        %1916 = vmatprep.mubr.bf16.mxu0 0
        %1917 = vmatmul.mubr.bf16.gmra.mxu0 %v1391
        %v1918 = vpop.f32.mrf.mxu0
        %v1919 = vadd.f32 %v1758, %v1918
        %v1920 = vpop.f32.mrf.mxu0
        %v1921 = vpop.f32.mrf.mxu0
        %v1922 = vadd.f32 %v1761, %v1921
        %v1923 = vpop.f32.mrf.mxu0
        %1924 = vmatprep.mubr.bf16.mxu0 0
        %1925 = vmatmul.mubr.bf16.gmra.mxu0 %v1394
        %v1926 = vpop.f32.mrf.mxu0
        %v1927 = vadd.f32 %v1766, %v1926
        %v1928 = vpop.f32.mrf.mxu0
        %v1929 = vpop.f32.mrf.mxu0
        %v1930 = vadd.f32 %v1769, %v1929
        %v1931 = vpop.f32.mrf.mxu0
        %1932 = vmatprep.mubr.bf16.mxu0 0
        %1933 = vmatmul.mubr.bf16.gmra.mxu0 %v1397
        %v1934 = vpop.f32.mrf.mxu0
        %v1935 = vadd.f32 %v1774, %v1934
        %v1936 = vpop.f32.mrf.mxu0
        %v1937 = vpop.f32.mrf.mxu0
        %v1938 = vadd.f32 %v1777, %v1937
        %v1939 = vpop.f32.mrf.mxu0
        %1940 = vmatprep.mubr.bf16.mxu0 0
        %1941 = vmatmul.mubr.bf16.gmra.mxu0 %v1400
        %v1942 = vpop.f32.mrf.mxu0
        %v1943 = vadd.f32 %v1782, %v1942
        %v1944 = vpop.f32.mrf.mxu0
        %v1945 = vpop.f32.mrf.mxu0
        %v1946 = vadd.f32 %v1785, %v1945
        %v1947 = vpop.f32.mrf.mxu0
        %1948 = vmatprep.mubr.bf16.mxu0 0
        %1949 = vmatmul.mubr.bf16.gmra.mxu0 %v1403
        %v1950 = vpop.f32.mrf.mxu0
        %v1951 = vadd.f32 %v1790, %v1950
        %v1952 = vpop.f32.mrf.mxu0
        %v1953 = vpop.f32.mrf.mxu0
        %v1954 = vadd.f32 %v1793, %v1953
        %v1955 = vpop.f32.mrf.mxu0
        %1956 = vmatprep.mubr.bf16.mxu0 0
        %1957 = vmatmul.mubr.bf16.gmra.mxu0 %v1406
        %v1958 = vpop.f32.mrf.mxu0
        %v1959 = vadd.f32 %v1798, %v1958
        %v1960 = vpop.f32.mrf.mxu0
        %v1961 = vpop.f32.mrf.mxu0
        %v1962 = vadd.f32 %v1801, %v1961
        %v1963 = vpop.f32.mrf.mxu0
        %1964 = vmatprep.mubr.bf16.mxu0 0
        %1965 = vmatmul.mubr.bf16.gmra.mxu0 %v1409
        %v1966 = vpop.f32.mrf.mxu0
        %v1967 = vadd.f32 %v1806, %v1966
        %v1968 = vpop.f32.mrf.mxu0
        %v1969 = vpop.f32.mrf.mxu0
        %v1970 = vadd.f32 %v1809, %v1969
        %v1971 = vpop.f32.mrf.mxu0
        %1972 = vmatprep.mubr.bf16.mxu0 0
        %1973 = vmatmul.mubr.bf16.gmra.mxu0 %v1412
        %v1974 = vpop.f32.mrf.mxu0
        %v1975 = vadd.f32 %v1814, %v1974
        %v1976 = vpop.f32.mrf.mxu0
        %v1977 = vpop.f32.mrf.mxu0
        %v1978 = vadd.f32 %v1817, %v1977
        %v1979 = vpop.f32.mrf.mxu0
        %1980 = vmatprep.mubr.bf16.mxu0 0
        %1981 = vmatmul.mubr.bf16.gmra.mxu0 %v1415
        %v1982 = vpop.f32.mrf.mxu0
        %v1983 = vadd.f32 %v1822, %v1982
        %v1984 = vpop.f32.mrf.mxu0
        %v1985 = vpop.f32.mrf.mxu0
        %v1986 = vadd.f32 %v1825, %v1985
        %v1987 = vpop.f32.mrf.mxu0
        %1988 = vmatprep.mubr.bf16.mxu0 0
        %1989 = vmatmul.mubr.bf16.gmra.mxu0 %v1418
        %v1990 = vpop.f32.mrf.mxu0
        %v1991 = vadd.f32 %v1830, %v1990
        %v1992 = vpop.f32.mrf.mxu0
        %v1993 = vpop.f32.mrf.mxu0
        %v1994 = vadd.f32 %v1833, %v1993
        %v1995 = vpop.f32.mrf.mxu0
        %1996 = vmatprep.mubr.bf16.mxu0 0
        %1997 = vmatmul.mubr.bf16.gmra.mxu0 %v1421
        %v1998 = vpop.f32.mrf.mxu0
        %v1999 = vadd.f32 %v1838, %v1998
        %v2000 = vpop.f32.mrf.mxu0
        %v2001 = vpop.f32.mrf.mxu0
        %v2002 = vadd.f32 %v1841, %v2001
        %v2003 = vpop.f32.mrf.mxu0
        %2004 = vdwg.mxu0
        %v2053 = vunpack.c.l.b16 %v1443
        %v2054 = vunpack.c.l.b16 %v1444
        %v2055 = vunpack.c.l.b16 %v1445
        %v2056 = vunpack.c.l.b16 %v1446
        %v2057 = vunpack.c.l.b16 %v1447
        %v2058 = vunpack.c.l.b16 %v1448
        %v2059 = vunpack.c.l.b16 %v1449
        %v2060 = vunpack.c.l.b16 %v1450
        %v2061 = vunpack.c.l.b16 %v1451
        %v2062 = vunpack.c.l.b16 %v1452
        %v2063 = vunpack.c.l.b16 %v1453
        %v2064 = vunpack.c.l.b16 %v1454
        %v2065 = vunpack.c.l.b16 %v1455
        %v2066 = vunpack.c.l.b16 %v1456
        %v2067 = vunpack.c.l.b16 %v1457
        %v2068 = vunpack.c.l.b16 %v1458
        %v2069 = vunpack.c.l.b16 %v1459
        %v2070 = vunpack.c.l.b16 %v1460
        %v2071 = vunpack.c.l.b16 %v1461
        %v2072 = vunpack.c.l.b16 %v1462
        %v2073 = vunpack.c.l.b16 %v1463
        %v2074 = vunpack.c.l.b16 %v1464
        %v2075 = vunpack.c.l.b16 %v1465
        %v2076 = vunpack.c.l.b16 %v1466
        %v2077 = vunpack.c.l.b16 %v1467
        %v2078 = vunpack.c.l.b16 %v1468
        %v2079 = vunpack.c.l.b16 %v1469
        %v2080 = vunpack.c.l.b16 %v1470
        %v2081 = vunpack.c.l.b16 %v1471
        %v2082 = vunpack.c.l.b16 %v1472
        %v2083 = vunpack.c.l.b16 %v1473
        %v2084 = vunpack.c.l.b16 %v1474
        %v2085 = vunpack.c.l.b16 %v1475
        %v2086 = vunpack.c.l.b16 %v1476
        %v2087 = vunpack.c.l.b16 %v1477
        %v2088 = vunpack.c.l.b16 %v1478
        %v2089 = vunpack.c.l.b16 %v1479
        %v2090 = vunpack.c.l.b16 %v1480
        %v2091 = vunpack.c.l.b16 %v1481
        %v2092 = vunpack.c.l.b16 %v1482
        %v2093 = vunpack.c.l.b16 %v1483
        %v2094 = vunpack.c.l.b16 %v1484
        %v2095 = vunpack.c.l.b16 %v1485
        %v2096 = vunpack.c.l.b16 %v1486
        %v2097 = vunpack.c.l.b16 %v1487
        %v2098 = vunpack.c.l.b16 %v1488
        %v2099 = vunpack.c.l.b16 %v1489
        %v2100 = vunpack.c.l.b16 %v1490
        %v2101 = vpack.c.b16 %v2054, %v2053
        %v2102 = vpack.c.b16 %v2056, %v2055
        %v2103 = vpack.c.b16 %v2058, %v2057
        %v2104 = vpack.c.b16 %v2060, %v2059
        %v2105 = vpack.c.b16 %v2062, %v2061
        %v2106 = vpack.c.b16 %v2064, %v2063
        %v2107 = vpack.c.b16 %v2066, %v2065
        %v2108 = vpack.c.b16 %v2068, %v2067
        %v2109 = vpack.c.b16 %v2070, %v2069
        %v2110 = vpack.c.b16 %v2072, %v2071
        %v2111 = vpack.c.b16 %v2074, %v2073
        %v2112 = vpack.c.b16 %v2076, %v2075
        %v2113 = vpack.c.b16 %v2078, %v2077
        %v2114 = vpack.c.b16 %v2080, %v2079
        %v2115 = vpack.c.b16 %v2082, %v2081
        %v2116 = vpack.c.b16 %v2084, %v2083
        %v2117 = vpack.c.b16 %v2086, %v2085
        %v2118 = vpack.c.b16 %v2088, %v2087
        %v2119 = vpack.c.b16 %v2090, %v2089
        %v2120 = vpack.c.b16 %v2092, %v2091
        %v2121 = vpack.c.b16 %v2094, %v2093
        %v2122 = vpack.c.b16 %v2096, %v2095
        %v2123 = vpack.c.b16 %v2098, %v2097
        %v2124 = vpack.c.b16 %v2100, %v2099
        %2149 = vmatprep.subr.bf16.mxu0 0
        %2150 = vmatpush1.bf16.msra.mxu0 %v2108
        %2151 = vmatprep.subr.bf16.mxu0 0
        %2152 = vmatpush1.bf16.msra.mxu0 %v2107
        %2153 = vmatprep.subr.bf16.mxu0 0
        %2154 = vmatpush1.bf16.msra.mxu0 %v2106
        %2155 = vmatprep.subr.bf16.mxu0 0
        %2156 = vmatpush1.bf16.msra.mxu0 %v2105
        %2157 = vmatprep.subr.bf16.mxu0 0
        %2158 = vmatpush1.bf16.msra.mxu0 %v2104
        %2159 = vmatprep.subr.bf16.mxu0 0
        %2160 = vmatpush1.bf16.msra.mxu0 %v2103
        %2161 = vmatprep.subr.bf16.mxu0 0
        %2162 = vmatpush1.bf16.msra.mxu0 %v2102
        %2163 = vmatprep.subr.bf16.mxu0 0
        %2164 = vmatpush1.bf16.msra.mxu0 %v2101
        %2165 = vmatprep.subr.bf16.mxu0 0
        %2166 = vmatpush2.bf16.msra.mxu0 %v2116
        %2167 = vmatprep.subr.bf16.mxu0 0
        %2168 = vmatpush2.bf16.msra.mxu0 %v2115
        %2169 = vmatprep.subr.bf16.mxu0 0
        %2170 = vmatpush2.bf16.msra.mxu0 %v2114
        %2171 = vmatprep.subr.bf16.mxu0 0
        %2172 = vmatpush2.bf16.msra.mxu0 %v2113
        %2173 = vmatprep.subr.bf16.mxu0 0
        %2174 = vmatpush2.bf16.msra.mxu0 %v2112
        %2175 = vmatprep.subr.bf16.mxu0 0
        %2176 = vmatpush2.bf16.msra.mxu0 %v2111
        %2177 = vmatprep.subr.bf16.mxu0 0
        %2178 = vmatpush2.bf16.msra.mxu0 %v2110
        %2179 = vmatprep.subr.bf16.mxu0 0
        %2180 = vmatpush2.bf16.msra.mxu0 %v2109
        %2181 = vmatprep.mubr.bf16.mxu0 %v1147
        %2182 = vmatmul.mubr.bf16.gmra.mxu0 %v1045
        %v2183 = vpop.f32.mrf.mxu0
        %v2184 = vadd.f32 %v1879, %v2183
        %v2185 = vpop.f32.mrf.mxu0
        %v2186 = vpop.f32.mrf.mxu0
        %v2187 = vadd.f32 %v1882, %v2186
        %v2188 = vpop.f32.mrf.mxu0
        %2189 = vmatprep.mubr.bf16.mxu0 %v1159
        %2190 = vmatmul.mubr.bf16.gmra.mxu0 %v1046
        %v2191 = vpop.f32.mrf.mxu0
        %v2192 = vadd.f32 %v1887, %v2191
        %v2193 = vpop.f32.mrf.mxu0
        %v2194 = vpop.f32.mrf.mxu0
        %v2195 = vadd.f32 %v1890, %v2194
        %v2196 = vpop.f32.mrf.mxu0
        %2197 = vmatprep.mubr.bf16.mxu0 %v1171
        %2198 = vmatmul.mubr.bf16.gmra.mxu0 %v1047
        %v2199 = vpop.f32.mrf.mxu0
        %v2200 = vadd.f32 %v1895, %v2199
        %v2201 = vpop.f32.mrf.mxu0
        %v2202 = vpop.f32.mrf.mxu0
        %v2203 = vadd.f32 %v1898, %v2202
        %v2204 = vpop.f32.mrf.mxu0
        %2205 = vmatprep.mubr.bf16.mxu0 %v1183
        %2206 = vmatmul.mubr.bf16.gmra.mxu0 %v1048
        %v2207 = vpop.f32.mrf.mxu0
        %v2208 = vadd.f32 %v1903, %v2207
        %v2209 = vpop.f32.mrf.mxu0
        %v2210 = vpop.f32.mrf.mxu0
        %v2211 = vadd.f32 %v1906, %v2210
        %v2212 = vpop.f32.mrf.mxu0
        %2213 = vmatprep.mubr.bf16.mxu0 %v1195
        %2214 = vmatmul.mubr.bf16.gmra.mxu0 %v1049
        %v2215 = vpop.f32.mrf.mxu0
        %v2216 = vadd.f32 %v1911, %v2215
        %v2217 = vpop.f32.mrf.mxu0
        %v2218 = vpop.f32.mrf.mxu0
        %v2219 = vadd.f32 %v1914, %v2218
        %v2220 = vpop.f32.mrf.mxu0
        %2221 = vmatprep.mubr.bf16.mxu0 %v1207
        %2222 = vmatmul.mubr.bf16.gmra.mxu0 %v1050
        %v2223 = vpop.f32.mrf.mxu0
        %v2224 = vadd.f32 %v1919, %v2223
        %v2225 = vpop.f32.mrf.mxu0
        %v2226 = vpop.f32.mrf.mxu0
        %v2227 = vadd.f32 %v1922, %v2226
        %v2228 = vpop.f32.mrf.mxu0
        %2229 = vmatprep.mubr.bf16.mxu0 %v1219
        %2230 = vmatmul.mubr.bf16.gmra.mxu0 %v1051
        %v2231 = vpop.f32.mrf.mxu0
        %v2232 = vadd.f32 %v1927, %v2231
        %v2233 = vpop.f32.mrf.mxu0
        %v2234 = vpop.f32.mrf.mxu0
        %v2235 = vadd.f32 %v1930, %v2234
        %v2236 = vpop.f32.mrf.mxu0
        %2237 = vmatprep.mubr.bf16.mxu0 %v1231
        %2238 = vmatmul.mubr.bf16.gmra.mxu0 %v1052
        %v2239 = vpop.f32.mrf.mxu0
        %v2240 = vadd.f32 %v1935, %v2239
        %v2241 = vpop.f32.mrf.mxu0
        %v2242 = vpop.f32.mrf.mxu0
        %v2243 = vadd.f32 %v1938, %v2242
        %v2244 = vpop.f32.mrf.mxu0
        %2245 = vmatprep.mubr.bf16.mxu0 %v1243
        %2246 = vmatmul.mubr.bf16.gmra.mxu0 %v1053
        %v2247 = vpop.f32.mrf.mxu0
        %v2248 = vadd.f32 %v1943, %v2247
        %v2249 = vpop.f32.mrf.mxu0
        %v2250 = vpop.f32.mrf.mxu0
        %v2251 = vadd.f32 %v1946, %v2250
        %v2252 = vpop.f32.mrf.mxu0
        %2253 = vmatprep.mubr.bf16.mxu0 %v1255
        %2254 = vmatmul.mubr.bf16.gmra.mxu0 %v1054
        %v2255 = vpop.f32.mrf.mxu0
        %v2256 = vadd.f32 %v1951, %v2255
        %v2257 = vpop.f32.mrf.mxu0
        %v2258 = vpop.f32.mrf.mxu0
        %v2259 = vadd.f32 %v1954, %v2258
        %v2260 = vpop.f32.mrf.mxu0
        %2261 = vmatprep.mubr.bf16.mxu0 %v1267
        %2262 = vmatmul.mubr.bf16.gmra.mxu0 %v1055
        %v2263 = vpop.f32.mrf.mxu0
        %v2264 = vadd.f32 %v1959, %v2263
        %v2265 = vpop.f32.mrf.mxu0
        %v2266 = vpop.f32.mrf.mxu0
        %v2267 = vadd.f32 %v1962, %v2266
        %v2268 = vpop.f32.mrf.mxu0
        %2269 = vmatprep.mubr.bf16.mxu0 %v1279
        %2270 = vmatmul.mubr.bf16.gmra.mxu0 %v1056
        %v2271 = vpop.f32.mrf.mxu0
        %v2272 = vadd.f32 %v1967, %v2271
        %v2273 = vpop.f32.mrf.mxu0
        %v2274 = vpop.f32.mrf.mxu0
        %v2275 = vadd.f32 %v1970, %v2274
        %v2276 = vpop.f32.mrf.mxu0
        %2277 = vmatprep.mubr.bf16.mxu0 %v1291
        %2278 = vmatmul.mubr.bf16.gmra.mxu0 %v1057
        %v2279 = vpop.f32.mrf.mxu0
        %v2280 = vadd.f32 %v1975, %v2279
        %v2281 = vpop.f32.mrf.mxu0
        %v2282 = vpop.f32.mrf.mxu0
        %v2283 = vadd.f32 %v1978, %v2282
        %v2284 = vpop.f32.mrf.mxu0
        %2285 = vmatprep.mubr.bf16.mxu0 %v1303
        %2286 = vmatmul.mubr.bf16.gmra.mxu0 %v1058
        %v2287 = vpop.f32.mrf.mxu0
        %v2288 = vadd.f32 %v1983, %v2287
        %v2289 = vpop.f32.mrf.mxu0
        %v2290 = vpop.f32.mrf.mxu0
        %v2291 = vadd.f32 %v1986, %v2290
        %v2292 = vpop.f32.mrf.mxu0
        %2293 = vmatprep.mubr.bf16.mxu0 %v1315
        %2294 = vmatmul.mubr.bf16.gmra.mxu0 %v1059
        %v2295 = vpop.f32.mrf.mxu0
        %v2296 = vadd.f32 %v1991, %v2295
        %v2297 = vpop.f32.mrf.mxu0
        %v2298 = vpop.f32.mrf.mxu0
        %v2299 = vadd.f32 %v1994, %v2298
        %v2300 = vpop.f32.mrf.mxu0
        %2301 = vmatprep.mubr.bf16.mxu0 %v1327
        %2302 = vmatmul.mubr.bf16.gmra.mxu0 %v1060
        %v2303 = vpop.f32.mrf.mxu0
        %v2304 = vadd.f32 %v1999, %v2303
        %v2305 = vpop.f32.mrf.mxu0
        %v2306 = vpop.f32.mrf.mxu0
        %v2307 = vadd.f32 %v2002, %v2306
        %v2308 = vpop.f32.mrf.mxu0
        %2309 = vdwg.mxu0
        %2310 = vmatprep.subr.bf16.mxu0 0
        %2311 = vmatpush1.bf16.msra.mxu0 %v2124
        %2312 = vmatprep.subr.bf16.mxu0 0
        %2313 = vmatpush1.bf16.msra.mxu0 %v2123
        %2314 = vmatprep.subr.bf16.mxu0 0
        %2315 = vmatpush1.bf16.msra.mxu0 %v2122
        %2316 = vmatprep.subr.bf16.mxu0 0
        %2317 = vmatpush1.bf16.msra.mxu0 %v2121
        %2318 = vmatprep.subr.bf16.mxu0 0
        %2319 = vmatpush1.bf16.msra.mxu0 %v2120
        %2320 = vmatprep.subr.bf16.mxu0 0
        %2321 = vmatpush1.bf16.msra.mxu0 %v2119
        %2322 = vmatprep.subr.bf16.mxu0 0
        %2323 = vmatpush1.bf16.msra.mxu0 %v2118
        %2324 = vmatprep.subr.bf16.mxu0 0
        %2325 = vmatpush1.bf16.msra.mxu0 %v2117
        %2326 = vmatprep.subr.bf16.mxu0 0
        %2327 = vmatpush2.bf16.msra.mxu0 0
        %2328 = vmatprep.subr.bf16.mxu0 0
        %2329 = vmatpush2.bf16.msra.mxu0 0
        %2330 = vmatprep.subr.bf16.mxu0 0
        %2331 = vmatpush2.bf16.msra.mxu0 0
        %2332 = vmatprep.subr.bf16.mxu0 0
        %2333 = vmatpush2.bf16.msra.mxu0 0
        %2334 = vmatprep.subr.bf16.mxu0 0
        %2335 = vmatpush2.bf16.msra.mxu0 0
        %2336 = vmatprep.subr.bf16.mxu0 0
        %2337 = vmatpush2.bf16.msra.mxu0 0
        %2338 = vmatprep.subr.bf16.mxu0 0
        %2339 = vmatpush2.bf16.msra.mxu0 0
        %2340 = vmatprep.subr.bf16.mxu0 0
        %2341 = vmatpush2.bf16.msra.mxu0 0
        %2342 = vmatprep.mubr.bf16.mxu0 0
        %2343 = vmatmul.mubr.bf16.gmra.mxu0 %v1373
        %v2344 = vpop.f32.mrf.mxu0
        %v2345 = vadd.f32 %v2184, %v2344
        %v2346 = vpop.f32.mrf.mxu0
        %v2347 = vpop.f32.mrf.mxu0
        %v2348 = vadd.f32 %v2187, %v2347
        %v2349 = vpop.f32.mrf.mxu0
        %2350 = vmatprep.mubr.bf16.mxu0 0
        %2351 = vmatmul.mubr.bf16.gmra.mxu0 %v1376
        %v2352 = vpop.f32.mrf.mxu0
        %v2353 = vadd.f32 %v2192, %v2352
        %v2354 = vpop.f32.mrf.mxu0
        %v2355 = vpop.f32.mrf.mxu0
        %v2356 = vadd.f32 %v2195, %v2355
        %v2357 = vpop.f32.mrf.mxu0
        %2358 = vmatprep.mubr.bf16.mxu0 0
        %2359 = vmatmul.mubr.bf16.gmra.mxu0 %v1379
        %v2360 = vpop.f32.mrf.mxu0
        %v2361 = vadd.f32 %v2200, %v2360
        %v2362 = vpop.f32.mrf.mxu0
        %v2363 = vpop.f32.mrf.mxu0
        %v2364 = vadd.f32 %v2203, %v2363
        %v2365 = vpop.f32.mrf.mxu0
        %2366 = vmatprep.mubr.bf16.mxu0 0
        %2367 = vmatmul.mubr.bf16.gmra.mxu0 %v1382
        %v2368 = vpop.f32.mrf.mxu0
        %v2369 = vadd.f32 %v2208, %v2368
        %v2370 = vpop.f32.mrf.mxu0
        %v2371 = vpop.f32.mrf.mxu0
        %v2372 = vadd.f32 %v2211, %v2371
        %v2373 = vpop.f32.mrf.mxu0
        %2374 = vmatprep.mubr.bf16.mxu0 0
        %2375 = vmatmul.mubr.bf16.gmra.mxu0 %v1385
        %v2376 = vpop.f32.mrf.mxu0
        %v2377 = vadd.f32 %v2216, %v2376
        %v2378 = vpop.f32.mrf.mxu0
        %v2379 = vpop.f32.mrf.mxu0
        %v2380 = vadd.f32 %v2219, %v2379
        %v2381 = vpop.f32.mrf.mxu0
        %2382 = vmatprep.mubr.bf16.mxu0 0
        %2383 = vmatmul.mubr.bf16.gmra.mxu0 %v1388
        %v2384 = vpop.f32.mrf.mxu0
        %v2385 = vadd.f32 %v2224, %v2384
        %v2386 = vpop.f32.mrf.mxu0
        %v2387 = vpop.f32.mrf.mxu0
        %v2388 = vadd.f32 %v2227, %v2387
        %v2389 = vpop.f32.mrf.mxu0
        %2390 = vmatprep.mubr.bf16.mxu0 0
        %2391 = vmatmul.mubr.bf16.gmra.mxu0 %v1391
        %v2392 = vpop.f32.mrf.mxu0
        %v2393 = vadd.f32 %v2232, %v2392
        %v2394 = vpop.f32.mrf.mxu0
        %v2395 = vpop.f32.mrf.mxu0
        %v2396 = vadd.f32 %v2235, %v2395
        %v2397 = vpop.f32.mrf.mxu0
        %2398 = vmatprep.mubr.bf16.mxu0 0
        %2399 = vmatmul.mubr.bf16.gmra.mxu0 %v1394
        %v2400 = vpop.f32.mrf.mxu0
        %v2401 = vadd.f32 %v2240, %v2400
        %v2402 = vpop.f32.mrf.mxu0
        %v2403 = vpop.f32.mrf.mxu0
        %v2404 = vadd.f32 %v2243, %v2403
        %v2405 = vpop.f32.mrf.mxu0
        %2406 = vmatprep.mubr.bf16.mxu0 0
        %2407 = vmatmul.mubr.bf16.gmra.mxu0 %v1397
        %v2408 = vpop.f32.mrf.mxu0
        %v2409 = vadd.f32 %v2248, %v2408
        %v2410 = vpop.f32.mrf.mxu0
        %v2411 = vpop.f32.mrf.mxu0
        %v2412 = vadd.f32 %v2251, %v2411
        %v2413 = vpop.f32.mrf.mxu0
        %2414 = vmatprep.mubr.bf16.mxu0 0
        %2415 = vmatmul.mubr.bf16.gmra.mxu0 %v1400
        %v2416 = vpop.f32.mrf.mxu0
        %v2417 = vadd.f32 %v2256, %v2416
        %v2418 = vpop.f32.mrf.mxu0
        %v2419 = vpop.f32.mrf.mxu0
        %v2420 = vadd.f32 %v2259, %v2419
        %v2421 = vpop.f32.mrf.mxu0
        %2422 = vmatprep.mubr.bf16.mxu0 0
        %2423 = vmatmul.mubr.bf16.gmra.mxu0 %v1403
        %v2424 = vpop.f32.mrf.mxu0
        %v2425 = vadd.f32 %v2264, %v2424
        %v2426 = vpop.f32.mrf.mxu0
        %v2427 = vpop.f32.mrf.mxu0
        %v2428 = vadd.f32 %v2267, %v2427
        %v2429 = vpop.f32.mrf.mxu0
        %2430 = vmatprep.mubr.bf16.mxu0 0
        %2431 = vmatmul.mubr.bf16.gmra.mxu0 %v1406
        %v2432 = vpop.f32.mrf.mxu0
        %v2433 = vadd.f32 %v2272, %v2432
        %v2434 = vpop.f32.mrf.mxu0
        %v2435 = vpop.f32.mrf.mxu0
        %v2436 = vadd.f32 %v2275, %v2435
        %v2437 = vpop.f32.mrf.mxu0
        %2438 = vmatprep.mubr.bf16.mxu0 0
        %2439 = vmatmul.mubr.bf16.gmra.mxu0 %v1409
        %v2440 = vpop.f32.mrf.mxu0
        %v2441 = vadd.f32 %v2280, %v2440
        %v2442 = vpop.f32.mrf.mxu0
        %v2443 = vpop.f32.mrf.mxu0
        %v2444 = vadd.f32 %v2283, %v2443
        %v2445 = vpop.f32.mrf.mxu0
        %2446 = vmatprep.mubr.bf16.mxu0 0
        %2447 = vmatmul.mubr.bf16.gmra.mxu0 %v1412
        %v2448 = vpop.f32.mrf.mxu0
        %v2449 = vadd.f32 %v2288, %v2448
        %v2450 = vpop.f32.mrf.mxu0
        %v2451 = vpop.f32.mrf.mxu0
        %v2452 = vadd.f32 %v2291, %v2451
        %v2453 = vpop.f32.mrf.mxu0
        %2454 = vmatprep.mubr.bf16.mxu0 0
        %2455 = vmatmul.mubr.bf16.gmra.mxu0 %v1415
        %v2456 = vpop.f32.mrf.mxu0
        %v2457 = vadd.f32 %v2296, %v2456
        %v2458 = vpop.f32.mrf.mxu0
        %v2459 = vpop.f32.mrf.mxu0
        %v2460 = vadd.f32 %v2299, %v2459
        %v2461 = vpop.f32.mrf.mxu0
        %2462 = vmatprep.mubr.bf16.mxu0 0
        %2463 = vmatmul.mubr.bf16.gmra.mxu0 %v1418
        %v2464 = vpop.f32.mrf.mxu0
        %v2465 = vadd.f32 %v2304, %v2464
        %v2466 = vpop.f32.mrf.mxu0
        %v2467 = vpop.f32.mrf.mxu0
        %v2468 = vadd.f32 %v2307, %v2467
        %v2469 = vpop.f32.mrf.mxu0
        %2470 = vdwg.mxu0
        %v2471 = vld [vmem:[#allocation6 + $0x180] sm:$0xf]
        %v2472 = vld [vmem:[#allocation6 + $0x184] sm:$0xf]
        %v2473 = vld [vmem:[#allocation6 + $0x188] sm:$0xf]
        %v2474 = vld [vmem:[#allocation6 + $0x18c] sm:$0xf]
        %v2475 = vld [vmem:[#allocation6 + $0x190] sm:$0xf]
        %v2476 = vld [vmem:[#allocation6 + $0x194] sm:$0xf]
        %v2477 = vld [vmem:[#allocation6 + $0x198] sm:$0xf]
        %v2478 = vld [vmem:[#allocation6 + $0x19c] sm:$0xf]
        %v2479 = vld [vmem:[#allocation6 + $0x1a0] sm:$0xf]
        %v2480 = vld [vmem:[#allocation6 + $0x1a4] sm:$0xf]
        %v2481 = vld [vmem:[#allocation6 + $0x1a8] sm:$0xf]
        %v2482 = vld [vmem:[#allocation6 + $0x1ac] sm:$0xf]
        %v2483 = vld [vmem:[#allocation6 + $0x1b0] sm:$0xf]
        %v2484 = vld [vmem:[#allocation6 + $0x1b4] sm:$0xf]
        %v2485 = vld [vmem:[#allocation6 + $0x1b8] sm:$0xf]
        %v2486 = vld [vmem:[#allocation6 + $0x1bc] sm:$0xf]
        %v2487 = vld [vmem:[#allocation6 + $0x1c0] sm:$0xf]
        %v2488 = vld [vmem:[#allocation6 + $0x1c4] sm:$0xf]
        %v2489 = vld [vmem:[#allocation6 + $0x1c8] sm:$0xf]
        %v2490 = vld [vmem:[#allocation6 + $0x1cc] sm:$0xf]
        %v2491 = vld [vmem:[#allocation6 + $0x1d0] sm:$0xf]
        %v2492 = vld [vmem:[#allocation6 + $0x1d4] sm:$0xf]
        %v2493 = vld [vmem:[#allocation6 + $0x1d8] sm:$0xf]
        %v2494 = vld [vmem:[#allocation6 + $0x1dc] sm:$0xf]
        %v2495 = vld [vmem:[#allocation6 + $0x1e0] sm:$0xf]
        %v2496 = vld [vmem:[#allocation6 + $0x1e4] sm:$0xf]
        %v2497 = vld [vmem:[#allocation6 + $0x1e8] sm:$0xf]
        %v2498 = vld [vmem:[#allocation6 + $0x1ec] sm:$0xf]
        %v2499 = vld [vmem:[#allocation6 + $0x1f0] sm:$0xf]
        %v2500 = vld [vmem:[#allocation6 + $0x1f4] sm:$0xf]
        %v2501 = vld [vmem:[#allocation6 + $0x1f8] sm:$0xf]
        %v2502 = vld [vmem:[#allocation6 + $0x1fc] sm:$0xf]
        %v2503 = vld [vmem:[#allocation6 + $0x200] sm:$0xf]
        %v2504 = vld [vmem:[#allocation6 + $0x204] sm:$0xf]
        %v2505 = vld [vmem:[#allocation6 + $0x208] sm:$0xf]
        %v2506 = vld [vmem:[#allocation6 + $0x20c] sm:$0xf]
        %v2507 = vld [vmem:[#allocation6 + $0x210] sm:$0xf]
        %v2508 = vld [vmem:[#allocation6 + $0x214] sm:$0xf]
        %v2509 = vld [vmem:[#allocation6 + $0x218] sm:$0xf]
        %v2510 = vld [vmem:[#allocation6 + $0x21c] sm:$0xf]
        %v2511 = vld [vmem:[#allocation6 + $0x220] sm:$0xf]
        %v2512 = vld [vmem:[#allocation6 + $0x224] sm:$0xf]
        %v2513 = vld [vmem:[#allocation6 + $0x228] sm:$0xf]
        %v2514 = vld [vmem:[#allocation6 + $0x22c] sm:$0xf]
        %v2515 = vld [vmem:[#allocation6 + $0x230] sm:$0xf]
        %v2516 = vld [vmem:[#allocation6 + $0x234] sm:$0xf]
        %v2517 = vld [vmem:[#allocation6 + $0x238] sm:$0xf]
        %v2518 = vld [vmem:[#allocation6 + $0x23c] sm:$0xf]
        %v2567 = vunpack.c.l.b16 %v2471
        %v2568 = vunpack.c.l.b16 %v2472
        %v2569 = vunpack.c.l.b16 %v2473
        %v2570 = vunpack.c.l.b16 %v2474
        %v2571 = vunpack.c.l.b16 %v2475
        %v2572 = vunpack.c.l.b16 %v2476
        %v2573 = vunpack.c.l.b16 %v2477
        %v2574 = vunpack.c.l.b16 %v2478
        %v2575 = vunpack.c.l.b16 %v2479
        %v2576 = vunpack.c.l.b16 %v2480
        %v2577 = vunpack.c.l.b16 %v2481
        %v2578 = vunpack.c.l.b16 %v2482
        %v2579 = vunpack.c.l.b16 %v2483
        %v2580 = vunpack.c.l.b16 %v2484
        %v2581 = vunpack.c.l.b16 %v2485
        %v2582 = vunpack.c.l.b16 %v2486
        %v2583 = vunpack.c.l.b16 %v2487
        %v2584 = vunpack.c.l.b16 %v2488
        %v2585 = vunpack.c.l.b16 %v2489
        %v2586 = vunpack.c.l.b16 %v2490
        %v2587 = vunpack.c.l.b16 %v2491
        %v2588 = vunpack.c.l.b16 %v2492
        %v2589 = vunpack.c.l.b16 %v2493
        %v2590 = vunpack.c.l.b16 %v2494
        %v2591 = vunpack.c.l.b16 %v2495
        %v2592 = vunpack.c.l.b16 %v2496
        %v2593 = vunpack.c.l.b16 %v2497
        %v2594 = vunpack.c.l.b16 %v2498
        %v2595 = vunpack.c.l.b16 %v2499
        %v2596 = vunpack.c.l.b16 %v2500
        %v2597 = vunpack.c.l.b16 %v2501
        %v2598 = vunpack.c.l.b16 %v2502
        %v2599 = vunpack.c.l.b16 %v2503
        %v2600 = vunpack.c.l.b16 %v2504
        %v2601 = vunpack.c.l.b16 %v2505
        %v2602 = vunpack.c.l.b16 %v2506
        %v2603 = vunpack.c.l.b16 %v2507
        %v2604 = vunpack.c.l.b16 %v2508
        %v2605 = vunpack.c.l.b16 %v2509
        %v2606 = vunpack.c.l.b16 %v2510
        %v2607 = vunpack.c.l.b16 %v2511
        %v2608 = vunpack.c.l.b16 %v2512
        %v2609 = vunpack.c.l.b16 %v2513
        %v2610 = vunpack.c.l.b16 %v2514
        %v2611 = vunpack.c.l.b16 %v2515
        %v2612 = vunpack.c.l.b16 %v2516
        %v2613 = vunpack.c.l.b16 %v2517
        %v2614 = vunpack.c.l.b16 %v2518
        %v2615 = vpack.c.b16 %v2568, %v2567
        %v2616 = vpack.c.b16 %v2570, %v2569
        %v2617 = vpack.c.b16 %v2572, %v2571
        %v2618 = vpack.c.b16 %v2574, %v2573
        %v2619 = vpack.c.b16 %v2576, %v2575
        %v2620 = vpack.c.b16 %v2578, %v2577
        %v2621 = vpack.c.b16 %v2580, %v2579
        %v2622 = vpack.c.b16 %v2582, %v2581
        %v2623 = vpack.c.b16 %v2584, %v2583
        %v2624 = vpack.c.b16 %v2586, %v2585
        %v2625 = vpack.c.b16 %v2588, %v2587
        %v2626 = vpack.c.b16 %v2590, %v2589
        %v2627 = vpack.c.b16 %v2592, %v2591
        %v2628 = vpack.c.b16 %v2594, %v2593
        %v2629 = vpack.c.b16 %v2596, %v2595
        %v2630 = vpack.c.b16 %v2598, %v2597
        %v2631 = vpack.c.b16 %v2600, %v2599
        %v2632 = vpack.c.b16 %v2602, %v2601
        %v2633 = vpack.c.b16 %v2604, %v2603
        %v2634 = vpack.c.b16 %v2606, %v2605
        %v2635 = vpack.c.b16 %v2608, %v2607
        %v2636 = vpack.c.b16 %v2610, %v2609
        %v2637 = vpack.c.b16 %v2612, %v2611
        %v2638 = vpack.c.b16 %v2614, %v2613
        %2663 = vmatprep.subr.bf16.mxu0 0
        %2664 = vmatpush1.bf16.msra.mxu0 %v2622
        %2665 = vmatprep.subr.bf16.mxu0 0
        %2666 = vmatpush1.bf16.msra.mxu0 %v2621
        %2667 = vmatprep.subr.bf16.mxu0 0
        %2668 = vmatpush1.bf16.msra.mxu0 %v2620
        %2669 = vmatprep.subr.bf16.mxu0 0
        %2670 = vmatpush1.bf16.msra.mxu0 %v2619
        %2671 = vmatprep.subr.bf16.mxu0 0
        %2672 = vmatpush1.bf16.msra.mxu0 %v2618
        %2673 = vmatprep.subr.bf16.mxu0 0
        %2674 = vmatpush1.bf16.msra.mxu0 %v2617
        %2675 = vmatprep.subr.bf16.mxu0 0
        %2676 = vmatpush1.bf16.msra.mxu0 %v2616
        %2677 = vmatprep.subr.bf16.mxu0 0
        %2678 = vmatpush1.bf16.msra.mxu0 %v2615
        %2679 = vmatprep.subr.bf16.mxu0 0
        %2680 = vmatpush2.bf16.msra.mxu0 %v2630
        %2681 = vmatprep.subr.bf16.mxu0 0
        %2682 = vmatpush2.bf16.msra.mxu0 %v2629
        %2683 = vmatprep.subr.bf16.mxu0 0
        %2684 = vmatpush2.bf16.msra.mxu0 %v2628
        %2685 = vmatprep.subr.bf16.mxu0 0
        %2686 = vmatpush2.bf16.msra.mxu0 %v2627
        %2687 = vmatprep.subr.bf16.mxu0 0
        %2688 = vmatpush2.bf16.msra.mxu0 %v2626
        %2689 = vmatprep.subr.bf16.mxu0 0
        %2690 = vmatpush2.bf16.msra.mxu0 %v2625
        %2691 = vmatprep.subr.bf16.mxu0 0
        %2692 = vmatpush2.bf16.msra.mxu0 %v2624
        %2693 = vmatprep.subr.bf16.mxu0 0
        %2694 = vmatpush2.bf16.msra.mxu0 %v2623
        %2695 = vmatprep.mubr.bf16.mxu0 %v1171
        %2696 = vmatmul.mubr.bf16.gmra.mxu0 %v1047
        %v2697 = vpop.f32.mrf.mxu0
        %v2698 = vadd.f32 0.0, %v2697
        %v2699 = vpop.f32.mrf.mxu0
        %v2700 = vpop.f32.mrf.mxu0
        %v2701 = vadd.f32 0.0, %v2700
        %v2702 = vpop.f32.mrf.mxu0
        %2703 = vmatprep.mubr.bf16.mxu0 %v1183
        %2704 = vmatmul.mubr.bf16.gmra.mxu0 %v1048
        %v2705 = vpop.f32.mrf.mxu0
        %v2706 = vadd.f32 0.0, %v2705
        %v2707 = vpop.f32.mrf.mxu0
        %v2708 = vpop.f32.mrf.mxu0
        %v2709 = vadd.f32 0.0, %v2708
        %v2710 = vpop.f32.mrf.mxu0
        %2711 = vmatprep.mubr.bf16.mxu0 %v1195
        %2712 = vmatmul.mubr.bf16.gmra.mxu0 %v1049
        %v2713 = vpop.f32.mrf.mxu0
        %v2714 = vadd.f32 0.0, %v2713
        %v2715 = vpop.f32.mrf.mxu0
        %v2716 = vpop.f32.mrf.mxu0
        %v2717 = vadd.f32 0.0, %v2716
        %v2718 = vpop.f32.mrf.mxu0
        %2719 = vmatprep.mubr.bf16.mxu0 %v1207
        %2720 = vmatmul.mubr.bf16.gmra.mxu0 %v1050
        %v2721 = vpop.f32.mrf.mxu0
        %v2722 = vadd.f32 0.0, %v2721
        %v2723 = vpop.f32.mrf.mxu0
        %v2724 = vpop.f32.mrf.mxu0
        %v2725 = vadd.f32 0.0, %v2724
        %v2726 = vpop.f32.mrf.mxu0
        %2727 = vmatprep.mubr.bf16.mxu0 %v1219
        %2728 = vmatmul.mubr.bf16.gmra.mxu0 %v1051
        %v2729 = vpop.f32.mrf.mxu0
        %v2730 = vadd.f32 0.0, %v2729
        %v2731 = vpop.f32.mrf.mxu0
        %v2732 = vpop.f32.mrf.mxu0
        %v2733 = vadd.f32 0.0, %v2732
        %v2734 = vpop.f32.mrf.mxu0
        %2735 = vmatprep.mubr.bf16.mxu0 %v1231
        %2736 = vmatmul.mubr.bf16.gmra.mxu0 %v1052
        %v2737 = vpop.f32.mrf.mxu0
        %v2738 = vadd.f32 0.0, %v2737
        %v2739 = vpop.f32.mrf.mxu0
        %v2740 = vpop.f32.mrf.mxu0
        %v2741 = vadd.f32 0.0, %v2740
        %v2742 = vpop.f32.mrf.mxu0
        %2743 = vmatprep.mubr.bf16.mxu0 %v1243
        %2744 = vmatmul.mubr.bf16.gmra.mxu0 %v1053
        %v2745 = vpop.f32.mrf.mxu0
        %v2746 = vadd.f32 0.0, %v2745
        %v2747 = vpop.f32.mrf.mxu0
        %v2748 = vpop.f32.mrf.mxu0
        %v2749 = vadd.f32 0.0, %v2748
        %v2750 = vpop.f32.mrf.mxu0
        %2751 = vmatprep.mubr.bf16.mxu0 %v1255
        %2752 = vmatmul.mubr.bf16.gmra.mxu0 %v1054
        %v2753 = vpop.f32.mrf.mxu0
        %v2754 = vadd.f32 0.0, %v2753
        %v2755 = vpop.f32.mrf.mxu0
        %v2756 = vpop.f32.mrf.mxu0
        %v2757 = vadd.f32 0.0, %v2756
        %v2758 = vpop.f32.mrf.mxu0
        %2759 = vmatprep.mubr.bf16.mxu0 %v1267
        %2760 = vmatmul.mubr.bf16.gmra.mxu0 %v1055
        %v2761 = vpop.f32.mrf.mxu0
        %v2762 = vadd.f32 0.0, %v2761
        %v2763 = vpop.f32.mrf.mxu0
        %v2764 = vpop.f32.mrf.mxu0
        %v2765 = vadd.f32 0.0, %v2764
        %v2766 = vpop.f32.mrf.mxu0
        %2767 = vmatprep.mubr.bf16.mxu0 %v1279
        %2768 = vmatmul.mubr.bf16.gmra.mxu0 %v1056
        %v2769 = vpop.f32.mrf.mxu0
        %v2770 = vadd.f32 0.0, %v2769
        %v2771 = vpop.f32.mrf.mxu0
        %v2772 = vpop.f32.mrf.mxu0
        %v2773 = vadd.f32 0.0, %v2772
        %v2774 = vpop.f32.mrf.mxu0
        %2775 = vmatprep.mubr.bf16.mxu0 %v1291
        %2776 = vmatmul.mubr.bf16.gmra.mxu0 %v1057
        %v2777 = vpop.f32.mrf.mxu0
        %v2778 = vadd.f32 0.0, %v2777
        %v2779 = vpop.f32.mrf.mxu0
        %v2780 = vpop.f32.mrf.mxu0
        %v2781 = vadd.f32 0.0, %v2780
        %v2782 = vpop.f32.mrf.mxu0
        %2783 = vmatprep.mubr.bf16.mxu0 %v1303
        %2784 = vmatmul.mubr.bf16.gmra.mxu0 %v1058
        %v2785 = vpop.f32.mrf.mxu0
        %v2786 = vadd.f32 0.0, %v2785
        %v2787 = vpop.f32.mrf.mxu0
        %v2788 = vpop.f32.mrf.mxu0
        %v2789 = vadd.f32 0.0, %v2788
        %v2790 = vpop.f32.mrf.mxu0
        %2791 = vmatprep.mubr.bf16.mxu0 %v1315
        %2792 = vmatmul.mubr.bf16.gmra.mxu0 %v1059
        %v2793 = vpop.f32.mrf.mxu0
        %v2794 = vadd.f32 0.0, %v2793
        %v2795 = vpop.f32.mrf.mxu0
        %v2796 = vpop.f32.mrf.mxu0
        %v2797 = vadd.f32 0.0, %v2796
        %v2798 = vpop.f32.mrf.mxu0
        %2799 = vmatprep.mubr.bf16.mxu0 %v1327
        %2800 = vmatmul.mubr.bf16.gmra.mxu0 %v1060
        %v2801 = vpop.f32.mrf.mxu0
        %v2802 = vadd.f32 0.0, %v2801
        %v2803 = vpop.f32.mrf.mxu0
        %v2804 = vpop.f32.mrf.mxu0
        %v2805 = vadd.f32 0.0, %v2804
        %v2806 = vpop.f32.mrf.mxu0
        %2807 = vmatprep.mubr.bf16.mxu0 %v1339
        %2808 = vmatmul.mubr.bf16.gmra.mxu0 %v1061
        %v2809 = vpop.f32.mrf.mxu0
        %v2810 = vadd.f32 0.0, %v2809
        %v2811 = vpop.f32.mrf.mxu0
        %v2812 = vpop.f32.mrf.mxu0
        %v2813 = vadd.f32 0.0, %v2812
        %v2814 = vpop.f32.mrf.mxu0
        %2815 = vmatprep.mubr.bf16.mxu0 %v1351
        %2816 = vmatmul.mubr.bf16.gmra.mxu0 %v1062
        %v2817 = vpop.f32.mrf.mxu0
        %v2818 = vadd.f32 0.0, %v2817
        %v2819 = vpop.f32.mrf.mxu0
        %v2820 = vpop.f32.mrf.mxu0
        %v2821 = vadd.f32 0.0, %v2820
        %v2822 = vpop.f32.mrf.mxu0
        %2823 = vdwg.mxu0
        %2824 = vmatprep.subr.bf16.mxu0 0
        %2825 = vmatpush1.bf16.msra.mxu0 %v2638
        %2826 = vmatprep.subr.bf16.mxu0 0
        %2827 = vmatpush1.bf16.msra.mxu0 %v2637
        %2828 = vmatprep.subr.bf16.mxu0 0
        %2829 = vmatpush1.bf16.msra.mxu0 %v2636
        %2830 = vmatprep.subr.bf16.mxu0 0
        %2831 = vmatpush1.bf16.msra.mxu0 %v2635
        %2832 = vmatprep.subr.bf16.mxu0 0
        %2833 = vmatpush1.bf16.msra.mxu0 %v2634
        %2834 = vmatprep.subr.bf16.mxu0 0
        %2835 = vmatpush1.bf16.msra.mxu0 %v2633
        %2836 = vmatprep.subr.bf16.mxu0 0
        %2837 = vmatpush1.bf16.msra.mxu0 %v2632
        %2838 = vmatprep.subr.bf16.mxu0 0
        %2839 = vmatpush1.bf16.msra.mxu0 %v2631
        %2840 = vmatprep.subr.bf16.mxu0 0
        %2841 = vmatpush2.bf16.msra.mxu0 0
        %2842 = vmatprep.subr.bf16.mxu0 0
        %2843 = vmatpush2.bf16.msra.mxu0 0
        %2844 = vmatprep.subr.bf16.mxu0 0
        %2845 = vmatpush2.bf16.msra.mxu0 0
        %2846 = vmatprep.subr.bf16.mxu0 0
        %2847 = vmatpush2.bf16.msra.mxu0 0
        %2848 = vmatprep.subr.bf16.mxu0 0
        %2849 = vmatpush2.bf16.msra.mxu0 0
        %2850 = vmatprep.subr.bf16.mxu0 0
        %2851 = vmatpush2.bf16.msra.mxu0 0
        %2852 = vmatprep.subr.bf16.mxu0 0
        %2853 = vmatpush2.bf16.msra.mxu0 0
        %2854 = vmatprep.subr.bf16.mxu0 0
        %2855 = vmatpush2.bf16.msra.mxu0 0
        %2856 = vmatprep.mubr.bf16.mxu0 0
        %2857 = vmatmul.mubr.bf16.gmra.mxu0 %v1379
        %v2858 = vpop.f32.mrf.mxu0
        %v2859 = vadd.f32 %v2698, %v2858
        %v2860 = vpop.f32.mrf.mxu0
        %v2861 = vpop.f32.mrf.mxu0
        %v2862 = vadd.f32 %v2701, %v2861
        %v2863 = vpop.f32.mrf.mxu0
        %2864 = vmatprep.mubr.bf16.mxu0 0
        %2865 = vmatmul.mubr.bf16.gmra.mxu0 %v1382
        %v2866 = vpop.f32.mrf.mxu0
        %v2867 = vadd.f32 %v2706, %v2866
        %v2868 = vpop.f32.mrf.mxu0
        %v2869 = vpop.f32.mrf.mxu0
        %v2870 = vadd.f32 %v2709, %v2869
        %v2871 = vpop.f32.mrf.mxu0
        %2872 = vmatprep.mubr.bf16.mxu0 0
        %2873 = vmatmul.mubr.bf16.gmra.mxu0 %v1385
        %v2874 = vpop.f32.mrf.mxu0
        %v2875 = vadd.f32 %v2714, %v2874
        %v2876 = vpop.f32.mrf.mxu0
        %v2877 = vpop.f32.mrf.mxu0
        %v2878 = vadd.f32 %v2717, %v2877
        %v2879 = vpop.f32.mrf.mxu0
        %2880 = vmatprep.mubr.bf16.mxu0 0
        %2881 = vmatmul.mubr.bf16.gmra.mxu0 %v1388
        %v2882 = vpop.f32.mrf.mxu0
        %v2883 = vadd.f32 %v2722, %v2882
        %v2884 = vpop.f32.mrf.mxu0
        %v2885 = vpop.f32.mrf.mxu0
        %v2886 = vadd.f32 %v2725, %v2885
        %v2887 = vpop.f32.mrf.mxu0
        %2888 = vmatprep.mubr.bf16.mxu0 0
        %2889 = vmatmul.mubr.bf16.gmra.mxu0 %v1391
        %v2890 = vpop.f32.mrf.mxu0
        %v2891 = vadd.f32 %v2730, %v2890
        %v2892 = vpop.f32.mrf.mxu0
        %v2893 = vpop.f32.mrf.mxu0
        %v2894 = vadd.f32 %v2733, %v2893
        %v2895 = vpop.f32.mrf.mxu0
        %2896 = vmatprep.mubr.bf16.mxu0 0
        %2897 = vmatmul.mubr.bf16.gmra.mxu0 %v1394
        %v2898 = vpop.f32.mrf.mxu0
        %v2899 = vadd.f32 %v2738, %v2898
        %v2900 = vpop.f32.mrf.mxu0
        %v2901 = vpop.f32.mrf.mxu0
        %v2902 = vadd.f32 %v2741, %v2901
        %v2903 = vpop.f32.mrf.mxu0
        %2904 = vmatprep.mubr.bf16.mxu0 0
        %2905 = vmatmul.mubr.bf16.gmra.mxu0 %v1397
        %v2906 = vpop.f32.mrf.mxu0
        %v2907 = vadd.f32 %v2746, %v2906
        %v2908 = vpop.f32.mrf.mxu0
        %v2909 = vpop.f32.mrf.mxu0
        %v2910 = vadd.f32 %v2749, %v2909
        %v2911 = vpop.f32.mrf.mxu0
        %2912 = vmatprep.mubr.bf16.mxu0 0
        %2913 = vmatmul.mubr.bf16.gmra.mxu0 %v1400
        %v2914 = vpop.f32.mrf.mxu0
        %v2915 = vadd.f32 %v2754, %v2914
        %v2916 = vpop.f32.mrf.mxu0
        %v2917 = vpop.f32.mrf.mxu0
        %v2918 = vadd.f32 %v2757, %v2917
        %v2919 = vpop.f32.mrf.mxu0
        %2920 = vmatprep.mubr.bf16.mxu0 0
        %2921 = vmatmul.mubr.bf16.gmra.mxu0 %v1403
        %v2922 = vpop.f32.mrf.mxu0
        %v2923 = vadd.f32 %v2762, %v2922
        %v2924 = vpop.f32.mrf.mxu0
        %v2925 = vpop.f32.mrf.mxu0
        %v2926 = vadd.f32 %v2765, %v2925
        %v2927 = vpop.f32.mrf.mxu0
        %2928 = vmatprep.mubr.bf16.mxu0 0
        %2929 = vmatmul.mubr.bf16.gmra.mxu0 %v1406
        %v2930 = vpop.f32.mrf.mxu0
        %v2931 = vadd.f32 %v2770, %v2930
        %v2932 = vpop.f32.mrf.mxu0
        %v2933 = vpop.f32.mrf.mxu0
        %v2934 = vadd.f32 %v2773, %v2933
        %v2935 = vpop.f32.mrf.mxu0
        %2936 = vmatprep.mubr.bf16.mxu0 0
        %2937 = vmatmul.mubr.bf16.gmra.mxu0 %v1409
        %v2938 = vpop.f32.mrf.mxu0
        %v2939 = vadd.f32 %v2778, %v2938
        %v2940 = vpop.f32.mrf.mxu0
        %v2941 = vpop.f32.mrf.mxu0
        %v2942 = vadd.f32 %v2781, %v2941
        %v2943 = vpop.f32.mrf.mxu0
        %2944 = vmatprep.mubr.bf16.mxu0 0
        %2945 = vmatmul.mubr.bf16.gmra.mxu0 %v1412
        %v2946 = vpop.f32.mrf.mxu0
        %v2947 = vadd.f32 %v2786, %v2946
        %v2948 = vpop.f32.mrf.mxu0
        %v2949 = vpop.f32.mrf.mxu0
        %v2950 = vadd.f32 %v2789, %v2949
        %v2951 = vpop.f32.mrf.mxu0
        %2952 = vmatprep.mubr.bf16.mxu0 0
        %2953 = vmatmul.mubr.bf16.gmra.mxu0 %v1415
        %v2954 = vpop.f32.mrf.mxu0
        %v2955 = vadd.f32 %v2794, %v2954
        %v2956 = vpop.f32.mrf.mxu0
        %v2957 = vpop.f32.mrf.mxu0
        %v2958 = vadd.f32 %v2797, %v2957
        %v2959 = vpop.f32.mrf.mxu0
        %2960 = vmatprep.mubr.bf16.mxu0 0
        %2961 = vmatmul.mubr.bf16.gmra.mxu0 %v1418
        %v2962 = vpop.f32.mrf.mxu0
        %v2963 = vadd.f32 %v2802, %v2962
        %v2964 = vpop.f32.mrf.mxu0
        %v2965 = vpop.f32.mrf.mxu0
        %v2966 = vadd.f32 %v2805, %v2965
        %v2967 = vpop.f32.mrf.mxu0
        %2968 = vmatprep.mubr.bf16.mxu0 0
        %2969 = vmatmul.mubr.bf16.gmra.mxu0 %v1421
        %v2970 = vpop.f32.mrf.mxu0
        %v2971 = vadd.f32 %v2810, %v2970
        %v2972 = vpop.f32.mrf.mxu0
        %v2973 = vpop.f32.mrf.mxu0
        %v2974 = vadd.f32 %v2813, %v2973
        %v2975 = vpop.f32.mrf.mxu0
        %2976 = vmatprep.mubr.bf16.mxu0 0
        %2977 = vmatmul.mubr.bf16.gmra.mxu0 %v1424
        %v2978 = vpop.f32.mrf.mxu0
        %v2979 = vadd.f32 %v2818, %v2978
        %v2980 = vpop.f32.mrf.mxu0
        %v2981 = vpop.f32.mrf.mxu0
        %v2982 = vadd.f32 %v2821, %v2981
        %v2983 = vpop.f32.mrf.mxu0
        %2984 = vdwg.mxu0
        %v2985 = vadd.f32 %v2345, %v2859
        %v2986 = vadd.f32 %v2348, %v2862
        %v2987 = vadd.f32 %v2353, %v2867
        %v2988 = vadd.f32 %v2356, %v2870
        %v2989 = vadd.f32 %v2361, %v2875
        %v2990 = vadd.f32 %v2364, %v2878
        %v2991 = vadd.f32 %v2369, %v2883
        %v2992 = vadd.f32 %v2372, %v2886
        %v2993 = vadd.f32 %v2377, %v2891
        %v2994 = vadd.f32 %v2380, %v2894
        %v2995 = vadd.f32 %v2385, %v2899
        %v2996 = vadd.f32 %v2388, %v2902
        %v2997 = vadd.f32 %v2393, %v2907
        %v2998 = vadd.f32 %v2396, %v2910
        %v2999 = vadd.f32 %v2401, %v2915
        %v3000 = vadd.f32 %v2404, %v2918
        %v3001 = vadd.f32 %v2409, %v2923
        %v3002 = vadd.f32 %v2412, %v2926
        %v3003 = vadd.f32 %v2417, %v2931
        %v3004 = vadd.f32 %v2420, %v2934
        %v3005 = vadd.f32 %v2425, %v2939
        %v3006 = vadd.f32 %v2428, %v2942
        %v3007 = vadd.f32 %v2433, %v2947
        %v3008 = vadd.f32 %v2436, %v2950
        %v3009 = vadd.f32 %v2441, %v2955
        %v3010 = vadd.f32 %v2444, %v2958
        %v3011 = vadd.f32 %v2449, %v2963
        %v3012 = vadd.f32 %v2452, %v2966
        %v3013 = vadd.f32 %v2457, %v2971
        %v3014 = vadd.f32 %v2460, %v2974
        %v3015 = vadd.f32 %v2465, %v2979
        %v3016 = vadd.f32 %v2468, %v2982
        %v3018 = vlaneseq
        %v3019 = vshrl.u32 %v3018, 7
        %v3020 = vsub.s32 0, %v3019
        %v3021 = vrot.slane %v352, %v3020
        %v3023 = vmul.f32 %v2985, %v3021
        %v3024 = vmul.f32 %v2986, %v3021
        %v3025 = vmul.f32 %v2987, %v3021
        %v3026 = vmul.f32 %v2988, %v3021
        %v3027 = vmul.f32 %v2989, %v3021
        %v3028 = vmul.f32 %v2990, %v3021
        %v3029 = vmul.f32 %v2991, %v3021
        %v3030 = vmul.f32 %v2992, %v3021
        %v3031 = vmul.f32 %v2993, %v3021
        %v3032 = vmul.f32 %v2994, %v3021
        %v3033 = vmul.f32 %v2995, %v3021
        %v3034 = vmul.f32 %v2996, %v3021
        %v3035 = vmul.f32 %v2997, %v3021
        %v3036 = vmul.f32 %v2998, %v3021
        %v3037 = vmul.f32 %v2999, %v3021
        %v3038 = vmul.f32 %v3000, %v3021
        %v3039 = vmul.f32 %v3001, %v3021
        %v3040 = vmul.f32 %v3002, %v3021
        %v3041 = vmul.f32 %v3003, %v3021
        %v3042 = vmul.f32 %v3004, %v3021
        %v3043 = vmul.f32 %v3005, %v3021
        %v3044 = vmul.f32 %v3006, %v3021
        %v3045 = vmul.f32 %v3007, %v3021
        %v3046 = vmul.f32 %v3008, %v3021
        %v3047 = vmul.f32 %v3009, %v3021
        %v3048 = vmul.f32 %v3010, %v3021
        %v3049 = vmul.f32 %v3011, %v3021
        %v3050 = vmul.f32 %v3012, %v3021
        %v3051 = vmul.f32 %v3013, %v3021
        %v3052 = vmul.f32 %v3014, %v3021
        %v3053 = vmul.f32 %v3015, %v3021
        %v3054 = vmul.f32 %v3016, %v3021
        %v3056 = vlaneseq
        %v3057 = vshrl.u32 %v3056, 7
        %v3058 = vsub.s32 0, %v3057
        %v3059 = vrot.slane %v353, %v3058
        %v3061 = vadd.f32 %v3023, %v3059
        %v3062 = vadd.f32 %v3024, %v3059
        %v3063 = vadd.f32 %v3025, %v3059
        %v3064 = vadd.f32 %v3026, %v3059
        %v3065 = vadd.f32 %v3027, %v3059
        %v3066 = vadd.f32 %v3028, %v3059
        %v3067 = vadd.f32 %v3029, %v3059
        %v3068 = vadd.f32 %v3030, %v3059
        %v3069 = vadd.f32 %v3031, %v3059
        %v3070 = vadd.f32 %v3032, %v3059
        %v3071 = vadd.f32 %v3033, %v3059
        %v3072 = vadd.f32 %v3034, %v3059
        %v3073 = vadd.f32 %v3035, %v3059
        %v3074 = vadd.f32 %v3036, %v3059
        %v3075 = vadd.f32 %v3037, %v3059
        %v3076 = vadd.f32 %v3038, %v3059
        %v3077 = vadd.f32 %v3039, %v3059
        %v3078 = vadd.f32 %v3040, %v3059
        %v3079 = vadd.f32 %v3041, %v3059
        %v3080 = vadd.f32 %v3042, %v3059
        %v3081 = vadd.f32 %v3043, %v3059
        %v3082 = vadd.f32 %v3044, %v3059
        %v3083 = vadd.f32 %v3045, %v3059
        %v3084 = vadd.f32 %v3046, %v3059
        %v3085 = vadd.f32 %v3047, %v3059
        %v3086 = vadd.f32 %v3048, %v3059
        %v3087 = vadd.f32 %v3049, %v3059
        %v3088 = vadd.f32 %v3050, %v3059
        %v3089 = vadd.f32 %v3051, %v3059
        %v3090 = vadd.f32 %v3052, %v3059
        %v3091 = vadd.f32 %v3053, %v3059
        %v3092 = vadd.f32 %v3054, %v3059
        %v3093 = vmax.f32 %v3061, 0.0
        %v3094 = vmax.f32 %v3062, 0.0
        %v3095 = vmax.f32 %v3063, 0.0
        %v3096 = vmax.f32 %v3064, 0.0
        %v3097 = vmax.f32 %v3065, 0.0
        %v3098 = vmax.f32 %v3066, 0.0
        %v3099 = vmax.f32 %v3067, 0.0
        %v3100 = vmax.f32 %v3068, 0.0
        %v3101 = vmax.f32 %v3069, 0.0
        %v3102 = vmax.f32 %v3070, 0.0
        %v3103 = vmax.f32 %v3071, 0.0
        %v3104 = vmax.f32 %v3072, 0.0
        %v3105 = vmax.f32 %v3073, 0.0
        %v3106 = vmax.f32 %v3074, 0.0
        %v3107 = vmax.f32 %v3075, 0.0
        %v3108 = vmax.f32 %v3076, 0.0
        %v3109 = vmax.f32 %v3077, 0.0
        %v3110 = vmax.f32 %v3078, 0.0
        %v3111 = vmax.f32 %v3079, 0.0
        %v3112 = vmax.f32 %v3080, 0.0
        %v3113 = vmax.f32 %v3081, 0.0
        %v3114 = vmax.f32 %v3082, 0.0
        %v3115 = vmax.f32 %v3083, 0.0
        %v3116 = vmax.f32 %v3084, 0.0
        %v3117 = vmax.f32 %v3085, 0.0
        %v3118 = vmax.f32 %v3086, 0.0
        %v3119 = vmax.f32 %v3087, 0.0
        %v3120 = vmax.f32 %v3088, 0.0
        %v3121 = vmax.f32 %v3089, 0.0
        %v3122 = vmax.f32 %v3090, 0.0
        %v3123 = vmax.f32 %v3091, 0.0
        %v3124 = vmax.f32 %v3092, 0.0
        %v3125 = vld [vmem:[%s202] sm:$0xff]
        %v3126 = vld [vmem:[%s202 + $0x8] sm:$0xff]
        %v3127 = vld [vmem:[%s202 + $0x10] sm:$0xff]
        %v3128 = vld [vmem:[%s202 + $0x18] sm:$0xff]
        %v3129 = vld [vmem:[%s202 + $0x20] sm:$0xff]
        %v3130 = vld [vmem:[%s202 + $0x28] sm:$0xff]
        %v3131 = vld [vmem:[%s202 + $0x30] sm:$0xff]
        %v3132 = vld [vmem:[%s202 + $0x38] sm:$0xff]
        %v3133 = vld [vmem:[%s202 + $0x40] sm:$0xff]
        %v3134 = vld [vmem:[%s202 + $0x48] sm:$0xff]
        %v3135 = vld [vmem:[%s202 + $0x50] sm:$0xff]
        %v3136 = vld [vmem:[%s202 + $0x58] sm:$0xff]
        %v3137 = vld [vmem:[%s202 + $0x60] sm:$0xff]
        %v3138 = vld [vmem:[%s202 + $0x68] sm:$0xff]
        %v3139 = vld [vmem:[%s202 + $0x70] sm:$0xff]
        %v3140 = vld [vmem:[%s202 + $0x78] sm:$0xff]
        %v3141 = vld [vmem:[%s202 + $0x80] sm:$0xff]
        %v3142 = vld [vmem:[%s202 + $0x88] sm:$0xff]
        %v3143 = vld [vmem:[%s202 + $0x90] sm:$0xff]
        %v3144 = vld [vmem:[%s202 + $0x98] sm:$0xff]
        %v3145 = vld [vmem:[%s202 + $0xa0] sm:$0xff]
        %v3146 = vld [vmem:[%s202 + $0xa8] sm:$0xff]
        %v3147 = vld [vmem:[%s202 + $0xb0] sm:$0xff]
        %v3148 = vld [vmem:[%s202 + $0xb8] sm:$0xff]
        %v3149 = vld [vmem:[%s202 + $0xc0] sm:$0xff]
        %v3150 = vld [vmem:[%s202 + $0xc8] sm:$0xff]
        %v3151 = vld [vmem:[%s202 + $0xd0] sm:$0xff]
        %v3152 = vld [vmem:[%s202 + $0xd8] sm:$0xff]
        %v3153 = vld [vmem:[%s202 + $0xe0] sm:$0xff]
        %v3154 = vld [vmem:[%s202 + $0xe8] sm:$0xff]
        %v3155 = vld [vmem:[%s202 + $0xf0] sm:$0xff]
        %v3156 = vld [vmem:[%s202 + $0xf8] sm:$0xff]
        %v3157 = vadd.f32 %v3125, %v3093
        %v3158 = vadd.f32 %v3126, %v3094
        %v3159 = vadd.f32 %v3127, %v3095
        %v3160 = vadd.f32 %v3128, %v3096
        %v3161 = vadd.f32 %v3129, %v3097
        %v3162 = vadd.f32 %v3130, %v3098
        %v3163 = vadd.f32 %v3131, %v3099
        %v3164 = vadd.f32 %v3132, %v3100
        %v3165 = vadd.f32 %v3133, %v3101
        %v3166 = vadd.f32 %v3134, %v3102
        %v3167 = vadd.f32 %v3135, %v3103
        %v3168 = vadd.f32 %v3136, %v3104
        %v3169 = vadd.f32 %v3137, %v3105
        %v3170 = vadd.f32 %v3138, %v3106
        %v3171 = vadd.f32 %v3139, %v3107
        %v3172 = vadd.f32 %v3140, %v3108
        %v3173 = vadd.f32 %v3141, %v3109
        %v3174 = vadd.f32 %v3142, %v3110
        %v3175 = vadd.f32 %v3143, %v3111
        %v3176 = vadd.f32 %v3144, %v3112
        %v3177 = vadd.f32 %v3145, %v3113
        %v3178 = vadd.f32 %v3146, %v3114
        %v3179 = vadd.f32 %v3147, %v3115
        %v3180 = vadd.f32 %v3148, %v3116
        %v3181 = vadd.f32 %v3149, %v3117
        %v3182 = vadd.f32 %v3150, %v3118
        %v3183 = vadd.f32 %v3151, %v3119
        %v3184 = vadd.f32 %v3152, %v3120
        %v3185 = vadd.f32 %v3153, %v3121
        %v3186 = vadd.f32 %v3154, %v3122
        %v3187 = vadd.f32 %v3155, %v3123
        %v3188 = vadd.f32 %v3156, %v3124
        %v3189 = vpack.c.bf16 %v3158, %v3157
        %v3190 = vpack.c.bf16 %v3160, %v3159
        %v3191 = vpack.c.bf16 %v3162, %v3161
        %v3192 = vpack.c.bf16 %v3164, %v3163
        %v3193 = vpack.c.bf16 %v3166, %v3165
        %v3194 = vpack.c.bf16 %v3168, %v3167
        %v3195 = vpack.c.bf16 %v3170, %v3169
        %v3196 = vpack.c.bf16 %v3172, %v3171
        %v3197 = vpack.c.bf16 %v3174, %v3173
        %v3198 = vpack.c.bf16 %v3176, %v3175
        %v3199 = vpack.c.bf16 %v3178, %v3177
        %v3200 = vpack.c.bf16 %v3180, %v3179
        %v3201 = vpack.c.bf16 %v3182, %v3181
        %v3202 = vpack.c.bf16 %v3184, %v3183
        %v3203 = vpack.c.bf16 %v3186, %v3185
        %v3204 = vpack.c.bf16 %v3188, %v3187
        %v3221 = vunpack.c.l.b16 %v3189
        %v3222 = vunpack.c.h.b16 %v3189
        %v3223 = vunpack.c.l.b16 %v3190
        %v3224 = vunpack.c.h.b16 %v3190
        %v3225 = vunpack.c.l.b16 %v3191
        %v3226 = vunpack.c.h.b16 %v3191
        %v3227 = vunpack.c.l.b16 %v3192
        %v3228 = vunpack.c.h.b16 %v3192
        %v3229 = vunpack.c.l.b16 %v3193
        %v3230 = vunpack.c.h.b16 %v3193
        %v3231 = vunpack.c.l.b16 %v3194
        %v3232 = vunpack.c.h.b16 %v3194
        %v3233 = vunpack.c.l.b16 %v3195
        %v3234 = vunpack.c.h.b16 %v3195
        %v3235 = vunpack.c.l.b16 %v3196
        %v3236 = vunpack.c.h.b16 %v3196
        %v3237 = vunpack.c.l.b16 %v3197
        %v3238 = vunpack.c.h.b16 %v3197
        %v3239 = vunpack.c.l.b16 %v3198
        %v3240 = vunpack.c.h.b16 %v3198
        %v3241 = vunpack.c.l.b16 %v3199
        %v3242 = vunpack.c.h.b16 %v3199
        %v3243 = vunpack.c.l.b16 %v3200
        %v3244 = vunpack.c.h.b16 %v3200
        %v3245 = vunpack.c.l.b16 %v3201
        %v3246 = vunpack.c.h.b16 %v3201
        %v3247 = vunpack.c.l.b16 %v3202
        %v3248 = vunpack.c.h.b16 %v3202
        %v3249 = vunpack.c.l.b16 %v3203
        %v3250 = vunpack.c.h.b16 %v3203
        %v3251 = vunpack.c.l.b16 %v3204
        %v3252 = vunpack.c.h.b16 %v3204
        %v3253 = vpack.c.b16 %v3221, %v3221
        %v3254 = vpack.c.b16 %v3222, %v3222
        %v3255 = vpack.c.b16 %v3223, %v3223
        %v3256 = vpack.c.b16 %v3224, %v3224
        %v3257 = vpack.c.b16 %v3225, %v3225
        %v3258 = vpack.c.b16 %v3226, %v3226
        %v3259 = vpack.c.b16 %v3227, %v3227
        %v3260 = vpack.c.b16 %v3228, %v3228
        %v3261 = vpack.c.b16 %v3229, %v3229
        %v3262 = vpack.c.b16 %v3230, %v3230
        %v3263 = vpack.c.b16 %v3231, %v3231
        %v3264 = vpack.c.b16 %v3232, %v3232
        %v3265 = vpack.c.b16 %v3233, %v3233
        %v3266 = vpack.c.b16 %v3234, %v3234
        %v3267 = vpack.c.b16 %v3235, %v3235
        %v3268 = vpack.c.b16 %v3236, %v3236
        %v3269 = vpack.c.b16 %v3237, %v3237
        %v3270 = vpack.c.b16 %v3238, %v3238
        %v3271 = vpack.c.b16 %v3239, %v3239
        %v3272 = vpack.c.b16 %v3240, %v3240
        %v3273 = vpack.c.b16 %v3241, %v3241
        %v3274 = vpack.c.b16 %v3242, %v3242
        %v3275 = vpack.c.b16 %v3243, %v3243
        %v3276 = vpack.c.b16 %v3244, %v3244
        %v3277 = vpack.c.b16 %v3245, %v3245
        %v3278 = vpack.c.b16 %v3246, %v3246
        %v3279 = vpack.c.b16 %v3247, %v3247
        %v3280 = vpack.c.b16 %v3248, %v3248
        %v3281 = vpack.c.b16 %v3249, %v3249
        %v3282 = vpack.c.b16 %v3250, %v3250
        %v3283 = vpack.c.b16 %v3251, %v3251
        %v3284 = vpack.c.b16 %v3252, %v3252
        %v3286 = vshrl.u32 %v3253, 16
        %v3288 = vrot.slane %v3286, 7
        %v3289 = vshll.u32 %v3253, 16
        %v3291 = vor.u32 %v3288, %v3289
        %v3292 = vrot.slane %v3288, 4
        %v3294 = vshrl.u32 %v3254, 16
        %v3296 = vrot.slane %v3294, 7
        %v3297 = vshll.u32 %v3254, 16
        %v3299 = vor.u32 %v3296, %v3297
        %v3300 = vsel %vm483, %v3292, %v3299
        %v3301 = vrot.slane %v3296, 4
        %v3303 = vshrl.u32 %v3255, 16
        %v3305 = vrot.slane %v3303, 7
        %v3306 = vshll.u32 %v3255, 16
        %v3308 = vor.u32 %v3305, %v3306
        %v3309 = vrot.slane %v3305, 4
        %v3311 = vshrl.u32 %v3256, 16
        %v3313 = vrot.slane %v3311, 7
        %v3314 = vshll.u32 %v3256, 16
        %v3316 = vor.u32 %v3313, %v3314
        %v3317 = vsel %vm483, %v3309, %v3316
        %v3318 = vrot.slane %v3313, 4
        %v3320 = vshrl.u32 %v3257, 16
        %v3322 = vrot.slane %v3320, 7
        %v3323 = vshll.u32 %v3257, 16
        %v3325 = vor.u32 %v3322, %v3323
        %v3326 = vrot.slane %v3322, 4
        %v3328 = vshrl.u32 %v3258, 16
        %v3330 = vrot.slane %v3328, 7
        %v3331 = vshll.u32 %v3258, 16
        %v3333 = vor.u32 %v3330, %v3331
        %v3334 = vsel %vm483, %v3326, %v3333
        %v3335 = vrot.slane %v3330, 4
        %v3337 = vshrl.u32 %v3259, 16
        %v3339 = vrot.slane %v3337, 7
        %v3340 = vshll.u32 %v3259, 16
        %v3342 = vor.u32 %v3339, %v3340
        %v3343 = vrot.slane %v3339, 4
        %v3345 = vshrl.u32 %v3260, 16
        %v3347 = vrot.slane %v3345, 7
        %v3348 = vshll.u32 %v3260, 16
        %v3350 = vor.u32 %v3347, %v3348
        %v3351 = vsel %vm483, %v3343, %v3350
        %v3352 = vrot.slane %v3347, 4
        %v3354 = vshrl.u32 %v3261, 16
        %v3356 = vrot.slane %v3354, 7
        %v3357 = vshll.u32 %v3261, 16
        %v3359 = vor.u32 %v3356, %v3357
        %v3360 = vrot.slane %v3356, 4
        %v3362 = vshrl.u32 %v3262, 16
        %v3364 = vrot.slane %v3362, 7
        %v3365 = vshll.u32 %v3262, 16
        %v3367 = vor.u32 %v3364, %v3365
        %v3368 = vsel %vm483, %v3360, %v3367
        %v3369 = vrot.slane %v3364, 4
        %v3371 = vshrl.u32 %v3263, 16
        %v3373 = vrot.slane %v3371, 7
        %v3374 = vshll.u32 %v3263, 16
        %v3376 = vor.u32 %v3373, %v3374
        %v3377 = vrot.slane %v3373, 4
        %v3379 = vshrl.u32 %v3264, 16
        %v3381 = vrot.slane %v3379, 7
        %v3382 = vshll.u32 %v3264, 16
        %v3384 = vor.u32 %v3381, %v3382
        %v3385 = vsel %vm483, %v3377, %v3384
        %v3386 = vrot.slane %v3381, 4
        %v3388 = vshrl.u32 %v3265, 16
        %v3390 = vrot.slane %v3388, 7
        %v3391 = vshll.u32 %v3265, 16
        %v3393 = vor.u32 %v3390, %v3391
        %v3394 = vrot.slane %v3390, 4
        %v3396 = vshrl.u32 %v3266, 16
        %v3398 = vrot.slane %v3396, 7
        %v3399 = vshll.u32 %v3266, 16
        %v3401 = vor.u32 %v3398, %v3399
        %v3402 = vsel %vm483, %v3394, %v3401
        %v3403 = vrot.slane %v3398, 4
        %v3405 = vshrl.u32 %v3267, 16
        %v3407 = vrot.slane %v3405, 7
        %v3408 = vshll.u32 %v3267, 16
        %v3410 = vor.u32 %v3407, %v3408
        %v3411 = vrot.slane %v3407, 4
        %v3413 = vshrl.u32 %v3268, 16
        %v3415 = vrot.slane %v3413, 7
        %v3416 = vshll.u32 %v3268, 16
        %v3418 = vor.u32 %v3415, %v3416
        %v3419 = vsel %vm483, %v3411, %v3418
        %v3420 = vrot.slane %v3415, 4
        %v3422 = vshrl.u32 %v3269, 16
        %v3424 = vrot.slane %v3422, 7
        %v3425 = vshll.u32 %v3269, 16
        %v3427 = vor.u32 %v3424, %v3425
        %v3428 = vrot.slane %v3424, 4
        %v3430 = vshrl.u32 %v3270, 16
        %v3432 = vrot.slane %v3430, 7
        %v3433 = vshll.u32 %v3270, 16
        %v3435 = vor.u32 %v3432, %v3433
        %v3436 = vsel %vm483, %v3428, %v3435
        %v3437 = vrot.slane %v3432, 4
        %v3439 = vshrl.u32 %v3271, 16
        %v3441 = vrot.slane %v3439, 7
        %v3442 = vshll.u32 %v3271, 16
        %v3444 = vor.u32 %v3441, %v3442
        %v3445 = vrot.slane %v3441, 4
        %v3447 = vshrl.u32 %v3272, 16
        %v3449 = vrot.slane %v3447, 7
        %v3450 = vshll.u32 %v3272, 16
        %v3452 = vor.u32 %v3449, %v3450
        %v3453 = vsel %vm483, %v3445, %v3452
        %v3454 = vrot.slane %v3449, 4
        %v3456 = vshrl.u32 %v3273, 16
        %v3458 = vrot.slane %v3456, 7
        %v3459 = vshll.u32 %v3273, 16
        %v3461 = vor.u32 %v3458, %v3459
        %v3462 = vrot.slane %v3458, 4
        %v3464 = vshrl.u32 %v3274, 16
        %v3466 = vrot.slane %v3464, 7
        %v3467 = vshll.u32 %v3274, 16
        %v3469 = vor.u32 %v3466, %v3467
        %v3470 = vsel %vm483, %v3462, %v3469
        %v3471 = vrot.slane %v3466, 4
        %v3473 = vshrl.u32 %v3275, 16
        %v3475 = vrot.slane %v3473, 7
        %v3476 = vshll.u32 %v3275, 16
        %v3478 = vor.u32 %v3475, %v3476
        %v3479 = vrot.slane %v3475, 4
        %v3481 = vshrl.u32 %v3276, 16
        %v3483 = vrot.slane %v3481, 7
        %v3484 = vshll.u32 %v3276, 16
        %v3486 = vor.u32 %v3483, %v3484
        %v3487 = vsel %vm483, %v3479, %v3486
        %v3488 = vrot.slane %v3483, 4
        %v3490 = vshrl.u32 %v3277, 16
        %v3492 = vrot.slane %v3490, 7
        %v3493 = vshll.u32 %v3277, 16
        %v3495 = vor.u32 %v3492, %v3493
        %v3496 = vrot.slane %v3492, 4
        %v3498 = vshrl.u32 %v3278, 16
        %v3500 = vrot.slane %v3498, 7
        %v3501 = vshll.u32 %v3278, 16
        %v3503 = vor.u32 %v3500, %v3501
        %v3504 = vsel %vm483, %v3496, %v3503
        %v3505 = vrot.slane %v3500, 4
        %v3507 = vshrl.u32 %v3279, 16
        %v3509 = vrot.slane %v3507, 7
        %v3510 = vshll.u32 %v3279, 16
        %v3512 = vor.u32 %v3509, %v3510
        %v3513 = vrot.slane %v3509, 4
        %v3515 = vshrl.u32 %v3280, 16
        %v3517 = vrot.slane %v3515, 7
        %v3518 = vshll.u32 %v3280, 16
        %v3520 = vor.u32 %v3517, %v3518
        %v3521 = vsel %vm483, %v3513, %v3520
        %v3522 = vrot.slane %v3517, 4
        %v3524 = vshrl.u32 %v3281, 16
        %v3526 = vrot.slane %v3524, 7
        %v3527 = vshll.u32 %v3281, 16
        %v3529 = vor.u32 %v3526, %v3527
        %v3530 = vrot.slane %v3526, 4
        %v3532 = vshrl.u32 %v3282, 16
        %v3534 = vrot.slane %v3532, 7
        %v3535 = vshll.u32 %v3282, 16
        %v3537 = vor.u32 %v3534, %v3535
        %v3538 = vsel %vm483, %v3530, %v3537
        %v3539 = vrot.slane %v3534, 4
        %v3541 = vshrl.u32 %v3283, 16
        %v3543 = vrot.slane %v3541, 7
        %v3544 = vshll.u32 %v3283, 16
        %v3546 = vor.u32 %v3543, %v3544
        %v3547 = vrot.slane %v3543, 4
        %v3549 = vshrl.u32 %v3284, 16
        %v3551 = vrot.slane %v3549, 7
        %v3552 = vshll.u32 %v3284, 16
        %v3554 = vor.u32 %v3551, %v3552
        %v3555 = vsel %vm483, %v3547, %v3554
        %v3556 = vrot.slane %v3551, 4
        %v3605 = vld [vmem:[%s804] sm:$0xf]
        %v3606 = vsel %vm806, %v3291, %v3605
        %3607 = vst [vmem:[%s804] sm:$0xf] %v3606
        %3608 = vst [vmem:[%s804 + $0x4] sm:$0xf] %v3300
        %v3609 = vld [vmem:[%s804 + $0x8] sm:$0x1]
        %v3610 = vsel %vm241, %v3301, %v3609
        %3611 = vst [vmem:[%s804 + $0x8] sm:$0x1] %v3610
        %v3612 = vld [vmem:[%s804 + $0xc] sm:$0xf]
        %v3613 = vsel %vm806, %v3308, %v3612
        %3614 = vst [vmem:[%s804 + $0xc] sm:$0xf] %v3613
        %3615 = vst [vmem:[%s804 + $0x10] sm:$0xf] %v3317
        %v3616 = vld [vmem:[%s804 + $0x14] sm:$0x1]
        %v3617 = vsel %vm241, %v3318, %v3616
        %3618 = vst [vmem:[%s804 + $0x14] sm:$0x1] %v3617
        %v3619 = vld [vmem:[%s804 + $0x18] sm:$0xf]
        %v3620 = vsel %vm806, %v3325, %v3619
        %3621 = vst [vmem:[%s804 + $0x18] sm:$0xf] %v3620
        %3622 = vst [vmem:[%s804 + $0x1c] sm:$0xf] %v3334
        %v3623 = vld [vmem:[%s804 + $0x20] sm:$0x1]
        %v3624 = vsel %vm241, %v3335, %v3623
        %3625 = vst [vmem:[%s804 + $0x20] sm:$0x1] %v3624
        %v3626 = vld [vmem:[%s804 + $0x24] sm:$0xf]
        %v3627 = vsel %vm806, %v3342, %v3626
        %3628 = vst [vmem:[%s804 + $0x24] sm:$0xf] %v3627
        %3629 = vst [vmem:[%s804 + $0x28] sm:$0xf] %v3351
        %v3630 = vld [vmem:[%s804 + $0x2c] sm:$0x1]
        %v3631 = vsel %vm241, %v3352, %v3630
        %3632 = vst [vmem:[%s804 + $0x2c] sm:$0x1] %v3631
        %v3633 = vld [vmem:[%s804 + $0x30] sm:$0xf]
        %v3634 = vsel %vm806, %v3359, %v3633
        %3635 = vst [vmem:[%s804 + $0x30] sm:$0xf] %v3634
        %3636 = vst [vmem:[%s804 + $0x34] sm:$0xf] %v3368
        %v3637 = vld [vmem:[%s804 + $0x38] sm:$0x1]
        %v3638 = vsel %vm241, %v3369, %v3637
        %3639 = vst [vmem:[%s804 + $0x38] sm:$0x1] %v3638
        %v3640 = vld [vmem:[%s804 + $0x3c] sm:$0xf]
        %v3641 = vsel %vm806, %v3376, %v3640
        %3642 = vst [vmem:[%s804 + $0x3c] sm:$0xf] %v3641
        %3643 = vst [vmem:[%s804 + $0x40] sm:$0xf] %v3385
        %v3644 = vld [vmem:[%s804 + $0x44] sm:$0x1]
        %v3645 = vsel %vm241, %v3386, %v3644
        %3646 = vst [vmem:[%s804 + $0x44] sm:$0x1] %v3645
        %v3647 = vld [vmem:[%s804 + $0x48] sm:$0xf]
        %v3648 = vsel %vm806, %v3393, %v3647
        %3649 = vst [vmem:[%s804 + $0x48] sm:$0xf] %v3648
        %3650 = vst [vmem:[%s804 + $0x4c] sm:$0xf] %v3402
        %v3651 = vld [vmem:[%s804 + $0x50] sm:$0x1]
        %v3652 = vsel %vm241, %v3403, %v3651
        %3653 = vst [vmem:[%s804 + $0x50] sm:$0x1] %v3652
        %v3654 = vld [vmem:[%s804 + $0x54] sm:$0xf]
        %v3655 = vsel %vm806, %v3410, %v3654
        %3656 = vst [vmem:[%s804 + $0x54] sm:$0xf] %v3655
        %3657 = vst [vmem:[%s804 + $0x58] sm:$0xf] %v3419
        %v3658 = vld [vmem:[%s804 + $0x5c] sm:$0x1]
        %v3659 = vsel %vm241, %v3420, %v3658
        %3660 = vst [vmem:[%s804 + $0x5c] sm:$0x1] %v3659
        %v3661 = vld [vmem:[%s804 + $0x60] sm:$0xf]
        %v3662 = vsel %vm806, %v3427, %v3661
        %3663 = vst [vmem:[%s804 + $0x60] sm:$0xf] %v3662
        %3664 = vst [vmem:[%s804 + $0x64] sm:$0xf] %v3436
        %v3665 = vld [vmem:[%s804 + $0x68] sm:$0x1]
        %v3666 = vsel %vm241, %v3437, %v3665
        %3667 = vst [vmem:[%s804 + $0x68] sm:$0x1] %v3666
        %v3668 = vld [vmem:[%s804 + $0x6c] sm:$0xf]
        %v3669 = vsel %vm806, %v3444, %v3668
        %3670 = vst [vmem:[%s804 + $0x6c] sm:$0xf] %v3669
        %3671 = vst [vmem:[%s804 + $0x70] sm:$0xf] %v3453
        %v3672 = vld [vmem:[%s804 + $0x74] sm:$0x1]
        %v3673 = vsel %vm241, %v3454, %v3672
        %3674 = vst [vmem:[%s804 + $0x74] sm:$0x1] %v3673
        %v3675 = vld [vmem:[%s804 + $0x78] sm:$0xf]
        %v3676 = vsel %vm806, %v3461, %v3675
        %3677 = vst [vmem:[%s804 + $0x78] sm:$0xf] %v3676
        %3678 = vst [vmem:[%s804 + $0x7c] sm:$0xf] %v3470
        %v3679 = vld [vmem:[%s804 + $0x80] sm:$0x1]
        %v3680 = vsel %vm241, %v3471, %v3679
        %3681 = vst [vmem:[%s804 + $0x80] sm:$0x1] %v3680
        %v3682 = vld [vmem:[%s804 + $0x84] sm:$0xf]
        %v3683 = vsel %vm806, %v3478, %v3682
        %3684 = vst [vmem:[%s804 + $0x84] sm:$0xf] %v3683
        %3685 = vst [vmem:[%s804 + $0x88] sm:$0xf] %v3487
        %v3686 = vld [vmem:[%s804 + $0x8c] sm:$0x1]
        %v3687 = vsel %vm241, %v3488, %v3686
        %3688 = vst [vmem:[%s804 + $0x8c] sm:$0x1] %v3687
        %v3689 = vld [vmem:[%s804 + $0x90] sm:$0xf]
        %v3690 = vsel %vm806, %v3495, %v3689
        %3691 = vst [vmem:[%s804 + $0x90] sm:$0xf] %v3690
        %3692 = vst [vmem:[%s804 + $0x94] sm:$0xf] %v3504
        %v3693 = vld [vmem:[%s804 + $0x98] sm:$0x1]
        %v3694 = vsel %vm241, %v3505, %v3693
        %3695 = vst [vmem:[%s804 + $0x98] sm:$0x1] %v3694
        %v3696 = vld [vmem:[%s804 + $0x9c] sm:$0xf]
        %v3697 = vsel %vm806, %v3512, %v3696
        %3698 = vst [vmem:[%s804 + $0x9c] sm:$0xf] %v3697
        %3699 = vst [vmem:[%s804 + $0xa0] sm:$0xf] %v3521
        %v3700 = vld [vmem:[%s804 + $0xa4] sm:$0x1]
        %v3701 = vsel %vm241, %v3522, %v3700
        %3702 = vst [vmem:[%s804 + $0xa4] sm:$0x1] %v3701
        %v3703 = vld [vmem:[%s804 + $0xa8] sm:$0xf]
        %v3704 = vsel %vm806, %v3529, %v3703
        %3705 = vst [vmem:[%s804 + $0xa8] sm:$0xf] %v3704
        %3706 = vst [vmem:[%s804 + $0xac] sm:$0xf] %v3538
        %v3707 = vld [vmem:[%s804 + $0xb0] sm:$0x1]
        %v3708 = vsel %vm241, %v3539, %v3707
        %3709 = vst [vmem:[%s804 + $0xb0] sm:$0x1] %v3708
        %v3710 = vld [vmem:[%s804 + $0xb4] sm:$0xf]
        %v3711 = vsel %vm806, %v3546, %v3710
        %3712 = vst [vmem:[%s804 + $0xb4] sm:$0xf] %v3711
        %3713 = vst [vmem:[%s804 + $0xb8] sm:$0xf] %v3555
        %v3714 = vld [vmem:[%s804 + $0xbc] sm:$0x1]
        %v3715 = vsel %vm241, %v3556, %v3714
        %3716 = vst [vmem:[%s804 + $0xbc] sm:$0x1] %v3715
        %v3717 = vld [vmem:[#allocation2] sm:$0xf]
        %v3718 = vld [vmem:[#allocation2 + $0x4] sm:$0xf]
        %v3719 = vld [vmem:[#allocation2 + $0x8] sm:$0x1]
        %v3720 = vld [vmem:[#allocation2 + $0xc] sm:$0xf]
        %v3721 = vld [vmem:[#allocation2 + $0x10] sm:$0xf]
        %v3722 = vld [vmem:[#allocation2 + $0x14] sm:$0x1]
        %v3723 = vld [vmem:[#allocation2 + $0x18] sm:$0xf]
        %v3724 = vld [vmem:[#allocation2 + $0x1c] sm:$0xf]
        %v3725 = vld [vmem:[#allocation2 + $0x20] sm:$0x1]
        %v3726 = vld [vmem:[#allocation2 + $0x24] sm:$0xf]
        %v3727 = vld [vmem:[#allocation2 + $0x28] sm:$0xf]
        %v3728 = vld [vmem:[#allocation2 + $0x2c] sm:$0x1]
        %v3729 = vld [vmem:[#allocation2 + $0x30] sm:$0xf]
        %v3730 = vld [vmem:[#allocation2 + $0x34] sm:$0xf]
        %v3731 = vld [vmem:[#allocation2 + $0x38] sm:$0x1]
        %v3732 = vld [vmem:[#allocation2 + $0x3c] sm:$0xf]
        %v3733 = vld [vmem:[#allocation2 + $0x40] sm:$0xf]
        %v3734 = vld [vmem:[#allocation2 + $0x44] sm:$0x1]
        %v3735 = vld [vmem:[#allocation2 + $0x48] sm:$0xf]
        %v3736 = vld [vmem:[#allocation2 + $0x4c] sm:$0xf]
        %v3737 = vld [vmem:[#allocation2 + $0x50] sm:$0x1]
        %v3738 = vld [vmem:[#allocation2 + $0x54] sm:$0xf]
        %v3739 = vld [vmem:[#allocation2 + $0x58] sm:$0xf]
        %v3740 = vld [vmem:[#allocation2 + $0x5c] sm:$0x1]
        %v3741 = vld [vmem:[#allocation2 + $0x60] sm:$0xf]
        %v3742 = vld [vmem:[#allocation2 + $0x64] sm:$0xf]
        %v3743 = vld [vmem:[#allocation2 + $0x68] sm:$0x1]
        %v3744 = vld [vmem:[#allocation2 + $0x6c] sm:$0xf]
        %v3745 = vld [vmem:[#allocation2 + $0x70] sm:$0xf]
        %v3746 = vld [vmem:[#allocation2 + $0x74] sm:$0x1]
        %v3747 = vld [vmem:[#allocation2 + $0x78] sm:$0xf]
        %v3748 = vld [vmem:[#allocation2 + $0x7c] sm:$0xf]
        %v3749 = vld [vmem:[#allocation2 + $0x80] sm:$0x1]
        %v3750 = vld [vmem:[#allocation2 + $0x84] sm:$0xf]
        %v3751 = vld [vmem:[#allocation2 + $0x88] sm:$0xf]
        %v3752 = vld [vmem:[#allocation2 + $0x8c] sm:$0x1]
        %v3753 = vld [vmem:[#allocation2 + $0x90] sm:$0xf]
        %v3754 = vld [vmem:[#allocation2 + $0x94] sm:$0xf]
        %v3755 = vld [vmem:[#allocation2 + $0x98] sm:$0x1]
        %v3756 = vld [vmem:[#allocation2 + $0x9c] sm:$0xf]
        %v3757 = vld [vmem:[#allocation2 + $0xa0] sm:$0xf]
        %v3758 = vld [vmem:[#allocation2 + $0xa4] sm:$0x1]
        %v3759 = vld [vmem:[#allocation2 + $0xa8] sm:$0xf]
        %v3760 = vld [vmem:[#allocation2 + $0xac] sm:$0xf]
        %v3761 = vld [vmem:[#allocation2 + $0xb0] sm:$0x1]
        %v3762 = vld [vmem:[#allocation2 + $0xb4] sm:$0xf]
        %v3763 = vld [vmem:[#allocation2 + $0xb8] sm:$0xf]
        %v3764 = vld [vmem:[#allocation2 + $0xbc] sm:$0x1]
        %v3765 = vld [vmem:[#allocation2 + $0xc0] sm:$0xf]
        %v3766 = vld [vmem:[#allocation2 + $0xc4] sm:$0xf]
        %v3767 = vld [vmem:[#allocation2 + $0xc8] sm:$0x1]
        %v3768 = vld [vmem:[#allocation2 + $0xcc] sm:$0xf]
        %v3769 = vld [vmem:[#allocation2 + $0xd0] sm:$0xf]
        %v3770 = vld [vmem:[#allocation2 + $0xd4] sm:$0x1]
        %v3807 = vunpack.c.l.b16 %v3717
        %v3808 = vunpack.c.l.b16 %v3718
        %v3809 = vunpack.c.l.b16 %v3720
        %v3810 = vunpack.c.l.b16 %v3721
        %v3811 = vunpack.c.l.b16 %v3723
        %v3812 = vunpack.c.l.b16 %v3724
        %v3813 = vunpack.c.l.b16 %v3726
        %v3814 = vunpack.c.l.b16 %v3727
        %v3815 = vunpack.c.l.b16 %v3729
        %v3816 = vunpack.c.l.b16 %v3730
        %v3817 = vunpack.c.l.b16 %v3732
        %v3818 = vunpack.c.l.b16 %v3733
        %v3819 = vunpack.c.l.b16 %v3735
        %v3820 = vunpack.c.l.b16 %v3736
        %v3821 = vunpack.c.l.b16 %v3738
        %v3822 = vunpack.c.l.b16 %v3739
        %v3823 = vunpack.c.l.b16 %v3741
        %v3824 = vunpack.c.l.b16 %v3742
        %v3825 = vunpack.c.l.b16 %v3744
        %v3826 = vunpack.c.l.b16 %v3745
        %v3827 = vunpack.c.l.b16 %v3747
        %v3828 = vunpack.c.l.b16 %v3748
        %v3829 = vunpack.c.l.b16 %v3750
        %v3830 = vunpack.c.l.b16 %v3751
        %v3831 = vunpack.c.l.b16 %v3753
        %v3832 = vunpack.c.l.b16 %v3754
        %v3833 = vunpack.c.l.b16 %v3756
        %v3834 = vunpack.c.l.b16 %v3757
        %v3835 = vunpack.c.l.b16 %v3759
        %v3836 = vunpack.c.l.b16 %v3760
        %v3837 = vunpack.c.l.b16 %v3762
        %v3838 = vunpack.c.l.b16 %v3763
        %v3839 = vunpack.c.l.b16 %v3765
        %v3840 = vunpack.c.l.b16 %v3766
        %v3841 = vunpack.c.l.b16 %v3768
        %v3842 = vunpack.c.l.b16 %v3769
        %v3843 = vpack.c.b16 %v3808, %v3807
        %v3844 = vpack.c.b16 %v3810, %v3809
        %v3845 = vpack.c.b16 %v3812, %v3811
        %v3846 = vpack.c.b16 %v3814, %v3813
        %v3847 = vpack.c.b16 %v3816, %v3815
        %v3848 = vpack.c.b16 %v3818, %v3817
        %v3849 = vpack.c.b16 %v3820, %v3819
        %v3850 = vpack.c.b16 %v3822, %v3821
        %v3851 = vpack.c.b16 %v3824, %v3823
        %v3852 = vpack.c.b16 %v3826, %v3825
        %v3853 = vpack.c.b16 %v3828, %v3827
        %v3854 = vpack.c.b16 %v3830, %v3829
        %v3855 = vpack.c.b16 %v3832, %v3831
        %v3856 = vpack.c.b16 %v3834, %v3833
        %v3857 = vpack.c.b16 %v3836, %v3835
        %v3858 = vpack.c.b16 %v3838, %v3837
        %v3859 = vpack.c.b16 %v3840, %v3839
        %v3860 = vpack.c.b16 %v3842, %v3841
        %v3897 = vunpack.c.l.b16 %v3719
        %v3898 = vunpack.c.l.b16 %v3722
        %v3899 = vunpack.c.l.b16 %v3725
        %v3900 = vunpack.c.l.b16 %v3728
        %v3901 = vunpack.c.l.b16 %v3731
        %v3902 = vunpack.c.l.b16 %v3734
        %v3903 = vunpack.c.l.b16 %v3737
        %v3904 = vunpack.c.l.b16 %v3740
        %v3905 = vunpack.c.l.b16 %v3743
        %v3906 = vunpack.c.l.b16 %v3746
        %v3907 = vunpack.c.l.b16 %v3749
        %v3908 = vunpack.c.l.b16 %v3752
        %v3909 = vunpack.c.l.b16 %v3755
        %v3910 = vunpack.c.l.b16 %v3758
        %v3911 = vunpack.c.l.b16 %v3761
        %v3912 = vunpack.c.l.b16 %v3764
        %v3913 = vunpack.c.l.b16 %v3767
        %v3914 = vunpack.c.l.b16 %v3770
        %v3915 = vpack.c.b16 %v3897, %v3897
        %v3916 = vpack.c.b16 %v3898, %v3898
        %v3917 = vpack.c.b16 %v3899, %v3899
        %v3918 = vpack.c.b16 %v3900, %v3900
        %v3919 = vpack.c.b16 %v3901, %v3901
        %v3920 = vpack.c.b16 %v3902, %v3902
        %v3921 = vpack.c.b16 %v3903, %v3903
        %v3922 = vpack.c.b16 %v3904, %v3904
        %v3923 = vpack.c.b16 %v3905, %v3905
        %v3924 = vpack.c.b16 %v3906, %v3906
        %v3925 = vpack.c.b16 %v3907, %v3907
        %v3926 = vpack.c.b16 %v3908, %v3908
        %v3927 = vpack.c.b16 %v3909, %v3909
        %v3928 = vpack.c.b16 %v3910, %v3910
        %v3929 = vpack.c.b16 %v3911, %v3911
        %v3930 = vpack.c.b16 %v3912, %v3912
        %v3931 = vpack.c.b16 %v3913, %v3913
        %v3932 = vpack.c.b16 %v3914, %v3914
        %v3934 = vshrl.u32 %v3843, 16
        %v3936 = vshll.u32 %v3843, 16
        %v3938 = vrot.slane %v3936, 1
        %v3939 = vor.u32 %v3934, %v3938
        %v3941 = vshll.u32 %v3915, 16
        %v3943 = vrot.slane %v3941, 1
        %v3944 = vsel %vm1135, %v3939, %v3943
        %v3946 = vshrl.u32 %v3844, 16
        %v3948 = vshll.u32 %v3844, 16
        %v3950 = vrot.slane %v3948, 1
        %v3951 = vor.u32 %v3946, %v3950
        %v3953 = vshll.u32 %v3916, 16
        %v3955 = vrot.slane %v3953, 1
        %v3956 = vsel %vm1135, %v3951, %v3955
        %v3958 = vshrl.u32 %v3845, 16
        %v3960 = vshll.u32 %v3845, 16
        %v3962 = vrot.slane %v3960, 1
        %v3963 = vor.u32 %v3958, %v3962
        %v3965 = vshll.u32 %v3917, 16
        %v3967 = vrot.slane %v3965, 1
        %v3968 = vsel %vm1135, %v3963, %v3967
        %v3970 = vshrl.u32 %v3846, 16
        %v3972 = vshll.u32 %v3846, 16
        %v3974 = vrot.slane %v3972, 1
        %v3975 = vor.u32 %v3970, %v3974
        %v3977 = vshll.u32 %v3918, 16
        %v3979 = vrot.slane %v3977, 1
        %v3980 = vsel %vm1135, %v3975, %v3979
        %v3982 = vshrl.u32 %v3847, 16
        %v3984 = vshll.u32 %v3847, 16
        %v3986 = vrot.slane %v3984, 1
        %v3987 = vor.u32 %v3982, %v3986
        %v3989 = vshll.u32 %v3919, 16
        %v3991 = vrot.slane %v3989, 1
        %v3992 = vsel %vm1135, %v3987, %v3991
        %v3994 = vshrl.u32 %v3848, 16
        %v3996 = vshll.u32 %v3848, 16
        %v3998 = vrot.slane %v3996, 1
        %v3999 = vor.u32 %v3994, %v3998
        %v4001 = vshll.u32 %v3920, 16
        %v4003 = vrot.slane %v4001, 1
        %v4004 = vsel %vm1135, %v3999, %v4003
        %v4006 = vshrl.u32 %v3849, 16
        %v4008 = vshll.u32 %v3849, 16
        %v4010 = vrot.slane %v4008, 1
        %v4011 = vor.u32 %v4006, %v4010
        %v4013 = vshll.u32 %v3921, 16
        %v4015 = vrot.slane %v4013, 1
        %v4016 = vsel %vm1135, %v4011, %v4015
        %v4018 = vshrl.u32 %v3850, 16
        %v4020 = vshll.u32 %v3850, 16
        %v4022 = vrot.slane %v4020, 1
        %v4023 = vor.u32 %v4018, %v4022
        %v4025 = vshll.u32 %v3922, 16
        %v4027 = vrot.slane %v4025, 1
        %v4028 = vsel %vm1135, %v4023, %v4027
        %v4030 = vshrl.u32 %v3851, 16
        %v4032 = vshll.u32 %v3851, 16
        %v4034 = vrot.slane %v4032, 1
        %v4035 = vor.u32 %v4030, %v4034
        %v4037 = vshll.u32 %v3923, 16
        %v4039 = vrot.slane %v4037, 1
        %v4040 = vsel %vm1135, %v4035, %v4039
        %v4042 = vshrl.u32 %v3852, 16
        %v4044 = vshll.u32 %v3852, 16
        %v4046 = vrot.slane %v4044, 1
        %v4047 = vor.u32 %v4042, %v4046
        %v4049 = vshll.u32 %v3924, 16
        %v4051 = vrot.slane %v4049, 1
        %v4052 = vsel %vm1135, %v4047, %v4051
        %v4054 = vshrl.u32 %v3853, 16
        %v4056 = vshll.u32 %v3853, 16
        %v4058 = vrot.slane %v4056, 1
        %v4059 = vor.u32 %v4054, %v4058
        %v4061 = vshll.u32 %v3925, 16
        %v4063 = vrot.slane %v4061, 1
        %v4064 = vsel %vm1135, %v4059, %v4063
        %v4066 = vshrl.u32 %v3854, 16
        %v4068 = vshll.u32 %v3854, 16
        %v4070 = vrot.slane %v4068, 1
        %v4071 = vor.u32 %v4066, %v4070
        %v4073 = vshll.u32 %v3926, 16
        %v4075 = vrot.slane %v4073, 1
        %v4076 = vsel %vm1135, %v4071, %v4075
        %v4078 = vshrl.u32 %v3855, 16
        %v4080 = vshll.u32 %v3855, 16
        %v4082 = vrot.slane %v4080, 1
        %v4083 = vor.u32 %v4078, %v4082
        %v4085 = vshll.u32 %v3927, 16
        %v4087 = vrot.slane %v4085, 1
        %v4088 = vsel %vm1135, %v4083, %v4087
        %v4090 = vshrl.u32 %v3856, 16
        %v4092 = vshll.u32 %v3856, 16
        %v4094 = vrot.slane %v4092, 1
        %v4095 = vor.u32 %v4090, %v4094
        %v4097 = vshll.u32 %v3928, 16
        %v4099 = vrot.slane %v4097, 1
        %v4100 = vsel %vm1135, %v4095, %v4099
        %v4102 = vshrl.u32 %v3857, 16
        %v4104 = vshll.u32 %v3857, 16
        %v4106 = vrot.slane %v4104, 1
        %v4107 = vor.u32 %v4102, %v4106
        %v4109 = vshll.u32 %v3929, 16
        %v4111 = vrot.slane %v4109, 1
        %v4112 = vsel %vm1135, %v4107, %v4111
        %v4114 = vshrl.u32 %v3858, 16
        %v4116 = vshll.u32 %v3858, 16
        %v4118 = vrot.slane %v4116, 1
        %v4119 = vor.u32 %v4114, %v4118
        %v4121 = vshll.u32 %v3930, 16
        %v4123 = vrot.slane %v4121, 1
        %v4124 = vsel %vm1135, %v4119, %v4123
        %v4126 = vshrl.u32 %v3859, 16
        %v4128 = vshll.u32 %v3859, 16
        %v4130 = vrot.slane %v4128, 1
        %v4131 = vor.u32 %v4126, %v4130
        %v4133 = vshll.u32 %v3931, 16
        %v4135 = vrot.slane %v4133, 1
        %v4136 = vsel %vm1135, %v4131, %v4135
        %v4138 = vshrl.u32 %v3860, 16
        %v4140 = vshll.u32 %v3860, 16
        %v4142 = vrot.slane %v4140, 1
        %v4143 = vor.u32 %v4138, %v4142
        %v4145 = vshll.u32 %v3932, 16
        %v4147 = vrot.slane %v4145, 1
        %v4148 = vsel %vm1135, %v4143, %v4147
        %v4167 = vrot.slane %v3843, 1
        %v4168 = vrot.slane %v3915, 1
        %v4169 = vsel %vm1370, %v4167, %v4168
        %v4170 = vrot.slane %v3844, 1
        %v4171 = vrot.slane %v3916, 1
        %v4172 = vsel %vm1370, %v4170, %v4171
        %v4173 = vrot.slane %v3845, 1
        %v4174 = vrot.slane %v3917, 1
        %v4175 = vsel %vm1370, %v4173, %v4174
        %v4176 = vrot.slane %v3846, 1
        %v4177 = vrot.slane %v3918, 1
        %v4178 = vsel %vm1370, %v4176, %v4177
        %v4179 = vrot.slane %v3847, 1
        %v4180 = vrot.slane %v3919, 1
        %v4181 = vsel %vm1370, %v4179, %v4180
        %v4182 = vrot.slane %v3848, 1
        %v4183 = vrot.slane %v3920, 1
        %v4184 = vsel %vm1370, %v4182, %v4183
        %v4185 = vrot.slane %v3849, 1
        %v4186 = vrot.slane %v3921, 1
        %v4187 = vsel %vm1370, %v4185, %v4186
        %v4188 = vrot.slane %v3850, 1
        %v4189 = vrot.slane %v3922, 1
        %v4190 = vsel %vm1370, %v4188, %v4189
        %v4191 = vrot.slane %v3851, 1
        %v4192 = vrot.slane %v3923, 1
        %v4193 = vsel %vm1370, %v4191, %v4192
        %v4194 = vrot.slane %v3852, 1
        %v4195 = vrot.slane %v3924, 1
        %v4196 = vsel %vm1370, %v4194, %v4195
        %v4197 = vrot.slane %v3853, 1
        %v4198 = vrot.slane %v3925, 1
        %v4199 = vsel %vm1370, %v4197, %v4198
        %v4200 = vrot.slane %v3854, 1
        %v4201 = vrot.slane %v3926, 1
        %v4202 = vsel %vm1370, %v4200, %v4201
        %v4203 = vrot.slane %v3855, 1
        %v4204 = vrot.slane %v3927, 1
        %v4205 = vsel %vm1370, %v4203, %v4204
        %v4206 = vrot.slane %v3856, 1
        %v4207 = vrot.slane %v3928, 1
        %v4208 = vsel %vm1370, %v4206, %v4207
        %v4209 = vrot.slane %v3857, 1
        %v4210 = vrot.slane %v3929, 1
        %v4211 = vsel %vm1370, %v4209, %v4210
        %v4212 = vrot.slane %v3858, 1
        %v4213 = vrot.slane %v3930, 1
        %v4214 = vsel %vm1370, %v4212, %v4213
        %v4215 = vrot.slane %v3859, 1
        %v4216 = vrot.slane %v3931, 1
        %v4217 = vsel %vm1370, %v4215, %v4216
        %v4218 = vrot.slane %v3860, 1
        %v4219 = vrot.slane %v3932, 1
        %v4220 = vsel %vm1370, %v4218, %v4219
        %v4239 = vld [vmem:[#allocation6] sm:$0xf]
        %v4240 = vld [vmem:[#allocation6 + $0x4] sm:$0xf]
        %v4241 = vld [vmem:[#allocation6 + $0x8] sm:$0xf]
        %v4242 = vld [vmem:[#allocation6 + $0xc] sm:$0xf]
        %v4243 = vld [vmem:[#allocation6 + $0x10] sm:$0xf]
        %v4244 = vld [vmem:[#allocation6 + $0x14] sm:$0xf]
        %v4245 = vld [vmem:[#allocation6 + $0x18] sm:$0xf]
        %v4246 = vld [vmem:[#allocation6 + $0x1c] sm:$0xf]
        %v4247 = vld [vmem:[#allocation6 + $0x20] sm:$0xf]
        %v4248 = vld [vmem:[#allocation6 + $0x24] sm:$0xf]
        %v4249 = vld [vmem:[#allocation6 + $0x28] sm:$0xf]
        %v4250 = vld [vmem:[#allocation6 + $0x2c] sm:$0xf]
        %v4251 = vld [vmem:[#allocation6 + $0x30] sm:$0xf]
        %v4252 = vld [vmem:[#allocation6 + $0x34] sm:$0xf]
        %v4253 = vld [vmem:[#allocation6 + $0x38] sm:$0xf]
        %v4254 = vld [vmem:[#allocation6 + $0x3c] sm:$0xf]
        %v4255 = vld [vmem:[#allocation6 + $0x40] sm:$0xf]
        %v4256 = vld [vmem:[#allocation6 + $0x44] sm:$0xf]
        %v4257 = vld [vmem:[#allocation6 + $0x48] sm:$0xf]
        %v4258 = vld [vmem:[#allocation6 + $0x4c] sm:$0xf]
        %v4259 = vld [vmem:[#allocation6 + $0x50] sm:$0xf]
        %v4260 = vld [vmem:[#allocation6 + $0x54] sm:$0xf]
        %v4261 = vld [vmem:[#allocation6 + $0x58] sm:$0xf]
        %v4262 = vld [vmem:[#allocation6 + $0x5c] sm:$0xf]
        %v4263 = vld [vmem:[#allocation6 + $0x60] sm:$0xf]
        %v4264 = vld [vmem:[#allocation6 + $0x64] sm:$0xf]
        %v4265 = vld [vmem:[#allocation6 + $0x68] sm:$0xf]
        %v4266 = vld [vmem:[#allocation6 + $0x6c] sm:$0xf]
        %v4267 = vld [vmem:[#allocation6 + $0x70] sm:$0xf]
        %v4268 = vld [vmem:[#allocation6 + $0x74] sm:$0xf]
        %v4269 = vld [vmem:[#allocation6 + $0x78] sm:$0xf]
        %v4270 = vld [vmem:[#allocation6 + $0x7c] sm:$0xf]
        %v4271 = vld [vmem:[#allocation6 + $0x80] sm:$0xf]
        %v4272 = vld [vmem:[#allocation6 + $0x84] sm:$0xf]
        %v4273 = vld [vmem:[#allocation6 + $0x88] sm:$0xf]
        %v4274 = vld [vmem:[#allocation6 + $0x8c] sm:$0xf]
        %v4275 = vld [vmem:[#allocation6 + $0x90] sm:$0xf]
        %v4276 = vld [vmem:[#allocation6 + $0x94] sm:$0xf]
        %v4277 = vld [vmem:[#allocation6 + $0x98] sm:$0xf]
        %v4278 = vld [vmem:[#allocation6 + $0x9c] sm:$0xf]
        %v4279 = vld [vmem:[#allocation6 + $0xa0] sm:$0xf]
        %v4280 = vld [vmem:[#allocation6 + $0xa4] sm:$0xf]
        %v4281 = vld [vmem:[#allocation6 + $0xa8] sm:$0xf]
        %v4282 = vld [vmem:[#allocation6 + $0xac] sm:$0xf]
        %v4283 = vld [vmem:[#allocation6 + $0xb0] sm:$0xf]
        %v4284 = vld [vmem:[#allocation6 + $0xb4] sm:$0xf]
        %v4285 = vld [vmem:[#allocation6 + $0xb8] sm:$0xf]
        %v4286 = vld [vmem:[#allocation6 + $0xbc] sm:$0xf]
        %v4287 = vld [vmem:[#allocation6 + $0xc0] sm:$0xf]
        %v4288 = vld [vmem:[#allocation6 + $0xc4] sm:$0xf]
        %v4289 = vld [vmem:[#allocation6 + $0xc8] sm:$0xf]
        %v4290 = vld [vmem:[#allocation6 + $0xcc] sm:$0xf]
        %v4291 = vld [vmem:[#allocation6 + $0xd0] sm:$0xf]
        %v4292 = vld [vmem:[#allocation6 + $0xd4] sm:$0xf]
        %v4293 = vld [vmem:[#allocation6 + $0xd8] sm:$0xf]
        %v4294 = vld [vmem:[#allocation6 + $0xdc] sm:$0xf]
        %v4295 = vld [vmem:[#allocation6 + $0xe0] sm:$0xf]
        %v4296 = vld [vmem:[#allocation6 + $0xe4] sm:$0xf]
        %v4297 = vld [vmem:[#allocation6 + $0xe8] sm:$0xf]
        %v4298 = vld [vmem:[#allocation6 + $0xec] sm:$0xf]
        %v4299 = vld [vmem:[#allocation6 + $0xf0] sm:$0xf]
        %v4300 = vld [vmem:[#allocation6 + $0xf4] sm:$0xf]
        %v4301 = vld [vmem:[#allocation6 + $0xf8] sm:$0xf]
        %v4302 = vld [vmem:[#allocation6 + $0xfc] sm:$0xf]
        %v4303 = vld [vmem:[#allocation6 + $0x100] sm:$0xf]
        %v4304 = vld [vmem:[#allocation6 + $0x104] sm:$0xf]
        %v4305 = vld [vmem:[#allocation6 + $0x108] sm:$0xf]
        %v4306 = vld [vmem:[#allocation6 + $0x10c] sm:$0xf]
        %v4307 = vld [vmem:[#allocation6 + $0x110] sm:$0xf]
        %v4308 = vld [vmem:[#allocation6 + $0x114] sm:$0xf]
        %v4309 = vld [vmem:[#allocation6 + $0x118] sm:$0xf]
        %v4310 = vld [vmem:[#allocation6 + $0x11c] sm:$0xf]
        %v4311 = vld [vmem:[#allocation6 + $0x120] sm:$0xf]
        %v4312 = vld [vmem:[#allocation6 + $0x124] sm:$0xf]
        %v4313 = vld [vmem:[#allocation6 + $0x128] sm:$0xf]
        %v4314 = vld [vmem:[#allocation6 + $0x12c] sm:$0xf]
        %v4315 = vld [vmem:[#allocation6 + $0x130] sm:$0xf]
        %v4316 = vld [vmem:[#allocation6 + $0x134] sm:$0xf]
        %v4317 = vld [vmem:[#allocation6 + $0x138] sm:$0xf]
        %v4318 = vld [vmem:[#allocation6 + $0x13c] sm:$0xf]
        %v4319 = vld [vmem:[#allocation6 + $0x140] sm:$0xf]
        %v4320 = vld [vmem:[#allocation6 + $0x144] sm:$0xf]
        %v4321 = vld [vmem:[#allocation6 + $0x148] sm:$0xf]
        %v4322 = vld [vmem:[#allocation6 + $0x14c] sm:$0xf]
        %v4323 = vld [vmem:[#allocation6 + $0x150] sm:$0xf]
        %v4324 = vld [vmem:[#allocation6 + $0x154] sm:$0xf]
        %v4325 = vld [vmem:[#allocation6 + $0x158] sm:$0xf]
        %v4326 = vld [vmem:[#allocation6 + $0x15c] sm:$0xf]
        %v4327 = vld [vmem:[#allocation6 + $0x160] sm:$0xf]
        %v4328 = vld [vmem:[#allocation6 + $0x164] sm:$0xf]
        %v4329 = vld [vmem:[#allocation6 + $0x168] sm:$0xf]
        %v4330 = vld [vmem:[#allocation6 + $0x16c] sm:$0xf]
        %v4331 = vld [vmem:[#allocation6 + $0x170] sm:$0xf]
        %v4332 = vld [vmem:[#allocation6 + $0x174] sm:$0xf]
        %v4333 = vld [vmem:[#allocation6 + $0x178] sm:$0xf]
        %v4334 = vld [vmem:[#allocation6 + $0x17c] sm:$0xf]
        %v4383 = vunpack.c.l.b16 %v4287
        %v4384 = vunpack.c.l.b16 %v4288
        %v4385 = vunpack.c.l.b16 %v4289
        %v4386 = vunpack.c.l.b16 %v4290
        %v4387 = vunpack.c.l.b16 %v4291
        %v4388 = vunpack.c.l.b16 %v4292
        %v4389 = vunpack.c.l.b16 %v4293
        %v4390 = vunpack.c.l.b16 %v4294
        %v4391 = vunpack.c.l.b16 %v4295
        %v4392 = vunpack.c.l.b16 %v4296
        %v4393 = vunpack.c.l.b16 %v4297
        %v4394 = vunpack.c.l.b16 %v4298
        %v4395 = vunpack.c.l.b16 %v4299
        %v4396 = vunpack.c.l.b16 %v4300
        %v4397 = vunpack.c.l.b16 %v4301
        %v4398 = vunpack.c.l.b16 %v4302
        %v4399 = vunpack.c.l.b16 %v4303
        %v4400 = vunpack.c.l.b16 %v4304
        %v4401 = vunpack.c.l.b16 %v4305
        %v4402 = vunpack.c.l.b16 %v4306
        %v4403 = vunpack.c.l.b16 %v4307
        %v4404 = vunpack.c.l.b16 %v4308
        %v4405 = vunpack.c.l.b16 %v4309
        %v4406 = vunpack.c.l.b16 %v4310
        %v4407 = vunpack.c.l.b16 %v4311
        %v4408 = vunpack.c.l.b16 %v4312
        %v4409 = vunpack.c.l.b16 %v4313
        %v4410 = vunpack.c.l.b16 %v4314
        %v4411 = vunpack.c.l.b16 %v4315
        %v4412 = vunpack.c.l.b16 %v4316
        %v4413 = vunpack.c.l.b16 %v4317
        %v4414 = vunpack.c.l.b16 %v4318
        %v4415 = vunpack.c.l.b16 %v4319
        %v4416 = vunpack.c.l.b16 %v4320
        %v4417 = vunpack.c.l.b16 %v4321
        %v4418 = vunpack.c.l.b16 %v4322
        %v4419 = vunpack.c.l.b16 %v4323
        %v4420 = vunpack.c.l.b16 %v4324
        %v4421 = vunpack.c.l.b16 %v4325
        %v4422 = vunpack.c.l.b16 %v4326
        %v4423 = vunpack.c.l.b16 %v4327
        %v4424 = vunpack.c.l.b16 %v4328
        %v4425 = vunpack.c.l.b16 %v4329
        %v4426 = vunpack.c.l.b16 %v4330
        %v4427 = vunpack.c.l.b16 %v4331
        %v4428 = vunpack.c.l.b16 %v4332
        %v4429 = vunpack.c.l.b16 %v4333
        %v4430 = vunpack.c.l.b16 %v4334
        %v4431 = vpack.c.b16 %v4384, %v4383
        %v4432 = vpack.c.b16 %v4386, %v4385
        %v4433 = vpack.c.b16 %v4388, %v4387
        %v4434 = vpack.c.b16 %v4390, %v4389
        %v4435 = vpack.c.b16 %v4392, %v4391
        %v4436 = vpack.c.b16 %v4394, %v4393
        %v4437 = vpack.c.b16 %v4396, %v4395
        %v4438 = vpack.c.b16 %v4398, %v4397
        %v4439 = vpack.c.b16 %v4400, %v4399
        %v4440 = vpack.c.b16 %v4402, %v4401
        %v4441 = vpack.c.b16 %v4404, %v4403
        %v4442 = vpack.c.b16 %v4406, %v4405
        %v4443 = vpack.c.b16 %v4408, %v4407
        %v4444 = vpack.c.b16 %v4410, %v4409
        %v4445 = vpack.c.b16 %v4412, %v4411
        %v4446 = vpack.c.b16 %v4414, %v4413
        %v4447 = vpack.c.b16 %v4416, %v4415
        %v4448 = vpack.c.b16 %v4418, %v4417
        %v4449 = vpack.c.b16 %v4420, %v4419
        %v4450 = vpack.c.b16 %v4422, %v4421
        %v4451 = vpack.c.b16 %v4424, %v4423
        %v4452 = vpack.c.b16 %v4426, %v4425
        %v4453 = vpack.c.b16 %v4428, %v4427
        %v4454 = vpack.c.b16 %v4430, %v4429
        %4479 = vmatprep.subr.bf16.mxu0 0
        %4480 = vmatpush1.bf16.msra.mxu0 %v4438
        %4481 = vmatprep.subr.bf16.mxu0 0
        %4482 = vmatpush1.bf16.msra.mxu0 %v4437
        %4483 = vmatprep.subr.bf16.mxu0 0
        %4484 = vmatpush1.bf16.msra.mxu0 %v4436
        %4485 = vmatprep.subr.bf16.mxu0 0
        %4486 = vmatpush1.bf16.msra.mxu0 %v4435
        %4487 = vmatprep.subr.bf16.mxu0 0
        %4488 = vmatpush1.bf16.msra.mxu0 %v4434
        %4489 = vmatprep.subr.bf16.mxu0 0
        %4490 = vmatpush1.bf16.msra.mxu0 %v4433
        %4491 = vmatprep.subr.bf16.mxu0 0
        %4492 = vmatpush1.bf16.msra.mxu0 %v4432
        %4493 = vmatprep.subr.bf16.mxu0 0
        %4494 = vmatpush1.bf16.msra.mxu0 %v4431
        %4495 = vmatprep.subr.bf16.mxu0 0
        %4496 = vmatpush2.bf16.msra.mxu0 %v4446
        %4497 = vmatprep.subr.bf16.mxu0 0
        %4498 = vmatpush2.bf16.msra.mxu0 %v4445
        %4499 = vmatprep.subr.bf16.mxu0 0
        %4500 = vmatpush2.bf16.msra.mxu0 %v4444
        %4501 = vmatprep.subr.bf16.mxu0 0
        %4502 = vmatpush2.bf16.msra.mxu0 %v4443
        %4503 = vmatprep.subr.bf16.mxu0 0
        %4504 = vmatpush2.bf16.msra.mxu0 %v4442
        %4505 = vmatprep.subr.bf16.mxu0 0
        %4506 = vmatpush2.bf16.msra.mxu0 %v4441
        %4507 = vmatprep.subr.bf16.mxu0 0
        %4508 = vmatpush2.bf16.msra.mxu0 %v4440
        %4509 = vmatprep.subr.bf16.mxu0 0
        %4510 = vmatpush2.bf16.msra.mxu0 %v4439
        %4511 = vmatprep.mubr.bf16.mxu0 %v3956
        %4512 = vmatmul.mubr.bf16.gmra.mxu0 %v3844
        %v4513 = vpop.f32.mrf.mxu0
        %v4514 = vadd.f32 0.0, %v4513
        %v4515 = vpop.f32.mrf.mxu0
        %v4516 = vpop.f32.mrf.mxu0
        %v4517 = vadd.f32 0.0, %v4516
        %v4518 = vpop.f32.mrf.mxu0
        %4519 = vmatprep.mubr.bf16.mxu0 %v3968
        %4520 = vmatmul.mubr.bf16.gmra.mxu0 %v3845
        %v4521 = vpop.f32.mrf.mxu0
        %v4522 = vadd.f32 0.0, %v4521
        %v4523 = vpop.f32.mrf.mxu0
        %v4524 = vpop.f32.mrf.mxu0
        %v4525 = vadd.f32 0.0, %v4524
        %v4526 = vpop.f32.mrf.mxu0
        %4527 = vmatprep.mubr.bf16.mxu0 %v3980
        %4528 = vmatmul.mubr.bf16.gmra.mxu0 %v3846
        %v4529 = vpop.f32.mrf.mxu0
        %v4530 = vadd.f32 0.0, %v4529
        %v4531 = vpop.f32.mrf.mxu0
        %v4532 = vpop.f32.mrf.mxu0
        %v4533 = vadd.f32 0.0, %v4532
        %v4534 = vpop.f32.mrf.mxu0
        %4535 = vmatprep.mubr.bf16.mxu0 %v3992
        %4536 = vmatmul.mubr.bf16.gmra.mxu0 %v3847
        %v4537 = vpop.f32.mrf.mxu0
        %v4538 = vadd.f32 0.0, %v4537
        %v4539 = vpop.f32.mrf.mxu0
        %v4540 = vpop.f32.mrf.mxu0
        %v4541 = vadd.f32 0.0, %v4540
        %v4542 = vpop.f32.mrf.mxu0
        %4543 = vmatprep.mubr.bf16.mxu0 %v4004
        %4544 = vmatmul.mubr.bf16.gmra.mxu0 %v3848
        %v4545 = vpop.f32.mrf.mxu0
        %v4546 = vadd.f32 0.0, %v4545
        %v4547 = vpop.f32.mrf.mxu0
        %v4548 = vpop.f32.mrf.mxu0
        %v4549 = vadd.f32 0.0, %v4548
        %v4550 = vpop.f32.mrf.mxu0
        %4551 = vmatprep.mubr.bf16.mxu0 %v4016
        %4552 = vmatmul.mubr.bf16.gmra.mxu0 %v3849
        %v4553 = vpop.f32.mrf.mxu0
        %v4554 = vadd.f32 0.0, %v4553
        %v4555 = vpop.f32.mrf.mxu0
        %v4556 = vpop.f32.mrf.mxu0
        %v4557 = vadd.f32 0.0, %v4556
        %v4558 = vpop.f32.mrf.mxu0
        %4559 = vmatprep.mubr.bf16.mxu0 %v4028
        %4560 = vmatmul.mubr.bf16.gmra.mxu0 %v3850
        %v4561 = vpop.f32.mrf.mxu0
        %v4562 = vadd.f32 0.0, %v4561
        %v4563 = vpop.f32.mrf.mxu0
        %v4564 = vpop.f32.mrf.mxu0
        %v4565 = vadd.f32 0.0, %v4564
        %v4566 = vpop.f32.mrf.mxu0
        %4567 = vmatprep.mubr.bf16.mxu0 %v4040
        %4568 = vmatmul.mubr.bf16.gmra.mxu0 %v3851
        %v4569 = vpop.f32.mrf.mxu0
        %v4570 = vadd.f32 0.0, %v4569
        %v4571 = vpop.f32.mrf.mxu0
        %v4572 = vpop.f32.mrf.mxu0
        %v4573 = vadd.f32 0.0, %v4572
        %v4574 = vpop.f32.mrf.mxu0
        %4575 = vmatprep.mubr.bf16.mxu0 %v4052
        %4576 = vmatmul.mubr.bf16.gmra.mxu0 %v3852
        %v4577 = vpop.f32.mrf.mxu0
        %v4578 = vadd.f32 0.0, %v4577
        %v4579 = vpop.f32.mrf.mxu0
        %v4580 = vpop.f32.mrf.mxu0
        %v4581 = vadd.f32 0.0, %v4580
        %v4582 = vpop.f32.mrf.mxu0
        %4583 = vmatprep.mubr.bf16.mxu0 %v4064
        %4584 = vmatmul.mubr.bf16.gmra.mxu0 %v3853
        %v4585 = vpop.f32.mrf.mxu0
        %v4586 = vadd.f32 0.0, %v4585
        %v4587 = vpop.f32.mrf.mxu0
        %v4588 = vpop.f32.mrf.mxu0
        %v4589 = vadd.f32 0.0, %v4588
        %v4590 = vpop.f32.mrf.mxu0
        %4591 = vmatprep.mubr.bf16.mxu0 %v4076
        %4592 = vmatmul.mubr.bf16.gmra.mxu0 %v3854
        %v4593 = vpop.f32.mrf.mxu0
        %v4594 = vadd.f32 0.0, %v4593
        %v4595 = vpop.f32.mrf.mxu0
        %v4596 = vpop.f32.mrf.mxu0
        %v4597 = vadd.f32 0.0, %v4596
        %v4598 = vpop.f32.mrf.mxu0
        %4599 = vmatprep.mubr.bf16.mxu0 %v4088
        %4600 = vmatmul.mubr.bf16.gmra.mxu0 %v3855
        %v4601 = vpop.f32.mrf.mxu0
        %v4602 = vadd.f32 0.0, %v4601
        %v4603 = vpop.f32.mrf.mxu0
        %v4604 = vpop.f32.mrf.mxu0
        %v4605 = vadd.f32 0.0, %v4604
        %v4606 = vpop.f32.mrf.mxu0
        %4607 = vmatprep.mubr.bf16.mxu0 %v4100
        %4608 = vmatmul.mubr.bf16.gmra.mxu0 %v3856
        %v4609 = vpop.f32.mrf.mxu0
        %v4610 = vadd.f32 0.0, %v4609
        %v4611 = vpop.f32.mrf.mxu0
        %v4612 = vpop.f32.mrf.mxu0
        %v4613 = vadd.f32 0.0, %v4612
        %v4614 = vpop.f32.mrf.mxu0
        %4615 = vmatprep.mubr.bf16.mxu0 %v4112
        %4616 = vmatmul.mubr.bf16.gmra.mxu0 %v3857
        %v4617 = vpop.f32.mrf.mxu0
        %v4618 = vadd.f32 0.0, %v4617
        %v4619 = vpop.f32.mrf.mxu0
        %v4620 = vpop.f32.mrf.mxu0
        %v4621 = vadd.f32 0.0, %v4620
        %v4622 = vpop.f32.mrf.mxu0
        %4623 = vmatprep.mubr.bf16.mxu0 %v4124
        %4624 = vmatmul.mubr.bf16.gmra.mxu0 %v3858
        %v4625 = vpop.f32.mrf.mxu0
        %v4626 = vadd.f32 0.0, %v4625
        %v4627 = vpop.f32.mrf.mxu0
        %v4628 = vpop.f32.mrf.mxu0
        %v4629 = vadd.f32 0.0, %v4628
        %v4630 = vpop.f32.mrf.mxu0
        %4631 = vmatprep.mubr.bf16.mxu0 %v4136
        %4632 = vmatmul.mubr.bf16.gmra.mxu0 %v3859
        %v4633 = vpop.f32.mrf.mxu0
        %v4634 = vadd.f32 0.0, %v4633
        %v4635 = vpop.f32.mrf.mxu0
        %v4636 = vpop.f32.mrf.mxu0
        %v4637 = vadd.f32 0.0, %v4636
        %v4638 = vpop.f32.mrf.mxu0
        %4639 = vdwg.mxu0
        %4640 = vmatprep.subr.bf16.mxu0 0
        %4641 = vmatpush1.bf16.msra.mxu0 %v4454
        %4642 = vmatprep.subr.bf16.mxu0 0
        %4643 = vmatpush1.bf16.msra.mxu0 %v4453
        %4644 = vmatprep.subr.bf16.mxu0 0
        %4645 = vmatpush1.bf16.msra.mxu0 %v4452
        %4646 = vmatprep.subr.bf16.mxu0 0
        %4647 = vmatpush1.bf16.msra.mxu0 %v4451
        %4648 = vmatprep.subr.bf16.mxu0 0
        %4649 = vmatpush1.bf16.msra.mxu0 %v4450
        %4650 = vmatprep.subr.bf16.mxu0 0
        %4651 = vmatpush1.bf16.msra.mxu0 %v4449
        %4652 = vmatprep.subr.bf16.mxu0 0
        %4653 = vmatpush1.bf16.msra.mxu0 %v4448
        %4654 = vmatprep.subr.bf16.mxu0 0
        %4655 = vmatpush1.bf16.msra.mxu0 %v4447
        %4656 = vmatprep.subr.bf16.mxu0 0
        %4657 = vmatpush2.bf16.msra.mxu0 0
        %4658 = vmatprep.subr.bf16.mxu0 0
        %4659 = vmatpush2.bf16.msra.mxu0 0
        %4660 = vmatprep.subr.bf16.mxu0 0
        %4661 = vmatpush2.bf16.msra.mxu0 0
        %4662 = vmatprep.subr.bf16.mxu0 0
        %4663 = vmatpush2.bf16.msra.mxu0 0
        %4664 = vmatprep.subr.bf16.mxu0 0
        %4665 = vmatpush2.bf16.msra.mxu0 0
        %4666 = vmatprep.subr.bf16.mxu0 0
        %4667 = vmatpush2.bf16.msra.mxu0 0
        %4668 = vmatprep.subr.bf16.mxu0 0
        %4669 = vmatpush2.bf16.msra.mxu0 0
        %4670 = vmatprep.subr.bf16.mxu0 0
        %4671 = vmatpush2.bf16.msra.mxu0 0
        %4672 = vmatprep.mubr.bf16.mxu0 0
        %4673 = vmatmul.mubr.bf16.gmra.mxu0 %v4172
        %v4674 = vpop.f32.mrf.mxu0
        %v4675 = vadd.f32 %v4514, %v4674
        %v4676 = vpop.f32.mrf.mxu0
        %v4677 = vpop.f32.mrf.mxu0
        %v4678 = vadd.f32 %v4517, %v4677
        %v4679 = vpop.f32.mrf.mxu0
        %4680 = vmatprep.mubr.bf16.mxu0 0
        %4681 = vmatmul.mubr.bf16.gmra.mxu0 %v4175
        %v4682 = vpop.f32.mrf.mxu0
        %v4683 = vadd.f32 %v4522, %v4682
        %v4684 = vpop.f32.mrf.mxu0
        %v4685 = vpop.f32.mrf.mxu0
        %v4686 = vadd.f32 %v4525, %v4685
        %v4687 = vpop.f32.mrf.mxu0
        %4688 = vmatprep.mubr.bf16.mxu0 0
        %4689 = vmatmul.mubr.bf16.gmra.mxu0 %v4178
        %v4690 = vpop.f32.mrf.mxu0
        %v4691 = vadd.f32 %v4530, %v4690
        %v4692 = vpop.f32.mrf.mxu0
        %v4693 = vpop.f32.mrf.mxu0
        %v4694 = vadd.f32 %v4533, %v4693
        %v4695 = vpop.f32.mrf.mxu0
        %4696 = vmatprep.mubr.bf16.mxu0 0
        %4697 = vmatmul.mubr.bf16.gmra.mxu0 %v4181
        %v4698 = vpop.f32.mrf.mxu0
        %v4699 = vadd.f32 %v4538, %v4698
        %v4700 = vpop.f32.mrf.mxu0
        %v4701 = vpop.f32.mrf.mxu0
        %v4702 = vadd.f32 %v4541, %v4701
        %v4703 = vpop.f32.mrf.mxu0
        %4704 = vmatprep.mubr.bf16.mxu0 0
        %4705 = vmatmul.mubr.bf16.gmra.mxu0 %v4184
        %v4706 = vpop.f32.mrf.mxu0
        %v4707 = vadd.f32 %v4546, %v4706
        %v4708 = vpop.f32.mrf.mxu0
        %v4709 = vpop.f32.mrf.mxu0
        %v4710 = vadd.f32 %v4549, %v4709
        %v4711 = vpop.f32.mrf.mxu0
        %4712 = vmatprep.mubr.bf16.mxu0 0
        %4713 = vmatmul.mubr.bf16.gmra.mxu0 %v4187
        %v4714 = vpop.f32.mrf.mxu0
        %v4715 = vadd.f32 %v4554, %v4714
        %v4716 = vpop.f32.mrf.mxu0
        %v4717 = vpop.f32.mrf.mxu0
        %v4718 = vadd.f32 %v4557, %v4717
        %v4719 = vpop.f32.mrf.mxu0
        %4720 = vmatprep.mubr.bf16.mxu0 0
        %4721 = vmatmul.mubr.bf16.gmra.mxu0 %v4190
        %v4722 = vpop.f32.mrf.mxu0
        %v4723 = vadd.f32 %v4562, %v4722
        %v4724 = vpop.f32.mrf.mxu0
        %v4725 = vpop.f32.mrf.mxu0
        %v4726 = vadd.f32 %v4565, %v4725
        %v4727 = vpop.f32.mrf.mxu0
        %4728 = vmatprep.mubr.bf16.mxu0 0
        %4729 = vmatmul.mubr.bf16.gmra.mxu0 %v4193
        %v4730 = vpop.f32.mrf.mxu0
        %v4731 = vadd.f32 %v4570, %v4730
        %v4732 = vpop.f32.mrf.mxu0
        %v4733 = vpop.f32.mrf.mxu0
        %v4734 = vadd.f32 %v4573, %v4733
        %v4735 = vpop.f32.mrf.mxu0
        %4736 = vmatprep.mubr.bf16.mxu0 0
        %4737 = vmatmul.mubr.bf16.gmra.mxu0 %v4196
        %v4738 = vpop.f32.mrf.mxu0
        %v4739 = vadd.f32 %v4578, %v4738
        %v4740 = vpop.f32.mrf.mxu0
        %v4741 = vpop.f32.mrf.mxu0
        %v4742 = vadd.f32 %v4581, %v4741
        %v4743 = vpop.f32.mrf.mxu0
        %4744 = vmatprep.mubr.bf16.mxu0 0
        %4745 = vmatmul.mubr.bf16.gmra.mxu0 %v4199
        %v4746 = vpop.f32.mrf.mxu0
        %v4747 = vadd.f32 %v4586, %v4746
        %v4748 = vpop.f32.mrf.mxu0
        %v4749 = vpop.f32.mrf.mxu0
        %v4750 = vadd.f32 %v4589, %v4749
        %v4751 = vpop.f32.mrf.mxu0
        %4752 = vmatprep.mubr.bf16.mxu0 0
        %4753 = vmatmul.mubr.bf16.gmra.mxu0 %v4202
        %v4754 = vpop.f32.mrf.mxu0
        %v4755 = vadd.f32 %v4594, %v4754
        %v4756 = vpop.f32.mrf.mxu0
        %v4757 = vpop.f32.mrf.mxu0
        %v4758 = vadd.f32 %v4597, %v4757
        %v4759 = vpop.f32.mrf.mxu0
        %4760 = vmatprep.mubr.bf16.mxu0 0
        %4761 = vmatmul.mubr.bf16.gmra.mxu0 %v4205
        %v4762 = vpop.f32.mrf.mxu0
        %v4763 = vadd.f32 %v4602, %v4762
        %v4764 = vpop.f32.mrf.mxu0
        %v4765 = vpop.f32.mrf.mxu0
        %v4766 = vadd.f32 %v4605, %v4765
        %v4767 = vpop.f32.mrf.mxu0
        %4768 = vmatprep.mubr.bf16.mxu0 0
        %4769 = vmatmul.mubr.bf16.gmra.mxu0 %v4208
        %v4770 = vpop.f32.mrf.mxu0
        %v4771 = vadd.f32 %v4610, %v4770
        %v4772 = vpop.f32.mrf.mxu0
        %v4773 = vpop.f32.mrf.mxu0
        %v4774 = vadd.f32 %v4613, %v4773
        %v4775 = vpop.f32.mrf.mxu0
        %4776 = vmatprep.mubr.bf16.mxu0 0
        %4777 = vmatmul.mubr.bf16.gmra.mxu0 %v4211
        %v4778 = vpop.f32.mrf.mxu0
        %v4779 = vadd.f32 %v4618, %v4778
        %v4780 = vpop.f32.mrf.mxu0
        %v4781 = vpop.f32.mrf.mxu0
        %v4782 = vadd.f32 %v4621, %v4781
        %v4783 = vpop.f32.mrf.mxu0
        %4784 = vmatprep.mubr.bf16.mxu0 0
        %4785 = vmatmul.mubr.bf16.gmra.mxu0 %v4214
        %v4786 = vpop.f32.mrf.mxu0
        %v4787 = vadd.f32 %v4626, %v4786
        %v4788 = vpop.f32.mrf.mxu0
        %v4789 = vpop.f32.mrf.mxu0
        %v4790 = vadd.f32 %v4629, %v4789
        %v4791 = vpop.f32.mrf.mxu0
        %4792 = vmatprep.mubr.bf16.mxu0 0
        %4793 = vmatmul.mubr.bf16.gmra.mxu0 %v4217
        %v4794 = vpop.f32.mrf.mxu0
        %v4795 = vadd.f32 %v4634, %v4794
        %v4796 = vpop.f32.mrf.mxu0
        %v4797 = vpop.f32.mrf.mxu0
        %v4798 = vadd.f32 %v4637, %v4797
        %v4799 = vpop.f32.mrf.mxu0
        %4800 = vdwg.mxu0
        %v4849 = vunpack.c.l.b16 %v4239
        %v4850 = vunpack.c.l.b16 %v4240
        %v4851 = vunpack.c.l.b16 %v4241
        %v4852 = vunpack.c.l.b16 %v4242
        %v4853 = vunpack.c.l.b16 %v4243
        %v4854 = vunpack.c.l.b16 %v4244
        %v4855 = vunpack.c.l.b16 %v4245
        %v4856 = vunpack.c.l.b16 %v4246
        %v4857 = vunpack.c.l.b16 %v4247
        %v4858 = vunpack.c.l.b16 %v4248
        %v4859 = vunpack.c.l.b16 %v4249
        %v4860 = vunpack.c.l.b16 %v4250
        %v4861 = vunpack.c.l.b16 %v4251
        %v4862 = vunpack.c.l.b16 %v4252
        %v4863 = vunpack.c.l.b16 %v4253
        %v4864 = vunpack.c.l.b16 %v4254
        %v4865 = vunpack.c.l.b16 %v4255
        %v4866 = vunpack.c.l.b16 %v4256
        %v4867 = vunpack.c.l.b16 %v4257
        %v4868 = vunpack.c.l.b16 %v4258
        %v4869 = vunpack.c.l.b16 %v4259
        %v4870 = vunpack.c.l.b16 %v4260
        %v4871 = vunpack.c.l.b16 %v4261
        %v4872 = vunpack.c.l.b16 %v4262
        %v4873 = vunpack.c.l.b16 %v4263
        %v4874 = vunpack.c.l.b16 %v4264
        %v4875 = vunpack.c.l.b16 %v4265
        %v4876 = vunpack.c.l.b16 %v4266
        %v4877 = vunpack.c.l.b16 %v4267
        %v4878 = vunpack.c.l.b16 %v4268
        %v4879 = vunpack.c.l.b16 %v4269
        %v4880 = vunpack.c.l.b16 %v4270
        %v4881 = vunpack.c.l.b16 %v4271
        %v4882 = vunpack.c.l.b16 %v4272
        %v4883 = vunpack.c.l.b16 %v4273
        %v4884 = vunpack.c.l.b16 %v4274
        %v4885 = vunpack.c.l.b16 %v4275
        %v4886 = vunpack.c.l.b16 %v4276
        %v4887 = vunpack.c.l.b16 %v4277
        %v4888 = vunpack.c.l.b16 %v4278
        %v4889 = vunpack.c.l.b16 %v4279
        %v4890 = vunpack.c.l.b16 %v4280
        %v4891 = vunpack.c.l.b16 %v4281
        %v4892 = vunpack.c.l.b16 %v4282
        %v4893 = vunpack.c.l.b16 %v4283
        %v4894 = vunpack.c.l.b16 %v4284
        %v4895 = vunpack.c.l.b16 %v4285
        %v4896 = vunpack.c.l.b16 %v4286
        %v4897 = vpack.c.b16 %v4850, %v4849
        %v4898 = vpack.c.b16 %v4852, %v4851
        %v4899 = vpack.c.b16 %v4854, %v4853
        %v4900 = vpack.c.b16 %v4856, %v4855
        %v4901 = vpack.c.b16 %v4858, %v4857
        %v4902 = vpack.c.b16 %v4860, %v4859
        %v4903 = vpack.c.b16 %v4862, %v4861
        %v4904 = vpack.c.b16 %v4864, %v4863
        %v4905 = vpack.c.b16 %v4866, %v4865
        %v4906 = vpack.c.b16 %v4868, %v4867
        %v4907 = vpack.c.b16 %v4870, %v4869
        %v4908 = vpack.c.b16 %v4872, %v4871
        %v4909 = vpack.c.b16 %v4874, %v4873
        %v4910 = vpack.c.b16 %v4876, %v4875
        %v4911 = vpack.c.b16 %v4878, %v4877
        %v4912 = vpack.c.b16 %v4880, %v4879
        %v4913 = vpack.c.b16 %v4882, %v4881
        %v4914 = vpack.c.b16 %v4884, %v4883
        %v4915 = vpack.c.b16 %v4886, %v4885
        %v4916 = vpack.c.b16 %v4888, %v4887
        %v4917 = vpack.c.b16 %v4890, %v4889
        %v4918 = vpack.c.b16 %v4892, %v4891
        %v4919 = vpack.c.b16 %v4894, %v4893
        %v4920 = vpack.c.b16 %v4896, %v4895
        %4945 = vmatprep.subr.bf16.mxu0 0
        %4946 = vmatpush1.bf16.msra.mxu0 %v4904
        %4947 = vmatprep.subr.bf16.mxu0 0
        %4948 = vmatpush1.bf16.msra.mxu0 %v4903
        %4949 = vmatprep.subr.bf16.mxu0 0
        %4950 = vmatpush1.bf16.msra.mxu0 %v4902
        %4951 = vmatprep.subr.bf16.mxu0 0
        %4952 = vmatpush1.bf16.msra.mxu0 %v4901
        %4953 = vmatprep.subr.bf16.mxu0 0
        %4954 = vmatpush1.bf16.msra.mxu0 %v4900
        %4955 = vmatprep.subr.bf16.mxu0 0
        %4956 = vmatpush1.bf16.msra.mxu0 %v4899
        %4957 = vmatprep.subr.bf16.mxu0 0
        %4958 = vmatpush1.bf16.msra.mxu0 %v4898
        %4959 = vmatprep.subr.bf16.mxu0 0
        %4960 = vmatpush1.bf16.msra.mxu0 %v4897
        %4961 = vmatprep.subr.bf16.mxu0 0
        %4962 = vmatpush2.bf16.msra.mxu0 %v4912
        %4963 = vmatprep.subr.bf16.mxu0 0
        %4964 = vmatpush2.bf16.msra.mxu0 %v4911
        %4965 = vmatprep.subr.bf16.mxu0 0
        %4966 = vmatpush2.bf16.msra.mxu0 %v4910
        %4967 = vmatprep.subr.bf16.mxu0 0
        %4968 = vmatpush2.bf16.msra.mxu0 %v4909
        %4969 = vmatprep.subr.bf16.mxu0 0
        %4970 = vmatpush2.bf16.msra.mxu0 %v4908
        %4971 = vmatprep.subr.bf16.mxu0 0
        %4972 = vmatpush2.bf16.msra.mxu0 %v4907
        %4973 = vmatprep.subr.bf16.mxu0 0
        %4974 = vmatpush2.bf16.msra.mxu0 %v4906
        %4975 = vmatprep.subr.bf16.mxu0 0
        %4976 = vmatpush2.bf16.msra.mxu0 %v4905
        %4977 = vmatprep.mubr.bf16.mxu0 %v3944
        %4978 = vmatmul.mubr.bf16.gmra.mxu0 %v3843
        %v4979 = vpop.f32.mrf.mxu0
        %v4980 = vadd.f32 %v4675, %v4979
        %v4981 = vpop.f32.mrf.mxu0
        %v4982 = vpop.f32.mrf.mxu0
        %v4983 = vadd.f32 %v4678, %v4982
        %v4984 = vpop.f32.mrf.mxu0
        %4985 = vmatprep.mubr.bf16.mxu0 %v3956
        %4986 = vmatmul.mubr.bf16.gmra.mxu0 %v3844
        %v4987 = vpop.f32.mrf.mxu0
        %v4988 = vadd.f32 %v4683, %v4987
        %v4989 = vpop.f32.mrf.mxu0
        %v4990 = vpop.f32.mrf.mxu0
        %v4991 = vadd.f32 %v4686, %v4990
        %v4992 = vpop.f32.mrf.mxu0
        %4993 = vmatprep.mubr.bf16.mxu0 %v3968
        %4994 = vmatmul.mubr.bf16.gmra.mxu0 %v3845
        %v4995 = vpop.f32.mrf.mxu0
        %v4996 = vadd.f32 %v4691, %v4995
        %v4997 = vpop.f32.mrf.mxu0
        %v4998 = vpop.f32.mrf.mxu0
        %v4999 = vadd.f32 %v4694, %v4998
        %v5000 = vpop.f32.mrf.mxu0
        %5001 = vmatprep.mubr.bf16.mxu0 %v3980
        %5002 = vmatmul.mubr.bf16.gmra.mxu0 %v3846
        %v5003 = vpop.f32.mrf.mxu0
        %v5004 = vadd.f32 %v4699, %v5003
        %v5005 = vpop.f32.mrf.mxu0
        %v5006 = vpop.f32.mrf.mxu0
        %v5007 = vadd.f32 %v4702, %v5006
        %v5008 = vpop.f32.mrf.mxu0
        %5009 = vmatprep.mubr.bf16.mxu0 %v3992
        %5010 = vmatmul.mubr.bf16.gmra.mxu0 %v3847
        %v5011 = vpop.f32.mrf.mxu0
        %v5012 = vadd.f32 %v4707, %v5011
        %v5013 = vpop.f32.mrf.mxu0
        %v5014 = vpop.f32.mrf.mxu0
        %v5015 = vadd.f32 %v4710, %v5014
        %v5016 = vpop.f32.mrf.mxu0
        %5017 = vmatprep.mubr.bf16.mxu0 %v4004
        %5018 = vmatmul.mubr.bf16.gmra.mxu0 %v3848
        %v5019 = vpop.f32.mrf.mxu0
        %v5020 = vadd.f32 %v4715, %v5019
        %v5021 = vpop.f32.mrf.mxu0
        %v5022 = vpop.f32.mrf.mxu0
        %v5023 = vadd.f32 %v4718, %v5022
        %v5024 = vpop.f32.mrf.mxu0
        %5025 = vmatprep.mubr.bf16.mxu0 %v4016
        %5026 = vmatmul.mubr.bf16.gmra.mxu0 %v3849
        %v5027 = vpop.f32.mrf.mxu0
        %v5028 = vadd.f32 %v4723, %v5027
        %v5029 = vpop.f32.mrf.mxu0
        %v5030 = vpop.f32.mrf.mxu0
        %v5031 = vadd.f32 %v4726, %v5030
        %v5032 = vpop.f32.mrf.mxu0
        %5033 = vmatprep.mubr.bf16.mxu0 %v4028
        %5034 = vmatmul.mubr.bf16.gmra.mxu0 %v3850
        %v5035 = vpop.f32.mrf.mxu0
        %v5036 = vadd.f32 %v4731, %v5035
        %v5037 = vpop.f32.mrf.mxu0
        %v5038 = vpop.f32.mrf.mxu0
        %v5039 = vadd.f32 %v4734, %v5038
        %v5040 = vpop.f32.mrf.mxu0
        %5041 = vmatprep.mubr.bf16.mxu0 %v4040
        %5042 = vmatmul.mubr.bf16.gmra.mxu0 %v3851
        %v5043 = vpop.f32.mrf.mxu0
        %v5044 = vadd.f32 %v4739, %v5043
        %v5045 = vpop.f32.mrf.mxu0
        %v5046 = vpop.f32.mrf.mxu0
        %v5047 = vadd.f32 %v4742, %v5046
        %v5048 = vpop.f32.mrf.mxu0
        %5049 = vmatprep.mubr.bf16.mxu0 %v4052
        %5050 = vmatmul.mubr.bf16.gmra.mxu0 %v3852
        %v5051 = vpop.f32.mrf.mxu0
        %v5052 = vadd.f32 %v4747, %v5051
        %v5053 = vpop.f32.mrf.mxu0
        %v5054 = vpop.f32.mrf.mxu0
        %v5055 = vadd.f32 %v4750, %v5054
        %v5056 = vpop.f32.mrf.mxu0
        %5057 = vmatprep.mubr.bf16.mxu0 %v4064
        %5058 = vmatmul.mubr.bf16.gmra.mxu0 %v3853
        %v5059 = vpop.f32.mrf.mxu0
        %v5060 = vadd.f32 %v4755, %v5059
        %v5061 = vpop.f32.mrf.mxu0
        %v5062 = vpop.f32.mrf.mxu0
        %v5063 = vadd.f32 %v4758, %v5062
        %v5064 = vpop.f32.mrf.mxu0
        %5065 = vmatprep.mubr.bf16.mxu0 %v4076
        %5066 = vmatmul.mubr.bf16.gmra.mxu0 %v3854
        %v5067 = vpop.f32.mrf.mxu0
        %v5068 = vadd.f32 %v4763, %v5067
        %v5069 = vpop.f32.mrf.mxu0
        %v5070 = vpop.f32.mrf.mxu0
        %v5071 = vadd.f32 %v4766, %v5070
        %v5072 = vpop.f32.mrf.mxu0
        %5073 = vmatprep.mubr.bf16.mxu0 %v4088
        %5074 = vmatmul.mubr.bf16.gmra.mxu0 %v3855
        %v5075 = vpop.f32.mrf.mxu0
        %v5076 = vadd.f32 %v4771, %v5075
        %v5077 = vpop.f32.mrf.mxu0
        %v5078 = vpop.f32.mrf.mxu0
        %v5079 = vadd.f32 %v4774, %v5078
        %v5080 = vpop.f32.mrf.mxu0
        %5081 = vmatprep.mubr.bf16.mxu0 %v4100
        %5082 = vmatmul.mubr.bf16.gmra.mxu0 %v3856
        %v5083 = vpop.f32.mrf.mxu0
        %v5084 = vadd.f32 %v4779, %v5083
        %v5085 = vpop.f32.mrf.mxu0
        %v5086 = vpop.f32.mrf.mxu0
        %v5087 = vadd.f32 %v4782, %v5086
        %v5088 = vpop.f32.mrf.mxu0
        %5089 = vmatprep.mubr.bf16.mxu0 %v4112
        %5090 = vmatmul.mubr.bf16.gmra.mxu0 %v3857
        %v5091 = vpop.f32.mrf.mxu0
        %v5092 = vadd.f32 %v4787, %v5091
        %v5093 = vpop.f32.mrf.mxu0
        %v5094 = vpop.f32.mrf.mxu0
        %v5095 = vadd.f32 %v4790, %v5094
        %v5096 = vpop.f32.mrf.mxu0
        %5097 = vmatprep.mubr.bf16.mxu0 %v4124
        %5098 = vmatmul.mubr.bf16.gmra.mxu0 %v3858
        %v5099 = vpop.f32.mrf.mxu0
        %v5100 = vadd.f32 %v4795, %v5099
        %v5101 = vpop.f32.mrf.mxu0
        %v5102 = vpop.f32.mrf.mxu0
        %v5103 = vadd.f32 %v4798, %v5102
        %v5104 = vpop.f32.mrf.mxu0
        %5105 = vdwg.mxu0
        %5106 = vmatprep.subr.bf16.mxu0 0
        %5107 = vmatpush1.bf16.msra.mxu0 %v4920
        %5108 = vmatprep.subr.bf16.mxu0 0
        %5109 = vmatpush1.bf16.msra.mxu0 %v4919
        %5110 = vmatprep.subr.bf16.mxu0 0
        %5111 = vmatpush1.bf16.msra.mxu0 %v4918
        %5112 = vmatprep.subr.bf16.mxu0 0
        %5113 = vmatpush1.bf16.msra.mxu0 %v4917
        %5114 = vmatprep.subr.bf16.mxu0 0
        %5115 = vmatpush1.bf16.msra.mxu0 %v4916
        %5116 = vmatprep.subr.bf16.mxu0 0
        %5117 = vmatpush1.bf16.msra.mxu0 %v4915
        %5118 = vmatprep.subr.bf16.mxu0 0
        %5119 = vmatpush1.bf16.msra.mxu0 %v4914
        %5120 = vmatprep.subr.bf16.mxu0 0
        %5121 = vmatpush1.bf16.msra.mxu0 %v4913
        %5122 = vmatprep.subr.bf16.mxu0 0
        %5123 = vmatpush2.bf16.msra.mxu0 0
        %5124 = vmatprep.subr.bf16.mxu0 0
        %5125 = vmatpush2.bf16.msra.mxu0 0
        %5126 = vmatprep.subr.bf16.mxu0 0
        %5127 = vmatpush2.bf16.msra.mxu0 0
        %5128 = vmatprep.subr.bf16.mxu0 0
        %5129 = vmatpush2.bf16.msra.mxu0 0
        %5130 = vmatprep.subr.bf16.mxu0 0
        %5131 = vmatpush2.bf16.msra.mxu0 0
        %5132 = vmatprep.subr.bf16.mxu0 0
        %5133 = vmatpush2.bf16.msra.mxu0 0
        %5134 = vmatprep.subr.bf16.mxu0 0
        %5135 = vmatpush2.bf16.msra.mxu0 0
        %5136 = vmatprep.subr.bf16.mxu0 0
        %5137 = vmatpush2.bf16.msra.mxu0 0
        %5138 = vmatprep.mubr.bf16.mxu0 0
        %5139 = vmatmul.mubr.bf16.gmra.mxu0 %v4169
        %v5140 = vpop.f32.mrf.mxu0
        %v5141 = vadd.f32 %v4980, %v5140
        %v5142 = vpop.f32.mrf.mxu0
        %v5143 = vpop.f32.mrf.mxu0
        %v5144 = vadd.f32 %v4983, %v5143
        %v5145 = vpop.f32.mrf.mxu0
        %5146 = vmatprep.mubr.bf16.mxu0 0
        %5147 = vmatmul.mubr.bf16.gmra.mxu0 %v4172
        %v5148 = vpop.f32.mrf.mxu0
        %v5149 = vadd.f32 %v4988, %v5148
        %v5150 = vpop.f32.mrf.mxu0
        %v5151 = vpop.f32.mrf.mxu0
        %v5152 = vadd.f32 %v4991, %v5151
        %v5153 = vpop.f32.mrf.mxu0
        %5154 = vmatprep.mubr.bf16.mxu0 0
        %5155 = vmatmul.mubr.bf16.gmra.mxu0 %v4175
        %v5156 = vpop.f32.mrf.mxu0
        %v5157 = vadd.f32 %v4996, %v5156
        %v5158 = vpop.f32.mrf.mxu0
        %v5159 = vpop.f32.mrf.mxu0
        %v5160 = vadd.f32 %v4999, %v5159
        %v5161 = vpop.f32.mrf.mxu0
        %5162 = vmatprep.mubr.bf16.mxu0 0
        %5163 = vmatmul.mubr.bf16.gmra.mxu0 %v4178
        %v5164 = vpop.f32.mrf.mxu0
        %v5165 = vadd.f32 %v5004, %v5164
        %v5166 = vpop.f32.mrf.mxu0
        %v5167 = vpop.f32.mrf.mxu0
        %v5168 = vadd.f32 %v5007, %v5167
        %v5169 = vpop.f32.mrf.mxu0
        %5170 = vmatprep.mubr.bf16.mxu0 0
        %5171 = vmatmul.mubr.bf16.gmra.mxu0 %v4181
        %v5172 = vpop.f32.mrf.mxu0
        %v5173 = vadd.f32 %v5012, %v5172
        %v5174 = vpop.f32.mrf.mxu0
        %v5175 = vpop.f32.mrf.mxu0
        %v5176 = vadd.f32 %v5015, %v5175
        %v5177 = vpop.f32.mrf.mxu0
        %5178 = vmatprep.mubr.bf16.mxu0 0
        %5179 = vmatmul.mubr.bf16.gmra.mxu0 %v4184
        %v5180 = vpop.f32.mrf.mxu0
        %v5181 = vadd.f32 %v5020, %v5180
        %v5182 = vpop.f32.mrf.mxu0
        %v5183 = vpop.f32.mrf.mxu0
        %v5184 = vadd.f32 %v5023, %v5183
        %v5185 = vpop.f32.mrf.mxu0
        %5186 = vmatprep.mubr.bf16.mxu0 0
        %5187 = vmatmul.mubr.bf16.gmra.mxu0 %v4187
        %v5188 = vpop.f32.mrf.mxu0
        %v5189 = vadd.f32 %v5028, %v5188
        %v5190 = vpop.f32.mrf.mxu0
        %v5191 = vpop.f32.mrf.mxu0
        %v5192 = vadd.f32 %v5031, %v5191
        %v5193 = vpop.f32.mrf.mxu0
        %5194 = vmatprep.mubr.bf16.mxu0 0
        %5195 = vmatmul.mubr.bf16.gmra.mxu0 %v4190
        %v5196 = vpop.f32.mrf.mxu0
        %v5197 = vadd.f32 %v5036, %v5196
        %v5198 = vpop.f32.mrf.mxu0
        %v5199 = vpop.f32.mrf.mxu0
        %v5200 = vadd.f32 %v5039, %v5199
        %v5201 = vpop.f32.mrf.mxu0
        %5202 = vmatprep.mubr.bf16.mxu0 0
        %5203 = vmatmul.mubr.bf16.gmra.mxu0 %v4193
        %v5204 = vpop.f32.mrf.mxu0
        %v5205 = vadd.f32 %v5044, %v5204
        %v5206 = vpop.f32.mrf.mxu0
        %v5207 = vpop.f32.mrf.mxu0
        %v5208 = vadd.f32 %v5047, %v5207
        %v5209 = vpop.f32.mrf.mxu0
        %5210 = vmatprep.mubr.bf16.mxu0 0
        %5211 = vmatmul.mubr.bf16.gmra.mxu0 %v4196
        %v5212 = vpop.f32.mrf.mxu0
        %v5213 = vadd.f32 %v5052, %v5212
        %v5214 = vpop.f32.mrf.mxu0
        %v5215 = vpop.f32.mrf.mxu0
        %v5216 = vadd.f32 %v5055, %v5215
        %v5217 = vpop.f32.mrf.mxu0
        %5218 = vmatprep.mubr.bf16.mxu0 0
        %5219 = vmatmul.mubr.bf16.gmra.mxu0 %v4199
        %v5220 = vpop.f32.mrf.mxu0
        %v5221 = vadd.f32 %v5060, %v5220
        %v5222 = vpop.f32.mrf.mxu0
        %v5223 = vpop.f32.mrf.mxu0
        %v5224 = vadd.f32 %v5063, %v5223
        %v5225 = vpop.f32.mrf.mxu0
        %5226 = vmatprep.mubr.bf16.mxu0 0
        %5227 = vmatmul.mubr.bf16.gmra.mxu0 %v4202
        %v5228 = vpop.f32.mrf.mxu0
        %v5229 = vadd.f32 %v5068, %v5228
        %v5230 = vpop.f32.mrf.mxu0
        %v5231 = vpop.f32.mrf.mxu0
        %v5232 = vadd.f32 %v5071, %v5231
        %v5233 = vpop.f32.mrf.mxu0
        %5234 = vmatprep.mubr.bf16.mxu0 0
        %5235 = vmatmul.mubr.bf16.gmra.mxu0 %v4205
        %v5236 = vpop.f32.mrf.mxu0
        %v5237 = vadd.f32 %v5076, %v5236
        %v5238 = vpop.f32.mrf.mxu0
        %v5239 = vpop.f32.mrf.mxu0
        %v5240 = vadd.f32 %v5079, %v5239
        %v5241 = vpop.f32.mrf.mxu0
        %5242 = vmatprep.mubr.bf16.mxu0 0
        %5243 = vmatmul.mubr.bf16.gmra.mxu0 %v4208
        %v5244 = vpop.f32.mrf.mxu0
        %v5245 = vadd.f32 %v5084, %v5244
        %v5246 = vpop.f32.mrf.mxu0
        %v5247 = vpop.f32.mrf.mxu0
        %v5248 = vadd.f32 %v5087, %v5247
        %v5249 = vpop.f32.mrf.mxu0
        %5250 = vmatprep.mubr.bf16.mxu0 0
        %5251 = vmatmul.mubr.bf16.gmra.mxu0 %v4211
        %v5252 = vpop.f32.mrf.mxu0
        %v5253 = vadd.f32 %v5092, %v5252
        %v5254 = vpop.f32.mrf.mxu0
        %v5255 = vpop.f32.mrf.mxu0
        %v5256 = vadd.f32 %v5095, %v5255
        %v5257 = vpop.f32.mrf.mxu0
        %5258 = vmatprep.mubr.bf16.mxu0 0
        %5259 = vmatmul.mubr.bf16.gmra.mxu0 %v4214
        %v5260 = vpop.f32.mrf.mxu0
        %v5261 = vadd.f32 %v5100, %v5260
        %v5262 = vpop.f32.mrf.mxu0
        %v5263 = vpop.f32.mrf.mxu0
        %v5264 = vadd.f32 %v5103, %v5263
        %v5265 = vpop.f32.mrf.mxu0
        %5266 = vdwg.mxu0
        %v5267 = vld [vmem:[#allocation6 + $0x180] sm:$0xf]
        %v5268 = vld [vmem:[#allocation6 + $0x184] sm:$0xf]
        %v5269 = vld [vmem:[#allocation6 + $0x188] sm:$0xf]
        %v5270 = vld [vmem:[#allocation6 + $0x18c] sm:$0xf]
        %v5271 = vld [vmem:[#allocation6 + $0x190] sm:$0xf]
        %v5272 = vld [vmem:[#allocation6 + $0x194] sm:$0xf]
        %v5273 = vld [vmem:[#allocation6 + $0x198] sm:$0xf]
        %v5274 = vld [vmem:[#allocation6 + $0x19c] sm:$0xf]
        %v5275 = vld [vmem:[#allocation6 + $0x1a0] sm:$0xf]
        %v5276 = vld [vmem:[#allocation6 + $0x1a4] sm:$0xf]
        %v5277 = vld [vmem:[#allocation6 + $0x1a8] sm:$0xf]
        %v5278 = vld [vmem:[#allocation6 + $0x1ac] sm:$0xf]
        %v5279 = vld [vmem:[#allocation6 + $0x1b0] sm:$0xf]
        %v5280 = vld [vmem:[#allocation6 + $0x1b4] sm:$0xf]
        %v5281 = vld [vmem:[#allocation6 + $0x1b8] sm:$0xf]
        %v5282 = vld [vmem:[#allocation6 + $0x1bc] sm:$0xf]
        %v5283 = vld [vmem:[#allocation6 + $0x1c0] sm:$0xf]
        %v5284 = vld [vmem:[#allocation6 + $0x1c4] sm:$0xf]
        %v5285 = vld [vmem:[#allocation6 + $0x1c8] sm:$0xf]
        %v5286 = vld [vmem:[#allocation6 + $0x1cc] sm:$0xf]
        %v5287 = vld [vmem:[#allocation6 + $0x1d0] sm:$0xf]
        %v5288 = vld [vmem:[#allocation6 + $0x1d4] sm:$0xf]
        %v5289 = vld [vmem:[#allocation6 + $0x1d8] sm:$0xf]
        %v5290 = vld [vmem:[#allocation6 + $0x1dc] sm:$0xf]
        %v5291 = vld [vmem:[#allocation6 + $0x1e0] sm:$0xf]
        %v5292 = vld [vmem:[#allocation6 + $0x1e4] sm:$0xf]
        %v5293 = vld [vmem:[#allocation6 + $0x1e8] sm:$0xf]
        %v5294 = vld [vmem:[#allocation6 + $0x1ec] sm:$0xf]
        %v5295 = vld [vmem:[#allocation6 + $0x1f0] sm:$0xf]
        %v5296 = vld [vmem:[#allocation6 + $0x1f4] sm:$0xf]
        %v5297 = vld [vmem:[#allocation6 + $0x1f8] sm:$0xf]
        %v5298 = vld [vmem:[#allocation6 + $0x1fc] sm:$0xf]
        %v5299 = vld [vmem:[#allocation6 + $0x200] sm:$0xf]
        %v5300 = vld [vmem:[#allocation6 + $0x204] sm:$0xf]
        %v5301 = vld [vmem:[#allocation6 + $0x208] sm:$0xf]
        %v5302 = vld [vmem:[#allocation6 + $0x20c] sm:$0xf]
        %v5303 = vld [vmem:[#allocation6 + $0x210] sm:$0xf]
        %v5304 = vld [vmem:[#allocation6 + $0x214] sm:$0xf]
        %v5305 = vld [vmem:[#allocation6 + $0x218] sm:$0xf]
        %v5306 = vld [vmem:[#allocation6 + $0x21c] sm:$0xf]
        %v5307 = vld [vmem:[#allocation6 + $0x220] sm:$0xf]
        %v5308 = vld [vmem:[#allocation6 + $0x224] sm:$0xf]
        %v5309 = vld [vmem:[#allocation6 + $0x228] sm:$0xf]
        %v5310 = vld [vmem:[#allocation6 + $0x22c] sm:$0xf]
        %v5311 = vld [vmem:[#allocation6 + $0x230] sm:$0xf]
        %v5312 = vld [vmem:[#allocation6 + $0x234] sm:$0xf]
        %v5313 = vld [vmem:[#allocation6 + $0x238] sm:$0xf]
        %v5314 = vld [vmem:[#allocation6 + $0x23c] sm:$0xf]
        %v5363 = vunpack.c.l.b16 %v5267
        %v5364 = vunpack.c.l.b16 %v5268
        %v5365 = vunpack.c.l.b16 %v5269
        %v5366 = vunpack.c.l.b16 %v5270
        %v5367 = vunpack.c.l.b16 %v5271
        %v5368 = vunpack.c.l.b16 %v5272
        %v5369 = vunpack.c.l.b16 %v5273
        %v5370 = vunpack.c.l.b16 %v5274
        %v5371 = vunpack.c.l.b16 %v5275
        %v5372 = vunpack.c.l.b16 %v5276
        %v5373 = vunpack.c.l.b16 %v5277
        %v5374 = vunpack.c.l.b16 %v5278
        %v5375 = vunpack.c.l.b16 %v5279
        %v5376 = vunpack.c.l.b16 %v5280
        %v5377 = vunpack.c.l.b16 %v5281
        %v5378 = vunpack.c.l.b16 %v5282
        %v5379 = vunpack.c.l.b16 %v5283
        %v5380 = vunpack.c.l.b16 %v5284
        %v5381 = vunpack.c.l.b16 %v5285
        %v5382 = vunpack.c.l.b16 %v5286
        %v5383 = vunpack.c.l.b16 %v5287
        %v5384 = vunpack.c.l.b16 %v5288
        %v5385 = vunpack.c.l.b16 %v5289
        %v5386 = vunpack.c.l.b16 %v5290
        %v5387 = vunpack.c.l.b16 %v5291
        %v5388 = vunpack.c.l.b16 %v5292
        %v5389 = vunpack.c.l.b16 %v5293
        %v5390 = vunpack.c.l.b16 %v5294
        %v5391 = vunpack.c.l.b16 %v5295
        %v5392 = vunpack.c.l.b16 %v5296
        %v5393 = vunpack.c.l.b16 %v5297
        %v5394 = vunpack.c.l.b16 %v5298
        %v5395 = vunpack.c.l.b16 %v5299
        %v5396 = vunpack.c.l.b16 %v5300
        %v5397 = vunpack.c.l.b16 %v5301
        %v5398 = vunpack.c.l.b16 %v5302
        %v5399 = vunpack.c.l.b16 %v5303
        %v5400 = vunpack.c.l.b16 %v5304
        %v5401 = vunpack.c.l.b16 %v5305
        %v5402 = vunpack.c.l.b16 %v5306
        %v5403 = vunpack.c.l.b16 %v5307
        %v5404 = vunpack.c.l.b16 %v5308
        %v5405 = vunpack.c.l.b16 %v5309
        %v5406 = vunpack.c.l.b16 %v5310
        %v5407 = vunpack.c.l.b16 %v5311
        %v5408 = vunpack.c.l.b16 %v5312
        %v5409 = vunpack.c.l.b16 %v5313
        %v5410 = vunpack.c.l.b16 %v5314
        %v5411 = vpack.c.b16 %v5364, %v5363
        %v5412 = vpack.c.b16 %v5366, %v5365
        %v5413 = vpack.c.b16 %v5368, %v5367
        %v5414 = vpack.c.b16 %v5370, %v5369
        %v5415 = vpack.c.b16 %v5372, %v5371
        %v5416 = vpack.c.b16 %v5374, %v5373
        %v5417 = vpack.c.b16 %v5376, %v5375
        %v5418 = vpack.c.b16 %v5378, %v5377
        %v5419 = vpack.c.b16 %v5380, %v5379
        %v5420 = vpack.c.b16 %v5382, %v5381
        %v5421 = vpack.c.b16 %v5384, %v5383
        %v5422 = vpack.c.b16 %v5386, %v5385
        %v5423 = vpack.c.b16 %v5388, %v5387
        %v5424 = vpack.c.b16 %v5390, %v5389
        %v5425 = vpack.c.b16 %v5392, %v5391
        %v5426 = vpack.c.b16 %v5394, %v5393
        %v5427 = vpack.c.b16 %v5396, %v5395
        %v5428 = vpack.c.b16 %v5398, %v5397
        %v5429 = vpack.c.b16 %v5400, %v5399
        %v5430 = vpack.c.b16 %v5402, %v5401
        %v5431 = vpack.c.b16 %v5404, %v5403
        %v5432 = vpack.c.b16 %v5406, %v5405
        %v5433 = vpack.c.b16 %v5408, %v5407
        %v5434 = vpack.c.b16 %v5410, %v5409
        %5459 = vmatprep.subr.bf16.mxu0 0
        %5460 = vmatpush1.bf16.msra.mxu0 %v5418
        %5461 = vmatprep.subr.bf16.mxu0 0
        %5462 = vmatpush1.bf16.msra.mxu0 %v5417
        %5463 = vmatprep.subr.bf16.mxu0 0
        %5464 = vmatpush1.bf16.msra.mxu0 %v5416
        %5465 = vmatprep.subr.bf16.mxu0 0
        %5466 = vmatpush1.bf16.msra.mxu0 %v5415
        %5467 = vmatprep.subr.bf16.mxu0 0
        %5468 = vmatpush1.bf16.msra.mxu0 %v5414
        %5469 = vmatprep.subr.bf16.mxu0 0
        %5470 = vmatpush1.bf16.msra.mxu0 %v5413
        %5471 = vmatprep.subr.bf16.mxu0 0
        %5472 = vmatpush1.bf16.msra.mxu0 %v5412
        %5473 = vmatprep.subr.bf16.mxu0 0
        %5474 = vmatpush1.bf16.msra.mxu0 %v5411
        %5475 = vmatprep.subr.bf16.mxu0 0
        %5476 = vmatpush2.bf16.msra.mxu0 %v5426
        %5477 = vmatprep.subr.bf16.mxu0 0
        %5478 = vmatpush2.bf16.msra.mxu0 %v5425
        %5479 = vmatprep.subr.bf16.mxu0 0
        %5480 = vmatpush2.bf16.msra.mxu0 %v5424
        %5481 = vmatprep.subr.bf16.mxu0 0
        %5482 = vmatpush2.bf16.msra.mxu0 %v5423
        %5483 = vmatprep.subr.bf16.mxu0 0
        %5484 = vmatpush2.bf16.msra.mxu0 %v5422
        %5485 = vmatprep.subr.bf16.mxu0 0
        %5486 = vmatpush2.bf16.msra.mxu0 %v5421
        %5487 = vmatprep.subr.bf16.mxu0 0
        %5488 = vmatpush2.bf16.msra.mxu0 %v5420
        %5489 = vmatprep.subr.bf16.mxu0 0
        %5490 = vmatpush2.bf16.msra.mxu0 %v5419
        %5491 = vmatprep.mubr.bf16.mxu0 %v3968
        %5492 = vmatmul.mubr.bf16.gmra.mxu0 %v3845
        %v5493 = vpop.f32.mrf.mxu0
        %v5494 = vadd.f32 0.0, %v5493
        %v5495 = vpop.f32.mrf.mxu0
        %v5496 = vpop.f32.mrf.mxu0
        %v5497 = vadd.f32 0.0, %v5496
        %v5498 = vpop.f32.mrf.mxu0
        %5499 = vmatprep.mubr.bf16.mxu0 %v3980
        %5500 = vmatmul.mubr.bf16.gmra.mxu0 %v3846
        %v5501 = vpop.f32.mrf.mxu0
        %v5502 = vadd.f32 0.0, %v5501
        %v5503 = vpop.f32.mrf.mxu0
        %v5504 = vpop.f32.mrf.mxu0
        %v5505 = vadd.f32 0.0, %v5504
        %v5506 = vpop.f32.mrf.mxu0
        %5507 = vmatprep.mubr.bf16.mxu0 %v3992
        %5508 = vmatmul.mubr.bf16.gmra.mxu0 %v3847
        %v5509 = vpop.f32.mrf.mxu0
        %v5510 = vadd.f32 0.0, %v5509
        %v5511 = vpop.f32.mrf.mxu0
        %v5512 = vpop.f32.mrf.mxu0
        %v5513 = vadd.f32 0.0, %v5512
        %v5514 = vpop.f32.mrf.mxu0
        %5515 = vmatprep.mubr.bf16.mxu0 %v4004
        %5516 = vmatmul.mubr.bf16.gmra.mxu0 %v3848
        %v5517 = vpop.f32.mrf.mxu0
        %v5518 = vadd.f32 0.0, %v5517
        %v5519 = vpop.f32.mrf.mxu0
        %v5520 = vpop.f32.mrf.mxu0
        %v5521 = vadd.f32 0.0, %v5520
        %v5522 = vpop.f32.mrf.mxu0
        %5523 = vmatprep.mubr.bf16.mxu0 %v4016
        %5524 = vmatmul.mubr.bf16.gmra.mxu0 %v3849
        %v5525 = vpop.f32.mrf.mxu0
        %v5526 = vadd.f32 0.0, %v5525
        %v5527 = vpop.f32.mrf.mxu0
        %v5528 = vpop.f32.mrf.mxu0
        %v5529 = vadd.f32 0.0, %v5528
        %v5530 = vpop.f32.mrf.mxu0
        %5531 = vmatprep.mubr.bf16.mxu0 %v4028
        %5532 = vmatmul.mubr.bf16.gmra.mxu0 %v3850
        %v5533 = vpop.f32.mrf.mxu0
        %v5534 = vadd.f32 0.0, %v5533
        %v5535 = vpop.f32.mrf.mxu0
        %v5536 = vpop.f32.mrf.mxu0
        %v5537 = vadd.f32 0.0, %v5536
        %v5538 = vpop.f32.mrf.mxu0
        %5539 = vmatprep.mubr.bf16.mxu0 %v4040
        %5540 = vmatmul.mubr.bf16.gmra.mxu0 %v3851
        %v5541 = vpop.f32.mrf.mxu0
        %v5542 = vadd.f32 0.0, %v5541
        %v5543 = vpop.f32.mrf.mxu0
        %v5544 = vpop.f32.mrf.mxu0
        %v5545 = vadd.f32 0.0, %v5544
        %v5546 = vpop.f32.mrf.mxu0
        %5547 = vmatprep.mubr.bf16.mxu0 %v4052
        %5548 = vmatmul.mubr.bf16.gmra.mxu0 %v3852
        %v5549 = vpop.f32.mrf.mxu0
        %v5550 = vadd.f32 0.0, %v5549
        %v5551 = vpop.f32.mrf.mxu0
        %v5552 = vpop.f32.mrf.mxu0
        %v5553 = vadd.f32 0.0, %v5552
        %v5554 = vpop.f32.mrf.mxu0
        %5555 = vmatprep.mubr.bf16.mxu0 %v4064
        %5556 = vmatmul.mubr.bf16.gmra.mxu0 %v3853
        %v5557 = vpop.f32.mrf.mxu0
        %v5558 = vadd.f32 0.0, %v5557
        %v5559 = vpop.f32.mrf.mxu0
        %v5560 = vpop.f32.mrf.mxu0
        %v5561 = vadd.f32 0.0, %v5560
        %v5562 = vpop.f32.mrf.mxu0
        %5563 = vmatprep.mubr.bf16.mxu0 %v4076
        %5564 = vmatmul.mubr.bf16.gmra.mxu0 %v3854
        %v5565 = vpop.f32.mrf.mxu0
        %v5566 = vadd.f32 0.0, %v5565
        %v5567 = vpop.f32.mrf.mxu0
        %v5568 = vpop.f32.mrf.mxu0
        %v5569 = vadd.f32 0.0, %v5568
        %v5570 = vpop.f32.mrf.mxu0
        %5571 = vmatprep.mubr.bf16.mxu0 %v4088
        %5572 = vmatmul.mubr.bf16.gmra.mxu0 %v3855
        %v5573 = vpop.f32.mrf.mxu0
        %v5574 = vadd.f32 0.0, %v5573
        %v5575 = vpop.f32.mrf.mxu0
        %v5576 = vpop.f32.mrf.mxu0
        %v5577 = vadd.f32 0.0, %v5576
        %v5578 = vpop.f32.mrf.mxu0
        %5579 = vmatprep.mubr.bf16.mxu0 %v4100
        %5580 = vmatmul.mubr.bf16.gmra.mxu0 %v3856
        %v5581 = vpop.f32.mrf.mxu0
        %v5582 = vadd.f32 0.0, %v5581
        %v5583 = vpop.f32.mrf.mxu0
        %v5584 = vpop.f32.mrf.mxu0
        %v5585 = vadd.f32 0.0, %v5584
        %v5586 = vpop.f32.mrf.mxu0
        %5587 = vmatprep.mubr.bf16.mxu0 %v4112
        %5588 = vmatmul.mubr.bf16.gmra.mxu0 %v3857
        %v5589 = vpop.f32.mrf.mxu0
        %v5590 = vadd.f32 0.0, %v5589
        %v5591 = vpop.f32.mrf.mxu0
        %v5592 = vpop.f32.mrf.mxu0
        %v5593 = vadd.f32 0.0, %v5592
        %v5594 = vpop.f32.mrf.mxu0
        %5595 = vmatprep.mubr.bf16.mxu0 %v4124
        %5596 = vmatmul.mubr.bf16.gmra.mxu0 %v3858
        %v5597 = vpop.f32.mrf.mxu0
        %v5598 = vadd.f32 0.0, %v5597
        %v5599 = vpop.f32.mrf.mxu0
        %v5600 = vpop.f32.mrf.mxu0
        %v5601 = vadd.f32 0.0, %v5600
        %v5602 = vpop.f32.mrf.mxu0
        %5603 = vmatprep.mubr.bf16.mxu0 %v4136
        %5604 = vmatmul.mubr.bf16.gmra.mxu0 %v3859
        %v5605 = vpop.f32.mrf.mxu0
        %v5606 = vadd.f32 0.0, %v5605
        %v5607 = vpop.f32.mrf.mxu0
        %v5608 = vpop.f32.mrf.mxu0
        %v5609 = vadd.f32 0.0, %v5608
        %v5610 = vpop.f32.mrf.mxu0
        %5611 = vmatprep.mubr.bf16.mxu0 %v4148
        %5612 = vmatmul.mubr.bf16.gmra.mxu0 %v3860
        %v5613 = vpop.f32.mrf.mxu0
        %v5614 = vadd.f32 0.0, %v5613
        %v5615 = vpop.f32.mrf.mxu0
        %v5616 = vpop.f32.mrf.mxu0
        %v5617 = vadd.f32 0.0, %v5616
        %v5618 = vpop.f32.mrf.mxu0
        %5619 = vdwg.mxu0
        %5620 = vmatprep.subr.bf16.mxu0 0
        %5621 = vmatpush1.bf16.msra.mxu0 %v5434
        %5622 = vmatprep.subr.bf16.mxu0 0
        %5623 = vmatpush1.bf16.msra.mxu0 %v5433
        %5624 = vmatprep.subr.bf16.mxu0 0
        %5625 = vmatpush1.bf16.msra.mxu0 %v5432
        %5626 = vmatprep.subr.bf16.mxu0 0
        %5627 = vmatpush1.bf16.msra.mxu0 %v5431
        %5628 = vmatprep.subr.bf16.mxu0 0
        %5629 = vmatpush1.bf16.msra.mxu0 %v5430
        %5630 = vmatprep.subr.bf16.mxu0 0
        %5631 = vmatpush1.bf16.msra.mxu0 %v5429
        %5632 = vmatprep.subr.bf16.mxu0 0
        %5633 = vmatpush1.bf16.msra.mxu0 %v5428
        %5634 = vmatprep.subr.bf16.mxu0 0
        %5635 = vmatpush1.bf16.msra.mxu0 %v5427
        %5636 = vmatprep.subr.bf16.mxu0 0
        %5637 = vmatpush2.bf16.msra.mxu0 0
        %5638 = vmatprep.subr.bf16.mxu0 0
        %5639 = vmatpush2.bf16.msra.mxu0 0
        %5640 = vmatprep.subr.bf16.mxu0 0
        %5641 = vmatpush2.bf16.msra.mxu0 0
        %5642 = vmatprep.subr.bf16.mxu0 0
        %5643 = vmatpush2.bf16.msra.mxu0 0
        %5644 = vmatprep.subr.bf16.mxu0 0
        %5645 = vmatpush2.bf16.msra.mxu0 0
        %5646 = vmatprep.subr.bf16.mxu0 0
        %5647 = vmatpush2.bf16.msra.mxu0 0
        %5648 = vmatprep.subr.bf16.mxu0 0
        %5649 = vmatpush2.bf16.msra.mxu0 0
        %5650 = vmatprep.subr.bf16.mxu0 0
        %5651 = vmatpush2.bf16.msra.mxu0 0
        %5652 = vmatprep.mubr.bf16.mxu0 0
        %5653 = vmatmul.mubr.bf16.gmra.mxu0 %v4175
        %v5654 = vpop.f32.mrf.mxu0
        %v5655 = vadd.f32 %v5494, %v5654
        %v5656 = vpop.f32.mrf.mxu0
        %v5657 = vpop.f32.mrf.mxu0
        %v5658 = vadd.f32 %v5497, %v5657
        %v5659 = vpop.f32.mrf.mxu0
        %5660 = vmatprep.mubr.bf16.mxu0 0
        %5661 = vmatmul.mubr.bf16.gmra.mxu0 %v4178
        %v5662 = vpop.f32.mrf.mxu0
        %v5663 = vadd.f32 %v5502, %v5662
        %v5664 = vpop.f32.mrf.mxu0
        %v5665 = vpop.f32.mrf.mxu0
        %v5666 = vadd.f32 %v5505, %v5665
        %v5667 = vpop.f32.mrf.mxu0
        %5668 = vmatprep.mubr.bf16.mxu0 0
        %5669 = vmatmul.mubr.bf16.gmra.mxu0 %v4181
        %v5670 = vpop.f32.mrf.mxu0
        %v5671 = vadd.f32 %v5510, %v5670
        %v5672 = vpop.f32.mrf.mxu0
        %v5673 = vpop.f32.mrf.mxu0
        %v5674 = vadd.f32 %v5513, %v5673
        %v5675 = vpop.f32.mrf.mxu0
        %5676 = vmatprep.mubr.bf16.mxu0 0
        %5677 = vmatmul.mubr.bf16.gmra.mxu0 %v4184
        %v5678 = vpop.f32.mrf.mxu0
        %v5679 = vadd.f32 %v5518, %v5678
        %v5680 = vpop.f32.mrf.mxu0
        %v5681 = vpop.f32.mrf.mxu0
        %v5682 = vadd.f32 %v5521, %v5681
        %v5683 = vpop.f32.mrf.mxu0
        %5684 = vmatprep.mubr.bf16.mxu0 0
        %5685 = vmatmul.mubr.bf16.gmra.mxu0 %v4187
        %v5686 = vpop.f32.mrf.mxu0
        %v5687 = vadd.f32 %v5526, %v5686
        %v5688 = vpop.f32.mrf.mxu0
        %v5689 = vpop.f32.mrf.mxu0
        %v5690 = vadd.f32 %v5529, %v5689
        %v5691 = vpop.f32.mrf.mxu0
        %5692 = vmatprep.mubr.bf16.mxu0 0
        %5693 = vmatmul.mubr.bf16.gmra.mxu0 %v4190
        %v5694 = vpop.f32.mrf.mxu0
        %v5695 = vadd.f32 %v5534, %v5694
        %v5696 = vpop.f32.mrf.mxu0
        %v5697 = vpop.f32.mrf.mxu0
        %v5698 = vadd.f32 %v5537, %v5697
        %v5699 = vpop.f32.mrf.mxu0
        %5700 = vmatprep.mubr.bf16.mxu0 0
        %5701 = vmatmul.mubr.bf16.gmra.mxu0 %v4193
        %v5702 = vpop.f32.mrf.mxu0
        %v5703 = vadd.f32 %v5542, %v5702
        %v5704 = vpop.f32.mrf.mxu0
        %v5705 = vpop.f32.mrf.mxu0
        %v5706 = vadd.f32 %v5545, %v5705
        %v5707 = vpop.f32.mrf.mxu0
        %5708 = vmatprep.mubr.bf16.mxu0 0
        %5709 = vmatmul.mubr.bf16.gmra.mxu0 %v4196
        %v5710 = vpop.f32.mrf.mxu0
        %v5711 = vadd.f32 %v5550, %v5710
        %v5712 = vpop.f32.mrf.mxu0
        %v5713 = vpop.f32.mrf.mxu0
        %v5714 = vadd.f32 %v5553, %v5713
        %v5715 = vpop.f32.mrf.mxu0
        %5716 = vmatprep.mubr.bf16.mxu0 0
        %5717 = vmatmul.mubr.bf16.gmra.mxu0 %v4199
        %v5718 = vpop.f32.mrf.mxu0
        %v5719 = vadd.f32 %v5558, %v5718
        %v5720 = vpop.f32.mrf.mxu0
        %v5721 = vpop.f32.mrf.mxu0
        %v5722 = vadd.f32 %v5561, %v5721
        %v5723 = vpop.f32.mrf.mxu0
        %5724 = vmatprep.mubr.bf16.mxu0 0
        %5725 = vmatmul.mubr.bf16.gmra.mxu0 %v4202
        %v5726 = vpop.f32.mrf.mxu0
        %v5727 = vadd.f32 %v5566, %v5726
        %v5728 = vpop.f32.mrf.mxu0
        %v5729 = vpop.f32.mrf.mxu0
        %v5730 = vadd.f32 %v5569, %v5729
        %v5731 = vpop.f32.mrf.mxu0
        %5732 = vmatprep.mubr.bf16.mxu0 0
        %5733 = vmatmul.mubr.bf16.gmra.mxu0 %v4205
        %v5734 = vpop.f32.mrf.mxu0
        %v5735 = vadd.f32 %v5574, %v5734
        %v5736 = vpop.f32.mrf.mxu0
        %v5737 = vpop.f32.mrf.mxu0
        %v5738 = vadd.f32 %v5577, %v5737
        %v5739 = vpop.f32.mrf.mxu0
        %5740 = vmatprep.mubr.bf16.mxu0 0
        %5741 = vmatmul.mubr.bf16.gmra.mxu0 %v4208
        %v5742 = vpop.f32.mrf.mxu0
        %v5743 = vadd.f32 %v5582, %v5742
        %v5744 = vpop.f32.mrf.mxu0
        %v5745 = vpop.f32.mrf.mxu0
        %v5746 = vadd.f32 %v5585, %v5745
        %v5747 = vpop.f32.mrf.mxu0
        %5748 = vmatprep.mubr.bf16.mxu0 0
        %5749 = vmatmul.mubr.bf16.gmra.mxu0 %v4211
        %v5750 = vpop.f32.mrf.mxu0
        %v5751 = vadd.f32 %v5590, %v5750
        %v5752 = vpop.f32.mrf.mxu0
        %v5753 = vpop.f32.mrf.mxu0
        %v5754 = vadd.f32 %v5593, %v5753
        %v5755 = vpop.f32.mrf.mxu0
        %5756 = vmatprep.mubr.bf16.mxu0 0
        %5757 = vmatmul.mubr.bf16.gmra.mxu0 %v4214
        %v5758 = vpop.f32.mrf.mxu0
        %v5759 = vadd.f32 %v5598, %v5758
        %v5760 = vpop.f32.mrf.mxu0
        %v5761 = vpop.f32.mrf.mxu0
        %v5762 = vadd.f32 %v5601, %v5761
        %v5763 = vpop.f32.mrf.mxu0
        %5764 = vmatprep.mubr.bf16.mxu0 0
        %5765 = vmatmul.mubr.bf16.gmra.mxu0 %v4217
        %v5766 = vpop.f32.mrf.mxu0
        %v5767 = vadd.f32 %v5606, %v5766
        %v5768 = vpop.f32.mrf.mxu0
        %v5769 = vpop.f32.mrf.mxu0
        %v5770 = vadd.f32 %v5609, %v5769
        %v5771 = vpop.f32.mrf.mxu0
        %5772 = vmatprep.mubr.bf16.mxu0 0
        %5773 = vmatmul.mubr.bf16.gmra.mxu0 %v4220
        %v5774 = vpop.f32.mrf.mxu0
        %v5775 = vadd.f32 %v5614, %v5774
        %v5776 = vpop.f32.mrf.mxu0
        %v5777 = vpop.f32.mrf.mxu0
        %v5778 = vadd.f32 %v5617, %v5777
        %v5779 = vpop.f32.mrf.mxu0
        %5780 = vdwg.mxu0
        %v5781 = vadd.f32 %v5141, %v5655
        %v5782 = vadd.f32 %v5144, %v5658
        %v5783 = vadd.f32 %v5149, %v5663
        %v5784 = vadd.f32 %v5152, %v5666
        %v5785 = vadd.f32 %v5157, %v5671
        %v5786 = vadd.f32 %v5160, %v5674
        %v5787 = vadd.f32 %v5165, %v5679
        %v5788 = vadd.f32 %v5168, %v5682
        %v5789 = vadd.f32 %v5173, %v5687
        %v5790 = vadd.f32 %v5176, %v5690
        %v5791 = vadd.f32 %v5181, %v5695
        %v5792 = vadd.f32 %v5184, %v5698
        %v5793 = vadd.f32 %v5189, %v5703
        %v5794 = vadd.f32 %v5192, %v5706
        %v5795 = vadd.f32 %v5197, %v5711
        %v5796 = vadd.f32 %v5200, %v5714
        %v5797 = vadd.f32 %v5205, %v5719
        %v5798 = vadd.f32 %v5208, %v5722
        %v5799 = vadd.f32 %v5213, %v5727
        %v5800 = vadd.f32 %v5216, %v5730
        %v5801 = vadd.f32 %v5221, %v5735
        %v5802 = vadd.f32 %v5224, %v5738
        %v5803 = vadd.f32 %v5229, %v5743
        %v5804 = vadd.f32 %v5232, %v5746
        %v5805 = vadd.f32 %v5237, %v5751
        %v5806 = vadd.f32 %v5240, %v5754
        %v5807 = vadd.f32 %v5245, %v5759
        %v5808 = vadd.f32 %v5248, %v5762
        %v5809 = vadd.f32 %v5253, %v5767
        %v5810 = vadd.f32 %v5256, %v5770
        %v5811 = vadd.f32 %v5261, %v5775
        %v5812 = vadd.f32 %v5264, %v5778
        %v5813 = vmul.f32 %v5781, %v3021
        %v5814 = vmul.f32 %v5782, %v3021
        %v5815 = vmul.f32 %v5783, %v3021
        %v5816 = vmul.f32 %v5784, %v3021
        %v5817 = vmul.f32 %v5785, %v3021
        %v5818 = vmul.f32 %v5786, %v3021
        %v5819 = vmul.f32 %v5787, %v3021
        %v5820 = vmul.f32 %v5788, %v3021
        %v5821 = vmul.f32 %v5789, %v3021
        %v5822 = vmul.f32 %v5790, %v3021
        %v5823 = vmul.f32 %v5791, %v3021
        %v5824 = vmul.f32 %v5792, %v3021
        %v5825 = vmul.f32 %v5793, %v3021
        %v5826 = vmul.f32 %v5794, %v3021
        %v5827 = vmul.f32 %v5795, %v3021
        %v5828 = vmul.f32 %v5796, %v3021
        %v5829 = vmul.f32 %v5797, %v3021
        %v5830 = vmul.f32 %v5798, %v3021
        %v5831 = vmul.f32 %v5799, %v3021
        %v5832 = vmul.f32 %v5800, %v3021
        %v5833 = vmul.f32 %v5801, %v3021
        %v5834 = vmul.f32 %v5802, %v3021
        %v5835 = vmul.f32 %v5803, %v3021
        %v5836 = vmul.f32 %v5804, %v3021
        %v5837 = vmul.f32 %v5805, %v3021
        %v5838 = vmul.f32 %v5806, %v3021
        %v5839 = vmul.f32 %v5807, %v3021
        %v5840 = vmul.f32 %v5808, %v3021
        %v5841 = vmul.f32 %v5809, %v3021
        %v5842 = vmul.f32 %v5810, %v3021
        %v5843 = vmul.f32 %v5811, %v3021
        %v5844 = vmul.f32 %v5812, %v3021
        %v5845 = vadd.f32 %v5813, %v3059
        %v5846 = vadd.f32 %v5814, %v3059
        %v5847 = vadd.f32 %v5815, %v3059
        %v5848 = vadd.f32 %v5816, %v3059
        %v5849 = vadd.f32 %v5817, %v3059
        %v5850 = vadd.f32 %v5818, %v3059
        %v5851 = vadd.f32 %v5819, %v3059
        %v5852 = vadd.f32 %v5820, %v3059
        %v5853 = vadd.f32 %v5821, %v3059
        %v5854 = vadd.f32 %v5822, %v3059
        %v5855 = vadd.f32 %v5823, %v3059
        %v5856 = vadd.f32 %v5824, %v3059
        %v5857 = vadd.f32 %v5825, %v3059
        %v5858 = vadd.f32 %v5826, %v3059
        %v5859 = vadd.f32 %v5827, %v3059
        %v5860 = vadd.f32 %v5828, %v3059
        %v5861 = vadd.f32 %v5829, %v3059
        %v5862 = vadd.f32 %v5830, %v3059
        %v5863 = vadd.f32 %v5831, %v3059
        %v5864 = vadd.f32 %v5832, %v3059
        %v5865 = vadd.f32 %v5833, %v3059
        %v5866 = vadd.f32 %v5834, %v3059
        %v5867 = vadd.f32 %v5835, %v3059
        %v5868 = vadd.f32 %v5836, %v3059
        %v5869 = vadd.f32 %v5837, %v3059
        %v5870 = vadd.f32 %v5838, %v3059
        %v5871 = vadd.f32 %v5839, %v3059
        %v5872 = vadd.f32 %v5840, %v3059
        %v5873 = vadd.f32 %v5841, %v3059
        %v5874 = vadd.f32 %v5842, %v3059
        %v5875 = vadd.f32 %v5843, %v3059
        %v5876 = vadd.f32 %v5844, %v3059
        %v5877 = vmax.f32 %v5845, 0.0
        %v5878 = vmax.f32 %v5846, 0.0
        %v5879 = vmax.f32 %v5847, 0.0
        %v5880 = vmax.f32 %v5848, 0.0
        %v5881 = vmax.f32 %v5849, 0.0
        %v5882 = vmax.f32 %v5850, 0.0
        %v5883 = vmax.f32 %v5851, 0.0
        %v5884 = vmax.f32 %v5852, 0.0
        %v5885 = vmax.f32 %v5853, 0.0
        %v5886 = vmax.f32 %v5854, 0.0
        %v5887 = vmax.f32 %v5855, 0.0
        %v5888 = vmax.f32 %v5856, 0.0
        %v5889 = vmax.f32 %v5857, 0.0
        %v5890 = vmax.f32 %v5858, 0.0
        %v5891 = vmax.f32 %v5859, 0.0
        %v5892 = vmax.f32 %v5860, 0.0
        %v5893 = vmax.f32 %v5861, 0.0
        %v5894 = vmax.f32 %v5862, 0.0
        %v5895 = vmax.f32 %v5863, 0.0
        %v5896 = vmax.f32 %v5864, 0.0
        %v5897 = vmax.f32 %v5865, 0.0
        %v5898 = vmax.f32 %v5866, 0.0
        %v5899 = vmax.f32 %v5867, 0.0
        %v5900 = vmax.f32 %v5868, 0.0
        %v5901 = vmax.f32 %v5869, 0.0
        %v5902 = vmax.f32 %v5870, 0.0
        %v5903 = vmax.f32 %v5871, 0.0
        %v5904 = vmax.f32 %v5872, 0.0
        %v5905 = vmax.f32 %v5873, 0.0
        %v5906 = vmax.f32 %v5874, 0.0
        %v5907 = vmax.f32 %v5875, 0.0
        %v5908 = vmax.f32 %v5876, 0.0
        %v5909 = vld [vmem:[%s202] sm:$0xff]
        %v5910 = vld [vmem:[%s202 + $0x8] sm:$0xff]
        %v5911 = vld [vmem:[%s202 + $0x10] sm:$0xff]
        %v5912 = vld [vmem:[%s202 + $0x18] sm:$0xff]
        %v5913 = vld [vmem:[%s202 + $0x20] sm:$0xff]
        %v5914 = vld [vmem:[%s202 + $0x28] sm:$0xff]
        %v5915 = vld [vmem:[%s202 + $0x30] sm:$0xff]
        %v5916 = vld [vmem:[%s202 + $0x38] sm:$0xff]
        %v5917 = vld [vmem:[%s202 + $0x40] sm:$0xff]
        %v5918 = vld [vmem:[%s202 + $0x48] sm:$0xff]
        %v5919 = vld [vmem:[%s202 + $0x50] sm:$0xff]
        %v5920 = vld [vmem:[%s202 + $0x58] sm:$0xff]
        %v5921 = vld [vmem:[%s202 + $0x60] sm:$0xff]
        %v5922 = vld [vmem:[%s202 + $0x68] sm:$0xff]
        %v5923 = vld [vmem:[%s202 + $0x70] sm:$0xff]
        %v5924 = vld [vmem:[%s202 + $0x78] sm:$0xff]
        %v5925 = vld [vmem:[%s202 + $0x80] sm:$0xff]
        %v5926 = vld [vmem:[%s202 + $0x88] sm:$0xff]
        %v5927 = vld [vmem:[%s202 + $0x90] sm:$0xff]
        %v5928 = vld [vmem:[%s202 + $0x98] sm:$0xff]
        %v5929 = vld [vmem:[%s202 + $0xa0] sm:$0xff]
        %v5930 = vld [vmem:[%s202 + $0xa8] sm:$0xff]
        %v5931 = vld [vmem:[%s202 + $0xb0] sm:$0xff]
        %v5932 = vld [vmem:[%s202 + $0xb8] sm:$0xff]
        %v5933 = vld [vmem:[%s202 + $0xc0] sm:$0xff]
        %v5934 = vld [vmem:[%s202 + $0xc8] sm:$0xff]
        %v5935 = vld [vmem:[%s202 + $0xd0] sm:$0xff]
        %v5936 = vld [vmem:[%s202 + $0xd8] sm:$0xff]
        %v5937 = vld [vmem:[%s202 + $0xe0] sm:$0xff]
        %v5938 = vld [vmem:[%s202 + $0xe8] sm:$0xff]
        %v5939 = vld [vmem:[%s202 + $0xf0] sm:$0xff]
        %v5940 = vld [vmem:[%s202 + $0xf8] sm:$0xff]
        %v5941 = vadd.f32 %v5909, %v5877
        %v5942 = vadd.f32 %v5910, %v5878
        %v5943 = vadd.f32 %v5911, %v5879
        %v5944 = vadd.f32 %v5912, %v5880
        %v5945 = vadd.f32 %v5913, %v5881
        %v5946 = vadd.f32 %v5914, %v5882
        %v5947 = vadd.f32 %v5915, %v5883
        %v5948 = vadd.f32 %v5916, %v5884
        %v5949 = vadd.f32 %v5917, %v5885
        %v5950 = vadd.f32 %v5918, %v5886
        %v5951 = vadd.f32 %v5919, %v5887
        %v5952 = vadd.f32 %v5920, %v5888
        %v5953 = vadd.f32 %v5921, %v5889
        %v5954 = vadd.f32 %v5922, %v5890
        %v5955 = vadd.f32 %v5923, %v5891
        %v5956 = vadd.f32 %v5924, %v5892
        %v5957 = vadd.f32 %v5925, %v5893
        %v5958 = vadd.f32 %v5926, %v5894
        %v5959 = vadd.f32 %v5927, %v5895
        %v5960 = vadd.f32 %v5928, %v5896
        %v5961 = vadd.f32 %v5929, %v5897
        %v5962 = vadd.f32 %v5930, %v5898
        %v5963 = vadd.f32 %v5931, %v5899
        %v5964 = vadd.f32 %v5932, %v5900
        %v5965 = vadd.f32 %v5933, %v5901
        %v5966 = vadd.f32 %v5934, %v5902
        %v5967 = vadd.f32 %v5935, %v5903
        %v5968 = vadd.f32 %v5936, %v5904
        %v5969 = vadd.f32 %v5937, %v5905
        %v5970 = vadd.f32 %v5938, %v5906
        %v5971 = vadd.f32 %v5939, %v5907
        %v5972 = vadd.f32 %v5940, %v5908
        %v5973 = vpack.c.bf16 %v5942, %v5941
        %v5974 = vpack.c.bf16 %v5944, %v5943
        %v5975 = vpack.c.bf16 %v5946, %v5945
        %v5976 = vpack.c.bf16 %v5948, %v5947
        %v5977 = vpack.c.bf16 %v5950, %v5949
        %v5978 = vpack.c.bf16 %v5952, %v5951
        %v5979 = vpack.c.bf16 %v5954, %v5953
        %v5980 = vpack.c.bf16 %v5956, %v5955
        %v5981 = vpack.c.bf16 %v5958, %v5957
        %v5982 = vpack.c.bf16 %v5960, %v5959
        %v5983 = vpack.c.bf16 %v5962, %v5961
        %v5984 = vpack.c.bf16 %v5964, %v5963
        %v5985 = vpack.c.bf16 %v5966, %v5965
        %v5986 = vpack.c.bf16 %v5968, %v5967
        %v5987 = vpack.c.bf16 %v5970, %v5969
        %v5988 = vpack.c.bf16 %v5972, %v5971
        %v6005 = vunpack.c.l.b16 %v5973
        %v6006 = vunpack.c.h.b16 %v5973
        %v6007 = vunpack.c.l.b16 %v5974
        %v6008 = vunpack.c.h.b16 %v5974
        %v6009 = vunpack.c.l.b16 %v5975
        %v6010 = vunpack.c.h.b16 %v5975
        %v6011 = vunpack.c.l.b16 %v5976
        %v6012 = vunpack.c.h.b16 %v5976
        %v6013 = vunpack.c.l.b16 %v5977
        %v6014 = vunpack.c.h.b16 %v5977
        %v6015 = vunpack.c.l.b16 %v5978
        %v6016 = vunpack.c.h.b16 %v5978
        %v6017 = vunpack.c.l.b16 %v5979
        %v6018 = vunpack.c.h.b16 %v5979
        %v6019 = vunpack.c.l.b16 %v5980
        %v6020 = vunpack.c.h.b16 %v5980
        %v6021 = vunpack.c.l.b16 %v5981
        %v6022 = vunpack.c.h.b16 %v5981
        %v6023 = vunpack.c.l.b16 %v5982
        %v6024 = vunpack.c.h.b16 %v5982
        %v6025 = vunpack.c.l.b16 %v5983
        %v6026 = vunpack.c.h.b16 %v5983
        %v6027 = vunpack.c.l.b16 %v5984
        %v6028 = vunpack.c.h.b16 %v5984
        %v6029 = vunpack.c.l.b16 %v5985
        %v6030 = vunpack.c.h.b16 %v5985
        %v6031 = vunpack.c.l.b16 %v5986
        %v6032 = vunpack.c.h.b16 %v5986
        %v6033 = vunpack.c.l.b16 %v5987
        %v6034 = vunpack.c.h.b16 %v5987
        %v6035 = vunpack.c.l.b16 %v5988
        %v6036 = vunpack.c.h.b16 %v5988
        %v6037 = vpack.c.b16 %v6005, %v6005
        %v6038 = vpack.c.b16 %v6006, %v6006
        %v6039 = vpack.c.b16 %v6007, %v6007
        %v6040 = vpack.c.b16 %v6008, %v6008
        %v6041 = vpack.c.b16 %v6009, %v6009
        %v6042 = vpack.c.b16 %v6010, %v6010
        %v6043 = vpack.c.b16 %v6011, %v6011
        %v6044 = vpack.c.b16 %v6012, %v6012
        %v6045 = vpack.c.b16 %v6013, %v6013
        %v6046 = vpack.c.b16 %v6014, %v6014
        %v6047 = vpack.c.b16 %v6015, %v6015
        %v6048 = vpack.c.b16 %v6016, %v6016
        %v6049 = vpack.c.b16 %v6017, %v6017
        %v6050 = vpack.c.b16 %v6018, %v6018
        %v6051 = vpack.c.b16 %v6019, %v6019
        %v6052 = vpack.c.b16 %v6020, %v6020
        %v6053 = vpack.c.b16 %v6021, %v6021
        %v6054 = vpack.c.b16 %v6022, %v6022
        %v6055 = vpack.c.b16 %v6023, %v6023
        %v6056 = vpack.c.b16 %v6024, %v6024
        %v6057 = vpack.c.b16 %v6025, %v6025
        %v6058 = vpack.c.b16 %v6026, %v6026
        %v6059 = vpack.c.b16 %v6027, %v6027
        %v6060 = vpack.c.b16 %v6028, %v6028
        %v6061 = vpack.c.b16 %v6029, %v6029
        %v6062 = vpack.c.b16 %v6030, %v6030
        %v6063 = vpack.c.b16 %v6031, %v6031
        %v6064 = vpack.c.b16 %v6032, %v6032
        %v6065 = vpack.c.b16 %v6033, %v6033
        %v6066 = vpack.c.b16 %v6034, %v6034
        %v6067 = vpack.c.b16 %v6035, %v6035
        %v6068 = vpack.c.b16 %v6036, %v6036
        %v6070 = vshrl.u32 %v6037, 16
        %v6072 = vrot.slane %v6070, 7
        %v6073 = vshll.u32 %v6037, 16
        %v6075 = vor.u32 %v6072, %v6073
        %v6076 = vrot.slane %v6072, 4
        %v6078 = vshrl.u32 %v6038, 16
        %v6080 = vrot.slane %v6078, 7
        %v6081 = vshll.u32 %v6038, 16
        %v6083 = vor.u32 %v6080, %v6081
        %v6084 = vsel %vm483, %v6076, %v6083
        %v6085 = vrot.slane %v6080, 4
        %v6087 = vshrl.u32 %v6039, 16
        %v6089 = vrot.slane %v6087, 7
        %v6090 = vshll.u32 %v6039, 16
        %v6092 = vor.u32 %v6089, %v6090
        %v6093 = vrot.slane %v6089, 4
        %v6095 = vshrl.u32 %v6040, 16
        %v6097 = vrot.slane %v6095, 7
        %v6098 = vshll.u32 %v6040, 16
        %v6100 = vor.u32 %v6097, %v6098
        %v6101 = vsel %vm483, %v6093, %v6100
        %v6102 = vrot.slane %v6097, 4
        %v6104 = vshrl.u32 %v6041, 16
        %v6106 = vrot.slane %v6104, 7
        %v6107 = vshll.u32 %v6041, 16
        %v6109 = vor.u32 %v6106, %v6107
        %v6110 = vrot.slane %v6106, 4
        %v6112 = vshrl.u32 %v6042, 16
        %v6114 = vrot.slane %v6112, 7
        %v6115 = vshll.u32 %v6042, 16
        %v6117 = vor.u32 %v6114, %v6115
        %v6118 = vsel %vm483, %v6110, %v6117
        %v6119 = vrot.slane %v6114, 4
        %v6121 = vshrl.u32 %v6043, 16
        %v6123 = vrot.slane %v6121, 7
        %v6124 = vshll.u32 %v6043, 16
        %v6126 = vor.u32 %v6123, %v6124
        %v6127 = vrot.slane %v6123, 4
        %v6129 = vshrl.u32 %v6044, 16
        %v6131 = vrot.slane %v6129, 7
        %v6132 = vshll.u32 %v6044, 16
        %v6134 = vor.u32 %v6131, %v6132
        %v6135 = vsel %vm483, %v6127, %v6134
        %v6136 = vrot.slane %v6131, 4
        %v6138 = vshrl.u32 %v6045, 16
        %v6140 = vrot.slane %v6138, 7
        %v6141 = vshll.u32 %v6045, 16
        %v6143 = vor.u32 %v6140, %v6141
        %v6144 = vrot.slane %v6140, 4
        %v6146 = vshrl.u32 %v6046, 16
        %v6148 = vrot.slane %v6146, 7
        %v6149 = vshll.u32 %v6046, 16
        %v6151 = vor.u32 %v6148, %v6149
        %v6152 = vsel %vm483, %v6144, %v6151
        %v6153 = vrot.slane %v6148, 4
        %v6155 = vshrl.u32 %v6047, 16
        %v6157 = vrot.slane %v6155, 7
        %v6158 = vshll.u32 %v6047, 16
        %v6160 = vor.u32 %v6157, %v6158
        %v6161 = vrot.slane %v6157, 4
        %v6163 = vshrl.u32 %v6048, 16
        %v6165 = vrot.slane %v6163, 7
        %v6166 = vshll.u32 %v6048, 16
        %v6168 = vor.u32 %v6165, %v6166
        %v6169 = vsel %vm483, %v6161, %v6168
        %v6170 = vrot.slane %v6165, 4
        %v6172 = vshrl.u32 %v6049, 16
        %v6174 = vrot.slane %v6172, 7
        %v6175 = vshll.u32 %v6049, 16
        %v6177 = vor.u32 %v6174, %v6175
        %v6178 = vrot.slane %v6174, 4
        %v6180 = vshrl.u32 %v6050, 16
        %v6182 = vrot.slane %v6180, 7
        %v6183 = vshll.u32 %v6050, 16
        %v6185 = vor.u32 %v6182, %v6183
        %v6186 = vsel %vm483, %v6178, %v6185
        %v6187 = vrot.slane %v6182, 4
        %v6189 = vshrl.u32 %v6051, 16
        %v6191 = vrot.slane %v6189, 7
        %v6192 = vshll.u32 %v6051, 16
        %v6194 = vor.u32 %v6191, %v6192
        %v6195 = vrot.slane %v6191, 4
        %v6197 = vshrl.u32 %v6052, 16
        %v6199 = vrot.slane %v6197, 7
        %v6200 = vshll.u32 %v6052, 16
        %v6202 = vor.u32 %v6199, %v6200
        %v6203 = vsel %vm483, %v6195, %v6202
        %v6204 = vrot.slane %v6199, 4
        %v6206 = vshrl.u32 %v6053, 16
        %v6208 = vrot.slane %v6206, 7
        %v6209 = vshll.u32 %v6053, 16
        %v6211 = vor.u32 %v6208, %v6209
        %v6212 = vrot.slane %v6208, 4
        %v6214 = vshrl.u32 %v6054, 16
        %v6216 = vrot.slane %v6214, 7
        %v6217 = vshll.u32 %v6054, 16
        %v6219 = vor.u32 %v6216, %v6217
        %v6220 = vsel %vm483, %v6212, %v6219
        %v6221 = vrot.slane %v6216, 4
        %v6223 = vshrl.u32 %v6055, 16
        %v6225 = vrot.slane %v6223, 7
        %v6226 = vshll.u32 %v6055, 16
        %v6228 = vor.u32 %v6225, %v6226
        %v6229 = vrot.slane %v6225, 4
        %v6231 = vshrl.u32 %v6056, 16
        %v6233 = vrot.slane %v6231, 7
        %v6234 = vshll.u32 %v6056, 16
        %v6236 = vor.u32 %v6233, %v6234
        %v6237 = vsel %vm483, %v6229, %v6236
        %v6238 = vrot.slane %v6233, 4
        %v6240 = vshrl.u32 %v6057, 16
        %v6242 = vrot.slane %v6240, 7
        %v6243 = vshll.u32 %v6057, 16
        %v6245 = vor.u32 %v6242, %v6243
        %v6246 = vrot.slane %v6242, 4
        %v6248 = vshrl.u32 %v6058, 16
        %v6250 = vrot.slane %v6248, 7
        %v6251 = vshll.u32 %v6058, 16
        %v6253 = vor.u32 %v6250, %v6251
        %v6254 = vsel %vm483, %v6246, %v6253
        %v6255 = vrot.slane %v6250, 4
        %v6257 = vshrl.u32 %v6059, 16
        %v6259 = vrot.slane %v6257, 7
        %v6260 = vshll.u32 %v6059, 16
        %v6262 = vor.u32 %v6259, %v6260
        %v6263 = vrot.slane %v6259, 4
        %v6265 = vshrl.u32 %v6060, 16
        %v6267 = vrot.slane %v6265, 7
        %v6268 = vshll.u32 %v6060, 16
        %v6270 = vor.u32 %v6267, %v6268
        %v6271 = vsel %vm483, %v6263, %v6270
        %v6272 = vrot.slane %v6267, 4
        %v6274 = vshrl.u32 %v6061, 16
        %v6276 = vrot.slane %v6274, 7
        %v6277 = vshll.u32 %v6061, 16
        %v6279 = vor.u32 %v6276, %v6277
        %v6280 = vrot.slane %v6276, 4
        %v6282 = vshrl.u32 %v6062, 16
        %v6284 = vrot.slane %v6282, 7
        %v6285 = vshll.u32 %v6062, 16
        %v6287 = vor.u32 %v6284, %v6285
        %v6288 = vsel %vm483, %v6280, %v6287
        %v6289 = vrot.slane %v6284, 4
        %v6291 = vshrl.u32 %v6063, 16
        %v6293 = vrot.slane %v6291, 7
        %v6294 = vshll.u32 %v6063, 16
        %v6296 = vor.u32 %v6293, %v6294
        %v6297 = vrot.slane %v6293, 4
        %v6299 = vshrl.u32 %v6064, 16
        %v6301 = vrot.slane %v6299, 7
        %v6302 = vshll.u32 %v6064, 16
        %v6304 = vor.u32 %v6301, %v6302
        %v6305 = vsel %vm483, %v6297, %v6304
        %v6306 = vrot.slane %v6301, 4
        %v6308 = vshrl.u32 %v6065, 16
        %v6310 = vrot.slane %v6308, 7
        %v6311 = vshll.u32 %v6065, 16
        %v6313 = vor.u32 %v6310, %v6311
        %v6314 = vrot.slane %v6310, 4
        %v6316 = vshrl.u32 %v6066, 16
        %v6318 = vrot.slane %v6316, 7
        %v6319 = vshll.u32 %v6066, 16
        %v6321 = vor.u32 %v6318, %v6319
        %v6322 = vsel %vm483, %v6314, %v6321
        %v6323 = vrot.slane %v6318, 4
        %v6325 = vshrl.u32 %v6067, 16
        %v6327 = vrot.slane %v6325, 7
        %v6328 = vshll.u32 %v6067, 16
        %v6330 = vor.u32 %v6327, %v6328
        %v6331 = vrot.slane %v6327, 4
        %v6333 = vshrl.u32 %v6068, 16
        %v6335 = vrot.slane %v6333, 7
        %v6336 = vshll.u32 %v6068, 16
        %v6338 = vor.u32 %v6335, %v6336
        %v6339 = vsel %vm483, %v6331, %v6338
        %v6340 = vrot.slane %v6335, 4
        %v6389 = vld [vmem:[%s804] sm:$0xf]
        %v6390 = vsel %vm806, %v6075, %v6389
        %6391 = vst [vmem:[%s804] sm:$0xf] %v6390
        %6392 = vst [vmem:[%s804 + $0x4] sm:$0xf] %v6084
        %v6393 = vld [vmem:[%s804 + $0x8] sm:$0x1]
        %v6394 = vsel %vm241, %v6085, %v6393
        %6395 = vst [vmem:[%s804 + $0x8] sm:$0x1] %v6394
        %v6396 = vld [vmem:[%s804 + $0xc] sm:$0xf]
        %v6397 = vsel %vm806, %v6092, %v6396
        %6398 = vst [vmem:[%s804 + $0xc] sm:$0xf] %v6397
        %6399 = vst [vmem:[%s804 + $0x10] sm:$0xf] %v6101
        %v6400 = vld [vmem:[%s804 + $0x14] sm:$0x1]
        %v6401 = vsel %vm241, %v6102, %v6400
        %6402 = vst [vmem:[%s804 + $0x14] sm:$0x1] %v6401
        %v6403 = vld [vmem:[%s804 + $0x18] sm:$0xf]
        %v6404 = vsel %vm806, %v6109, %v6403
        %6405 = vst [vmem:[%s804 + $0x18] sm:$0xf] %v6404
        %6406 = vst [vmem:[%s804 + $0x1c] sm:$0xf] %v6118
        %v6407 = vld [vmem:[%s804 + $0x20] sm:$0x1]
        %v6408 = vsel %vm241, %v6119, %v6407
        %6409 = vst [vmem:[%s804 + $0x20] sm:$0x1] %v6408
        %v6410 = vld [vmem:[%s804 + $0x24] sm:$0xf]
        %v6411 = vsel %vm806, %v6126, %v6410
        %6412 = vst [vmem:[%s804 + $0x24] sm:$0xf] %v6411
        %6413 = vst [vmem:[%s804 + $0x28] sm:$0xf] %v6135
        %v6414 = vld [vmem:[%s804 + $0x2c] sm:$0x1]
        %v6415 = vsel %vm241, %v6136, %v6414
        %6416 = vst [vmem:[%s804 + $0x2c] sm:$0x1] %v6415
        %v6417 = vld [vmem:[%s804 + $0x30] sm:$0xf]
        %v6418 = vsel %vm806, %v6143, %v6417
        %6419 = vst [vmem:[%s804 + $0x30] sm:$0xf] %v6418
        %6420 = vst [vmem:[%s804 + $0x34] sm:$0xf] %v6152
        %v6421 = vld [vmem:[%s804 + $0x38] sm:$0x1]
        %v6422 = vsel %vm241, %v6153, %v6421
        %6423 = vst [vmem:[%s804 + $0x38] sm:$0x1] %v6422
        %v6424 = vld [vmem:[%s804 + $0x3c] sm:$0xf]
        %v6425 = vsel %vm806, %v6160, %v6424
        %6426 = vst [vmem:[%s804 + $0x3c] sm:$0xf] %v6425
        %6427 = vst [vmem:[%s804 + $0x40] sm:$0xf] %v6169
        %v6428 = vld [vmem:[%s804 + $0x44] sm:$0x1]
        %v6429 = vsel %vm241, %v6170, %v6428
        %6430 = vst [vmem:[%s804 + $0x44] sm:$0x1] %v6429
        %v6431 = vld [vmem:[%s804 + $0x48] sm:$0xf]
        %v6432 = vsel %vm806, %v6177, %v6431
        %6433 = vst [vmem:[%s804 + $0x48] sm:$0xf] %v6432
        %6434 = vst [vmem:[%s804 + $0x4c] sm:$0xf] %v6186
        %v6435 = vld [vmem:[%s804 + $0x50] sm:$0x1]
        %v6436 = vsel %vm241, %v6187, %v6435
        %6437 = vst [vmem:[%s804 + $0x50] sm:$0x1] %v6436
        %v6438 = vld [vmem:[%s804 + $0x54] sm:$0xf]
        %v6439 = vsel %vm806, %v6194, %v6438
        %6440 = vst [vmem:[%s804 + $0x54] sm:$0xf] %v6439
        %6441 = vst [vmem:[%s804 + $0x58] sm:$0xf] %v6203
        %v6442 = vld [vmem:[%s804 + $0x5c] sm:$0x1]
        %v6443 = vsel %vm241, %v6204, %v6442
        %6444 = vst [vmem:[%s804 + $0x5c] sm:$0x1] %v6443
        %v6445 = vld [vmem:[%s804 + $0x60] sm:$0xf]
        %v6446 = vsel %vm806, %v6211, %v6445
        %6447 = vst [vmem:[%s804 + $0x60] sm:$0xf] %v6446
        %6448 = vst [vmem:[%s804 + $0x64] sm:$0xf] %v6220
        %v6449 = vld [vmem:[%s804 + $0x68] sm:$0x1]
        %v6450 = vsel %vm241, %v6221, %v6449
        %6451 = vst [vmem:[%s804 + $0x68] sm:$0x1] %v6450
        %v6452 = vld [vmem:[%s804 + $0x6c] sm:$0xf]
        %v6453 = vsel %vm806, %v6228, %v6452
        %6454 = vst [vmem:[%s804 + $0x6c] sm:$0xf] %v6453
        %6455 = vst [vmem:[%s804 + $0x70] sm:$0xf] %v6237
        %v6456 = vld [vmem:[%s804 + $0x74] sm:$0x1]
        %v6457 = vsel %vm241, %v6238, %v6456
        %6458 = vst [vmem:[%s804 + $0x74] sm:$0x1] %v6457
        %v6459 = vld [vmem:[%s804 + $0x78] sm:$0xf]
        %v6460 = vsel %vm806, %v6245, %v6459
        %6461 = vst [vmem:[%s804 + $0x78] sm:$0xf] %v6460
        %6462 = vst [vmem:[%s804 + $0x7c] sm:$0xf] %v6254
        %v6463 = vld [vmem:[%s804 + $0x80] sm:$0x1]
        %v6464 = vsel %vm241, %v6255, %v6463
        %6465 = vst [vmem:[%s804 + $0x80] sm:$0x1] %v6464
        %v6466 = vld [vmem:[%s804 + $0x84] sm:$0xf]
        %v6467 = vsel %vm806, %v6262, %v6466
        %6468 = vst [vmem:[%s804 + $0x84] sm:$0xf] %v6467
        %6469 = vst [vmem:[%s804 + $0x88] sm:$0xf] %v6271
        %v6470 = vld [vmem:[%s804 + $0x8c] sm:$0x1]
        %v6471 = vsel %vm241, %v6272, %v6470
        %6472 = vst [vmem:[%s804 + $0x8c] sm:$0x1] %v6471
        %v6473 = vld [vmem:[%s804 + $0x90] sm:$0xf]
        %v6474 = vsel %vm806, %v6279, %v6473
        %6475 = vst [vmem:[%s804 + $0x90] sm:$0xf] %v6474
        %6476 = vst [vmem:[%s804 + $0x94] sm:$0xf] %v6288
        %v6477 = vld [vmem:[%s804 + $0x98] sm:$0x1]
        %v6478 = vsel %vm241, %v6289, %v6477
        %6479 = vst [vmem:[%s804 + $0x98] sm:$0x1] %v6478
        %v6480 = vld [vmem:[%s804 + $0x9c] sm:$0xf]
        %v6481 = vsel %vm806, %v6296, %v6480
        %6482 = vst [vmem:[%s804 + $0x9c] sm:$0xf] %v6481
        %6483 = vst [vmem:[%s804 + $0xa0] sm:$0xf] %v6305
        %v6484 = vld [vmem:[%s804 + $0xa4] sm:$0x1]
        %v6485 = vsel %vm241, %v6306, %v6484
        %6486 = vst [vmem:[%s804 + $0xa4] sm:$0x1] %v6485
        %v6487 = vld [vmem:[%s804 + $0xa8] sm:$0xf]
        %v6488 = vsel %vm806, %v6313, %v6487
        %6489 = vst [vmem:[%s804 + $0xa8] sm:$0xf] %v6488
        %6490 = vst [vmem:[%s804 + $0xac] sm:$0xf] %v6322
        %v6491 = vld [vmem:[%s804 + $0xb0] sm:$0x1]
        %v6492 = vsel %vm241, %v6323, %v6491
        %6493 = vst [vmem:[%s804 + $0xb0] sm:$0x1] %v6492
        %v6494 = vld [vmem:[%s804 + $0xb4] sm:$0xf]
        %v6495 = vsel %vm806, %v6330, %v6494
        %6496 = vst [vmem:[%s804 + $0xb4] sm:$0xf] %v6495
        %6497 = vst [vmem:[%s804 + $0xb8] sm:$0xf] %v6339
        %v6498 = vld [vmem:[%s804 + $0xbc] sm:$0x1]
        %v6499 = vsel %vm241, %v6340, %v6498
        %6500 = vst [vmem:[%s804 + $0xbc] sm:$0x1] %v6499
        %v6501 = vld [vmem:[#allocation2] sm:$0xf]
        %v6502 = vld [vmem:[#allocation2 + $0x4] sm:$0xf]
        %v6503 = vld [vmem:[#allocation2 + $0x8] sm:$0x1]
        %v6504 = vld [vmem:[#allocation2 + $0xc] sm:$0xf]
        %v6505 = vld [vmem:[#allocation2 + $0x10] sm:$0xf]
        %v6506 = vld [vmem:[#allocation2 + $0x14] sm:$0x1]
        %v6507 = vld [vmem:[#allocation2 + $0x18] sm:$0xf]
        %v6508 = vld [vmem:[#allocation2 + $0x1c] sm:$0xf]
        %v6509 = vld [vmem:[#allocation2 + $0x20] sm:$0x1]
        %v6510 = vld [vmem:[#allocation2 + $0x24] sm:$0xf]
        %v6511 = vld [vmem:[#allocation2 + $0x28] sm:$0xf]
        %v6512 = vld [vmem:[#allocation2 + $0x2c] sm:$0x1]
        %v6513 = vld [vmem:[#allocation2 + $0x30] sm:$0xf]
        %v6514 = vld [vmem:[#allocation2 + $0x34] sm:$0xf]
        %v6515 = vld [vmem:[#allocation2 + $0x38] sm:$0x1]
        %v6516 = vld [vmem:[#allocation2 + $0x3c] sm:$0xf]
        %v6517 = vld [vmem:[#allocation2 + $0x40] sm:$0xf]
        %v6518 = vld [vmem:[#allocation2 + $0x44] sm:$0x1]
        %v6519 = vld [vmem:[#allocation2 + $0x48] sm:$0xf]
        %v6520 = vld [vmem:[#allocation2 + $0x4c] sm:$0xf]
        %v6521 = vld [vmem:[#allocation2 + $0x50] sm:$0x1]
        %v6522 = vld [vmem:[#allocation2 + $0x54] sm:$0xf]
        %v6523 = vld [vmem:[#allocation2 + $0x58] sm:$0xf]
        %v6524 = vld [vmem:[#allocation2 + $0x5c] sm:$0x1]
        %v6525 = vld [vmem:[#allocation2 + $0x60] sm:$0xf]
        %v6526 = vld [vmem:[#allocation2 + $0x64] sm:$0xf]
        %v6527 = vld [vmem:[#allocation2 + $0x68] sm:$0x1]
        %v6528 = vld [vmem:[#allocation2 + $0x6c] sm:$0xf]
        %v6529 = vld [vmem:[#allocation2 + $0x70] sm:$0xf]
        %v6530 = vld [vmem:[#allocation2 + $0x74] sm:$0x1]
        %v6531 = vld [vmem:[#allocation2 + $0x78] sm:$0xf]
        %v6532 = vld [vmem:[#allocation2 + $0x7c] sm:$0xf]
        %v6533 = vld [vmem:[#allocation2 + $0x80] sm:$0x1]
        %v6534 = vld [vmem:[#allocation2 + $0x84] sm:$0xf]
        %v6535 = vld [vmem:[#allocation2 + $0x88] sm:$0xf]
        %v6536 = vld [vmem:[#allocation2 + $0x8c] sm:$0x1]
        %v6537 = vld [vmem:[#allocation2 + $0x90] sm:$0xf]
        %v6538 = vld [vmem:[#allocation2 + $0x94] sm:$0xf]
        %v6539 = vld [vmem:[#allocation2 + $0x98] sm:$0x1]
        %v6540 = vld [vmem:[#allocation2 + $0x9c] sm:$0xf]
        %v6541 = vld [vmem:[#allocation2 + $0xa0] sm:$0xf]
        %v6542 = vld [vmem:[#allocation2 + $0xa4] sm:$0x1]
        %v6543 = vld [vmem:[#allocation2 + $0xa8] sm:$0xf]
        %v6544 = vld [vmem:[#allocation2 + $0xac] sm:$0xf]
        %v6545 = vld [vmem:[#allocation2 + $0xb0] sm:$0x1]
        %v6546 = vld [vmem:[#allocation2 + $0xb4] sm:$0xf]
        %v6547 = vld [vmem:[#allocation2 + $0xb8] sm:$0xf]
        %v6548 = vld [vmem:[#allocation2 + $0xbc] sm:$0x1]
        %v6549 = vld [vmem:[#allocation2 + $0xc0] sm:$0xf]
        %v6550 = vld [vmem:[#allocation2 + $0xc4] sm:$0xf]
        %v6551 = vld [vmem:[#allocation2 + $0xc8] sm:$0x1]
        %v6552 = vld [vmem:[#allocation2 + $0xcc] sm:$0xf]
        %v6553 = vld [vmem:[#allocation2 + $0xd0] sm:$0xf]
        %v6554 = vld [vmem:[#allocation2 + $0xd4] sm:$0x1]
        %v6591 = vunpack.c.l.b16 %v6501
        %v6592 = vunpack.c.l.b16 %v6502
        %v6593 = vunpack.c.l.b16 %v6504
        %v6594 = vunpack.c.l.b16 %v6505
        %v6595 = vunpack.c.l.b16 %v6507
        %v6596 = vunpack.c.l.b16 %v6508
        %v6597 = vunpack.c.l.b16 %v6510
        %v6598 = vunpack.c.l.b16 %v6511
        %v6599 = vunpack.c.l.b16 %v6513
        %v6600 = vunpack.c.l.b16 %v6514
        %v6601 = vunpack.c.l.b16 %v6516
        %v6602 = vunpack.c.l.b16 %v6517
        %v6603 = vunpack.c.l.b16 %v6519
        %v6604 = vunpack.c.l.b16 %v6520
        %v6605 = vunpack.c.l.b16 %v6522
        %v6606 = vunpack.c.l.b16 %v6523
        %v6607 = vunpack.c.l.b16 %v6525
        %v6608 = vunpack.c.l.b16 %v6526
        %v6609 = vunpack.c.l.b16 %v6528
        %v6610 = vunpack.c.l.b16 %v6529
        %v6611 = vunpack.c.l.b16 %v6531
        %v6612 = vunpack.c.l.b16 %v6532
        %v6613 = vunpack.c.l.b16 %v6534
        %v6614 = vunpack.c.l.b16 %v6535
        %v6615 = vunpack.c.l.b16 %v6537
        %v6616 = vunpack.c.l.b16 %v6538
        %v6617 = vunpack.c.l.b16 %v6540
        %v6618 = vunpack.c.l.b16 %v6541
        %v6619 = vunpack.c.l.b16 %v6543
        %v6620 = vunpack.c.l.b16 %v6544
        %v6621 = vunpack.c.l.b16 %v6546
        %v6622 = vunpack.c.l.b16 %v6547
        %v6623 = vunpack.c.l.b16 %v6549
        %v6624 = vunpack.c.l.b16 %v6550
        %v6625 = vunpack.c.l.b16 %v6552
        %v6626 = vunpack.c.l.b16 %v6553
        %v6627 = vpack.c.b16 %v6592, %v6591
        %v6628 = vpack.c.b16 %v6594, %v6593
        %v6629 = vpack.c.b16 %v6596, %v6595
        %v6630 = vpack.c.b16 %v6598, %v6597
        %v6631 = vpack.c.b16 %v6600, %v6599
        %v6632 = vpack.c.b16 %v6602, %v6601
        %v6633 = vpack.c.b16 %v6604, %v6603
        %v6634 = vpack.c.b16 %v6606, %v6605
        %v6635 = vpack.c.b16 %v6608, %v6607
        %v6636 = vpack.c.b16 %v6610, %v6609
        %v6637 = vpack.c.b16 %v6612, %v6611
        %v6638 = vpack.c.b16 %v6614, %v6613
        %v6639 = vpack.c.b16 %v6616, %v6615
        %v6640 = vpack.c.b16 %v6618, %v6617
        %v6641 = vpack.c.b16 %v6620, %v6619
        %v6642 = vpack.c.b16 %v6622, %v6621
        %v6643 = vpack.c.b16 %v6624, %v6623
        %v6644 = vpack.c.b16 %v6626, %v6625
        %v6681 = vunpack.c.l.b16 %v6503
        %v6682 = vunpack.c.l.b16 %v6506
        %v6683 = vunpack.c.l.b16 %v6509
        %v6684 = vunpack.c.l.b16 %v6512
        %v6685 = vunpack.c.l.b16 %v6515
        %v6686 = vunpack.c.l.b16 %v6518
        %v6687 = vunpack.c.l.b16 %v6521
        %v6688 = vunpack.c.l.b16 %v6524
        %v6689 = vunpack.c.l.b16 %v6527
        %v6690 = vunpack.c.l.b16 %v6530
        %v6691 = vunpack.c.l.b16 %v6533
        %v6692 = vunpack.c.l.b16 %v6536
        %v6693 = vunpack.c.l.b16 %v6539
        %v6694 = vunpack.c.l.b16 %v6542
        %v6695 = vunpack.c.l.b16 %v6545
        %v6696 = vunpack.c.l.b16 %v6548
        %v6697 = vunpack.c.l.b16 %v6551
        %v6698 = vunpack.c.l.b16 %v6554
        %v6699 = vpack.c.b16 %v6681, %v6681
        %v6700 = vpack.c.b16 %v6682, %v6682
        %v6701 = vpack.c.b16 %v6683, %v6683
        %v6702 = vpack.c.b16 %v6684, %v6684
        %v6703 = vpack.c.b16 %v6685, %v6685
        %v6704 = vpack.c.b16 %v6686, %v6686
        %v6705 = vpack.c.b16 %v6687, %v6687
        %v6706 = vpack.c.b16 %v6688, %v6688
        %v6707 = vpack.c.b16 %v6689, %v6689
        %v6708 = vpack.c.b16 %v6690, %v6690
        %v6709 = vpack.c.b16 %v6691, %v6691
        %v6710 = vpack.c.b16 %v6692, %v6692
        %v6711 = vpack.c.b16 %v6693, %v6693
        %v6712 = vpack.c.b16 %v6694, %v6694
        %v6713 = vpack.c.b16 %v6695, %v6695
        %v6714 = vpack.c.b16 %v6696, %v6696
        %v6715 = vpack.c.b16 %v6697, %v6697
        %v6716 = vpack.c.b16 %v6698, %v6698
        %v6718 = vshrl.u32 %v6627, 16
        %v6720 = vshll.u32 %v6627, 16
        %v6722 = vrot.slane %v6720, 1
        %v6723 = vor.u32 %v6718, %v6722
        %v6725 = vshll.u32 %v6699, 16
        %v6727 = vrot.slane %v6725, 1
        %v6728 = vsel %vm1135, %v6723, %v6727
        %v6730 = vshrl.u32 %v6628, 16
        %v6732 = vshll.u32 %v6628, 16
        %v6734 = vrot.slane %v6732, 1
        %v6735 = vor.u32 %v6730, %v6734
        %v6737 = vshll.u32 %v6700, 16
        %v6739 = vrot.slane %v6737, 1
        %v6740 = vsel %vm1135, %v6735, %v6739
        %v6742 = vshrl.u32 %v6629, 16
        %v6744 = vshll.u32 %v6629, 16
        %v6746 = vrot.slane %v6744, 1
        %v6747 = vor.u32 %v6742, %v6746
        %v6749 = vshll.u32 %v6701, 16
        %v6751 = vrot.slane %v6749, 1
        %v6752 = vsel %vm1135, %v6747, %v6751
        %v6754 = vshrl.u32 %v6630, 16
        %v6756 = vshll.u32 %v6630, 16
        %v6758 = vrot.slane %v6756, 1
        %v6759 = vor.u32 %v6754, %v6758
        %v6761 = vshll.u32 %v6702, 16
        %v6763 = vrot.slane %v6761, 1
        %v6764 = vsel %vm1135, %v6759, %v6763
        %v6766 = vshrl.u32 %v6631, 16
        %v6768 = vshll.u32 %v6631, 16
        %v6770 = vrot.slane %v6768, 1
        %v6771 = vor.u32 %v6766, %v6770
        %v6773 = vshll.u32 %v6703, 16
        %v6775 = vrot.slane %v6773, 1
        %v6776 = vsel %vm1135, %v6771, %v6775
        %v6778 = vshrl.u32 %v6632, 16
        %v6780 = vshll.u32 %v6632, 16
        %v6782 = vrot.slane %v6780, 1
        %v6783 = vor.u32 %v6778, %v6782
        %v6785 = vshll.u32 %v6704, 16
        %v6787 = vrot.slane %v6785, 1
        %v6788 = vsel %vm1135, %v6783, %v6787
        %v6790 = vshrl.u32 %v6633, 16
        %v6792 = vshll.u32 %v6633, 16
        %v6794 = vrot.slane %v6792, 1
        %v6795 = vor.u32 %v6790, %v6794
        %v6797 = vshll.u32 %v6705, 16
        %v6799 = vrot.slane %v6797, 1
        %v6800 = vsel %vm1135, %v6795, %v6799
        %v6802 = vshrl.u32 %v6634, 16
        %v6804 = vshll.u32 %v6634, 16
        %v6806 = vrot.slane %v6804, 1
        %v6807 = vor.u32 %v6802, %v6806
        %v6809 = vshll.u32 %v6706, 16
        %v6811 = vrot.slane %v6809, 1
        %v6812 = vsel %vm1135, %v6807, %v6811
        %v6814 = vshrl.u32 %v6635, 16
        %v6816 = vshll.u32 %v6635, 16
        %v6818 = vrot.slane %v6816, 1
        %v6819 = vor.u32 %v6814, %v6818
        %v6821 = vshll.u32 %v6707, 16
        %v6823 = vrot.slane %v6821, 1
        %v6824 = vsel %vm1135, %v6819, %v6823
        %v6826 = vshrl.u32 %v6636, 16
        %v6828 = vshll.u32 %v6636, 16
        %v6830 = vrot.slane %v6828, 1
        %v6831 = vor.u32 %v6826, %v6830
        %v6833 = vshll.u32 %v6708, 16
        %v6835 = vrot.slane %v6833, 1
        %v6836 = vsel %vm1135, %v6831, %v6835
        %v6838 = vshrl.u32 %v6637, 16
        %v6840 = vshll.u32 %v6637, 16
        %v6842 = vrot.slane %v6840, 1
        %v6843 = vor.u32 %v6838, %v6842
        %v6845 = vshll.u32 %v6709, 16
        %v6847 = vrot.slane %v6845, 1
        %v6848 = vsel %vm1135, %v6843, %v6847
        %v6850 = vshrl.u32 %v6638, 16
        %v6852 = vshll.u32 %v6638, 16
        %v6854 = vrot.slane %v6852, 1
        %v6855 = vor.u32 %v6850, %v6854
        %v6857 = vshll.u32 %v6710, 16
        %v6859 = vrot.slane %v6857, 1
        %v6860 = vsel %vm1135, %v6855, %v6859
        %v6862 = vshrl.u32 %v6639, 16
        %v6864 = vshll.u32 %v6639, 16
        %v6866 = vrot.slane %v6864, 1
        %v6867 = vor.u32 %v6862, %v6866
        %v6869 = vshll.u32 %v6711, 16
        %v6871 = vrot.slane %v6869, 1
        %v6872 = vsel %vm1135, %v6867, %v6871
        %v6874 = vshrl.u32 %v6640, 16
        %v6876 = vshll.u32 %v6640, 16
        %v6878 = vrot.slane %v6876, 1
        %v6879 = vor.u32 %v6874, %v6878
        %v6881 = vshll.u32 %v6712, 16
        %v6883 = vrot.slane %v6881, 1
        %v6884 = vsel %vm1135, %v6879, %v6883
        %v6886 = vshrl.u32 %v6641, 16
        %v6888 = vshll.u32 %v6641, 16
        %v6890 = vrot.slane %v6888, 1
        %v6891 = vor.u32 %v6886, %v6890
        %v6893 = vshll.u32 %v6713, 16
        %v6895 = vrot.slane %v6893, 1
        %v6896 = vsel %vm1135, %v6891, %v6895
        %v6898 = vshrl.u32 %v6642, 16
        %v6900 = vshll.u32 %v6642, 16
        %v6902 = vrot.slane %v6900, 1
        %v6903 = vor.u32 %v6898, %v6902
        %v6905 = vshll.u32 %v6714, 16
        %v6907 = vrot.slane %v6905, 1
        %v6908 = vsel %vm1135, %v6903, %v6907
        %v6910 = vshrl.u32 %v6643, 16
        %v6912 = vshll.u32 %v6643, 16
        %v6914 = vrot.slane %v6912, 1
        %v6915 = vor.u32 %v6910, %v6914
        %v6917 = vshll.u32 %v6715, 16
        %v6919 = vrot.slane %v6917, 1
        %v6920 = vsel %vm1135, %v6915, %v6919
        %v6922 = vshrl.u32 %v6644, 16
        %v6924 = vshll.u32 %v6644, 16
        %v6926 = vrot.slane %v6924, 1
        %v6927 = vor.u32 %v6922, %v6926
        %v6929 = vshll.u32 %v6716, 16
        %v6931 = vrot.slane %v6929, 1
        %v6932 = vsel %vm1135, %v6927, %v6931
        %v6951 = vrot.slane %v6627, 1
        %v6952 = vrot.slane %v6699, 1
        %v6953 = vsel %vm1370, %v6951, %v6952
        %v6954 = vrot.slane %v6628, 1
        %v6955 = vrot.slane %v6700, 1
        %v6956 = vsel %vm1370, %v6954, %v6955
        %v6957 = vrot.slane %v6629, 1
        %v6958 = vrot.slane %v6701, 1
        %v6959 = vsel %vm1370, %v6957, %v6958
        %v6960 = vrot.slane %v6630, 1
        %v6961 = vrot.slane %v6702, 1
        %v6962 = vsel %vm1370, %v6960, %v6961
        %v6963 = vrot.slane %v6631, 1
        %v6964 = vrot.slane %v6703, 1
        %v6965 = vsel %vm1370, %v6963, %v6964
        %v6966 = vrot.slane %v6632, 1
        %v6967 = vrot.slane %v6704, 1
        %v6968 = vsel %vm1370, %v6966, %v6967
        %v6969 = vrot.slane %v6633, 1
        %v6970 = vrot.slane %v6705, 1
        %v6971 = vsel %vm1370, %v6969, %v6970
        %v6972 = vrot.slane %v6634, 1
        %v6973 = vrot.slane %v6706, 1
        %v6974 = vsel %vm1370, %v6972, %v6973
        %v6975 = vrot.slane %v6635, 1
        %v6976 = vrot.slane %v6707, 1
        %v6977 = vsel %vm1370, %v6975, %v6976
        %v6978 = vrot.slane %v6636, 1
        %v6979 = vrot.slane %v6708, 1
        %v6980 = vsel %vm1370, %v6978, %v6979
        %v6981 = vrot.slane %v6637, 1
        %v6982 = vrot.slane %v6709, 1
        %v6983 = vsel %vm1370, %v6981, %v6982
        %v6984 = vrot.slane %v6638, 1
        %v6985 = vrot.slane %v6710, 1
        %v6986 = vsel %vm1370, %v6984, %v6985
        %v6987 = vrot.slane %v6639, 1
        %v6988 = vrot.slane %v6711, 1
        %v6989 = vsel %vm1370, %v6987, %v6988
        %v6990 = vrot.slane %v6640, 1
        %v6991 = vrot.slane %v6712, 1
        %v6992 = vsel %vm1370, %v6990, %v6991
        %v6993 = vrot.slane %v6641, 1
        %v6994 = vrot.slane %v6713, 1
        %v6995 = vsel %vm1370, %v6993, %v6994
        %v6996 = vrot.slane %v6642, 1
        %v6997 = vrot.slane %v6714, 1
        %v6998 = vsel %vm1370, %v6996, %v6997
        %v6999 = vrot.slane %v6643, 1
        %v7000 = vrot.slane %v6715, 1
        %v7001 = vsel %vm1370, %v6999, %v7000
        %v7002 = vrot.slane %v6644, 1
        %v7003 = vrot.slane %v6716, 1
        %v7004 = vsel %vm1370, %v7002, %v7003
        %v7023 = vld [vmem:[#allocation6] sm:$0xf]
        %v7024 = vld [vmem:[#allocation6 + $0x4] sm:$0xf]
        %v7025 = vld [vmem:[#allocation6 + $0x8] sm:$0xf]
        %v7026 = vld [vmem:[#allocation6 + $0xc] sm:$0xf]
        %v7027 = vld [vmem:[#allocation6 + $0x10] sm:$0xf]
        %v7028 = vld [vmem:[#allocation6 + $0x14] sm:$0xf]
        %v7029 = vld [vmem:[#allocation6 + $0x18] sm:$0xf]
        %v7030 = vld [vmem:[#allocation6 + $0x1c] sm:$0xf]
        %v7031 = vld [vmem:[#allocation6 + $0x20] sm:$0xf]
        %v7032 = vld [vmem:[#allocation6 + $0x24] sm:$0xf]
        %v7033 = vld [vmem:[#allocation6 + $0x28] sm:$0xf]
        %v7034 = vld [vmem:[#allocation6 + $0x2c] sm:$0xf]
        %v7035 = vld [vmem:[#allocation6 + $0x30] sm:$0xf]
        %v7036 = vld [vmem:[#allocation6 + $0x34] sm:$0xf]
        %v7037 = vld [vmem:[#allocation6 + $0x38] sm:$0xf]
        %v7038 = vld [vmem:[#allocation6 + $0x3c] sm:$0xf]
        %v7039 = vld [vmem:[#allocation6 + $0x40] sm:$0xf]
        %v7040 = vld [vmem:[#allocation6 + $0x44] sm:$0xf]
        %v7041 = vld [vmem:[#allocation6 + $0x48] sm:$0xf]
        %v7042 = vld [vmem:[#allocation6 + $0x4c] sm:$0xf]
        %v7043 = vld [vmem:[#allocation6 + $0x50] sm:$0xf]
        %v7044 = vld [vmem:[#allocation6 + $0x54] sm:$0xf]
        %v7045 = vld [vmem:[#allocation6 + $0x58] sm:$0xf]
        %v7046 = vld [vmem:[#allocation6 + $0x5c] sm:$0xf]
        %v7047 = vld [vmem:[#allocation6 + $0x60] sm:$0xf]
        %v7048 = vld [vmem:[#allocation6 + $0x64] sm:$0xf]
        %v7049 = vld [vmem:[#allocation6 + $0x68] sm:$0xf]
        %v7050 = vld [vmem:[#allocation6 + $0x6c] sm:$0xf]
        %v7051 = vld [vmem:[#allocation6 + $0x70] sm:$0xf]
        %v7052 = vld [vmem:[#allocation6 + $0x74] sm:$0xf]
        %v7053 = vld [vmem:[#allocation6 + $0x78] sm:$0xf]
        %v7054 = vld [vmem:[#allocation6 + $0x7c] sm:$0xf]
        %v7055 = vld [vmem:[#allocation6 + $0x80] sm:$0xf]
        %v7056 = vld [vmem:[#allocation6 + $0x84] sm:$0xf]
        %v7057 = vld [vmem:[#allocation6 + $0x88] sm:$0xf]
        %v7058 = vld [vmem:[#allocation6 + $0x8c] sm:$0xf]
        %v7059 = vld [vmem:[#allocation6 + $0x90] sm:$0xf]
        %v7060 = vld [vmem:[#allocation6 + $0x94] sm:$0xf]
        %v7061 = vld [vmem:[#allocation6 + $0x98] sm:$0xf]
        %v7062 = vld [vmem:[#allocation6 + $0x9c] sm:$0xf]
        %v7063 = vld [vmem:[#allocation6 + $0xa0] sm:$0xf]
        %v7064 = vld [vmem:[#allocation6 + $0xa4] sm:$0xf]
        %v7065 = vld [vmem:[#allocation6 + $0xa8] sm:$0xf]
        %v7066 = vld [vmem:[#allocation6 + $0xac] sm:$0xf]
        %v7067 = vld [vmem:[#allocation6 + $0xb0] sm:$0xf]
        %v7068 = vld [vmem:[#allocation6 + $0xb4] sm:$0xf]
        %v7069 = vld [vmem:[#allocation6 + $0xb8] sm:$0xf]
        %v7070 = vld [vmem:[#allocation6 + $0xbc] sm:$0xf]
        %v7071 = vld [vmem:[#allocation6 + $0xc0] sm:$0xf]
        %v7072 = vld [vmem:[#allocation6 + $0xc4] sm:$0xf]
        %v7073 = vld [vmem:[#allocation6 + $0xc8] sm:$0xf]
        %v7074 = vld [vmem:[#allocation6 + $0xcc] sm:$0xf]
        %v7075 = vld [vmem:[#allocation6 + $0xd0] sm:$0xf]
        %v7076 = vld [vmem:[#allocation6 + $0xd4] sm:$0xf]
        %v7077 = vld [vmem:[#allocation6 + $0xd8] sm:$0xf]
        %v7078 = vld [vmem:[#allocation6 + $0xdc] sm:$0xf]
        %v7079 = vld [vmem:[#allocation6 + $0xe0] sm:$0xf]
        %v7080 = vld [vmem:[#allocation6 + $0xe4] sm:$0xf]
        %v7081 = vld [vmem:[#allocation6 + $0xe8] sm:$0xf]
        %v7082 = vld [vmem:[#allocation6 + $0xec] sm:$0xf]
        %v7083 = vld [vmem:[#allocation6 + $0xf0] sm:$0xf]
        %v7084 = vld [vmem:[#allocation6 + $0xf4] sm:$0xf]
        %v7085 = vld [vmem:[#allocation6 + $0xf8] sm:$0xf]
        %v7086 = vld [vmem:[#allocation6 + $0xfc] sm:$0xf]
        %v7087 = vld [vmem:[#allocation6 + $0x100] sm:$0xf]
        %v7088 = vld [vmem:[#allocation6 + $0x104] sm:$0xf]
        %v7089 = vld [vmem:[#allocation6 + $0x108] sm:$0xf]
        %v7090 = vld [vmem:[#allocation6 + $0x10c] sm:$0xf]
        %v7091 = vld [vmem:[#allocation6 + $0x110] sm:$0xf]
        %v7092 = vld [vmem:[#allocation6 + $0x114] sm:$0xf]
        %v7093 = vld [vmem:[#allocation6 + $0x118] sm:$0xf]
        %v7094 = vld [vmem:[#allocation6 + $0x11c] sm:$0xf]
        %v7095 = vld [vmem:[#allocation6 + $0x120] sm:$0xf]
        %v7096 = vld [vmem:[#allocation6 + $0x124] sm:$0xf]
        %v7097 = vld [vmem:[#allocation6 + $0x128] sm:$0xf]
        %v7098 = vld [vmem:[#allocation6 + $0x12c] sm:$0xf]
        %v7099 = vld [vmem:[#allocation6 + $0x130] sm:$0xf]
        %v7100 = vld [vmem:[#allocation6 + $0x134] sm:$0xf]
        %v7101 = vld [vmem:[#allocation6 + $0x138] sm:$0xf]
        %v7102 = vld [vmem:[#allocation6 + $0x13c] sm:$0xf]
        %v7103 = vld [vmem:[#allocation6 + $0x140] sm:$0xf]
        %v7104 = vld [vmem:[#allocation6 + $0x144] sm:$0xf]
        %v7105 = vld [vmem:[#allocation6 + $0x148] sm:$0xf]
        %v7106 = vld [vmem:[#allocation6 + $0x14c] sm:$0xf]
        %v7107 = vld [vmem:[#allocation6 + $0x150] sm:$0xf]
        %v7108 = vld [vmem:[#allocation6 + $0x154] sm:$0xf]
        %v7109 = vld [vmem:[#allocation6 + $0x158] sm:$0xf]
        %v7110 = vld [vmem:[#allocation6 + $0x15c] sm:$0xf]
        %v7111 = vld [vmem:[#allocation6 + $0x160] sm:$0xf]
        %v7112 = vld [vmem:[#allocation6 + $0x164] sm:$0xf]
        %v7113 = vld [vmem:[#allocation6 + $0x168] sm:$0xf]
        %v7114 = vld [vmem:[#allocation6 + $0x16c] sm:$0xf]
        %v7115 = vld [vmem:[#allocation6 + $0x170] sm:$0xf]
        %v7116 = vld [vmem:[#allocation6 + $0x174] sm:$0xf]
        %v7117 = vld [vmem:[#allocation6 + $0x178] sm:$0xf]
        %v7118 = vld [vmem:[#allocation6 + $0x17c] sm:$0xf]
        %v7167 = vunpack.c.l.b16 %v7071
        %v7168 = vunpack.c.l.b16 %v7072
        %v7169 = vunpack.c.l.b16 %v7073
        %v7170 = vunpack.c.l.b16 %v7074
        %v7171 = vunpack.c.l.b16 %v7075
        %v7172 = vunpack.c.l.b16 %v7076
        %v7173 = vunpack.c.l.b16 %v7077
        %v7174 = vunpack.c.l.b16 %v7078
        %v7175 = vunpack.c.l.b16 %v7079
        %v7176 = vunpack.c.l.b16 %v7080
        %v7177 = vunpack.c.l.b16 %v7081
        %v7178 = vunpack.c.l.b16 %v7082
        %v7179 = vunpack.c.l.b16 %v7083
        %v7180 = vunpack.c.l.b16 %v7084
        %v7181 = vunpack.c.l.b16 %v7085
        %v7182 = vunpack.c.l.b16 %v7086
        %v7183 = vunpack.c.l.b16 %v7087
        %v7184 = vunpack.c.l.b16 %v7088
        %v7185 = vunpack.c.l.b16 %v7089
        %v7186 = vunpack.c.l.b16 %v7090
        %v7187 = vunpack.c.l.b16 %v7091
        %v7188 = vunpack.c.l.b16 %v7092
        %v7189 = vunpack.c.l.b16 %v7093
        %v7190 = vunpack.c.l.b16 %v7094
        %v7191 = vunpack.c.l.b16 %v7095
        %v7192 = vunpack.c.l.b16 %v7096
        %v7193 = vunpack.c.l.b16 %v7097
        %v7194 = vunpack.c.l.b16 %v7098
        %v7195 = vunpack.c.l.b16 %v7099
        %v7196 = vunpack.c.l.b16 %v7100
        %v7197 = vunpack.c.l.b16 %v7101
        %v7198 = vunpack.c.l.b16 %v7102
        %v7199 = vunpack.c.l.b16 %v7103
        %v7200 = vunpack.c.l.b16 %v7104
        %v7201 = vunpack.c.l.b16 %v7105
        %v7202 = vunpack.c.l.b16 %v7106
        %v7203 = vunpack.c.l.b16 %v7107
        %v7204 = vunpack.c.l.b16 %v7108
        %v7205 = vunpack.c.l.b16 %v7109
        %v7206 = vunpack.c.l.b16 %v7110
        %v7207 = vunpack.c.l.b16 %v7111
        %v7208 = vunpack.c.l.b16 %v7112
        %v7209 = vunpack.c.l.b16 %v7113
        %v7210 = vunpack.c.l.b16 %v7114
        %v7211 = vunpack.c.l.b16 %v7115
        %v7212 = vunpack.c.l.b16 %v7116
        %v7213 = vunpack.c.l.b16 %v7117
        %v7214 = vunpack.c.l.b16 %v7118
        %v7215 = vpack.c.b16 %v7168, %v7167
        %v7216 = vpack.c.b16 %v7170, %v7169
        %v7217 = vpack.c.b16 %v7172, %v7171
        %v7218 = vpack.c.b16 %v7174, %v7173
        %v7219 = vpack.c.b16 %v7176, %v7175
        %v7220 = vpack.c.b16 %v7178, %v7177
        %v7221 = vpack.c.b16 %v7180, %v7179
        %v7222 = vpack.c.b16 %v7182, %v7181
        %v7223 = vpack.c.b16 %v7184, %v7183
        %v7224 = vpack.c.b16 %v7186, %v7185
        %v7225 = vpack.c.b16 %v7188, %v7187
        %v7226 = vpack.c.b16 %v7190, %v7189
        %v7227 = vpack.c.b16 %v7192, %v7191
        %v7228 = vpack.c.b16 %v7194, %v7193
        %v7229 = vpack.c.b16 %v7196, %v7195
        %v7230 = vpack.c.b16 %v7198, %v7197
        %v7231 = vpack.c.b16 %v7200, %v7199
        %v7232 = vpack.c.b16 %v7202, %v7201
        %v7233 = vpack.c.b16 %v7204, %v7203
        %v7234 = vpack.c.b16 %v7206, %v7205
        %v7235 = vpack.c.b16 %v7208, %v7207
        %v7236 = vpack.c.b16 %v7210, %v7209
        %v7237 = vpack.c.b16 %v7212, %v7211
        %v7238 = vpack.c.b16 %v7214, %v7213
        %7263 = vmatprep.subr.bf16.mxu0 0
        %7264 = vmatpush1.bf16.msra.mxu0 %v7222
        %7265 = vmatprep.subr.bf16.mxu0 0
        %7266 = vmatpush1.bf16.msra.mxu0 %v7221
        %7267 = vmatprep.subr.bf16.mxu0 0
        %7268 = vmatpush1.bf16.msra.mxu0 %v7220
        %7269 = vmatprep.subr.bf16.mxu0 0
        %7270 = vmatpush1.bf16.msra.mxu0 %v7219
        %7271 = vmatprep.subr.bf16.mxu0 0
        %7272 = vmatpush1.bf16.msra.mxu0 %v7218
        %7273 = vmatprep.subr.bf16.mxu0 0
        %7274 = vmatpush1.bf16.msra.mxu0 %v7217
        %7275 = vmatprep.subr.bf16.mxu0 0
        %7276 = vmatpush1.bf16.msra.mxu0 %v7216
        %7277 = vmatprep.subr.bf16.mxu0 0
        %7278 = vmatpush1.bf16.msra.mxu0 %v7215
        %7279 = vmatprep.subr.bf16.mxu0 0
        %7280 = vmatpush2.bf16.msra.mxu0 %v7230
        %7281 = vmatprep.subr.bf16.mxu0 0
        %7282 = vmatpush2.bf16.msra.mxu0 %v7229
        %7283 = vmatprep.subr.bf16.mxu0 0
        %7284 = vmatpush2.bf16.msra.mxu0 %v7228
        %7285 = vmatprep.subr.bf16.mxu0 0
        %7286 = vmatpush2.bf16.msra.mxu0 %v7227
        %7287 = vmatprep.subr.bf16.mxu0 0
        %7288 = vmatpush2.bf16.msra.mxu0 %v7226
        %7289 = vmatprep.subr.bf16.mxu0 0
        %7290 = vmatpush2.bf16.msra.mxu0 %v7225
        %7291 = vmatprep.subr.bf16.mxu0 0
        %7292 = vmatpush2.bf16.msra.mxu0 %v7224
        %7293 = vmatprep.subr.bf16.mxu0 0
        %7294 = vmatpush2.bf16.msra.mxu0 %v7223
        %7295 = vmatprep.mubr.bf16.mxu0 %v6740
        %7296 = vmatmul.mubr.bf16.gmra.mxu0 %v6628
        %v7297 = vpop.f32.mrf.mxu0
        %v7298 = vadd.f32 0.0, %v7297
        %v7299 = vpop.f32.mrf.mxu0
        %v7300 = vpop.f32.mrf.mxu0
        %v7301 = vadd.f32 0.0, %v7300
        %v7302 = vpop.f32.mrf.mxu0
        %7303 = vmatprep.mubr.bf16.mxu0 %v6752
        %7304 = vmatmul.mubr.bf16.gmra.mxu0 %v6629
        %v7305 = vpop.f32.mrf.mxu0
        %v7306 = vadd.f32 0.0, %v7305
        %v7307 = vpop.f32.mrf.mxu0
        %v7308 = vpop.f32.mrf.mxu0
        %v7309 = vadd.f32 0.0, %v7308
        %v7310 = vpop.f32.mrf.mxu0
        %7311 = vmatprep.mubr.bf16.mxu0 %v6764
        %7312 = vmatmul.mubr.bf16.gmra.mxu0 %v6630
        %v7313 = vpop.f32.mrf.mxu0
        %v7314 = vadd.f32 0.0, %v7313
        %v7315 = vpop.f32.mrf.mxu0
        %v7316 = vpop.f32.mrf.mxu0
        %v7317 = vadd.f32 0.0, %v7316
        %v7318 = vpop.f32.mrf.mxu0
        %7319 = vmatprep.mubr.bf16.mxu0 %v6776
        %7320 = vmatmul.mubr.bf16.gmra.mxu0 %v6631
        %v7321 = vpop.f32.mrf.mxu0
        %v7322 = vadd.f32 0.0, %v7321
        %v7323 = vpop.f32.mrf.mxu0
        %v7324 = vpop.f32.mrf.mxu0
        %v7325 = vadd.f32 0.0, %v7324
        %v7326 = vpop.f32.mrf.mxu0
        %7327 = vmatprep.mubr.bf16.mxu0 %v6788
        %7328 = vmatmul.mubr.bf16.gmra.mxu0 %v6632
        %v7329 = vpop.f32.mrf.mxu0
        %v7330 = vadd.f32 0.0, %v7329
        %v7331 = vpop.f32.mrf.mxu0
        %v7332 = vpop.f32.mrf.mxu0
        %v7333 = vadd.f32 0.0, %v7332
        %v7334 = vpop.f32.mrf.mxu0
        %7335 = vmatprep.mubr.bf16.mxu0 %v6800
        %7336 = vmatmul.mubr.bf16.gmra.mxu0 %v6633
        %v7337 = vpop.f32.mrf.mxu0
        %v7338 = vadd.f32 0.0, %v7337
        %v7339 = vpop.f32.mrf.mxu0
        %v7340 = vpop.f32.mrf.mxu0
        %v7341 = vadd.f32 0.0, %v7340
        %v7342 = vpop.f32.mrf.mxu0
        %7343 = vmatprep.mubr.bf16.mxu0 %v6812
        %7344 = vmatmul.mubr.bf16.gmra.mxu0 %v6634
        %v7345 = vpop.f32.mrf.mxu0
        %v7346 = vadd.f32 0.0, %v7345
        %v7347 = vpop.f32.mrf.mxu0
        %v7348 = vpop.f32.mrf.mxu0
        %v7349 = vadd.f32 0.0, %v7348
        %v7350 = vpop.f32.mrf.mxu0
        %7351 = vmatprep.mubr.bf16.mxu0 %v6824
        %7352 = vmatmul.mubr.bf16.gmra.mxu0 %v6635
        %v7353 = vpop.f32.mrf.mxu0
        %v7354 = vadd.f32 0.0, %v7353
        %v7355 = vpop.f32.mrf.mxu0
        %v7356 = vpop.f32.mrf.mxu0
        %v7357 = vadd.f32 0.0, %v7356
        %v7358 = vpop.f32.mrf.mxu0
        %7359 = vmatprep.mubr.bf16.mxu0 %v6836
        %7360 = vmatmul.mubr.bf16.gmra.mxu0 %v6636
        %v7361 = vpop.f32.mrf.mxu0
        %v7362 = vadd.f32 0.0, %v7361
        %v7363 = vpop.f32.mrf.mxu0
        %v7364 = vpop.f32.mrf.mxu0
        %v7365 = vadd.f32 0.0, %v7364
        %v7366 = vpop.f32.mrf.mxu0
        %7367 = vmatprep.mubr.bf16.mxu0 %v6848
        %7368 = vmatmul.mubr.bf16.gmra.mxu0 %v6637
        %v7369 = vpop.f32.mrf.mxu0
        %v7370 = vadd.f32 0.0, %v7369
        %v7371 = vpop.f32.mrf.mxu0
        %v7372 = vpop.f32.mrf.mxu0
        %v7373 = vadd.f32 0.0, %v7372
        %v7374 = vpop.f32.mrf.mxu0
        %7375 = vmatprep.mubr.bf16.mxu0 %v6860
        %7376 = vmatmul.mubr.bf16.gmra.mxu0 %v6638
        %v7377 = vpop.f32.mrf.mxu0
        %v7378 = vadd.f32 0.0, %v7377
        %v7379 = vpop.f32.mrf.mxu0
        %v7380 = vpop.f32.mrf.mxu0
        %v7381 = vadd.f32 0.0, %v7380
        %v7382 = vpop.f32.mrf.mxu0
        %7383 = vmatprep.mubr.bf16.mxu0 %v6872
        %7384 = vmatmul.mubr.bf16.gmra.mxu0 %v6639
        %v7385 = vpop.f32.mrf.mxu0
        %v7386 = vadd.f32 0.0, %v7385
        %v7387 = vpop.f32.mrf.mxu0
        %v7388 = vpop.f32.mrf.mxu0
        %v7389 = vadd.f32 0.0, %v7388
        %v7390 = vpop.f32.mrf.mxu0
        %7391 = vmatprep.mubr.bf16.mxu0 %v6884
        %7392 = vmatmul.mubr.bf16.gmra.mxu0 %v6640
        %v7393 = vpop.f32.mrf.mxu0
        %v7394 = vadd.f32 0.0, %v7393
        %v7395 = vpop.f32.mrf.mxu0
        %v7396 = vpop.f32.mrf.mxu0
        %v7397 = vadd.f32 0.0, %v7396
        %v7398 = vpop.f32.mrf.mxu0
        %7399 = vmatprep.mubr.bf16.mxu0 %v6896
        %7400 = vmatmul.mubr.bf16.gmra.mxu0 %v6641
        %v7401 = vpop.f32.mrf.mxu0
        %v7402 = vadd.f32 0.0, %v7401
        %v7403 = vpop.f32.mrf.mxu0
        %v7404 = vpop.f32.mrf.mxu0
        %v7405 = vadd.f32 0.0, %v7404
        %v7406 = vpop.f32.mrf.mxu0
        %7407 = vmatprep.mubr.bf16.mxu0 %v6908
        %7408 = vmatmul.mubr.bf16.gmra.mxu0 %v6642
        %v7409 = vpop.f32.mrf.mxu0
        %v7410 = vadd.f32 0.0, %v7409
        %v7411 = vpop.f32.mrf.mxu0
        %v7412 = vpop.f32.mrf.mxu0
        %v7413 = vadd.f32 0.0, %v7412
        %v7414 = vpop.f32.mrf.mxu0
        %7415 = vmatprep.mubr.bf16.mxu0 %v6920
        %7416 = vmatmul.mubr.bf16.gmra.mxu0 %v6643
        %v7417 = vpop.f32.mrf.mxu0
        %v7418 = vadd.f32 0.0, %v7417
        %v7419 = vpop.f32.mrf.mxu0
        %v7420 = vpop.f32.mrf.mxu0
        %v7421 = vadd.f32 0.0, %v7420
        %v7422 = vpop.f32.mrf.mxu0
        %7423 = vdwg.mxu0
        %7424 = vmatprep.subr.bf16.mxu0 0
        %7425 = vmatpush1.bf16.msra.mxu0 %v7238
        %7426 = vmatprep.subr.bf16.mxu0 0
        %7427 = vmatpush1.bf16.msra.mxu0 %v7237
        %7428 = vmatprep.subr.bf16.mxu0 0
        %7429 = vmatpush1.bf16.msra.mxu0 %v7236
        %7430 = vmatprep.subr.bf16.mxu0 0
        %7431 = vmatpush1.bf16.msra.mxu0 %v7235
        %7432 = vmatprep.subr.bf16.mxu0 0
        %7433 = vmatpush1.bf16.msra.mxu0 %v7234
        %7434 = vmatprep.subr.bf16.mxu0 0
        %7435 = vmatpush1.bf16.msra.mxu0 %v7233
        %7436 = vmatprep.subr.bf16.mxu0 0
        %7437 = vmatpush1.bf16.msra.mxu0 %v7232
        %7438 = vmatprep.subr.bf16.mxu0 0
        %7439 = vmatpush1.bf16.msra.mxu0 %v7231
        %7440 = vmatprep.subr.bf16.mxu0 0
        %7441 = vmatpush2.bf16.msra.mxu0 0
        %7442 = vmatprep.subr.bf16.mxu0 0
        %7443 = vmatpush2.bf16.msra.mxu0 0
        %7444 = vmatprep.subr.bf16.mxu0 0
        %7445 = vmatpush2.bf16.msra.mxu0 0
        %7446 = vmatprep.subr.bf16.mxu0 0
        %7447 = vmatpush2.bf16.msra.mxu0 0
        %7448 = vmatprep.subr.bf16.mxu0 0
        %7449 = vmatpush2.bf16.msra.mxu0 0
        %7450 = vmatprep.subr.bf16.mxu0 0
        %7451 = vmatpush2.bf16.msra.mxu0 0
        %7452 = vmatprep.subr.bf16.mxu0 0
        %7453 = vmatpush2.bf16.msra.mxu0 0
        %7454 = vmatprep.subr.bf16.mxu0 0
        %7455 = vmatpush2.bf16.msra.mxu0 0
        %7456 = vmatprep.mubr.bf16.mxu0 0
        %7457 = vmatmul.mubr.bf16.gmra.mxu0 %v6956
        %v7458 = vpop.f32.mrf.mxu0
        %v7459 = vadd.f32 %v7298, %v7458
        %v7460 = vpop.f32.mrf.mxu0
        %v7461 = vpop.f32.mrf.mxu0
        %v7462 = vadd.f32 %v7301, %v7461
        %v7463 = vpop.f32.mrf.mxu0
        %7464 = vmatprep.mubr.bf16.mxu0 0
        %7465 = vmatmul.mubr.bf16.gmra.mxu0 %v6959
        %v7466 = vpop.f32.mrf.mxu0
        %v7467 = vadd.f32 %v7306, %v7466
        %v7468 = vpop.f32.mrf.mxu0
        %v7469 = vpop.f32.mrf.mxu0
        %v7470 = vadd.f32 %v7309, %v7469
        %v7471 = vpop.f32.mrf.mxu0
        %7472 = vmatprep.mubr.bf16.mxu0 0
        %7473 = vmatmul.mubr.bf16.gmra.mxu0 %v6962
        %v7474 = vpop.f32.mrf.mxu0
        %v7475 = vadd.f32 %v7314, %v7474
        %v7476 = vpop.f32.mrf.mxu0
        %v7477 = vpop.f32.mrf.mxu0
        %v7478 = vadd.f32 %v7317, %v7477
        %v7479 = vpop.f32.mrf.mxu0
        %7480 = vmatprep.mubr.bf16.mxu0 0
        %7481 = vmatmul.mubr.bf16.gmra.mxu0 %v6965
        %v7482 = vpop.f32.mrf.mxu0
        %v7483 = vadd.f32 %v7322, %v7482
        %v7484 = vpop.f32.mrf.mxu0
        %v7485 = vpop.f32.mrf.mxu0
        %v7486 = vadd.f32 %v7325, %v7485
        %v7487 = vpop.f32.mrf.mxu0
        %7488 = vmatprep.mubr.bf16.mxu0 0
        %7489 = vmatmul.mubr.bf16.gmra.mxu0 %v6968
        %v7490 = vpop.f32.mrf.mxu0
        %v7491 = vadd.f32 %v7330, %v7490
        %v7492 = vpop.f32.mrf.mxu0
        %v7493 = vpop.f32.mrf.mxu0
        %v7494 = vadd.f32 %v7333, %v7493
        %v7495 = vpop.f32.mrf.mxu0
        %7496 = vmatprep.mubr.bf16.mxu0 0
        %7497 = vmatmul.mubr.bf16.gmra.mxu0 %v6971
        %v7498 = vpop.f32.mrf.mxu0
        %v7499 = vadd.f32 %v7338, %v7498
        %v7500 = vpop.f32.mrf.mxu0
        %v7501 = vpop.f32.mrf.mxu0
        %v7502 = vadd.f32 %v7341, %v7501
        %v7503 = vpop.f32.mrf.mxu0
        %7504 = vmatprep.mubr.bf16.mxu0 0
        %7505 = vmatmul.mubr.bf16.gmra.mxu0 %v6974
        %v7506 = vpop.f32.mrf.mxu0
        %v7507 = vadd.f32 %v7346, %v7506
        %v7508 = vpop.f32.mrf.mxu0
        %v7509 = vpop.f32.mrf.mxu0
        %v7510 = vadd.f32 %v7349, %v7509
        %v7511 = vpop.f32.mrf.mxu0
        %7512 = vmatprep.mubr.bf16.mxu0 0
        %7513 = vmatmul.mubr.bf16.gmra.mxu0 %v6977
        %v7514 = vpop.f32.mrf.mxu0
        %v7515 = vadd.f32 %v7354, %v7514
        %v7516 = vpop.f32.mrf.mxu0
        %v7517 = vpop.f32.mrf.mxu0
        %v7518 = vadd.f32 %v7357, %v7517
        %v7519 = vpop.f32.mrf.mxu0
        %7520 = vmatprep.mubr.bf16.mxu0 0
        %7521 = vmatmul.mubr.bf16.gmra.mxu0 %v6980
        %v7522 = vpop.f32.mrf.mxu0
        %v7523 = vadd.f32 %v7362, %v7522
        %v7524 = vpop.f32.mrf.mxu0
        %v7525 = vpop.f32.mrf.mxu0
        %v7526 = vadd.f32 %v7365, %v7525
        %v7527 = vpop.f32.mrf.mxu0
        %7528 = vmatprep.mubr.bf16.mxu0 0
        %7529 = vmatmul.mubr.bf16.gmra.mxu0 %v6983
        %v7530 = vpop.f32.mrf.mxu0
        %v7531 = vadd.f32 %v7370, %v7530
        %v7532 = vpop.f32.mrf.mxu0
        %v7533 = vpop.f32.mrf.mxu0
        %v7534 = vadd.f32 %v7373, %v7533
        %v7535 = vpop.f32.mrf.mxu0
        %7536 = vmatprep.mubr.bf16.mxu0 0
        %7537 = vmatmul.mubr.bf16.gmra.mxu0 %v6986
        %v7538 = vpop.f32.mrf.mxu0
        %v7539 = vadd.f32 %v7378, %v7538
        %v7540 = vpop.f32.mrf.mxu0
        %v7541 = vpop.f32.mrf.mxu0
        %v7542 = vadd.f32 %v7381, %v7541
        %v7543 = vpop.f32.mrf.mxu0
        %7544 = vmatprep.mubr.bf16.mxu0 0
        %7545 = vmatmul.mubr.bf16.gmra.mxu0 %v6989
        %v7546 = vpop.f32.mrf.mxu0
        %v7547 = vadd.f32 %v7386, %v7546
        %v7548 = vpop.f32.mrf.mxu0
        %v7549 = vpop.f32.mrf.mxu0
        %v7550 = vadd.f32 %v7389, %v7549
        %v7551 = vpop.f32.mrf.mxu0
        %7552 = vmatprep.mubr.bf16.mxu0 0
        %7553 = vmatmul.mubr.bf16.gmra.mxu0 %v6992
        %v7554 = vpop.f32.mrf.mxu0
        %v7555 = vadd.f32 %v7394, %v7554
        %v7556 = vpop.f32.mrf.mxu0
        %v7557 = vpop.f32.mrf.mxu0
        %v7558 = vadd.f32 %v7397, %v7557
        %v7559 = vpop.f32.mrf.mxu0
        %7560 = vmatprep.mubr.bf16.mxu0 0
        %7561 = vmatmul.mubr.bf16.gmra.mxu0 %v6995
        %v7562 = vpop.f32.mrf.mxu0
        %v7563 = vadd.f32 %v7402, %v7562
        %v7564 = vpop.f32.mrf.mxu0
        %v7565 = vpop.f32.mrf.mxu0
        %v7566 = vadd.f32 %v7405, %v7565
        %v7567 = vpop.f32.mrf.mxu0
        %7568 = vmatprep.mubr.bf16.mxu0 0
        %7569 = vmatmul.mubr.bf16.gmra.mxu0 %v6998
        %v7570 = vpop.f32.mrf.mxu0
        %v7571 = vadd.f32 %v7410, %v7570
        %v7572 = vpop.f32.mrf.mxu0
        %v7573 = vpop.f32.mrf.mxu0
        %v7574 = vadd.f32 %v7413, %v7573
        %v7575 = vpop.f32.mrf.mxu0
        %7576 = vmatprep.mubr.bf16.mxu0 0
        %7577 = vmatmul.mubr.bf16.gmra.mxu0 %v7001
        %v7578 = vpop.f32.mrf.mxu0
        %v7579 = vadd.f32 %v7418, %v7578
        %v7580 = vpop.f32.mrf.mxu0
        %v7581 = vpop.f32.mrf.mxu0
        %v7582 = vadd.f32 %v7421, %v7581
        %v7583 = vpop.f32.mrf.mxu0
        %7584 = vdwg.mxu0
        %v7633 = vunpack.c.l.b16 %v7023
        %v7634 = vunpack.c.l.b16 %v7024
        %v7635 = vunpack.c.l.b16 %v7025
        %v7636 = vunpack.c.l.b16 %v7026
        %v7637 = vunpack.c.l.b16 %v7027
        %v7638 = vunpack.c.l.b16 %v7028
        %v7639 = vunpack.c.l.b16 %v7029
        %v7640 = vunpack.c.l.b16 %v7030
        %v7641 = vunpack.c.l.b16 %v7031
        %v7642 = vunpack.c.l.b16 %v7032
        %v7643 = vunpack.c.l.b16 %v7033
        %v7644 = vunpack.c.l.b16 %v7034
        %v7645 = vunpack.c.l.b16 %v7035
        %v7646 = vunpack.c.l.b16 %v7036
        %v7647 = vunpack.c.l.b16 %v7037
        %v7648 = vunpack.c.l.b16 %v7038
        %v7649 = vunpack.c.l.b16 %v7039
        %v7650 = vunpack.c.l.b16 %v7040
        %v7651 = vunpack.c.l.b16 %v7041
        %v7652 = vunpack.c.l.b16 %v7042
        %v7653 = vunpack.c.l.b16 %v7043
        %v7654 = vunpack.c.l.b16 %v7044
        %v7655 = vunpack.c.l.b16 %v7045
        %v7656 = vunpack.c.l.b16 %v7046
        %v7657 = vunpack.c.l.b16 %v7047
        %v7658 = vunpack.c.l.b16 %v7048
        %v7659 = vunpack.c.l.b16 %v7049
        %v7660 = vunpack.c.l.b16 %v7050
        %v7661 = vunpack.c.l.b16 %v7051
        %v7662 = vunpack.c.l.b16 %v7052
        %v7663 = vunpack.c.l.b16 %v7053
        %v7664 = vunpack.c.l.b16 %v7054
        %v7665 = vunpack.c.l.b16 %v7055
        %v7666 = vunpack.c.l.b16 %v7056
        %v7667 = vunpack.c.l.b16 %v7057
        %v7668 = vunpack.c.l.b16 %v7058
        %v7669 = vunpack.c.l.b16 %v7059
        %v7670 = vunpack.c.l.b16 %v7060
        %v7671 = vunpack.c.l.b16 %v7061
        %v7672 = vunpack.c.l.b16 %v7062
        %v7673 = vunpack.c.l.b16 %v7063
        %v7674 = vunpack.c.l.b16 %v7064
        %v7675 = vunpack.c.l.b16 %v7065
        %v7676 = vunpack.c.l.b16 %v7066
        %v7677 = vunpack.c.l.b16 %v7067
        %v7678 = vunpack.c.l.b16 %v7068
        %v7679 = vunpack.c.l.b16 %v7069
        %v7680 = vunpack.c.l.b16 %v7070
        %v7681 = vpack.c.b16 %v7634, %v7633
        %v7682 = vpack.c.b16 %v7636, %v7635
        %v7683 = vpack.c.b16 %v7638, %v7637
        %v7684 = vpack.c.b16 %v7640, %v7639
        %v7685 = vpack.c.b16 %v7642, %v7641
        %v7686 = vpack.c.b16 %v7644, %v7643
        %v7687 = vpack.c.b16 %v7646, %v7645
        %v7688 = vpack.c.b16 %v7648, %v7647
        %v7689 = vpack.c.b16 %v7650, %v7649
        %v7690 = vpack.c.b16 %v7652, %v7651
        %v7691 = vpack.c.b16 %v7654, %v7653
        %v7692 = vpack.c.b16 %v7656, %v7655
        %v7693 = vpack.c.b16 %v7658, %v7657
        %v7694 = vpack.c.b16 %v7660, %v7659
        %v7695 = vpack.c.b16 %v7662, %v7661
        %v7696 = vpack.c.b16 %v7664, %v7663
        %v7697 = vpack.c.b16 %v7666, %v7665
        %v7698 = vpack.c.b16 %v7668, %v7667
        %v7699 = vpack.c.b16 %v7670, %v7669
        %v7700 = vpack.c.b16 %v7672, %v7671
        %v7701 = vpack.c.b16 %v7674, %v7673
        %v7702 = vpack.c.b16 %v7676, %v7675
        %v7703 = vpack.c.b16 %v7678, %v7677
        %v7704 = vpack.c.b16 %v7680, %v7679
        %7729 = vmatprep.subr.bf16.mxu0 0
        %7730 = vmatpush1.bf16.msra.mxu0 %v7688
        %7731 = vmatprep.subr.bf16.mxu0 0
        %7732 = vmatpush1.bf16.msra.mxu0 %v7687
        %7733 = vmatprep.subr.bf16.mxu0 0
        %7734 = vmatpush1.bf16.msra.mxu0 %v7686
        %7735 = vmatprep.subr.bf16.mxu0 0
        %7736 = vmatpush1.bf16.msra.mxu0 %v7685
        %7737 = vmatprep.subr.bf16.mxu0 0
        %7738 = vmatpush1.bf16.msra.mxu0 %v7684
        %7739 = vmatprep.subr.bf16.mxu0 0
        %7740 = vmatpush1.bf16.msra.mxu0 %v7683
        %7741 = vmatprep.subr.bf16.mxu0 0
        %7742 = vmatpush1.bf16.msra.mxu0 %v7682
        %7743 = vmatprep.subr.bf16.mxu0 0
        %7744 = vmatpush1.bf16.msra.mxu0 %v7681
        %7745 = vmatprep.subr.bf16.mxu0 0
        %7746 = vmatpush2.bf16.msra.mxu0 %v7696
        %7747 = vmatprep.subr.bf16.mxu0 0
        %7748 = vmatpush2.bf16.msra.mxu0 %v7695
        %7749 = vmatprep.subr.bf16.mxu0 0
        %7750 = vmatpush2.bf16.msra.mxu0 %v7694
        %7751 = vmatprep.subr.bf16.mxu0 0
        %7752 = vmatpush2.bf16.msra.mxu0 %v7693
        %7753 = vmatprep.subr.bf16.mxu0 0
        %7754 = vmatpush2.bf16.msra.mxu0 %v7692
        %7755 = vmatprep.subr.bf16.mxu0 0
        %7756 = vmatpush2.bf16.msra.mxu0 %v7691
        %7757 = vmatprep.subr.bf16.mxu0 0
        %7758 = vmatpush2.bf16.msra.mxu0 %v7690
        %7759 = vmatprep.subr.bf16.mxu0 0
        %7760 = vmatpush2.bf16.msra.mxu0 %v7689
        %7761 = vmatprep.mubr.bf16.mxu0 %v6728
        %7762 = vmatmul.mubr.bf16.gmra.mxu0 %v6627
        %v7763 = vpop.f32.mrf.mxu0
        %v7764 = vadd.f32 %v7459, %v7763
        %v7765 = vpop.f32.mrf.mxu0
        %v7766 = vpop.f32.mrf.mxu0
        %v7767 = vadd.f32 %v7462, %v7766
        %v7768 = vpop.f32.mrf.mxu0
        %7769 = vmatprep.mubr.bf16.mxu0 %v6740
        %7770 = vmatmul.mubr.bf16.gmra.mxu0 %v6628
        %v7771 = vpop.f32.mrf.mxu0
        %v7772 = vadd.f32 %v7467, %v7771
        %v7773 = vpop.f32.mrf.mxu0
        %v7774 = vpop.f32.mrf.mxu0
        %v7775 = vadd.f32 %v7470, %v7774
        %v7776 = vpop.f32.mrf.mxu0
        %7777 = vmatprep.mubr.bf16.mxu0 %v6752
        %7778 = vmatmul.mubr.bf16.gmra.mxu0 %v6629
        %v7779 = vpop.f32.mrf.mxu0
        %v7780 = vadd.f32 %v7475, %v7779
        %v7781 = vpop.f32.mrf.mxu0
        %v7782 = vpop.f32.mrf.mxu0
        %v7783 = vadd.f32 %v7478, %v7782
        %v7784 = vpop.f32.mrf.mxu0
        %7785 = vmatprep.mubr.bf16.mxu0 %v6764
        %7786 = vmatmul.mubr.bf16.gmra.mxu0 %v6630
        %v7787 = vpop.f32.mrf.mxu0
        %v7788 = vadd.f32 %v7483, %v7787
        %v7789 = vpop.f32.mrf.mxu0
        %v7790 = vpop.f32.mrf.mxu0
        %v7791 = vadd.f32 %v7486, %v7790
        %v7792 = vpop.f32.mrf.mxu0
        %7793 = vmatprep.mubr.bf16.mxu0 %v6776
        %7794 = vmatmul.mubr.bf16.gmra.mxu0 %v6631
        %v7795 = vpop.f32.mrf.mxu0
        %v7796 = vadd.f32 %v7491, %v7795
        %v7797 = vpop.f32.mrf.mxu0
        %v7798 = vpop.f32.mrf.mxu0
        %v7799 = vadd.f32 %v7494, %v7798
        %v7800 = vpop.f32.mrf.mxu0
        %7801 = vmatprep.mubr.bf16.mxu0 %v6788
        %7802 = vmatmul.mubr.bf16.gmra.mxu0 %v6632
        %v7803 = vpop.f32.mrf.mxu0
        %v7804 = vadd.f32 %v7499, %v7803
        %v7805 = vpop.f32.mrf.mxu0
        %v7806 = vpop.f32.mrf.mxu0
        %v7807 = vadd.f32 %v7502, %v7806
        %v7808 = vpop.f32.mrf.mxu0
        %7809 = vmatprep.mubr.bf16.mxu0 %v6800
        %7810 = vmatmul.mubr.bf16.gmra.mxu0 %v6633
        %v7811 = vpop.f32.mrf.mxu0
        %v7812 = vadd.f32 %v7507, %v7811
        %v7813 = vpop.f32.mrf.mxu0
        %v7814 = vpop.f32.mrf.mxu0
        %v7815 = vadd.f32 %v7510, %v7814
        %v7816 = vpop.f32.mrf.mxu0
        %7817 = vmatprep.mubr.bf16.mxu0 %v6812
        %7818 = vmatmul.mubr.bf16.gmra.mxu0 %v6634
        %v7819 = vpop.f32.mrf.mxu0
        %v7820 = vadd.f32 %v7515, %v7819
        %v7821 = vpop.f32.mrf.mxu0
        %v7822 = vpop.f32.mrf.mxu0
        %v7823 = vadd.f32 %v7518, %v7822
        %v7824 = vpop.f32.mrf.mxu0
        %7825 = vmatprep.mubr.bf16.mxu0 %v6824
        %7826 = vmatmul.mubr.bf16.gmra.mxu0 %v6635
        %v7827 = vpop.f32.mrf.mxu0
        %v7828 = vadd.f32 %v7523, %v7827
        %v7829 = vpop.f32.mrf.mxu0
        %v7830 = vpop.f32.mrf.mxu0
        %v7831 = vadd.f32 %v7526, %v7830
        %v7832 = vpop.f32.mrf.mxu0
        %7833 = vmatprep.mubr.bf16.mxu0 %v6836
        %7834 = vmatmul.mubr.bf16.gmra.mxu0 %v6636
        %v7835 = vpop.f32.mrf.mxu0
        %v7836 = vadd.f32 %v7531, %v7835
        %v7837 = vpop.f32.mrf.mxu0
        %v7838 = vpop.f32.mrf.mxu0
        %v7839 = vadd.f32 %v7534, %v7838
        %v7840 = vpop.f32.mrf.mxu0
        %7841 = vmatprep.mubr.bf16.mxu0 %v6848
        %7842 = vmatmul.mubr.bf16.gmra.mxu0 %v6637
        %v7843 = vpop.f32.mrf.mxu0
        %v7844 = vadd.f32 %v7539, %v7843
        %v7845 = vpop.f32.mrf.mxu0
        %v7846 = vpop.f32.mrf.mxu0
        %v7847 = vadd.f32 %v7542, %v7846
        %v7848 = vpop.f32.mrf.mxu0
        %7849 = vmatprep.mubr.bf16.mxu0 %v6860
        %7850 = vmatmul.mubr.bf16.gmra.mxu0 %v6638
        %v7851 = vpop.f32.mrf.mxu0
        %v7852 = vadd.f32 %v7547, %v7851
        %v7853 = vpop.f32.mrf.mxu0
        %v7854 = vpop.f32.mrf.mxu0
        %v7855 = vadd.f32 %v7550, %v7854
        %v7856 = vpop.f32.mrf.mxu0
        %7857 = vmatprep.mubr.bf16.mxu0 %v6872
        %7858 = vmatmul.mubr.bf16.gmra.mxu0 %v6639
        %v7859 = vpop.f32.mrf.mxu0
        %v7860 = vadd.f32 %v7555, %v7859
        %v7861 = vpop.f32.mrf.mxu0
        %v7862 = vpop.f32.mrf.mxu0
        %v7863 = vadd.f32 %v7558, %v7862
        %v7864 = vpop.f32.mrf.mxu0
        %7865 = vmatprep.mubr.bf16.mxu0 %v6884
        %7866 = vmatmul.mubr.bf16.gmra.mxu0 %v6640
        %v7867 = vpop.f32.mrf.mxu0
        %v7868 = vadd.f32 %v7563, %v7867
        %v7869 = vpop.f32.mrf.mxu0
        %v7870 = vpop.f32.mrf.mxu0
        %v7871 = vadd.f32 %v7566, %v7870
        %v7872 = vpop.f32.mrf.mxu0
        %7873 = vmatprep.mubr.bf16.mxu0 %v6896
        %7874 = vmatmul.mubr.bf16.gmra.mxu0 %v6641
        %v7875 = vpop.f32.mrf.mxu0
        %v7876 = vadd.f32 %v7571, %v7875
        %v7877 = vpop.f32.mrf.mxu0
        %v7878 = vpop.f32.mrf.mxu0
        %v7879 = vadd.f32 %v7574, %v7878
        %v7880 = vpop.f32.mrf.mxu0
        %7881 = vmatprep.mubr.bf16.mxu0 %v6908
        %7882 = vmatmul.mubr.bf16.gmra.mxu0 %v6642
        %v7883 = vpop.f32.mrf.mxu0
        %v7884 = vadd.f32 %v7579, %v7883
        %v7885 = vpop.f32.mrf.mxu0
        %v7886 = vpop.f32.mrf.mxu0
        %v7887 = vadd.f32 %v7582, %v7886
        %v7888 = vpop.f32.mrf.mxu0
        %7889 = vdwg.mxu0
        %7890 = vmatprep.subr.bf16.mxu0 0
        %7891 = vmatpush1.bf16.msra.mxu0 %v7704
        %7892 = vmatprep.subr.bf16.mxu0 0
        %7893 = vmatpush1.bf16.msra.mxu0 %v7703
        %7894 = vmatprep.subr.bf16.mxu0 0
        %7895 = vmatpush1.bf16.msra.mxu0 %v7702
        %7896 = vmatprep.subr.bf16.mxu0 0
        %7897 = vmatpush1.bf16.msra.mxu0 %v7701
        %7898 = vmatprep.subr.bf16.mxu0 0
        %7899 = vmatpush1.bf16.msra.mxu0 %v7700
        %7900 = vmatprep.subr.bf16.mxu0 0
        %7901 = vmatpush1.bf16.msra.mxu0 %v7699
        %7902 = vmatprep.subr.bf16.mxu0 0
        %7903 = vmatpush1.bf16.msra.mxu0 %v7698
        %7904 = vmatprep.subr.bf16.mxu0 0
        %7905 = vmatpush1.bf16.msra.mxu0 %v7697
        %7906 = vmatprep.subr.bf16.mxu0 0
        %7907 = vmatpush2.bf16.msra.mxu0 0
        %7908 = vmatprep.subr.bf16.mxu0 0
        %7909 = vmatpush2.bf16.msra.mxu0 0
        %7910 = vmatprep.subr.bf16.mxu0 0
        %7911 = vmatpush2.bf16.msra.mxu0 0
        %7912 = vmatprep.subr.bf16.mxu0 0
        %7913 = vmatpush2.bf16.msra.mxu0 0
        %7914 = vmatprep.subr.bf16.mxu0 0
        %7915 = vmatpush2.bf16.msra.mxu0 0
        %7916 = vmatprep.subr.bf16.mxu0 0
        %7917 = vmatpush2.bf16.msra.mxu0 0
        %7918 = vmatprep.subr.bf16.mxu0 0
        %7919 = vmatpush2.bf16.msra.mxu0 0
        %7920 = vmatprep.subr.bf16.mxu0 0
        %7921 = vmatpush2.bf16.msra.mxu0 0
        %7922 = vmatprep.mubr.bf16.mxu0 0
        %7923 = vmatmul.mubr.bf16.gmra.mxu0 %v6953
        %v7924 = vpop.f32.mrf.mxu0
        %v7925 = vadd.f32 %v7764, %v7924
        %v7926 = vpop.f32.mrf.mxu0
        %v7927 = vpop.f32.mrf.mxu0
        %v7928 = vadd.f32 %v7767, %v7927
        %v7929 = vpop.f32.mrf.mxu0
        %7930 = vmatprep.mubr.bf16.mxu0 0
        %7931 = vmatmul.mubr.bf16.gmra.mxu0 %v6956
        %v7932 = vpop.f32.mrf.mxu0
        %v7933 = vadd.f32 %v7772, %v7932
        %v7934 = vpop.f32.mrf.mxu0
        %v7935 = vpop.f32.mrf.mxu0
        %v7936 = vadd.f32 %v7775, %v7935
        %v7937 = vpop.f32.mrf.mxu0
        %7938 = vmatprep.mubr.bf16.mxu0 0
        %7939 = vmatmul.mubr.bf16.gmra.mxu0 %v6959
        %v7940 = vpop.f32.mrf.mxu0
        %v7941 = vadd.f32 %v7780, %v7940
        %v7942 = vpop.f32.mrf.mxu0
        %v7943 = vpop.f32.mrf.mxu0
        %v7944 = vadd.f32 %v7783, %v7943
        %v7945 = vpop.f32.mrf.mxu0
        %7946 = vmatprep.mubr.bf16.mxu0 0
        %7947 = vmatmul.mubr.bf16.gmra.mxu0 %v6962
        %v7948 = vpop.f32.mrf.mxu0
        %v7949 = vadd.f32 %v7788, %v7948
        %v7950 = vpop.f32.mrf.mxu0
        %v7951 = vpop.f32.mrf.mxu0
        %v7952 = vadd.f32 %v7791, %v7951
        %v7953 = vpop.f32.mrf.mxu0
        %7954 = vmatprep.mubr.bf16.mxu0 0
        %7955 = vmatmul.mubr.bf16.gmra.mxu0 %v6965
        %v7956 = vpop.f32.mrf.mxu0
        %v7957 = vadd.f32 %v7796, %v7956
        %v7958 = vpop.f32.mrf.mxu0
        %v7959 = vpop.f32.mrf.mxu0
        %v7960 = vadd.f32 %v7799, %v7959
        %v7961 = vpop.f32.mrf.mxu0
        %7962 = vmatprep.mubr.bf16.mxu0 0
        %7963 = vmatmul.mubr.bf16.gmra.mxu0 %v6968
        %v7964 = vpop.f32.mrf.mxu0
        %v7965 = vadd.f32 %v7804, %v7964
        %v7966 = vpop.f32.mrf.mxu0
        %v7967 = vpop.f32.mrf.mxu0
        %v7968 = vadd.f32 %v7807, %v7967
        %v7969 = vpop.f32.mrf.mxu0
        %7970 = vmatprep.mubr.bf16.mxu0 0
        %7971 = vmatmul.mubr.bf16.gmra.mxu0 %v6971
        %v7972 = vpop.f32.mrf.mxu0
        %v7973 = vadd.f32 %v7812, %v7972
        %v7974 = vpop.f32.mrf.mxu0
        %v7975 = vpop.f32.mrf.mxu0
        %v7976 = vadd.f32 %v7815, %v7975
        %v7977 = vpop.f32.mrf.mxu0
        %7978 = vmatprep.mubr.bf16.mxu0 0
        %7979 = vmatmul.mubr.bf16.gmra.mxu0 %v6974
        %v7980 = vpop.f32.mrf.mxu0
        %v7981 = vadd.f32 %v7820, %v7980
        %v7982 = vpop.f32.mrf.mxu0
        %v7983 = vpop.f32.mrf.mxu0
        %v7984 = vadd.f32 %v7823, %v7983
        %v7985 = vpop.f32.mrf.mxu0
        %7986 = vmatprep.mubr.bf16.mxu0 0
        %7987 = vmatmul.mubr.bf16.gmra.mxu0 %v6977
        %v7988 = vpop.f32.mrf.mxu0
        %v7989 = vadd.f32 %v7828, %v7988
        %v7990 = vpop.f32.mrf.mxu0
        %v7991 = vpop.f32.mrf.mxu0
        %v7992 = vadd.f32 %v7831, %v7991
        %v7993 = vpop.f32.mrf.mxu0
        %7994 = vmatprep.mubr.bf16.mxu0 0
        %7995 = vmatmul.mubr.bf16.gmra.mxu0 %v6980
        %v7996 = vpop.f32.mrf.mxu0
        %v7997 = vadd.f32 %v7836, %v7996
        %v7998 = vpop.f32.mrf.mxu0
        %v7999 = vpop.f32.mrf.mxu0
        %v8000 = vadd.f32 %v7839, %v7999
        %v8001 = vpop.f32.mrf.mxu0
        %8002 = vmatprep.mubr.bf16.mxu0 0
        %8003 = vmatmul.mubr.bf16.gmra.mxu0 %v6983
        %v8004 = vpop.f32.mrf.mxu0
        %v8005 = vadd.f32 %v7844, %v8004
        %v8006 = vpop.f32.mrf.mxu0
        %v8007 = vpop.f32.mrf.mxu0
        %v8008 = vadd.f32 %v7847, %v8007
        %v8009 = vpop.f32.mrf.mxu0
        %8010 = vmatprep.mubr.bf16.mxu0 0
        %8011 = vmatmul.mubr.bf16.gmra.mxu0 %v6986
        %v8012 = vpop.f32.mrf.mxu0
        %v8013 = vadd.f32 %v7852, %v8012
        %v8014 = vpop.f32.mrf.mxu0
        %v8015 = vpop.f32.mrf.mxu0
        %v8016 = vadd.f32 %v7855, %v8015
        %v8017 = vpop.f32.mrf.mxu0
        %8018 = vmatprep.mubr.bf16.mxu0 0
        %8019 = vmatmul.mubr.bf16.gmra.mxu0 %v6989
        %v8020 = vpop.f32.mrf.mxu0
        %v8021 = vadd.f32 %v7860, %v8020
        %v8022 = vpop.f32.mrf.mxu0
        %v8023 = vpop.f32.mrf.mxu0
        %v8024 = vadd.f32 %v7863, %v8023
        %v8025 = vpop.f32.mrf.mxu0
        %8026 = vmatprep.mubr.bf16.mxu0 0
        %8027 = vmatmul.mubr.bf16.gmra.mxu0 %v6992
        %v8028 = vpop.f32.mrf.mxu0
        %v8029 = vadd.f32 %v7868, %v8028
        %v8030 = vpop.f32.mrf.mxu0
        %v8031 = vpop.f32.mrf.mxu0
        %v8032 = vadd.f32 %v7871, %v8031
        %v8033 = vpop.f32.mrf.mxu0
        %8034 = vmatprep.mubr.bf16.mxu0 0
        %8035 = vmatmul.mubr.bf16.gmra.mxu0 %v6995
        %v8036 = vpop.f32.mrf.mxu0
        %v8037 = vadd.f32 %v7876, %v8036
        %v8038 = vpop.f32.mrf.mxu0
        %v8039 = vpop.f32.mrf.mxu0
        %v8040 = vadd.f32 %v7879, %v8039
        %v8041 = vpop.f32.mrf.mxu0
        %8042 = vmatprep.mubr.bf16.mxu0 0
        %8043 = vmatmul.mubr.bf16.gmra.mxu0 %v6998
        %v8044 = vpop.f32.mrf.mxu0
        %v8045 = vadd.f32 %v7884, %v8044
        %v8046 = vpop.f32.mrf.mxu0
        %v8047 = vpop.f32.mrf.mxu0
        %v8048 = vadd.f32 %v7887, %v8047
        %v8049 = vpop.f32.mrf.mxu0
        %8050 = vdwg.mxu0
        %v8051 = vld [vmem:[#allocation6 + $0x180] sm:$0xf]
        %v8052 = vld [vmem:[#allocation6 + $0x184] sm:$0xf]
        %v8053 = vld [vmem:[#allocation6 + $0x188] sm:$0xf]
        %v8054 = vld [vmem:[#allocation6 + $0x18c] sm:$0xf]
        %v8055 = vld [vmem:[#allocation6 + $0x190] sm:$0xf]
        %v8056 = vld [vmem:[#allocation6 + $0x194] sm:$0xf]
        %v8057 = vld [vmem:[#allocation6 + $0x198] sm:$0xf]
        %v8058 = vld [vmem:[#allocation6 + $0x19c] sm:$0xf]
        %v8059 = vld [vmem:[#allocation6 + $0x1a0] sm:$0xf]
        %v8060 = vld [vmem:[#allocation6 + $0x1a4] sm:$0xf]
        %v8061 = vld [vmem:[#allocation6 + $0x1a8] sm:$0xf]
        %v8062 = vld [vmem:[#allocation6 + $0x1ac] sm:$0xf]
        %v8063 = vld [vmem:[#allocation6 + $0x1b0] sm:$0xf]
        %v8064 = vld [vmem:[#allocation6 + $0x1b4] sm:$0xf]
        %v8065 = vld [vmem:[#allocation6 + $0x1b8] sm:$0xf]
        %v8066 = vld [vmem:[#allocation6 + $0x1bc] sm:$0xf]
        %v8067 = vld [vmem:[#allocation6 + $0x1c0] sm:$0xf]
        %v8068 = vld [vmem:[#allocation6 + $0x1c4] sm:$0xf]
        %v8069 = vld [vmem:[#allocation6 + $0x1c8] sm:$0xf]
        %v8070 = vld [vmem:[#allocation6 + $0x1cc] sm:$0xf]
        %v8071 = vld [vmem:[#allocation6 + $0x1d0] sm:$0xf]
        %v8072 = vld [vmem:[#allocation6 + $0x1d4] sm:$0xf]
        %v8073 = vld [vmem:[#allocation6 + $0x1d8] sm:$0xf]
        %v8074 = vld [vmem:[#allocation6 + $0x1dc] sm:$0xf]
        %v8075 = vld [vmem:[#allocation6 + $0x1e0] sm:$0xf]
        %v8076 = vld [vmem:[#allocation6 + $0x1e4] sm:$0xf]
        %v8077 = vld [vmem:[#allocation6 + $0x1e8] sm:$0xf]
        %v8078 = vld [vmem:[#allocation6 + $0x1ec] sm:$0xf]
        %v8079 = vld [vmem:[#allocation6 + $0x1f0] sm:$0xf]
        %v8080 = vld [vmem:[#allocation6 + $0x1f4] sm:$0xf]
        %v8081 = vld [vmem:[#allocation6 + $0x1f8] sm:$0xf]
        %v8082 = vld [vmem:[#allocation6 + $0x1fc] sm:$0xf]
        %v8083 = vld [vmem:[#allocation6 + $0x200] sm:$0xf]
        %v8084 = vld [vmem:[#allocation6 + $0x204] sm:$0xf]
        %v8085 = vld [vmem:[#allocation6 + $0x208] sm:$0xf]
        %v8086 = vld [vmem:[#allocation6 + $0x20c] sm:$0xf]
        %v8087 = vld [vmem:[#allocation6 + $0x210] sm:$0xf]
        %v8088 = vld [vmem:[#allocation6 + $0x214] sm:$0xf]
        %v8089 = vld [vmem:[#allocation6 + $0x218] sm:$0xf]
        %v8090 = vld [vmem:[#allocation6 + $0x21c] sm:$0xf]
        %v8091 = vld [vmem:[#allocation6 + $0x220] sm:$0xf]
        %v8092 = vld [vmem:[#allocation6 + $0x224] sm:$0xf]
        %v8093 = vld [vmem:[#allocation6 + $0x228] sm:$0xf]
        %v8094 = vld [vmem:[#allocation6 + $0x22c] sm:$0xf]
        %v8095 = vld [vmem:[#allocation6 + $0x230] sm:$0xf]
        %v8096 = vld [vmem:[#allocation6 + $0x234] sm:$0xf]
        %v8097 = vld [vmem:[#allocation6 + $0x238] sm:$0xf]
        %v8098 = vld [vmem:[#allocation6 + $0x23c] sm:$0xf]
        %v8147 = vunpack.c.l.b16 %v8051
        %v8148 = vunpack.c.l.b16 %v8052
        %v8149 = vunpack.c.l.b16 %v8053
        %v8150 = vunpack.c.l.b16 %v8054
        %v8151 = vunpack.c.l.b16 %v8055
        %v8152 = vunpack.c.l.b16 %v8056
        %v8153 = vunpack.c.l.b16 %v8057
        %v8154 = vunpack.c.l.b16 %v8058
        %v8155 = vunpack.c.l.b16 %v8059
        %v8156 = vunpack.c.l.b16 %v8060
        %v8157 = vunpack.c.l.b16 %v8061
        %v8158 = vunpack.c.l.b16 %v8062
        %v8159 = vunpack.c.l.b16 %v8063
        %v8160 = vunpack.c.l.b16 %v8064
        %v8161 = vunpack.c.l.b16 %v8065
        %v8162 = vunpack.c.l.b16 %v8066
        %v8163 = vunpack.c.l.b16 %v8067
        %v8164 = vunpack.c.l.b16 %v8068
        %v8165 = vunpack.c.l.b16 %v8069
        %v8166 = vunpack.c.l.b16 %v8070
        %v8167 = vunpack.c.l.b16 %v8071
        %v8168 = vunpack.c.l.b16 %v8072
        %v8169 = vunpack.c.l.b16 %v8073
        %v8170 = vunpack.c.l.b16 %v8074
        %v8171 = vunpack.c.l.b16 %v8075
        %v8172 = vunpack.c.l.b16 %v8076
        %v8173 = vunpack.c.l.b16 %v8077
        %v8174 = vunpack.c.l.b16 %v8078
        %v8175 = vunpack.c.l.b16 %v8079
        %v8176 = vunpack.c.l.b16 %v8080
        %v8177 = vunpack.c.l.b16 %v8081
        %v8178 = vunpack.c.l.b16 %v8082
        %v8179 = vunpack.c.l.b16 %v8083
        %v8180 = vunpack.c.l.b16 %v8084
        %v8181 = vunpack.c.l.b16 %v8085
        %v8182 = vunpack.c.l.b16 %v8086
        %v8183 = vunpack.c.l.b16 %v8087
        %v8184 = vunpack.c.l.b16 %v8088
        %v8185 = vunpack.c.l.b16 %v8089
        %v8186 = vunpack.c.l.b16 %v8090
        %v8187 = vunpack.c.l.b16 %v8091
        %v8188 = vunpack.c.l.b16 %v8092
        %v8189 = vunpack.c.l.b16 %v8093
        %v8190 = vunpack.c.l.b16 %v8094
        %v8191 = vunpack.c.l.b16 %v8095
        %v8192 = vunpack.c.l.b16 %v8096
        %v8193 = vunpack.c.l.b16 %v8097
        %v8194 = vunpack.c.l.b16 %v8098
        %v8195 = vpack.c.b16 %v8148, %v8147
        %v8196 = vpack.c.b16 %v8150, %v8149
        %v8197 = vpack.c.b16 %v8152, %v8151
        %v8198 = vpack.c.b16 %v8154, %v8153
        %v8199 = vpack.c.b16 %v8156, %v8155
        %v8200 = vpack.c.b16 %v8158, %v8157
        %v8201 = vpack.c.b16 %v8160, %v8159
        %v8202 = vpack.c.b16 %v8162, %v8161
        %v8203 = vpack.c.b16 %v8164, %v8163
        %v8204 = vpack.c.b16 %v8166, %v8165
        %v8205 = vpack.c.b16 %v8168, %v8167
        %v8206 = vpack.c.b16 %v8170, %v8169
        %v8207 = vpack.c.b16 %v8172, %v8171
        %v8208 = vpack.c.b16 %v8174, %v8173
        %v8209 = vpack.c.b16 %v8176, %v8175
        %v8210 = vpack.c.b16 %v8178, %v8177
        %v8211 = vpack.c.b16 %v8180, %v8179
        %v8212 = vpack.c.b16 %v8182, %v8181
        %v8213 = vpack.c.b16 %v8184, %v8183
        %v8214 = vpack.c.b16 %v8186, %v8185
        %v8215 = vpack.c.b16 %v8188, %v8187
        %v8216 = vpack.c.b16 %v8190, %v8189
        %v8217 = vpack.c.b16 %v8192, %v8191
        %v8218 = vpack.c.b16 %v8194, %v8193
        %8243 = vmatprep.subr.bf16.mxu0 0
        %8244 = vmatpush1.bf16.msra.mxu0 %v8202
        %8245 = vmatprep.subr.bf16.mxu0 0
        %8246 = vmatpush1.bf16.msra.mxu0 %v8201
        %8247 = vmatprep.subr.bf16.mxu0 0
        %8248 = vmatpush1.bf16.msra.mxu0 %v8200
        %8249 = vmatprep.subr.bf16.mxu0 0
        %8250 = vmatpush1.bf16.msra.mxu0 %v8199
        %8251 = vmatprep.subr.bf16.mxu0 0
        %8252 = vmatpush1.bf16.msra.mxu0 %v8198
        %8253 = vmatprep.subr.bf16.mxu0 0
        %8254 = vmatpush1.bf16.msra.mxu0 %v8197
        %8255 = vmatprep.subr.bf16.mxu0 0
        %8256 = vmatpush1.bf16.msra.mxu0 %v8196
        %8257 = vmatprep.subr.bf16.mxu0 0
        %8258 = vmatpush1.bf16.msra.mxu0 %v8195
        %8259 = vmatprep.subr.bf16.mxu0 0
        %8260 = vmatpush2.bf16.msra.mxu0 %v8210
        %8261 = vmatprep.subr.bf16.mxu0 0
        %8262 = vmatpush2.bf16.msra.mxu0 %v8209
        %8263 = vmatprep.subr.bf16.mxu0 0
        %8264 = vmatpush2.bf16.msra.mxu0 %v8208
        %8265 = vmatprep.subr.bf16.mxu0 0
        %8266 = vmatpush2.bf16.msra.mxu0 %v8207
        %8267 = vmatprep.subr.bf16.mxu0 0
        %8268 = vmatpush2.bf16.msra.mxu0 %v8206
        %8269 = vmatprep.subr.bf16.mxu0 0
        %8270 = vmatpush2.bf16.msra.mxu0 %v8205
        %8271 = vmatprep.subr.bf16.mxu0 0
        %8272 = vmatpush2.bf16.msra.mxu0 %v8204
        %8273 = vmatprep.subr.bf16.mxu0 0
        %8274 = vmatpush2.bf16.msra.mxu0 %v8203
        %8275 = vmatprep.mubr.bf16.mxu0 %v6752
        %8276 = vmatmul.mubr.bf16.gmra.mxu0 %v6629
        %v8277 = vpop.f32.mrf.mxu0
        %v8278 = vadd.f32 0.0, %v8277
        %v8279 = vpop.f32.mrf.mxu0
        %v8280 = vpop.f32.mrf.mxu0
        %v8281 = vadd.f32 0.0, %v8280
        %v8282 = vpop.f32.mrf.mxu0
        %8283 = vmatprep.mubr.bf16.mxu0 %v6764
        %8284 = vmatmul.mubr.bf16.gmra.mxu0 %v6630
        %v8285 = vpop.f32.mrf.mxu0
        %v8286 = vadd.f32 0.0, %v8285
        %v8287 = vpop.f32.mrf.mxu0
        %v8288 = vpop.f32.mrf.mxu0
        %v8289 = vadd.f32 0.0, %v8288
        %v8290 = vpop.f32.mrf.mxu0
        %8291 = vmatprep.mubr.bf16.mxu0 %v6776
        %8292 = vmatmul.mubr.bf16.gmra.mxu0 %v6631
        %v8293 = vpop.f32.mrf.mxu0
        %v8294 = vadd.f32 0.0, %v8293
        %v8295 = vpop.f32.mrf.mxu0
        %v8296 = vpop.f32.mrf.mxu0
        %v8297 = vadd.f32 0.0, %v8296
        %v8298 = vpop.f32.mrf.mxu0
        %8299 = vmatprep.mubr.bf16.mxu0 %v6788
        %8300 = vmatmul.mubr.bf16.gmra.mxu0 %v6632
        %v8301 = vpop.f32.mrf.mxu0
        %v8302 = vadd.f32 0.0, %v8301
        %v8303 = vpop.f32.mrf.mxu0
        %v8304 = vpop.f32.mrf.mxu0
        %v8305 = vadd.f32 0.0, %v8304
        %v8306 = vpop.f32.mrf.mxu0
        %8307 = vmatprep.mubr.bf16.mxu0 %v6800
        %8308 = vmatmul.mubr.bf16.gmra.mxu0 %v6633
        %v8309 = vpop.f32.mrf.mxu0
        %v8310 = vadd.f32 0.0, %v8309
        %v8311 = vpop.f32.mrf.mxu0
        %v8312 = vpop.f32.mrf.mxu0
        %v8313 = vadd.f32 0.0, %v8312
        %v8314 = vpop.f32.mrf.mxu0
        %8315 = vmatprep.mubr.bf16.mxu0 %v6812
        %8316 = vmatmul.mubr.bf16.gmra.mxu0 %v6634
        %v8317 = vpop.f32.mrf.mxu0
        %v8318 = vadd.f32 0.0, %v8317
        %v8319 = vpop.f32.mrf.mxu0
        %v8320 = vpop.f32.mrf.mxu0
        %v8321 = vadd.f32 0.0, %v8320
        %v8322 = vpop.f32.mrf.mxu0
        %8323 = vmatprep.mubr.bf16.mxu0 %v6824
        %8324 = vmatmul.mubr.bf16.gmra.mxu0 %v6635
        %v8325 = vpop.f32.mrf.mxu0
        %v8326 = vadd.f32 0.0, %v8325
        %v8327 = vpop.f32.mrf.mxu0
        %v8328 = vpop.f32.mrf.mxu0
        %v8329 = vadd.f32 0.0, %v8328
        %v8330 = vpop.f32.mrf.mxu0
        %8331 = vmatprep.mubr.bf16.mxu0 %v6836
        %8332 = vmatmul.mubr.bf16.gmra.mxu0 %v6636
        %v8333 = vpop.f32.mrf.mxu0
        %v8334 = vadd.f32 0.0, %v8333
        %v8335 = vpop.f32.mrf.mxu0
        %v8336 = vpop.f32.mrf.mxu0
        %v8337 = vadd.f32 0.0, %v8336
        %v8338 = vpop.f32.mrf.mxu0
        %8339 = vmatprep.mubr.bf16.mxu0 %v6848
        %8340 = vmatmul.mubr.bf16.gmra.mxu0 %v6637
        %v8341 = vpop.f32.mrf.mxu0
        %v8342 = vadd.f32 0.0, %v8341
        %v8343 = vpop.f32.mrf.mxu0
        %v8344 = vpop.f32.mrf.mxu0
        %v8345 = vadd.f32 0.0, %v8344
        %v8346 = vpop.f32.mrf.mxu0
        %8347 = vmatprep.mubr.bf16.mxu0 %v6860
        %8348 = vmatmul.mubr.bf16.gmra.mxu0 %v6638
        %v8349 = vpop.f32.mrf.mxu0
        %v8350 = vadd.f32 0.0, %v8349
        %v8351 = vpop.f32.mrf.mxu0
        %v8352 = vpop.f32.mrf.mxu0
        %v8353 = vadd.f32 0.0, %v8352
        %v8354 = vpop.f32.mrf.mxu0
        %8355 = vmatprep.mubr.bf16.mxu0 %v6872
        %8356 = vmatmul.mubr.bf16.gmra.mxu0 %v6639
        %v8357 = vpop.f32.mrf.mxu0
        %v8358 = vadd.f32 0.0, %v8357
        %v8359 = vpop.f32.mrf.mxu0
        %v8360 = vpop.f32.mrf.mxu0
        %v8361 = vadd.f32 0.0, %v8360
        %v8362 = vpop.f32.mrf.mxu0
        %8363 = vmatprep.mubr.bf16.mxu0 %v6884
        %8364 = vmatmul.mubr.bf16.gmra.mxu0 %v6640
        %v8365 = vpop.f32.mrf.mxu0
        %v8366 = vadd.f32 0.0, %v8365
        %v8367 = vpop.f32.mrf.mxu0
        %v8368 = vpop.f32.mrf.mxu0
        %v8369 = vadd.f32 0.0, %v8368
        %v8370 = vpop.f32.mrf.mxu0
        %8371 = vmatprep.mubr.bf16.mxu0 %v6896
        %8372 = vmatmul.mubr.bf16.gmra.mxu0 %v6641
        %v8373 = vpop.f32.mrf.mxu0
        %v8374 = vadd.f32 0.0, %v8373
        %v8375 = vpop.f32.mrf.mxu0
        %v8376 = vpop.f32.mrf.mxu0
        %v8377 = vadd.f32 0.0, %v8376
        %v8378 = vpop.f32.mrf.mxu0
        %8379 = vmatprep.mubr.bf16.mxu0 %v6908
        %8380 = vmatmul.mubr.bf16.gmra.mxu0 %v6642
        %v8381 = vpop.f32.mrf.mxu0
        %v8382 = vadd.f32 0.0, %v8381
        %v8383 = vpop.f32.mrf.mxu0
        %v8384 = vpop.f32.mrf.mxu0
        %v8385 = vadd.f32 0.0, %v8384
        %v8386 = vpop.f32.mrf.mxu0
        %8387 = vmatprep.mubr.bf16.mxu0 %v6920
        %8388 = vmatmul.mubr.bf16.gmra.mxu0 %v6643
        %v8389 = vpop.f32.mrf.mxu0
        %v8390 = vadd.f32 0.0, %v8389
        %v8391 = vpop.f32.mrf.mxu0
        %v8392 = vpop.f32.mrf.mxu0
        %v8393 = vadd.f32 0.0, %v8392
        %v8394 = vpop.f32.mrf.mxu0
        %8395 = vmatprep.mubr.bf16.mxu0 %v6932
        %8396 = vmatmul.mubr.bf16.gmra.mxu0 %v6644
        %v8397 = vpop.f32.mrf.mxu0
        %v8398 = vadd.f32 0.0, %v8397
        %v8399 = vpop.f32.mrf.mxu0
        %v8400 = vpop.f32.mrf.mxu0
        %v8401 = vadd.f32 0.0, %v8400
        %v8402 = vpop.f32.mrf.mxu0
        %8403 = vdwg.mxu0
        %8404 = vmatprep.subr.bf16.mxu0 0
        %8405 = vmatpush1.bf16.msra.mxu0 %v8218
        %8406 = vmatprep.subr.bf16.mxu0 0
        %8407 = vmatpush1.bf16.msra.mxu0 %v8217
        %8408 = vmatprep.subr.bf16.mxu0 0
        %8409 = vmatpush1.bf16.msra.mxu0 %v8216
        %8410 = vmatprep.subr.bf16.mxu0 0
        %8411 = vmatpush1.bf16.msra.mxu0 %v8215
        %8412 = vmatprep.subr.bf16.mxu0 0
        %8413 = vmatpush1.bf16.msra.mxu0 %v8214
        %8414 = vmatprep.subr.bf16.mxu0 0
        %8415 = vmatpush1.bf16.msra.mxu0 %v8213
        %8416 = vmatprep.subr.bf16.mxu0 0
        %8417 = vmatpush1.bf16.msra.mxu0 %v8212
        %8418 = vmatprep.subr.bf16.mxu0 0
        %8419 = vmatpush1.bf16.msra.mxu0 %v8211
        %8420 = vmatprep.subr.bf16.mxu0 0
        %8421 = vmatpush2.bf16.msra.mxu0 0
        %8422 = vmatprep.subr.bf16.mxu0 0
        %8423 = vmatpush2.bf16.msra.mxu0 0
        %8424 = vmatprep.subr.bf16.mxu0 0
        %8425 = vmatpush2.bf16.msra.mxu0 0
        %8426 = vmatprep.subr.bf16.mxu0 0
        %8427 = vmatpush2.bf16.msra.mxu0 0
        %8428 = vmatprep.subr.bf16.mxu0 0
        %8429 = vmatpush2.bf16.msra.mxu0 0
        %8430 = vmatprep.subr.bf16.mxu0 0
        %8431 = vmatpush2.bf16.msra.mxu0 0
        %8432 = vmatprep.subr.bf16.mxu0 0
        %8433 = vmatpush2.bf16.msra.mxu0 0
        %8434 = vmatprep.subr.bf16.mxu0 0
        %8435 = vmatpush2.bf16.msra.mxu0 0
        %8436 = vmatprep.mubr.bf16.mxu0 0
        %8437 = vmatmul.mubr.bf16.gmra.mxu0 %v6959
        %v8438 = vpop.f32.mrf.mxu0
        %v8439 = vadd.f32 %v8278, %v8438
        %v8440 = vpop.f32.mrf.mxu0
        %v8441 = vpop.f32.mrf.mxu0
        %v8442 = vadd.f32 %v8281, %v8441
        %v8443 = vpop.f32.mrf.mxu0
        %8444 = vmatprep.mubr.bf16.mxu0 0
        %8445 = vmatmul.mubr.bf16.gmra.mxu0 %v6962
        %v8446 = vpop.f32.mrf.mxu0
        %v8447 = vadd.f32 %v8286, %v8446
        %v8448 = vpop.f32.mrf.mxu0
        %v8449 = vpop.f32.mrf.mxu0
        %v8450 = vadd.f32 %v8289, %v8449
        %v8451 = vpop.f32.mrf.mxu0
        %8452 = vmatprep.mubr.bf16.mxu0 0
        %8453 = vmatmul.mubr.bf16.gmra.mxu0 %v6965
        %v8454 = vpop.f32.mrf.mxu0
        %v8455 = vadd.f32 %v8294, %v8454
        %v8456 = vpop.f32.mrf.mxu0
        %v8457 = vpop.f32.mrf.mxu0
        %v8458 = vadd.f32 %v8297, %v8457
        %v8459 = vpop.f32.mrf.mxu0
        %8460 = vmatprep.mubr.bf16.mxu0 0
        %8461 = vmatmul.mubr.bf16.gmra.mxu0 %v6968
        %v8462 = vpop.f32.mrf.mxu0
        %v8463 = vadd.f32 %v8302, %v8462
        %v8464 = vpop.f32.mrf.mxu0
        %v8465 = vpop.f32.mrf.mxu0
        %v8466 = vadd.f32 %v8305, %v8465
        %v8467 = vpop.f32.mrf.mxu0
        %8468 = vmatprep.mubr.bf16.mxu0 0
        %8469 = vmatmul.mubr.bf16.gmra.mxu0 %v6971
        %v8470 = vpop.f32.mrf.mxu0
        %v8471 = vadd.f32 %v8310, %v8470
        %v8472 = vpop.f32.mrf.mxu0
        %v8473 = vpop.f32.mrf.mxu0
        %v8474 = vadd.f32 %v8313, %v8473
        %v8475 = vpop.f32.mrf.mxu0
        %8476 = vmatprep.mubr.bf16.mxu0 0
        %8477 = vmatmul.mubr.bf16.gmra.mxu0 %v6974
        %v8478 = vpop.f32.mrf.mxu0
        %v8479 = vadd.f32 %v8318, %v8478
        %v8480 = vpop.f32.mrf.mxu0
        %v8481 = vpop.f32.mrf.mxu0
        %v8482 = vadd.f32 %v8321, %v8481
        %v8483 = vpop.f32.mrf.mxu0
        %8484 = vmatprep.mubr.bf16.mxu0 0
        %8485 = vmatmul.mubr.bf16.gmra.mxu0 %v6977
        %v8486 = vpop.f32.mrf.mxu0
        %v8487 = vadd.f32 %v8326, %v8486
        %v8488 = vpop.f32.mrf.mxu0
        %v8489 = vpop.f32.mrf.mxu0
        %v8490 = vadd.f32 %v8329, %v8489
        %v8491 = vpop.f32.mrf.mxu0
        %8492 = vmatprep.mubr.bf16.mxu0 0
        %8493 = vmatmul.mubr.bf16.gmra.mxu0 %v6980
        %v8494 = vpop.f32.mrf.mxu0
        %v8495 = vadd.f32 %v8334, %v8494
        %v8496 = vpop.f32.mrf.mxu0
        %v8497 = vpop.f32.mrf.mxu0
        %v8498 = vadd.f32 %v8337, %v8497
        %v8499 = vpop.f32.mrf.mxu0
        %8500 = vmatprep.mubr.bf16.mxu0 0
        %8501 = vmatmul.mubr.bf16.gmra.mxu0 %v6983
        %v8502 = vpop.f32.mrf.mxu0
        %v8503 = vadd.f32 %v8342, %v8502
        %v8504 = vpop.f32.mrf.mxu0
        %v8505 = vpop.f32.mrf.mxu0
        %v8506 = vadd.f32 %v8345, %v8505
        %v8507 = vpop.f32.mrf.mxu0
        %8508 = vmatprep.mubr.bf16.mxu0 0
        %8509 = vmatmul.mubr.bf16.gmra.mxu0 %v6986
        %v8510 = vpop.f32.mrf.mxu0
        %v8511 = vadd.f32 %v8350, %v8510
        %v8512 = vpop.f32.mrf.mxu0
        %v8513 = vpop.f32.mrf.mxu0
        %v8514 = vadd.f32 %v8353, %v8513
        %v8515 = vpop.f32.mrf.mxu0
        %8516 = vmatprep.mubr.bf16.mxu0 0
        %8517 = vmatmul.mubr.bf16.gmra.mxu0 %v6989
        %v8518 = vpop.f32.mrf.mxu0
        %v8519 = vadd.f32 %v8358, %v8518
        %v8520 = vpop.f32.mrf.mxu0
        %v8521 = vpop.f32.mrf.mxu0
        %v8522 = vadd.f32 %v8361, %v8521
        %v8523 = vpop.f32.mrf.mxu0
        %8524 = vmatprep.mubr.bf16.mxu0 0
        %8525 = vmatmul.mubr.bf16.gmra.mxu0 %v6992
        %v8526 = vpop.f32.mrf.mxu0
        %v8527 = vadd.f32 %v8366, %v8526
        %v8528 = vpop.f32.mrf.mxu0
        %v8529 = vpop.f32.mrf.mxu0
        %v8530 = vadd.f32 %v8369, %v8529
        %v8531 = vpop.f32.mrf.mxu0
        %8532 = vmatprep.mubr.bf16.mxu0 0
        %8533 = vmatmul.mubr.bf16.gmra.mxu0 %v6995
        %v8534 = vpop.f32.mrf.mxu0
        %v8535 = vadd.f32 %v8374, %v8534
        %v8536 = vpop.f32.mrf.mxu0
        %v8537 = vpop.f32.mrf.mxu0
        %v8538 = vadd.f32 %v8377, %v8537
        %v8539 = vpop.f32.mrf.mxu0
        %8540 = vmatprep.mubr.bf16.mxu0 0
        %8541 = vmatmul.mubr.bf16.gmra.mxu0 %v6998
        %v8542 = vpop.f32.mrf.mxu0
        %v8543 = vadd.f32 %v8382, %v8542
        %v8544 = vpop.f32.mrf.mxu0
        %v8545 = vpop.f32.mrf.mxu0
        %v8546 = vadd.f32 %v8385, %v8545
        %v8547 = vpop.f32.mrf.mxu0
        %8548 = vmatprep.mubr.bf16.mxu0 0
        %8549 = vmatmul.mubr.bf16.gmra.mxu0 %v7001
        %v8550 = vpop.f32.mrf.mxu0
        %v8551 = vadd.f32 %v8390, %v8550
        %v8552 = vpop.f32.mrf.mxu0
        %v8553 = vpop.f32.mrf.mxu0
        %v8554 = vadd.f32 %v8393, %v8553
        %v8555 = vpop.f32.mrf.mxu0
        %8556 = vmatprep.mubr.bf16.mxu0 0
        %8557 = vmatmul.mubr.bf16.gmra.mxu0 %v7004
        %v8558 = vpop.f32.mrf.mxu0
        %v8559 = vadd.f32 %v8398, %v8558
        %v8560 = vpop.f32.mrf.mxu0
        %v8561 = vpop.f32.mrf.mxu0
        %v8562 = vadd.f32 %v8401, %v8561
        %v8563 = vpop.f32.mrf.mxu0
        %8564 = vdwg.mxu0
        %v8565 = vadd.f32 %v7925, %v8439
        %v8566 = vadd.f32 %v7928, %v8442
        %v8567 = vadd.f32 %v7933, %v8447
        %v8568 = vadd.f32 %v7936, %v8450
        %v8569 = vadd.f32 %v7941, %v8455
        %v8570 = vadd.f32 %v7944, %v8458
        %v8571 = vadd.f32 %v7949, %v8463
        %v8572 = vadd.f32 %v7952, %v8466
        %v8573 = vadd.f32 %v7957, %v8471
        %v8574 = vadd.f32 %v7960, %v8474
        %v8575 = vadd.f32 %v7965, %v8479
        %v8576 = vadd.f32 %v7968, %v8482
        %v8577 = vadd.f32 %v7973, %v8487
        %v8578 = vadd.f32 %v7976, %v8490
        %v8579 = vadd.f32 %v7981, %v8495
        %v8580 = vadd.f32 %v7984, %v8498
        %v8581 = vadd.f32 %v7989, %v8503
        %v8582 = vadd.f32 %v7992, %v8506
        %v8583 = vadd.f32 %v7997, %v8511
        %v8584 = vadd.f32 %v8000, %v8514
        %v8585 = vadd.f32 %v8005, %v8519
        %v8586 = vadd.f32 %v8008, %v8522
        %v8587 = vadd.f32 %v8013, %v8527
        %v8588 = vadd.f32 %v8016, %v8530
        %v8589 = vadd.f32 %v8021, %v8535
        %v8590 = vadd.f32 %v8024, %v8538
        %v8591 = vadd.f32 %v8029, %v8543
        %v8592 = vadd.f32 %v8032, %v8546
        %v8593 = vadd.f32 %v8037, %v8551
        %v8594 = vadd.f32 %v8040, %v8554
        %v8595 = vadd.f32 %v8045, %v8559
        %v8596 = vadd.f32 %v8048, %v8562
        %v8597 = vmul.f32 %v8565, %v3021
        %v8598 = vmul.f32 %v8566, %v3021
        %v8599 = vmul.f32 %v8567, %v3021
        %v8600 = vmul.f32 %v8568, %v3021
        %v8601 = vmul.f32 %v8569, %v3021
        %v8602 = vmul.f32 %v8570, %v3021
        %v8603 = vmul.f32 %v8571, %v3021
        %v8604 = vmul.f32 %v8572, %v3021
        %v8605 = vmul.f32 %v8573, %v3021
        %v8606 = vmul.f32 %v8574, %v3021
        %v8607 = vmul.f32 %v8575, %v3021
        %v8608 = vmul.f32 %v8576, %v3021
        %v8609 = vmul.f32 %v8577, %v3021
        %v8610 = vmul.f32 %v8578, %v3021
        %v8611 = vmul.f32 %v8579, %v3021
        %v8612 = vmul.f32 %v8580, %v3021
        %v8613 = vmul.f32 %v8581, %v3021
        %v8614 = vmul.f32 %v8582, %v3021
        %v8615 = vmul.f32 %v8583, %v3021
        %v8616 = vmul.f32 %v8584, %v3021
        %v8617 = vmul.f32 %v8585, %v3021
        %v8618 = vmul.f32 %v8586, %v3021
        %v8619 = vmul.f32 %v8587, %v3021
        %v8620 = vmul.f32 %v8588, %v3021
        %v8621 = vmul.f32 %v8589, %v3021
        %v8622 = vmul.f32 %v8590, %v3021
        %v8623 = vmul.f32 %v8591, %v3021
        %v8624 = vmul.f32 %v8592, %v3021
        %v8625 = vmul.f32 %v8593, %v3021
        %v8626 = vmul.f32 %v8594, %v3021
        %v8627 = vmul.f32 %v8595, %v3021
        %v8628 = vmul.f32 %v8596, %v3021
        %v8629 = vadd.f32 %v8597, %v3059
        %v8630 = vadd.f32 %v8598, %v3059
        %v8631 = vadd.f32 %v8599, %v3059
        %v8632 = vadd.f32 %v8600, %v3059
        %v8633 = vadd.f32 %v8601, %v3059
        %v8634 = vadd.f32 %v8602, %v3059
        %v8635 = vadd.f32 %v8603, %v3059
        %v8636 = vadd.f32 %v8604, %v3059
        %v8637 = vadd.f32 %v8605, %v3059
        %v8638 = vadd.f32 %v8606, %v3059
        %v8639 = vadd.f32 %v8607, %v3059
        %v8640 = vadd.f32 %v8608, %v3059
        %v8641 = vadd.f32 %v8609, %v3059
        %v8642 = vadd.f32 %v8610, %v3059
        %v8643 = vadd.f32 %v8611, %v3059
        %v8644 = vadd.f32 %v8612, %v3059
        %v8645 = vadd.f32 %v8613, %v3059
        %v8646 = vadd.f32 %v8614, %v3059
        %v8647 = vadd.f32 %v8615, %v3059
        %v8648 = vadd.f32 %v8616, %v3059
        %v8649 = vadd.f32 %v8617, %v3059
        %v8650 = vadd.f32 %v8618, %v3059
        %v8651 = vadd.f32 %v8619, %v3059
        %v8652 = vadd.f32 %v8620, %v3059
        %v8653 = vadd.f32 %v8621, %v3059
        %v8654 = vadd.f32 %v8622, %v3059
        %v8655 = vadd.f32 %v8623, %v3059
        %v8656 = vadd.f32 %v8624, %v3059
        %v8657 = vadd.f32 %v8625, %v3059
        %v8658 = vadd.f32 %v8626, %v3059
        %v8659 = vadd.f32 %v8627, %v3059
        %v8660 = vadd.f32 %v8628, %v3059
        %v8661 = vmax.f32 %v8629, 0.0
        %v8662 = vmax.f32 %v8630, 0.0
        %v8663 = vmax.f32 %v8631, 0.0
        %v8664 = vmax.f32 %v8632, 0.0
        %v8665 = vmax.f32 %v8633, 0.0
        %v8666 = vmax.f32 %v8634, 0.0
        %v8667 = vmax.f32 %v8635, 0.0
        %v8668 = vmax.f32 %v8636, 0.0
        %v8669 = vmax.f32 %v8637, 0.0
        %v8670 = vmax.f32 %v8638, 0.0
        %v8671 = vmax.f32 %v8639, 0.0
        %v8672 = vmax.f32 %v8640, 0.0
        %v8673 = vmax.f32 %v8641, 0.0
        %v8674 = vmax.f32 %v8642, 0.0
        %v8675 = vmax.f32 %v8643, 0.0
        %v8676 = vmax.f32 %v8644, 0.0
        %v8677 = vmax.f32 %v8645, 0.0
        %v8678 = vmax.f32 %v8646, 0.0
        %v8679 = vmax.f32 %v8647, 0.0
        %v8680 = vmax.f32 %v8648, 0.0
        %v8681 = vmax.f32 %v8649, 0.0
        %v8682 = vmax.f32 %v8650, 0.0
        %v8683 = vmax.f32 %v8651, 0.0
        %v8684 = vmax.f32 %v8652, 0.0
        %v8685 = vmax.f32 %v8653, 0.0
        %v8686 = vmax.f32 %v8654, 0.0
        %v8687 = vmax.f32 %v8655, 0.0
        %v8688 = vmax.f32 %v8656, 0.0
        %v8689 = vmax.f32 %v8657, 0.0
        %v8690 = vmax.f32 %v8658, 0.0
        %v8691 = vmax.f32 %v8659, 0.0
        %v8692 = vmax.f32 %v8660, 0.0
        %8693 = vst [vmem:[%s230] sm:$0xff] %v8661
        %8694 = vst [vmem:[%s230 + $0x8] sm:$0xff] %v8662
        %8695 = vst [vmem:[%s230 + $0x10] sm:$0xff] %v8663
        %8696 = vst [vmem:[%s230 + $0x18] sm:$0xff] %v8664
        %8697 = vst [vmem:[%s230 + $0x20] sm:$0xff] %v8665
        %8698 = vst [vmem:[%s230 + $0x28] sm:$0xff] %v8666
        %8699 = vst [vmem:[%s230 + $0x30] sm:$0xff] %v8667
        %8700 = vst [vmem:[%s230 + $0x38] sm:$0xff] %v8668
        %8701 = vst [vmem:[%s230 + $0x40] sm:$0xff] %v8669
        %8702 = vst [vmem:[%s230 + $0x48] sm:$0xff] %v8670
        %8703 = vst [vmem:[%s230 + $0x50] sm:$0xff] %v8671
        %8704 = vst [vmem:[%s230 + $0x58] sm:$0xff] %v8672
        %8705 = vst [vmem:[%s230 + $0x60] sm:$0xff] %v8673
        %8706 = vst [vmem:[%s230 + $0x68] sm:$0xff] %v8674
        %8707 = vst [vmem:[%s230 + $0x70] sm:$0xff] %v8675
        %8708 = vst [vmem:[%s230 + $0x78] sm:$0xff] %v8676
        %8709 = vst [vmem:[%s230 + $0x80] sm:$0xff] %v8677
        %8710 = vst [vmem:[%s230 + $0x88] sm:$0xff] %v8678
        %8711 = vst [vmem:[%s230 + $0x90] sm:$0xff] %v8679
        %8712 = vst [vmem:[%s230 + $0x98] sm:$0xff] %v8680
        %8713 = vst [vmem:[%s230 + $0xa0] sm:$0xff] %v8681
        %8714 = vst [vmem:[%s230 + $0xa8] sm:$0xff] %v8682
        %8715 = vst [vmem:[%s230 + $0xb0] sm:$0xff] %v8683
        %8716 = vst [vmem:[%s230 + $0xb8] sm:$0xff] %v8684
        %8717 = vst [vmem:[%s230 + $0xc0] sm:$0xff] %v8685
        %8718 = vst [vmem:[%s230 + $0xc8] sm:$0xff] %v8686
        %8719 = vst [vmem:[%s230 + $0xd0] sm:$0xff] %v8687
        %8720 = vst [vmem:[%s230 + $0xd8] sm:$0xff] %v8688
        %8721 = vst [vmem:[%s230 + $0xe0] sm:$0xff] %v8689
        %8722 = vst [vmem:[%s230 + $0xe8] sm:$0xff] %v8690
        %8723 = vst [vmem:[%s230 + $0xf0] sm:$0xff] %v8691
        %8724 = vst [vmem:[%s230 + $0xf8] sm:$0xff] %v8692
        %s8725 = sand.u32 %s119, 1
        %s8726 = scalar_lea.sflag [#allocation5], %s8725
        %s8727 = sand.u32 %s119, 1
        %s8728 = smul.addr %s8727, 256
        %s8729 = scalar_lea.vmem [#allocation8], %s8728
        // Predicated region
        $region45: #{tpu_custom_call.1} parent=35 // pred_check
          %p8730 = pneg %p129
        $region46: #{tpu_custom_call.1} parent=35 // pred_check_branch
          %8732 = sbr.rel (%p8730) target = $region48
        $region47: #{tpu_custom_call.1} parent=35 // pred_region
          %s8734 = ssub.s32 4096, 4096
          %8735 = vsyncadd %s8726, %s8734
          %s8736 = smul.addr %s22, 32
          %s8737 = smul.addr %s8736, 128
          %s8738 = scalar_lea.hbm %s4, %s8737
          %s8739 = sshll.u32 %s8729, 4
          %s8740 = int_to_ptr.vmem [resolvable:$true] %s8739
          %8745 = dma.vmem_to_hbm [thread:$0]  %s8740, 4096, %s8738, %s8726, 128, 128, 8
        $region48: #{tpu_custom_call.1} parent=35 // pred_fallthru
          _
      $region36: #{tpu_custom_call.1} parent=5 // pred_fallthru
        _
      %p8746 = scmp.le.s32.totalorder 2, %s17
      // Predicated region
      $region49: #{tpu_custom_call.1} parent=5 // pred_check
        %p8747 = pneg %p8746
      $region50: #{tpu_custom_call.1} parent=5 // pred_check_branch
        %8749 = sbr.rel (%p8747) target = $region52
      $region51: #{tpu_custom_call.1} parent=5 // pred_region
        %s8750 = ssub.s32 %s17, 2
        // Predicated region
        $region53: #{tpu_custom_call.1} parent=51 // pred_check
          %p8751 = pneg %p135
        $region54: #{tpu_custom_call.1} parent=51 // pred_check_branch
          %8753 = sbr.rel (%p8751) target = $region56
        $region55: #{tpu_custom_call.1} parent=51 // pred_region
          %s8754 = sand.u32 %s120, 1
          %s8755 = scalar_lea.sflag [#allocation5], %s8754
          %s8756 = sand.u32 %s120, 1
          %s8757 = smul.addr %s8756, 256
          %s8758 = scalar_lea.vmem [#allocation8], %s8757
          %8759 = dma.done %s8755, 4096
        $region56: #{tpu_custom_call.1} parent=51 // pred_fallthru
          _
      $region52: #{tpu_custom_call.1} parent=5 // pred_fallthru
        _
    $region6: #{tpu_custom_call.1} parent=1 // loop_footer
      %s21 = sadd.s32 1, %s17
    $region7: #{tpu_custom_call.1} parent=1 // loop_footer_branch
      %16 = sbr.rel target = $region3
    $region8: #{tpu_custom_call.1} parent=1 // loop_exit
      _
    %8760 = vsyncpa [#allocation4], 1
    %s8761 = scalar_lea.sflag [#allocation4], 1
    %8762 = vsyncpa %s8761, 1
    %8763 = vsyncpa [#allocation7], 1
    %8764 = vsyncpa [#allocation5], 1
    %s8765 = scalar_lea.sflag [#allocation5], 1
    %8766 = vsyncpa %s8765, 1

</llo_original>
